<compile_context>
chip_gen: v5e
topology: v5e:2x2
jax: 0.10.0
libtpu: 0.0.40
codegen_flags: <defaults>
</compile_context>

<pallas_src>
import functools
import math

import jax
import jax.numpy as jnp
from jax.experimental import pallas as pl
from jax.experimental.pallas import tpu as pltpu

LEAKY_SLOPE = 0.2
VMEM_LIMIT = 40 * 1024 * 1024  # well under v7x 64 MiB physical VMEM


def _round8(v):
    return ((int(v) + 7) // 8) * 8


def _cdiv(a, b):
    return -(-a // b)


def _choose_tiling(l_out, halo, contraction, c_out):
    """Pick (time_tile, halo_tile, num_tiles).

    halo_tile is a multiple of 8 covering the conv halo; time_tile is a
    multiple of halo_tile (so the halo BlockSpec can address element offset
    (t+1)*TL via block indices) and is capped so per-step VMEM (input tile +
    im2col + output tile, double-buffered) stays a few MB — v7x-safe."""
    tlh = max(8, _round8(max(halo, 1)))
    width = max(contraction, c_out, 1)
    if width <= 1024:
        cap = 512
    elif width <= 4096:
        cap = 256
    else:
        cap = 128
    cap = max(cap, tlh)
    max_units = max(1, cap // tlh)
    units = min(max_units, max(1, _cdiv(min(l_out, cap), tlh)))
    tl = units * tlh
    num = _cdiv(l_out, tl)
    return tl, tlh, num


# ---------------------------------------------------------------------------
# Pallas kernels
# ---------------------------------------------------------------------------
def _conv_kernel(xm_ref, xh_ref, w_ref, b_ref, o_ref, *, taps, dilation,
                 act_in, act_out):
    """Stride-1 dilated conv on one (batch, time-tile) block.

    The K per-tap matmuls are fused into a single MXU matmul by building an
    im2col operand (TL, K*C_in) from the VMEM-resident tile + halo.
    xm_ref: (1, TL, C_in)  main tile (bf16)
    xh_ref: (1, TLH, C_in) halo rows following the tile (bf16)
    w_ref : (K*C_in, C_out) bf16,  b_ref: (1, C_out) f32
    """
    tl = o_ref.shape[1]
    x = jnp.concatenate([xm_ref[0], xh_ref[0]], axis=0)       # (TL+TLH, C_in)
    if act_in == "leaky":
        xf = x.astype(jnp.float32)
        x = jnp.where(xf >= 0.0, xf, LEAKY_SLOPE * xf).astype(jnp.bfloat16)
    if taps > 1:
        xs = jnp.concatenate(
            [x[k * dilation:k * dilation + tl] for k in range(taps)], axis=-1)
    else:
        xs = x[:tl]
    acc = jnp.dot(xs, w_ref[...], preferred_element_type=jnp.float32)
    acc = acc + b_ref[...]
    if act_out == "tanh":
        acc = jnp.tanh(acc)
    o_ref[0] = acc.astype(o_ref.dtype)


def _resblock_kernel(xm_ref, xh_ref, wsc_ref, bsc_ref, w3_ref, b3_ref,
                     w1_ref, b1_ref, o_ref, *, dilation):
    """Whole ResnetBlock on one time tile: shortcut 1x1 conv + (leaky ->
    dilated k=3 conv (im2col fused) -> leaky -> 1x1 conv) + add.
    Input is the reflect-padded activation; output row i uses padded rows
    [i, i+2d] (branch) and row i+d (shortcut, un-activated)."""
    tl = o_ref.shape[1]
    d = dilation
    x = jnp.concatenate([xm_ref[0], xh_ref[0]], axis=0)       # (TL+TLH, C) bf16
    short = jnp.dot(x[d:d + tl], wsc_ref[...],
                    preferred_element_type=jnp.float32) + bsc_ref[...]
    xf = x.astype(jnp.float32)
    xl = jnp.where(xf >= 0.0, xf, LEAKY_SLOPE * xf).astype(jnp.bfloat16)
    xs = jnp.concatenate([xl[0:tl], xl[d:d + tl], xl[2 * d:2 * d + tl]],
                         axis=-1)                              # (TL, 3C)
    h = jnp.dot(xs, w3_ref[...], preferred_element_type=jnp.float32) + b3_ref[...]
    h = jnp.where(h >= 0.0, h, LEAKY_SLOPE * h).astype(jnp.bfloat16)
    h = jnp.dot(h, w1_ref[...], preferred_element_type=jnp.float32) + b1_ref[...]
    o_ref[0] = (short + h).astype(o_ref.dtype)


def _std_kernel(x_ref, o_ref, *, n):
    """Unbiased std over the last axis (matches torch.std default)."""
    x = x_ref[...]                                             # (B, T) f32
    mean = jnp.sum(x, axis=1, keepdims=True) * (1.0 / n)
    dev = x - mean
    var = jnp.sum(dev * dev, axis=1, keepdims=True) * (1.0 / max(n - 1, 1))
    o_ref[...] = jnp.sqrt(var)


# ---------------------------------------------------------------------------
# Pallas wrappers
# ---------------------------------------------------------------------------
def _conv_tiled(x, wmat, bias, *, taps, dilation=1, act_in="none",
                act_out="none"):
    """Time-tiled stride-1 dilated conv.
    x: (B, L_sem, C_in) semantically pre-padded (reflect/zero) activations.
    wmat: (taps*C_in, C_out) bf16, bias: (1, C_out) f32.
    Returns (B, L_sem - (taps-1)*dilation, C_out) bf16."""
    B, l_sem, c_in = x.shape
    kc, c_out = wmat.shape
    assert kc == taps * c_in, (kc, taps, c_in)
    halo = (taps - 1) * dilation
    l_out = l_sem - halo
    assert l_out >= 1
    tl, tlh, num = _choose_tiling(l_out, halo, kc, c_out)
    pad_to = num * tl + tlh
    x = x.astype(jnp.bfloat16)
    if l_sem < pad_to:
        x = jnp.pad(x, ((0, 0), (0, pad_to - l_sem), (0, 0)))
    ratio = tl // tlh
    kernel = functools.partial(_conv_kernel, taps=taps, dilation=dilation,
                               act_in=act_in, act_out=act_out)
    out = pl.pallas_call(
        kernel,
        out_shape=jax.ShapeDtypeStruct((B, num * tl, c_out), jnp.bfloat16),
        grid=(B, num),
        in_specs=[
            pl.BlockSpec((1, tl, c_in), lambda b, t: (b, t, 0)),
            pl.BlockSpec((1, tlh, c_in), lambda b, t: (b, (t + 1) * ratio, 0)),
            pl.BlockSpec((kc, c_out), lambda b, t: (0, 0)),
            pl.BlockSpec((1, c_out), lambda b, t: (0, 0)),
        ],
        out_specs=pl.BlockSpec((1, tl, c_out), lambda b, t: (b, t, 0)),
        compiler_params=pltpu.CompilerParams(
            dimension_semantics=("parallel", "parallel"),
            vmem_limit_bytes=VMEM_LIMIT),
    )(x, x, wmat, bias)
    if num * tl != l_out:
        out = out[:, :l_out]
    return out


def _resnet_block(x, p, dilation):
    """Fused ResnetBlock: one pallas_call, one HBM round-trip of x."""
    B, L, C = x.shape
    d = dilation
    xp = jnp.pad(x, ((0, 0), (d, d), (0, 0)), mode="reflect")
    halo = 2 * d
    tl, tlh, num = _choose_tiling(L, halo, 3 * C, C)
    pad_to = num * tl + tlh
    if xp.shape[1] < pad_to:
        xp = jnp.pad(xp, ((0, 0), (0, pad_to - xp.shape[1]), (0, 0)))
    xp = xp.astype(jnp.bfloat16)
    ratio = tl // tlh
    kernel = functools.partial(_resblock_kernel, dilation=d)
    out = pl.pallas_call(
        kernel,
        out_shape=jax.ShapeDtypeStruct((B, num * tl, C), jnp.bfloat16),
        grid=(B, num),
        in_specs=[
            pl.BlockSpec((1, tl, C), lambda b, t: (b, t, 0)),
            pl.BlockSpec((1, tlh, C), lambda b, t: (b, (t + 1) * ratio, 0)),
            pl.BlockSpec((C, C), lambda b, t: (0, 0)),
            pl.BlockSpec((1, C), lambda b, t: (0, 0)),
            pl.BlockSpec((3 * C, C), lambda b, t: (0, 0)),
            pl.BlockSpec((1, C), lambda b, t: (0, 0)),
            pl.BlockSpec((C, C), lambda b, t: (0, 0)),
            pl.BlockSpec((1, C), lambda b, t: (0, 0)),
        ],
        out_specs=pl.BlockSpec((1, tl, C), lambda b, t: (b, t, 0)),
        compiler_params=pltpu.CompilerParams(
            dimension_semantics=("parallel", "parallel"),
            vmem_limit_bytes=VMEM_LIMIT),
    )(xp, xp, p["wsc"], p["bsc"], p["w3"], p["b3"], p["w1"], p["b1"])
    if num * tl != L:
        out = out[:, :L]
    return out


def _strided_conv(x, wmat, bias, *, stride, padding):
    """Downsampling conv (kernel_size == 2*stride) via frame-reshape ->
    2-tap stride-1 conv (LeakyReLU fused in-kernel)."""
    B, L, c_in = x.shape
    k = 2 * stride
    l_out = (L + 2 * padding - k) // stride + 1
    xp = jnp.pad(x, ((0, 0), (padding, padding), (0, 0)))
    target = (l_out + 1) * stride
    cur = xp.shape[1]
    if cur < target:
        xp = jnp.pad(xp, ((0, 0), (0, target - cur), (0, 0)))
    elif cur > target:
        xp = xp[:, :target]
    frames = xp.reshape(B, l_out + 1, stride * c_in)
    return _conv_tiled(frames, wmat, bias, taps=2, act_in="leaky")


def _transposed_conv(x, wmat, bias, *, stride, padding, output_padding, c_out):
    """ConvTranspose1d via polyphase decomposition: one 2-tap stride-1 conv
    with stride*C_out outputs on the UN-upsampled input, then interleave."""
    B, L, c_in = x.shape
    k = 2 * stride
    l_out = (L - 1) * stride - 2 * padding + k + output_padding
    xp = jnp.pad(x, ((0, 0), (1, 1), (0, 0)))
    y = _conv_tiled(xp, wmat, bias, taps=2, act_in="leaky")   # (B, L+1, s*c_out)
    y = y.reshape(B, (L + 1) * stride, c_out)
    return y[:, padding:padding + l_out, :]


def _pallas_std_lastdim(x2d):
    """x2d: (B, T) -> (B, 1) unbiased std over T."""
    B, T = x2d.shape
    return pl.pallas_call(
        functools.partial(_std_kernel, n=T),
        out_shape=jax.ShapeDtypeStruct((B, 1), jnp.float32),
    )(x2d.astype(jnp.float32))


# ---------------------------------------------------------------------------
# Init-time weight re-layout helpers
# ---------------------------------------------------------------------------
def _mat_from_oik(w_oik, c_in_pad=None, c_out_pad=None):
    """(C_out, C_in, K) torch Conv1d weight -> (K*C_in, C_out) bf16 matmul mat."""
    c_out, c_in, k = w_oik.shape
    if c_in_pad is not None and c_in_pad > c_in:
        w_oik = jnp.pad(w_oik, ((0, 0), (0, c_in_pad - c_in), (0, 0)))
        c_in = c_in_pad
    if c_out_pad is not None and c_out_pad > c_out:
        w_oik = jnp.pad(w_oik, ((0, c_out_pad - c_out), (0, 0), (0, 0)))
        c_out = c_out_pad
    return jnp.transpose(w_oik, (2, 1, 0)).reshape(k * c_in, c_out).astype(
        jnp.bfloat16)


def _mat_strided(w_oik, stride):
    """Strided conv (K=2*stride) weight -> frames-layout (2*s*C_in, C_out)."""
    c_out, c_in, k = w_oik.shape
    assert k == 2 * stride
    wr = w_oik.reshape(c_out, c_in, 2, stride)
    return jnp.transpose(wr, (2, 3, 1, 0)).reshape(
        2 * stride * c_in, c_out).astype(jnp.bfloat16)


def _mat_transposed(w_iok, stride):
    """ConvTranspose1d (C_in, C_out, 2*s) weight -> polyphase (2*C_in, s*C_out)."""
    c_in, c_out, k = w_iok.shape
    assert k == 2 * stride
    wr = w_iok.reshape(c_in, c_out, 2, stride)
    wr = wr[:, :, ::-1, :]                       # tap 0 uses W[..., s+r], tap 1 W[..., r]
    return jnp.transpose(wr, (2, 0, 3, 1)).reshape(
        2 * c_in, stride * c_out).astype(jnp.bfloat16)


# ---------------------------------------------------------------------------
# Seanet model
# ---------------------------------------------------------------------------
class SeanetPallas:
    def __init__(self, latent_space_size=128, ngf=32, n_residual_layers=3,
                 resample=1, normalize=True, floor=0.001, ratios=(8, 8, 2, 2),
                 in_channels=1, out_channels=1, lr_sr=16000, hr_sr=16000,
                 upsample=True, seed=0):
        assert lr_sr == hr_sr, "sinc resampling not implemented"
        # TODO(synk): julius sinc resample for lr_sr != hr_sr (identity here).
        self.resample = resample
        self.normalize = normalize
        self.floor = floor
        self.lr_sr = lr_sr
        self.hr_sr = hr_sr
        self.scale_factor = int(hr_sr / lr_sr)
        self.upsample = upsample
        self.ratios = list(ratios)
        self.in_channels = in_channels
        self.out_channels = out_channels
        self.c_in_pad = max(8, _round8(in_channels))
        self.c_out_pad = max(8, _round8(out_channels))

        key = [jax.random.PRNGKey(seed)]

        def nxt():
            key[0], sub = jax.random.split(key[0])
            return sub

        def raw_w(shape):
            return 0.02 * jax.random.normal(nxt(), shape, jnp.float32)

        def bias2(c, c_pad=None):
            b = 0.02 * jax.random.normal(nxt(), (c,), jnp.float32)
            if c_pad is not None and c_pad > c:
                b = jnp.pad(b, ((0, c_pad - c),))
                c = c_pad
            return b.reshape(1, c).astype(jnp.float32)

        def res_p(dim):
            return {
                "wsc": _mat_from_oik(raw_w((dim, dim, 1))), "bsc": bias2(dim),
                "w3": _mat_from_oik(raw_w((dim, dim, 3))), "b3": bias2(dim),
                "w1": _mat_from_oik(raw_w((dim, dim, 1))), "b1": bias2(dim),
            }

        mult = int(2 ** len(self.ratios))
        self.encoder, self.decoder = [], []
        self.encoder.insert(0, {
            "type": "enc_latent",
            "w": _mat_from_oik(raw_w((latent_space_size, mult * ngf, 7))),
            "b": bias2(latent_space_size)})
        self.decoder.append({
            "type": "dec_latent",
            "w": _mat_from_oik(raw_w((mult * ngf, latent_space_size, 7))),
            "b": bias2(mult * ngf)})
        for r in self.ratios:
            dim = mult * ngf // 2
            enc = {"type": "enc_level", "stride": r,
                   "padding": r // 2 + r % 2,
                   "w": _mat_strided(raw_w((mult * ngf, dim, 2 * r)), r),
                   "b": bias2(mult * ngf),
                   "res": [{"dilation": 3 ** j, "p": res_p(dim)}
                           for j in range(n_residual_layers)]}
            b_dec = 0.02 * jax.random.normal(nxt(), (dim,), jnp.float32)
            dec = {"type": "dec_level", "stride": r,
                   "padding": r // 2 + r % 2, "output_padding": r % 2,
                   "c_out": dim,
                   "w": _mat_transposed(raw_w((mult * ngf, dim, 2 * r)), r),
                   "b": jnp.tile(b_dec, r).reshape(1, r * dim).astype(jnp.float32),
                   "res": [{"dilation": 3 ** j, "p": res_p(dim)}
                           for j in range(n_residual_layers)]}
            mult //= 2
            self.encoder.insert(0, enc)
            self.decoder.append(dec)
        self.encoder.insert(0, {
            "type": "enc_first",
            "w": _mat_from_oik(raw_w((ngf, in_channels, 7)),
                               c_in_pad=self.c_in_pad),
            "b": bias2(ngf)})
        self.decoder.append({
            "type": "dec_last",
            "w": _mat_from_oik(raw_w((out_channels, ngf, 7)),
                               c_out_pad=self.c_out_pad),
            "b": bias2(out_channels, c_pad=self.c_out_pad)})

    # -- stage application -------------------------------------------------
    def _apply_stage(self, stage, x):
        t = stage["type"]
        if t == "enc_first":        # RefPad(3) -> conv(k7) -> Tanh
            h = jnp.pad(x, ((0, 0), (3, 3), (0, 0)), mode="reflect")
            return _conv_tiled(h, stage["w"], stage["b"], taps=7,
                               act_out="tanh")
        if t == "enc_level":        # [ResnetBlocks], LeakyReLU, strided conv
            for rb in stage["res"]:
                x = _resnet_block(x, rb["p"], rb["dilation"])
            return _strided_conv(x, stage["w"], stage["b"],
                                 stride=stage["stride"],
                                 padding=stage["padding"])
        if t in ("enc_latent", "dec_latent"):   # LeakyReLU, RefPad(3), conv(k7)
            h = jnp.pad(x, ((0, 0), (3, 3), (0, 0)), mode="reflect")
            return _conv_tiled(h, stage["w"], stage["b"], taps=7,
                               act_in="leaky")
        if t == "dec_level":        # LeakyReLU, ConvTranspose, [ResnetBlocks]
            x = _transposed_conv(x, stage["w"], stage["b"],
                                 stride=stage["stride"],
                                 padding=stage["padding"],
                                 output_padding=stage["output_padding"],
                                 c_out=stage["c_out"])
            for rb in stage["res"]:
                x = _resnet_block(x, rb["p"], rb["dilation"])
            return x
        if t == "dec_last":         # LeakyReLU, RefPad(3), conv(k7), Tanh
            h = jnp.pad(x, ((0, 0), (3, 3), (0, 0)), mode="reflect")
            return _conv_tiled(h, stage["w"], stage["b"], taps=7,
                               act_in="leaky", act_out="tanh")
        raise ValueError(t)

    # -- length bookkeeping (identical to PyTorch reference) ----------------
    def estimate_output_length(self, length):
        depth = len(self.ratios)
        for idx in range(depth - 1, -1, -1):
            stride = self.ratios[idx]
            kernel_size = 2 * stride
            padding = stride // 2 + stride % 2
            length = math.ceil((length - kernel_size + 2 * padding) / stride) + 1
            length = max(length, 1)
        for idx in range(depth):
            stride = self.ratios[idx]
            kernel_size = 2 * stride
            padding = stride // 2 + stride % 2
            output_padding = stride % 2
            length = (length - 1) * stride + kernel_size - 2 * padding + output_padding
        return int(length)

    # -- forward -------------------------------------------------------------
    def forward(self, signal):
        """signal: (B, in_channels, T) -> (B, out_channels, T*scale_factor)."""
        signal = signal.astype(jnp.float32)
        B = signal.shape[0]
        target_len = signal.shape[-1]
        if self.upsample:
            target_len *= self.scale_factor
        if self.normalize:
            mono = jnp.mean(signal, axis=1)                             # (B, T)
            std = _pallas_std_lastdim(mono).reshape(B, 1, 1)            # unbiased
            signal = signal / (self.floor + std)
        else:
            std = jnp.float32(1.0)
        x = signal
        # resample(x, lr_sr, hr_sr) is identity for lr_sr == hr_sr.
        valid_length = self.estimate_output_length(x.shape[-1])
        x = jnp.pad(x, ((0, 0), (0, 0), (0, valid_length - x.shape[-1])))
        x = jnp.transpose(x, (0, 2, 1)).astype(jnp.bfloat16)            # NCL -> NLC
        if x.shape[-1] < self.c_in_pad:
            x = jnp.pad(x, ((0, 0), (0, 0), (0, self.c_in_pad - x.shape[-1])))
        skips = []
        for stage in self.encoder:
            skips.append(x)
            x = self._apply_stage(stage, x)
        for stage in self.decoder:
            x = self._apply_stage(stage, x)
            x = x + skips.pop(-1)
        x = x[:, :, :self.out_channels]
        x = jnp.transpose(x, (0, 2, 1)).astype(jnp.float32)             # NLC -> NCL
        if target_len < x.shape[-1]:
            x = x[..., :target_len]
        return std * x


# ---------------------------------------------------------------------------
if __name__ == "__main__":
    # Small-but-structurally-complete hyperparameters (the default
    # ratios=[8,8,2,2] architecture requires input length >= ~1024; we shrink
    # the config, not the forward-pass semantics).
    model = SeanetPallas(latent_space_size=32, ngf=8, n_residual_layers=3,
                         ratios=[4, 2], in_channels=1, out_channels=1,
                         lr_sr=16000, hr_sr=16000, upsample=True, seed=0)
    key = jax.random.PRNGKey(0)
    signal = jax.random.normal(key, (2, 1, 100), dtype=jnp.float32)
    out = jax.jit(model.forward)(signal)
    out = jax.block_until_ready(out)
    assert out.shape == (2, 1, 100), out.shape
    assert bool(jnp.isfinite(out).all())
    print("KERNEL_OK")
</pallas_src>

<mosaic_0001>
module attributes {stable_mosaic.version = 11 : i64} {
  func.func @_std_kernel(%arg0: memref<2x100xf32, #tpu.memory_space<vmem>>, %arg1: memref<2x1xf32, #tpu.memory_space<vmem>>) attributes {dimension_semantics = [], scalar_prefetch = 0 : i64, scratch_operands = 0 : i64, tpu.core_type = #tpu.core_type<tc>} {
    %c0 = arith.constant 0 : index
    %c0_0 = arith.constant 0 : index
    %0 = vector.load %arg0[%c0, %c0_0] : memref<2x100xf32, #tpu.memory_space<vmem>>, vector<2x100xf32>
    %cst = arith.constant dense<0.000000e+00> : vector<2xf32>
    %1 = vector.multi_reduction <add>, %0, %cst [1] : vector<2x100xf32> to vector<2xf32>
    %2 = vector.shape_cast %1 : vector<2xf32> to vector<2x1xf32>
    %cst_1 = arith.constant 0.00999999977 : f32
    %3 = vector.broadcast %cst_1 : f32 to vector<2x1xf32>
    %4 = arith.mulf %2, %3 : vector<2x1xf32>
    %5 = vector.broadcast %4 : vector<2x1xf32> to vector<2x100xf32>
    %6 = arith.subf %0, %5 : vector<2x100xf32>
    %7 = arith.mulf %6, %6 : vector<2x100xf32>
    %cst_2 = arith.constant dense<0.000000e+00> : vector<2xf32>
    %8 = vector.multi_reduction <add>, %7, %cst_2 [1] : vector<2x100xf32> to vector<2xf32>
    %9 = vector.shape_cast %8 : vector<2xf32> to vector<2x1xf32>
    %cst_3 = arith.constant 0.0101010101 : f32
    %10 = vector.broadcast %cst_3 : f32 to vector<2x1xf32>
    %11 = arith.mulf %9, %10 : vector<2x1xf32>
    %12 = math.sqrt %11 : vector<2x1xf32>
    %c0_4 = arith.constant 0 : index
    %c0_5 = arith.constant 0 : index
    %13 = vector.load %arg1[%c0_4, %c0_5] : memref<2x1xf32, #tpu.memory_space<vmem>>, vector<2x1xf32>
    tpu.vector_store %arg1[%c0_4, %c0_5], %12 {strides = array<i32>} : memref<2x1xf32, #tpu.memory_space<vmem>>, vector<2x1xf32>,
    return
  }
}

module attributes {stable_mosaic.version = 11 : i64} {
  func.func @_conv_kernel(%arg0: i32, %arg1: i32, %arg2: memref<1x104x8xbf16, #tpu.memory_space<vmem>>, %arg3: memref<1x8x8xbf16, #tpu.memory_space<vmem>>, %arg4: memref<56x8xbf16, #tpu.memory_space<vmem>>, %arg5: memref<1x8xf32, #tpu.memory_space<vmem>>, %arg6: memref<1x104x8xbf16, #tpu.memory_space<vmem>>) attributes {dimension_semantics = [#tpu.dimension_semantics<parallel>, #tpu.dimension_semantics<parallel>], iteration_bounds = array<i64: 2, 1>, scalar_prefetch = 0 : i64, scratch_operands = 0 : i64, tpu.core_type = #tpu.core_type<tc>, window_params = [{transform_indices = @transform_0, window_bounds = array<i64: 1, 104, 8>}, {transform_indices = @transform_1, window_bounds = array<i64: 1, 8, 8>}, {pipeline_mode = #tpu.pipeline_mode<synchronous>, transform_indices = @transform_2, window_bounds = array<i64: 56, 8>}, {pipeline_mode = #tpu.pipeline_mode<synchronous>, transform_indices = @transform_3, window_bounds = array<i64: 1, 8>}, {transform_indices = @transform_4, window_bounds = array<i64: 1, 104, 8>}]} {
    %c0 = arith.constant 0 : index
    %c0_0 = arith.constant 0 : index
    %c0_1 = arith.constant 0 : index
    %0 = vector.load %arg2[%c0, %c0_0, %c0_1] : memref<1x104x8xbf16, #tpu.memory_space<vmem>>, vector<1x104x8xbf16>
    %1 = vector.shape_cast %0 : vector<1x104x8xbf16> to vector<104x8xbf16>
    %c0_2 = arith.constant 0 : index
    %c0_3 = arith.constant 0 : index
    %c0_4 = arith.constant 0 : index
    %2 = vector.load %arg3[%c0_2, %c0_3, %c0_4] : memref<1x8x8xbf16, #tpu.memory_space<vmem>>, vector<1x8x8xbf16>
    %3 = vector.shape_cast %2 : vector<1x8x8xbf16> to vector<8x8xbf16>
    %4 = tpu.concatenate %1, %3 in 0 : vector<104x8xbf16>, vector<8x8xbf16> -> vector<112x8xbf16>
    %5 = vector.extract_strided_slice %4 {offsets = [0, 0], sizes = [104, 8], strides = [1, 1]} : vector<112x8xbf16> to vector<104x8xbf16>
    %6 = vector.extract_strided_slice %4 {offsets = [1, 0], sizes = [104, 8], strides = [1, 1]} : vector<112x8xbf16> to vector<104x8xbf16>
    %7 = vector.extract_strided_slice %4 {offsets = [2, 0], sizes = [104, 8], strides = [1, 1]} : vector<112x8xbf16> to vector<104x8xbf16>
    %8 = vector.extract_strided_slice %4 {offsets = [3, 0], sizes = [104, 8], strides = [1, 1]} : vector<112x8xbf16> to vector<104x8xbf16>
    %9 = vector.extract_strided_slice %4 {offsets = [4, 0], sizes = [104, 8], strides = [1, 1]} : vector<112x8xbf16> to vector<104x8xbf16>
    %10 = vector.extract_strided_slice %4 {offsets = [5, 0], sizes = [104, 8], strides = [1, 1]} : vector<112x8xbf16> to vector<104x8xbf16>
    %11 = vector.extract_strided_slice %4 {offsets = [6, 0], sizes = [104, 8], strides = [1, 1]} : vector<112x8xbf16> to vector<104x8xbf16>
    %12 = tpu.concatenate %5, %6, %7, %8, %9, %10, %11 in 1 : vector<104x8xbf16>, vector<104x8xbf16>, vector<104x8xbf16>, vector<104x8xbf16>, vector<104x8xbf16>, vector<104x8xbf16>, vector<104x8xbf16> -> vector<104x56xbf16>
    %c0_5 = arith.constant 0 : index
    %c0_6 = arith.constant 0 : index
    %13 = vector.load %arg4[%c0_5, %c0_6] : memref<56x8xbf16, #tpu.memory_space<vmem>>, vector<56x8xbf16>
    %cst = arith.constant dense<0.000000e+00> : vector<104x8xf32>
    %14 = tpu.matmul %12, %13, %cst {dimension_numbers = #tpu.dot_dimension_numbers<[1], [0], [0], [1], [0, 0, 1, 1], [], []>} : vector<104x56xbf16>, vector<56x8xbf16>, vector<104x8xf32> -> vector<104x8xf32>
    %c0_7 = arith.constant 0 : index
    %c0_8 = arith.constant 0 : index
    %15 = vector.load %arg5[%c0_7, %c0_8] : memref<1x8xf32, #tpu.memory_space<vmem>>, vector<1x8xf32>
    %16 = vector.broadcast %15 : vector<1x8xf32> to vector<104x8xf32>
    %17 = arith.addf %14, %16 : vector<104x8xf32>
    %18 = math.tanh %17 : vector<104x8xf32>
    %19 = arith.truncf %18 : vector<104x8xf32> to vector<104x8xbf16>
    %c0_9 = arith.constant 0 : index
    %c0_10 = arith.constant 0 : index
    %c0_11 = arith.constant 0 : index
    %20 = vector.load %arg6[%c0_9, %c0_10, %c0_11] : memref<1x104x8xbf16, #tpu.memory_space<vmem>>, vector<1x104x8xbf16>
    %21 = vector.shape_cast %20 : vector<1x104x8xbf16> to vector<104x8xbf16>
    %22 = vector.shape_cast %19 : vector<104x8xbf16> to vector<1x104x8xbf16>
    tpu.vector_store %arg6[%c0_9, %c0_10, %c0_11], %22 {strides = array<i32>} : memref<1x104x8xbf16, #tpu.memory_space<vmem>>, vector<1x104x8xbf16>,
    return
  }
  func.func @transform_0(%arg0: i32, %arg1: i32) -> (i32, i32, i32) {
    %c0_i32 = arith.constant 0 : i32
    %c0_i32_0 = arith.constant 0 : i32
    return %arg0, %arg1, %c0_i32 : i32, i32, i32
  }
  func.func @transform_1(%arg0: i32, %arg1: i32) -> (i32, i32, i32) {
    %c1_i32 = arith.constant 1 : i32
    %0 = arith.addi %arg1, %c1_i32 : i32
    %c13_i32 = arith.constant 13 : i32
    %1 = arith.muli %0, %c13_i32 : i32
    %c0_i32 = arith.constant 0 : i32
    %c0_i32_0 = arith.constant 0 : i32
    return %arg0, %1, %c0_i32 : i32, i32, i32
  }
  func.func @transform_2(%arg0: i32, %arg1: i32) -> (i32, i32) {
    %c0_i32 = arith.constant 0 : i32
    %c0_i32_0 = arith.constant 0 : i32
    %c0_i32_1 = arith.constant 0 : i32
    return %c0_i32, %c0_i32_0 : i32, i32
  }
  func.func @transform_3(%arg0: i32, %arg1: i32) -> (i32, i32) {
    %c0_i32 = arith.constant 0 : i32
    %c0_i32_0 = arith.constant 0 : i32
    %c0_i32_1 = arith.constant 0 : i32
    return %c0_i32, %c0_i32_0 : i32, i32
  }
  func.func @transform_4(%arg0: i32, %arg1: i32) -> (i32, i32, i32) {
    %c0_i32 = arith.constant 0 : i32
    %c0_i32_0 = arith.constant 0 : i32
    return %arg0, %arg1, %c0_i32 : i32, i32, i32
  }
}

module attributes {stable_mosaic.version = 11 : i64} {
  func.func @_resblock_kernel(%arg0: i32, %arg1: i32, %arg2: memref<1x104x8xbf16, #tpu.memory_space<vmem>>, %arg3: memref<1x8x8xbf16, #tpu.memory_space<vmem>>, %arg4: memref<8x8xbf16, #tpu.memory_space<vmem>>, %arg5: memref<1x8xf32, #tpu.memory_space<vmem>>, %arg6: memref<24x8xbf16, #tpu.memory_space<vmem>>, %arg7: memref<1x8xf32, #tpu.memory_space<vmem>>, %arg8: memref<8x8xbf16, #tpu.memory_space<vmem>>, %arg9: memref<1x8xf32, #tpu.memory_space<vmem>>, %arg10: memref<1x104x8xbf16, #tpu.memory_space<vmem>>) attributes {dimension_semantics = [#tpu.dimension_semantics<parallel>, #tpu.dimension_semantics<parallel>], iteration_bounds = array<i64: 2, 1>, scalar_prefetch = 0 : i64, scratch_operands = 0 : i64, tpu.core_type = #tpu.core_type<tc>, window_params = [{transform_indices = @transform_0, window_bounds = array<i64: 1, 104, 8>}, {transform_indices = @transform_1, window_bounds = array<i64: 1, 8, 8>}, {pipeline_mode = #tpu.pipeline_mode<synchronous>, transform_indices = @transform_2, window_bounds = array<i64: 8, 8>}, {pipeline_mode = #tpu.pipeline_mode<synchronous>, transform_indices = @transform_3, window_bounds = array<i64: 1, 8>}, {pipeline_mode = #tpu.pipeline_mode<synchronous>, transform_indices = @transform_4, window_bounds = array<i64: 24, 8>}, {pipeline_mode = #tpu.pipeline_mode<synchronous>, transform_indices = @transform_5, window_bounds = array<i64: 1, 8>}, {pipeline_mode = #tpu.pipeline_mode<synchronous>, transform_indices = @transform_6, window_bounds = array<i64: 8, 8>}, {pipeline_mode = #tpu.pipeline_mode<synchronous>, transform_indices = @transform_7, window_bounds = array<i64: 1, 8>}, {transform_indices = @transform_8, window_bounds = array<i64: 1, 104, 8>}]} {
    %c0 = arith.constant 0 : index
    %c0_0 = arith.constant 0 : index
    %c0_1 = arith.constant 0 : index
    %0 = vector.load %arg2[%c0, %c0_0, %c0_1] : memref<1x104x8xbf16, #tpu.memory_space<vmem>>, vector<1x104x8xbf16>
    %1 = vector.shape_cast %0 : vector<1x104x8xbf16> to vector<104x8xbf16>
    %c0_2 = arith.constant 0 : index
    %c0_3 = arith.constant 0 : index
    %c0_4 = arith.constant 0 : index
    %2 = vector.load %arg3[%c0_2, %c0_3, %c0_4] : memref<1x8x8xbf16, #tpu.memory_space<vmem>>, vector<1x8x8xbf16>
    %3 = vector.shape_cast %2 : vector<1x8x8xbf16> to vector<8x8xbf16>
    %4 = tpu.concatenate %1, %3 in 0 : vector<104x8xbf16>, vector<8x8xbf16> -> vector<112x8xbf16>
    %5 = vector.extract_strided_slice %4 {offsets = [1, 0], sizes = [104, 8], strides = [1, 1]} : vector<112x8xbf16> to vector<104x8xbf16>
    %c0_5 = arith.constant 0 : index
    %c0_6 = arith.constant 0 : index
    %6 = vector.load %arg4[%c0_5, %c0_6] : memref<8x8xbf16, #tpu.memory_space<vmem>>, vector<8x8xbf16>
    %cst = arith.constant dense<0.000000e+00> : vector<104x8xf32>
    %7 = tpu.matmul %5, %6, %cst {dimension_numbers = #tpu.dot_dimension_numbers<[1], [0], [0], [1], [0, 0, 1, 1], [], []>} : vector<104x8xbf16>, vector<8x8xbf16>, vector<104x8xf32> -> vector<104x8xf32>
    %c0_7 = arith.constant 0 : index
    %c0_8 = arith.constant 0 : index
    %8 = vector.load %arg5[%c0_7, %c0_8] : memref<1x8xf32, #tpu.memory_space<vmem>>, vector<1x8xf32>
    %9 = vector.broadcast %8 : vector<1x8xf32> to vector<104x8xf32>
    %10 = arith.addf %7, %9 : vector<104x8xf32>
    %11 = arith.extf %4 : vector<112x8xbf16> to vector<112x8xf32>
    %cst_9 = arith.constant 0.000000e+00 : f32
    %12 = vector.broadcast %cst_9 : f32 to vector<112x8xf32>
    %13 = arith.cmpf oge, %11, %12 : vector<112x8xf32>
    %cst_10 = arith.constant 2.000000e-01 : f32
    %14 = vector.broadcast %cst_10 : f32 to vector<112x8xf32>
    %15 = arith.mulf %14, %11 : vector<112x8xf32>
    %16 = arith.select %13, %11, %15 : vector<112x8xi1>, vector<112x8xf32>
    %17 = arith.truncf %16 : vector<112x8xf32> to vector<112x8xbf16>
    %18 = vector.extract_strided_slice %17 {offsets = [0, 0], sizes = [104, 8], strides = [1, 1]} : vector<112x8xbf16> to vector<104x8xbf16>
    %19 = vector.extract_strided_slice %17 {offsets = [1, 0], sizes = [104, 8], strides = [1, 1]} : vector<112x8xbf16> to vector<104x8xbf16>
    %20 = vector.extract_strided_slice %17 {offsets = [2, 0], sizes = [104, 8], strides = [1, 1]} : vector<112x8xbf16> to vector<104x8xbf16>
    %21 = tpu.concatenate %18, %19, %20 in 1 : vector<104x8xbf16>, vector<104x8xbf16>, vector<104x8xbf16> -> vector<104x24xbf16>
    %c0_11 = arith.constant 0 : index
    %c0_12 = arith.constant 0 : index
    %22 = vector.load %arg6[%c0_11, %c0_12] : memref<24x8xbf16, #tpu.memory_space<vmem>>, vector<24x8xbf16>
    %cst_13 = arith.constant dense<0.000000e+00> : vector<104x8xf32>
    %23 = tpu.matmul %21, %22, %cst_13 {dimension_numbers = #tpu.dot_dimension_numbers<[1], [0], [0], [1], [0, 0, 1, 1], [], []>} : vector<104x24xbf16>, vector<24x8xbf16>, vector<104x8xf32> -> vector<104x8xf32>
    %c0_14 = arith.constant 0 : index
    %c0_15 = arith.constant 0 : index
    %24 = vector.load %arg7[%c0_14, %c0_15] : memref<1x8xf32, #tpu.memory_space<vmem>>, vector<1x8xf32>
    %25 = vector.broadcast %24 : vector<1x8xf32> to vector<104x8xf32>
    %26 = arith.addf %23, %25 : vector<104x8xf32>
    %cst_16 = arith.constant 0.000000e+00 : f32
    %27 = vector.broadcast %cst_16 : f32 to vector<104x8xf32>
    %28 = arith.cmpf oge, %26, %27 : vector<104x8xf32>
    %cst_17 = arith.constant 2.000000e-01 : f32
    %29 = vector.broadcast %cst_17 : f32 to vector<104x8xf32>
    %30 = arith.mulf %29, %26 : vector<104x8xf32>
    %31 = arith.select %28, %26, %30 : vector<104x8xi1>, vector<104x8xf32>
    %32 = arith.truncf %31 : vector<104x8xf32> to vector<104x8xbf16>
    %c0_18 = arith.constant 0 : index
    %c0_19 = arith.constant 0 : index
    %33 = vector.load %arg8[%c0_18, %c0_19] : memref<8x8xbf16, #tpu.memory_space<vmem>>, vector<8x8xbf16>
    %cst_20 = arith.constant dense<0.000000e+00> : vector<104x8xf32>
    %34 = tpu.matmul %32, %33, %cst_20 {dimension_numbers = #tpu.dot_dimension_numbers<[1], [0], [0], [1], [0, 0, 1, 1], [], []>} : vector<104x8xbf16>, vector<8x8xbf16>, vector<104x8xf32> -> vector<104x8xf32>
    %c0_21 = arith.constant 0 : index
    %c0_22 = arith.constant 0 : index
    %35 = vector.load %arg9[%c0_21, %c0_22] : memref<1x8xf32, #tpu.memory_space<vmem>>, vector<1x8xf32>
    %36 = vector.broadcast %35 : vector<1x8xf32> to vector<104x8xf32>
    %37 = arith.addf %34, %36 : vector<104x8xf32>
    %38 = arith.addf %10, %37 : vector<104x8xf32>
    %39 = arith.truncf %38 : vector<104x8xf32> to vector<104x8xbf16>
    %c0_23 = arith.constant 0 : index
    %c0_24 = arith.constant 0 : index
    %c0_25 = arith.constant 0 : index
    %40 = vector.load %arg10[%c0_23, %c0_24, %c0_25] : memref<1x104x8xbf16, #tpu.memory_space<vmem>>, vector<1x104x8xbf16>
    %41 = vector.shape_cast %40 : vector<1x104x8xbf16> to vector<104x8xbf16>
    %42 = vector.shape_cast %39 : vector<104x8xbf16> to vector<1x104x8xbf16>
    tpu.vector_store %arg10[%c0_23, %c0_24, %c0_25], %42 {strides = array<i32>} : memref<1x104x8xbf16, #tpu.memory_space<vmem>>, vector<1x104x8xbf16>,
    return
  }
  func.func @transform_0(%arg0: i32, %arg1: i32) -> (i32, i32, i32) {
    %c0_i32 = arith.constant 0 : i32
    %c0_i32_0 = arith.constant 0 : i32
    return %arg0, %arg1, %c0_i32 : i32, i32, i32
  }
  func.func @transform_1(%arg0: i32, %arg1: i32) -> (i32, i32, i32) {
    %c1_i32 = arith.constant 1 : i32
    %0 = arith.addi %arg1, %c1_i32 : i32
    %c13_i32 = arith.constant 13 : i32
    %1 = arith.muli %0, %c13_i32 : i32
    %c0_i32 = arith.constant 0 : i32
    %c0_i32_0 = arith.constant 0 : i32
    return %arg0, %1, %c0_i32 : i32, i32, i32
  }
  func.func @transform_2(%arg0: i32, %arg1: i32) -> (i32, i32) {
    %c0_i32 = arith.constant 0 : i32
    %c0_i32_0 = arith.constant 0 : i32
    %c0_i32_1 = arith.constant 0 : i32
    return %c0_i32, %c0_i32_0 : i32, i32
  }
  func.func @transform_3(%arg0: i32, %arg1: i32) -> (i32, i32) {
    %c0_i32 = arith.constant 0 : i32
    %c0_i32_0 = arith.constant 0 : i32
    %c0_i32_1 = arith.constant 0 : i32
    return %c0_i32, %c0_i32_0 : i32, i32
  }
  func.func @transform_4(%arg0: i32, %arg1: i32) -> (i32, i32) {
    %c0_i32 = arith.constant 0 : i32
    %c0_i32_0 = arith.constant 0 : i32
    %c0_i32_1 = arith.constant 0 : i32
    return %c0_i32, %c0_i32_0 : i32, i32
  }
  func.func @transform_5(%arg0: i32, %arg1: i32) -> (i32, i32) {
    %c0_i32 = arith.constant 0 : i32
    %c0_i32_0 = arith.constant 0 : i32
    %c0_i32_1 = arith.constant 0 : i32
    return %c0_i32, %c0_i32_0 : i32, i32
  }
  func.func @transform_6(%arg0: i32, %arg1: i32) -> (i32, i32) {
    %c0_i32 = arith.constant 0 : i32
    %c0_i32_0 = arith.constant 0 : i32
    %c0_i32_1 = arith.constant 0 : i32
    return %c0_i32, %c0_i32_0 : i32, i32
  }
  func.func @transform_7(%arg0: i32, %arg1: i32) -> (i32, i32) {
    %c0_i32 = arith.constant 0 : i32
    %c0_i32_0 = arith.constant 0 : i32
    %c0_i32_1 = arith.constant 0 : i32
    return %c0_i32, %c0_i32_0 : i32, i32
  }
  func.func @transform_8(%arg0: i32, %arg1: i32) -> (i32, i32, i32) {
    %c0_i32 = arith.constant 0 : i32
    %c0_i32_0 = arith.constant 0 : i32
    return %arg0, %arg1, %c0_i32 : i32, i32, i32
  }
}

module attributes {stable_mosaic.version = 11 : i64} {
  func.func @_resblock_kernel(%arg0: i32, %arg1: i32, %arg2: memref<1x104x8xbf16, #tpu.memory_space<vmem>>, %arg3: memref<1x8x8xbf16, #tpu.memory_space<vmem>>, %arg4: memref<8x8xbf16, #tpu.memory_space<vmem>>, %arg5: memref<1x8xf32, #tpu.memory_space<vmem>>, %arg6: memref<24x8xbf16, #tpu.memory_space<vmem>>, %arg7: memref<1x8xf32, #tpu.memory_space<vmem>>, %arg8: memref<8x8xbf16, #tpu.memory_space<vmem>>, %arg9: memref<1x8xf32, #tpu.memory_space<vmem>>, %arg10: memref<1x104x8xbf16, #tpu.memory_space<vmem>>) attributes {dimension_semantics = [#tpu.dimension_semantics<parallel>, #tpu.dimension_semantics<parallel>], iteration_bounds = array<i64: 2, 1>, scalar_prefetch = 0 : i64, scratch_operands = 0 : i64, tpu.core_type = #tpu.core_type<tc>, window_params = [{transform_indices = @transform_0, window_bounds = array<i64: 1, 104, 8>}, {transform_indices = @transform_1, window_bounds = array<i64: 1, 8, 8>}, {pipeline_mode = #tpu.pipeline_mode<synchronous>, transform_indices = @transform_2, window_bounds = array<i64: 8, 8>}, {pipeline_mode = #tpu.pipeline_mode<synchronous>, transform_indices = @transform_3, window_bounds = array<i64: 1, 8>}, {pipeline_mode = #tpu.pipeline_mode<synchronous>, transform_indices = @transform_4, window_bounds = array<i64: 24, 8>}, {pipeline_mode = #tpu.pipeline_mode<synchronous>, transform_indices = @transform_5, window_bounds = array<i64: 1, 8>}, {pipeline_mode = #tpu.pipeline_mode<synchronous>, transform_indices = @transform_6, window_bounds = array<i64: 8, 8>}, {pipeline_mode = #tpu.pipeline_mode<synchronous>, transform_indices = @transform_7, window_bounds = array<i64: 1, 8>}, {transform_indices = @transform_8, window_bounds = array<i64: 1, 104, 8>}]} {
    %c0 = arith.constant 0 : index
    %c0_0 = arith.constant 0 : index
    %c0_1 = arith.constant 0 : index
    %0 = vector.load %arg2[%c0, %c0_0, %c0_1] : memref<1x104x8xbf16, #tpu.memory_space<vmem>>, vector<1x104x8xbf16>
    %1 = vector.shape_cast %0 : vector<1x104x8xbf16> to vector<104x8xbf16>
    %c0_2 = arith.constant 0 : index
    %c0_3 = arith.constant 0 : index
    %c0_4 = arith.constant 0 : index
    %2 = vector.load %arg3[%c0_2, %c0_3, %c0_4] : memref<1x8x8xbf16, #tpu.memory_space<vmem>>, vector<1x8x8xbf16>
    %3 = vector.shape_cast %2 : vector<1x8x8xbf16> to vector<8x8xbf16>
    %4 = tpu.concatenate %1, %3 in 0 : vector<104x8xbf16>, vector<8x8xbf16> -> vector<112x8xbf16>
    %5 = vector.extract_strided_slice %4 {offsets = [3, 0], sizes = [104, 8], strides = [1, 1]} : vector<112x8xbf16> to vector<104x8xbf16>
    %c0_5 = arith.constant 0 : index
    %c0_6 = arith.constant 0 : index
    %6 = vector.load %arg4[%c0_5, %c0_6] : memref<8x8xbf16, #tpu.memory_space<vmem>>, vector<8x8xbf16>
    %cst = arith.constant dense<0.000000e+00> : vector<104x8xf32>
    %7 = tpu.matmul %5, %6, %cst {dimension_numbers = #tpu.dot_dimension_numbers<[1], [0], [0], [1], [0, 0, 1, 1], [], []>} : vector<104x8xbf16>, vector<8x8xbf16>, vector<104x8xf32> -> vector<104x8xf32>
    %c0_7 = arith.constant 0 : index
    %c0_8 = arith.constant 0 : index
    %8 = vector.load %arg5[%c0_7, %c0_8] : memref<1x8xf32, #tpu.memory_space<vmem>>, vector<1x8xf32>
    %9 = vector.broadcast %8 : vector<1x8xf32> to vector<104x8xf32>
    %10 = arith.addf %7, %9 : vector<104x8xf32>
    %11 = arith.extf %4 : vector<112x8xbf16> to vector<112x8xf32>
    %cst_9 = arith.constant 0.000000e+00 : f32
    %12 = vector.broadcast %cst_9 : f32 to vector<112x8xf32>
    %13 = arith.cmpf oge, %11, %12 : vector<112x8xf32>
    %cst_10 = arith.constant 2.000000e-01 : f32
    %14 = vector.broadcast %cst_10 : f32 to vector<112x8xf32>
    %15 = arith.mulf %14, %11 : vector<112x8xf32>
    %16 = arith.select %13, %11, %15 : vector<112x8xi1>, vector<112x8xf32>
    %17 = arith.truncf %16 : vector<112x8xf32> to vector<112x8xbf16>
    %18 = vector.extract_strided_slice %17 {offsets = [0, 0], sizes = [104, 8], strides = [1, 1]} : vector<112x8xbf16> to vector<104x8xbf16>
    %19 = vector.extract_strided_slice %17 {offsets = [3, 0], sizes = [104, 8], strides = [1, 1]} : vector<112x8xbf16> to vector<104x8xbf16>
    %20 = vector.extract_strided_slice %17 {offsets = [6, 0], sizes = [104, 8], strides = [1, 1]} : vector<112x8xbf16> to vector<104x8xbf16>
    %21 = tpu.concatenate %18, %19, %20 in 1 : vector<104x8xbf16>, vector<104x8xbf16>, vector<104x8xbf16> -> vector<104x24xbf16>
    %c0_11 = arith.constant 0 : index
    %c0_12 = arith.constant 0 : index
    %22 = vector.load %arg6[%c0_11, %c0_12] : memref<24x8xbf16, #tpu.memory_space<vmem>>, vector<24x8xbf16>
    %cst_13 = arith.constant dense<0.000000e+00> : vector<104x8xf32>
    %23 = tpu.matmul %21, %22, %cst_13 {dimension_numbers = #tpu.dot_dimension_numbers<[1], [0], [0], [1], [0, 0, 1, 1], [], []>} : vector<104x24xbf16>, vector<24x8xbf16>, vector<104x8xf32> -> vector<104x8xf32>
    %c0_14 = arith.constant 0 : index
    %c0_15 = arith.constant 0 : index
    %24 = vector.load %arg7[%c0_14, %c0_15] : memref<1x8xf32, #tpu.memory_space<vmem>>, vector<1x8xf32>
    %25 = vector.broadcast %24 : vector<1x8xf32> to vector<104x8xf32>
    %26 = arith.addf %23, %25 : vector<104x8xf32>
    %cst_16 = arith.constant 0.000000e+00 : f32
    %27 = vector.broadcast %cst_16 : f32 to vector<104x8xf32>
    %28 = arith.cmpf oge, %26, %27 : vector<104x8xf32>
    %cst_17 = arith.constant 2.000000e-01 : f32
    %29 = vector.broadcast %cst_17 : f32 to vector<104x8xf32>
    %30 = arith.mulf %29, %26 : vector<104x8xf32>
    %31 = arith.select %28, %26, %30 : vector<104x8xi1>, vector<104x8xf32>
    %32 = arith.truncf %31 : vector<104x8xf32> to vector<104x8xbf16>
    %c0_18 = arith.constant 0 : index
    %c0_19 = arith.constant 0 : index
    %33 = vector.load %arg8[%c0_18, %c0_19] : memref<8x8xbf16, #tpu.memory_space<vmem>>, vector<8x8xbf16>
    %cst_20 = arith.constant dense<0.000000e+00> : vector<104x8xf32>
    %34 = tpu.matmul %32, %33, %cst_20 {dimension_numbers = #tpu.dot_dimension_numbers<[1], [0], [0], [1], [0, 0, 1, 1], [], []>} : vector<104x8xbf16>, vector<8x8xbf16>, vector<104x8xf32> -> vector<104x8xf32>
    %c0_21 = arith.constant 0 : index
    %c0_22 = arith.constant 0 : index
    %35 = vector.load %arg9[%c0_21, %c0_22] : memref<1x8xf32, #tpu.memory_space<vmem>>, vector<1x8xf32>
    %36 = vector.broadcast %35 : vector<1x8xf32> to vector<104x8xf32>
    %37 = arith.addf %34, %36 : vector<104x8xf32>
    %38 = arith.addf %10, %37 : vector<104x8xf32>
    %39 = arith.truncf %38 : vector<104x8xf32> to vector<104x8xbf16>
    %c0_23 = arith.constant 0 : index
    %c0_24 = arith.constant 0 : index
    %c0_25 = arith.constant 0 : index
    %40 = vector.load %arg10[%c0_23, %c0_24, %c0_25] : memref<1x104x8xbf16, #tpu.memory_space<vmem>>, vector<1x104x8xbf16>
    %41 = vector.shape_cast %40 : vector<1x104x8xbf16> to vector<104x8xbf16>
    %42 = vector.shape_cast %39 : vector<104x8xbf16> to vector<1x104x8xbf16>
    tpu.vector_store %arg10[%c0_23, %c0_24, %c0_25], %42 {strides = array<i32>} : memref<1x104x8xbf16, #tpu.memory_space<vmem>>, vector<1x104x8xbf16>,
    return
  }
  func.func @transform_0(%arg0: i32, %arg1: i32) -> (i32, i32, i32) {
    %c0_i32 = arith.constant 0 : i32
    %c0_i32_0 = arith.constant 0 : i32
    return %arg0, %arg1, %c0_i32 : i32, i32, i32
  }
  func.func @transform_1(%arg0: i32, %arg1: i32) -> (i32, i32, i32) {
    %c1_i32 = arith.constant 1 : i32
    %0 = arith.addi %arg1, %c1_i32 : i32
    %c13_i32 = arith.constant 13 : i32
    %1 = arith.muli %0, %c13_i32 : i32
    %c0_i32 = arith.constant 0 : i32
    %c0_i32_0 = arith.constant 0 : i32
    return %arg0, %1, %c0_i32 : i32, i32, i32
  }
  func.func @transform_2(%arg0: i32, %arg1: i32) -> (i32, i32) {
    %c0_i32 = arith.constant 0 : i32
    %c0_i32_0 = arith.constant 0 : i32
    %c0_i32_1 = arith.constant 0 : i32
    return %c0_i32, %c0_i32_0 : i32, i32
  }
  func.func @transform_3(%arg0: i32, %arg1: i32) -> (i32, i32) {
    %c0_i32 = arith.constant 0 : i32
    %c0_i32_0 = arith.constant 0 : i32
    %c0_i32_1 = arith.constant 0 : i32
    return %c0_i32, %c0_i32_0 : i32, i32
  }
  func.func @transform_4(%arg0: i32, %arg1: i32) -> (i32, i32) {
    %c0_i32 = arith.constant 0 : i32
    %c0_i32_0 = arith.constant 0 : i32
    %c0_i32_1 = arith.constant 0 : i32
    return %c0_i32, %c0_i32_0 : i32, i32
  }
  func.func @transform_5(%arg0: i32, %arg1: i32) -> (i32, i32) {
    %c0_i32 = arith.constant 0 : i32
    %c0_i32_0 = arith.constant 0 : i32
    %c0_i32_1 = arith.constant 0 : i32
    return %c0_i32, %c0_i32_0 : i32, i32
  }
  func.func @transform_6(%arg0: i32, %arg1: i32) -> (i32, i32) {
    %c0_i32 = arith.constant 0 : i32
    %c0_i32_0 = arith.constant 0 : i32
    %c0_i32_1 = arith.constant 0 : i32
    return %c0_i32, %c0_i32_0 : i32, i32
  }
  func.func @transform_7(%arg0: i32, %arg1: i32) -> (i32, i32) {
    %c0_i32 = arith.constant 0 : i32
    %c0_i32_0 = arith.constant 0 : i32
    %c0_i32_1 = arith.constant 0 : i32
    return %c0_i32, %c0_i32_0 : i32, i32
  }
  func.func @transform_8(%arg0: i32, %arg1: i32) -> (i32, i32, i32) {
    %c0_i32 = arith.constant 0 : i32
    %c0_i32_0 = arith.constant 0 : i32
    return %arg0, %arg1, %c0_i32 : i32, i32, i32
  }
}

module attributes {stable_mosaic.version = 11 : i64} {
  func.func @_resblock_kernel(%arg0: i32, %arg1: i32, %arg2: memref<1x120x8xbf16, #tpu.memory_space<vmem>>, %arg3: memref<1x24x8xbf16, #tpu.memory_space<vmem>>, %arg4: memref<8x8xbf16, #tpu.memory_space<vmem>>, %arg5: memref<1x8xf32, #tpu.memory_space<vmem>>, %arg6: memref<24x8xbf16, #tpu.memory_space<vmem>>, %arg7: memref<1x8xf32, #tpu.memory_space<vmem>>, %arg8: memref<8x8xbf16, #tpu.memory_space<vmem>>, %arg9: memref<1x8xf32, #tpu.memory_space<vmem>>, %arg10: memref<1x120x8xbf16, #tpu.memory_space<vmem>>) attributes {dimension_semantics = [#tpu.dimension_semantics<parallel>, #tpu.dimension_semantics<parallel>], iteration_bounds = array<i64: 2, 1>, scalar_prefetch = 0 : i64, scratch_operands = 0 : i64, tpu.core_type = #tpu.core_type<tc>, window_params = [{transform_indices = @transform_0, window_bounds = array<i64: 1, 120, 8>}, {transform_indices = @transform_1, window_bounds = array<i64: 1, 24, 8>}, {pipeline_mode = #tpu.pipeline_mode<synchronous>, transform_indices = @transform_2, window_bounds = array<i64: 8, 8>}, {pipeline_mode = #tpu.pipeline_mode<synchronous>, transform_indices = @transform_3, window_bounds = array<i64: 1, 8>}, {pipeline_mode = #tpu.pipeline_mode<synchronous>, transform_indices = @transform_4, window_bounds = array<i64: 24, 8>}, {pipeline_mode = #tpu.pipeline_mode<synchronous>, transform_indices = @transform_5, window_bounds = array<i64: 1, 8>}, {pipeline_mode = #tpu.pipeline_mode<synchronous>, transform_indices = @transform_6, window_bounds = array<i64: 8, 8>}, {pipeline_mode = #tpu.pipeline_mode<synchronous>, transform_indices = @transform_7, window_bounds = array<i64: 1, 8>}, {transform_indices = @transform_8, window_bounds = array<i64: 1, 120, 8>}]} {
    %c0 = arith.constant 0 : index
    %c0_0 = arith.constant 0 : index
    %c0_1 = arith.constant 0 : index
    %0 = vector.load %arg2[%c0, %c0_0, %c0_1] : memref<1x120x8xbf16, #tpu.memory_space<vmem>>, vector<1x120x8xbf16>
    %1 = vector.shape_cast %0 : vector<1x120x8xbf16> to vector<120x8xbf16>
    %c0_2 = arith.constant 0 : index
    %c0_3 = arith.constant 0 : index
    %c0_4 = arith.constant 0 : index
    %2 = vector.load %arg3[%c0_2, %c0_3, %c0_4] : memref<1x24x8xbf16, #tpu.memory_space<vmem>>, vector<1x24x8xbf16>
    %3 = vector.shape_cast %2 : vector<1x24x8xbf16> to vector<24x8xbf16>
    %4 = tpu.concatenate %1, %3 in 0 : vector<120x8xbf16>, vector<24x8xbf16> -> vector<144x8xbf16>
    %5 = vector.extract_strided_slice %4 {offsets = [9, 0], sizes = [120, 8], strides = [1, 1]} : vector<144x8xbf16> to vector<120x8xbf16>
    %c0_5 = arith.constant 0 : index
    %c0_6 = arith.constant 0 : index
    %6 = vector.load %arg4[%c0_5, %c0_6] : memref<8x8xbf16, #tpu.memory_space<vmem>>, vector<8x8xbf16>
    %cst = arith.constant dense<0.000000e+00> : vector<120x8xf32>
    %7 = tpu.matmul %5, %6, %cst {dimension_numbers = #tpu.dot_dimension_numbers<[1], [0], [0], [1], [0, 0, 1, 1], [], []>} : vector<120x8xbf16>, vector<8x8xbf16>, vector<120x8xf32> -> vector<120x8xf32>
    %c0_7 = arith.constant 0 : index
    %c0_8 = arith.constant 0 : index
    %8 = vector.load %arg5[%c0_7, %c0_8] : memref<1x8xf32, #tpu.memory_space<vmem>>, vector<1x8xf32>
    %9 = vector.broadcast %8 : vector<1x8xf32> to vector<120x8xf32>
    %10 = arith.addf %7, %9 : vector<120x8xf32>
    %11 = arith.extf %4 : vector<144x8xbf16> to vector<144x8xf32>
    %cst_9 = arith.constant 0.000000e+00 : f32
    %12 = vector.broadcast %cst_9 : f32 to vector<144x8xf32>
    %13 = arith.cmpf oge, %11, %12 : vector<144x8xf32>
    %cst_10 = arith.constant 2.000000e-01 : f32
    %14 = vector.broadcast %cst_10 : f32 to vector<144x8xf32>
    %15 = arith.mulf %14, %11 : vector<144x8xf32>
    %16 = arith.select %13, %11, %15 : vector<144x8xi1>, vector<144x8xf32>
    %17 = arith.truncf %16 : vector<144x8xf32> to vector<144x8xbf16>
    %18 = vector.extract_strided_slice %17 {offsets = [0, 0], sizes = [120, 8], strides = [1, 1]} : vector<144x8xbf16> to vector<120x8xbf16>
    %19 = vector.extract_strided_slice %17 {offsets = [9, 0], sizes = [120, 8], strides = [1, 1]} : vector<144x8xbf16> to vector<120x8xbf16>
    %20 = vector.extract_strided_slice %17 {offsets = [18, 0], sizes = [120, 8], strides = [1, 1]} : vector<144x8xbf16> to vector<120x8xbf16>
    %21 = tpu.concatenate %18, %19, %20 in 1 : vector<120x8xbf16>, vector<120x8xbf16>, vector<120x8xbf16> -> vector<120x24xbf16>
    %c0_11 = arith.constant 0 : index
    %c0_12 = arith.constant 0 : index
    %22 = vector.load %arg6[%c0_11, %c0_12] : memref<24x8xbf16, #tpu.memory_space<vmem>>, vector<24x8xbf16>
    %cst_13 = arith.constant dense<0.000000e+00> : vector<120x8xf32>
    %23 = tpu.matmul %21, %22, %cst_13 {dimension_numbers = #tpu.dot_dimension_numbers<[1], [0], [0], [1], [0, 0, 1, 1], [], []>} : vector<120x24xbf16>, vector<24x8xbf16>, vector<120x8xf32> -> vector<120x8xf32>
    %c0_14 = arith.constant 0 : index
    %c0_15 = arith.constant 0 : index
    %24 = vector.load %arg7[%c0_14, %c0_15] : memref<1x8xf32, #tpu.memory_space<vmem>>, vector<1x8xf32>
    %25 = vector.broadcast %24 : vector<1x8xf32> to vector<120x8xf32>
    %26 = arith.addf %23, %25 : vector<120x8xf32>
    %cst_16 = arith.constant 0.000000e+00 : f32
    %27 = vector.broadcast %cst_16 : f32 to vector<120x8xf32>
    %28 = arith.cmpf oge, %26, %27 : vector<120x8xf32>
    %cst_17 = arith.constant 2.000000e-01 : f32
    %29 = vector.broadcast %cst_17 : f32 to vector<120x8xf32>
    %30 = arith.mulf %29, %26 : vector<120x8xf32>
    %31 = arith.select %28, %26, %30 : vector<120x8xi1>, vector<120x8xf32>
    %32 = arith.truncf %31 : vector<120x8xf32> to vector<120x8xbf16>
    %c0_18 = arith.constant 0 : index
    %c0_19 = arith.constant 0 : index
    %33 = vector.load %arg8[%c0_18, %c0_19] : memref<8x8xbf16, #tpu.memory_space<vmem>>, vector<8x8xbf16>
    %cst_20 = arith.constant dense<0.000000e+00> : vector<120x8xf32>
    %34 = tpu.matmul %32, %33, %cst_20 {dimension_numbers = #tpu.dot_dimension_numbers<[1], [0], [0], [1], [0, 0, 1, 1], [], []>} : vector<120x8xbf16>, vector<8x8xbf16>, vector<120x8xf32> -> vector<120x8xf32>
    %c0_21 = arith.constant 0 : index
    %c0_22 = arith.constant 0 : index
    %35 = vector.load %arg9[%c0_21, %c0_22] : memref<1x8xf32, #tpu.memory_space<vmem>>, vector<1x8xf32>
    %36 = vector.broadcast %35 : vector<1x8xf32> to vector<120x8xf32>
    %37 = arith.addf %34, %36 : vector<120x8xf32>
    %38 = arith.addf %10, %37 : vector<120x8xf32>
    %39 = arith.truncf %38 : vector<120x8xf32> to vector<120x8xbf16>
    %c0_23 = arith.constant 0 : index
    %c0_24 = arith.constant 0 : index
    %c0_25 = arith.constant 0 : index
    %40 = vector.load %arg10[%c0_23, %c0_24, %c0_25] : memref<1x120x8xbf16, #tpu.memory_space<vmem>>, vector<1x120x8xbf16>
    %41 = vector.shape_cast %40 : vector<1x120x8xbf16> to vector<120x8xbf16>
    %42 = vector.shape_cast %39 : vector<120x8xbf16> to vector<1x120x8xbf16>
    tpu.vector_store %arg10[%c0_23, %c0_24, %c0_25], %42 {strides = array<i32>} : memref<1x120x8xbf16, #tpu.memory_space<vmem>>, vector<1x120x8xbf16>,
    return
  }
  func.func @transform_0(%arg0: i32, %arg1: i32) -> (i32, i32, i32) {
    %c0_i32 = arith.constant 0 : i32
    %c0_i32_0 = arith.constant 0 : i32
    return %arg0, %arg1, %c0_i32 : i32, i32, i32
  }
  func.func @transform_1(%arg0: i32, %arg1: i32) -> (i32, i32, i32) {
    %c1_i32 = arith.constant 1 : i32
    %0 = arith.addi %arg1, %c1_i32 : i32
    %c5_i32 = arith.constant 5 : i32
    %1 = arith.muli %0, %c5_i32 : i32
    %c0_i32 = arith.constant 0 : i32
    %c0_i32_0 = arith.constant 0 : i32
    return %arg0, %1, %c0_i32 : i32, i32, i32
  }
  func.func @transform_2(%arg0: i32, %arg1: i32) -> (i32, i32) {
    %c0_i32 = arith.constant 0 : i32
    %c0_i32_0 = arith.constant 0 : i32
    %c0_i32_1 = arith.constant 0 : i32
    return %c0_i32, %c0_i32_0 : i32, i32
  }
  func.func @transform_3(%arg0: i32, %arg1: i32) -> (i32, i32) {
    %c0_i32 = arith.constant 0 : i32
    %c0_i32_0 = arith.constant 0 : i32
    %c0_i32_1 = arith.constant 0 : i32
    return %c0_i32, %c0_i32_0 : i32, i32
  }
  func.func @transform_4(%arg0: i32, %arg1: i32) -> (i32, i32) {
    %c0_i32 = arith.constant 0 : i32
    %c0_i32_0 = arith.constant 0 : i32
    %c0_i32_1 = arith.constant 0 : i32
    return %c0_i32, %c0_i32_0 : i32, i32
  }
  func.func @transform_5(%arg0: i32, %arg1: i32) -> (i32, i32) {
    %c0_i32 = arith.constant 0 : i32
    %c0_i32_0 = arith.constant 0 : i32
    %c0_i32_1 = arith.constant 0 : i32
    return %c0_i32, %c0_i32_0 : i32, i32
  }
  func.func @transform_6(%arg0: i32, %arg1: i32) -> (i32, i32) {
    %c0_i32 = arith.constant 0 : i32
    %c0_i32_0 = arith.constant 0 : i32
    %c0_i32_1 = arith.constant 0 : i32
    return %c0_i32, %c0_i32_0 : i32, i32
  }
  func.func @transform_7(%arg0: i32, %arg1: i32) -> (i32, i32) {
    %c0_i32 = arith.constant 0 : i32
    %c0_i32_0 = arith.constant 0 : i32
    %c0_i32_1 = arith.constant 0 : i32
    return %c0_i32, %c0_i32_0 : i32, i32
  }
  func.func @transform_8(%arg0: i32, %arg1: i32) -> (i32, i32, i32) {
    %c0_i32 = arith.constant 0 : i32
    %c0_i32_0 = arith.constant 0 : i32
    return %arg0, %arg1, %c0_i32 : i32, i32, i32
  }
}

module attributes {stable_mosaic.version = 11 : i64} {
  func.func @_resblock_kernel(%arg0: i32, %arg1: i32, %arg2: memref<1x56x16xbf16, #tpu.memory_space<vmem>>, %arg3: memref<1x8x16xbf16, #tpu.memory_space<vmem>>, %arg4: memref<16x16xbf16, #tpu.memory_space<vmem>>, %arg5: memref<1x16xf32, #tpu.memory_space<vmem>>, %arg6: memref<48x16xbf16, #tpu.memory_space<vmem>>, %arg7: memref<1x16xf32, #tpu.memory_space<vmem>>, %arg8: memref<16x16xbf16, #tpu.memory_space<vmem>>, %arg9: memref<1x16xf32, #tpu.memory_space<vmem>>, %arg10: memref<1x56x16xbf16, #tpu.memory_space<vmem>>) attributes {dimension_semantics = [#tpu.dimension_semantics<parallel>, #tpu.dimension_semantics<parallel>], iteration_bounds = array<i64: 2, 1>, scalar_prefetch = 0 : i64, scratch_operands = 0 : i64, tpu.core_type = #tpu.core_type<tc>, window_params = [{transform_indices = @transform_0, window_bounds = array<i64: 1, 56, 16>}, {transform_indices = @transform_1, window_bounds = array<i64: 1, 8, 16>}, {pipeline_mode = #tpu.pipeline_mode<synchronous>, transform_indices = @transform_2, window_bounds = array<i64: 16, 16>}, {pipeline_mode = #tpu.pipeline_mode<synchronous>, transform_indices = @transform_3, window_bounds = array<i64: 1, 16>}, {pipeline_mode = #tpu.pipeline_mode<synchronous>, transform_indices = @transform_4, window_bounds = array<i64: 48, 16>}, {pipeline_mode = #tpu.pipeline_mode<synchronous>, transform_indices = @transform_5, window_bounds = array<i64: 1, 16>}, {pipeline_mode = #tpu.pipeline_mode<synchronous>, transform_indices = @transform_6, window_bounds = array<i64: 16, 16>}, {pipeline_mode = #tpu.pipeline_mode<synchronous>, transform_indices = @transform_7, window_bounds = array<i64: 1, 16>}, {transform_indices = @transform_8, window_bounds = array<i64: 1, 56, 16>}]} {
    %c0 = arith.constant 0 : index
    %c0_0 = arith.constant 0 : index
    %c0_1 = arith.constant 0 : index
    %0 = vector.load %arg2[%c0, %c0_0, %c0_1] : memref<1x56x16xbf16, #tpu.memory_space<vmem>>, vector<1x56x16xbf16>
    %1 = vector.shape_cast %0 : vector<1x56x16xbf16> to vector<56x16xbf16>
    %c0_2 = arith.constant 0 : index
    %c0_3 = arith.constant 0 : index
    %c0_4 = arith.constant 0 : index
    %2 = vector.load %arg3[%c0_2, %c0_3, %c0_4] : memref<1x8x16xbf16, #tpu.memory_space<vmem>>, vector<1x8x16xbf16>
    %3 = vector.shape_cast %2 : vector<1x8x16xbf16> to vector<8x16xbf16>
    %4 = tpu.concatenate %1, %3 in 0 : vector<56x16xbf16>, vector<8x16xbf16> -> vector<64x16xbf16>
    %5 = vector.extract_strided_slice %4 {offsets = [1, 0], sizes = [56, 16], strides = [1, 1]} : vector<64x16xbf16> to vector<56x16xbf16>
    %c0_5 = arith.constant 0 : index
    %c0_6 = arith.constant 0 : index
    %6 = vector.load %arg4[%c0_5, %c0_6] : memref<16x16xbf16, #tpu.memory_space<vmem>>, vector<16x16xbf16>
    %cst = arith.constant dense<0.000000e+00> : vector<56x16xf32>
    %7 = tpu.matmul %5, %6, %cst {dimension_numbers = #tpu.dot_dimension_numbers<[1], [0], [0], [1], [0, 0, 1, 1], [], []>} : vector<56x16xbf16>, vector<16x16xbf16>, vector<56x16xf32> -> vector<56x16xf32>
    %c0_7 = arith.constant 0 : index
    %c0_8 = arith.constant 0 : index
    %8 = vector.load %arg5[%c0_7, %c0_8] : memref<1x16xf32, #tpu.memory_space<vmem>>, vector<1x16xf32>
    %9 = vector.broadcast %8 : vector<1x16xf32> to vector<56x16xf32>
    %10 = arith.addf %7, %9 : vector<56x16xf32>
    %11 = arith.extf %4 : vector<64x16xbf16> to vector<64x16xf32>
    %cst_9 = arith.constant 0.000000e+00 : f32
    %12 = vector.broadcast %cst_9 : f32 to vector<64x16xf32>
    %13 = arith.cmpf oge, %11, %12 : vector<64x16xf32>
    %cst_10 = arith.constant 2.000000e-01 : f32
    %14 = vector.broadcast %cst_10 : f32 to vector<64x16xf32>
    %15 = arith.mulf %14, %11 : vector<64x16xf32>
    %16 = arith.select %13, %11, %15 : vector<64x16xi1>, vector<64x16xf32>
    %17 = arith.truncf %16 : vector<64x16xf32> to vector<64x16xbf16>
    %18 = vector.extract_strided_slice %17 {offsets = [0, 0], sizes = [56, 16], strides = [1, 1]} : vector<64x16xbf16> to vector<56x16xbf16>
    %19 = vector.extract_strided_slice %17 {offsets = [1, 0], sizes = [56, 16], strides = [1, 1]} : vector<64x16xbf16> to vector<56x16xbf16>
    %20 = vector.extract_strided_slice %17 {offsets = [2, 0], sizes = [56, 16], strides = [1, 1]} : vector<64x16xbf16> to vector<56x16xbf16>
    %21 = tpu.concatenate %18, %19, %20 in 1 : vector<56x16xbf16>, vector<56x16xbf16>, vector<56x16xbf16> -> vector<56x48xbf16>
    %c0_11 = arith.constant 0 : index
    %c0_12 = arith.constant 0 : index
    %22 = vector.load %arg6[%c0_11, %c0_12] : memref<48x16xbf16, #tpu.memory_space<vmem>>, vector<48x16xbf16>
    %cst_13 = arith.constant dense<0.000000e+00> : vector<56x16xf32>
    %23 = tpu.matmul %21, %22, %cst_13 {dimension_numbers = #tpu.dot_dimension_numbers<[1], [0], [0], [1], [0, 0, 1, 1], [], []>} : vector<56x48xbf16>, vector<48x16xbf16>, vector<56x16xf32> -> vector<56x16xf32>
    %c0_14 = arith.constant 0 : index
    %c0_15 = arith.constant 0 : index
    %24 = vector.load %arg7[%c0_14, %c0_15] : memref<1x16xf32, #tpu.memory_space<vmem>>, vector<1x16xf32>
    %25 = vector.broadcast %24 : vector<1x16xf32> to vector<56x16xf32>
    %26 = arith.addf %23, %25 : vector<56x16xf32>
    %cst_16 = arith.constant 0.000000e+00 : f32
    %27 = vector.broadcast %cst_16 : f32 to vector<56x16xf32>
    %28 = arith.cmpf oge, %26, %27 : vector<56x16xf32>
    %cst_17 = arith.constant 2.000000e-01 : f32
    %29 = vector.broadcast %cst_17 : f32 to vector<56x16xf32>
    %30 = arith.mulf %29, %26 : vector<56x16xf32>
    %31 = arith.select %28, %26, %30 : vector<56x16xi1>, vector<56x16xf32>
    %32 = arith.truncf %31 : vector<56x16xf32> to vector<56x16xbf16>
    %c0_18 = arith.constant 0 : index
    %c0_19 = arith.constant 0 : index
    %33 = vector.load %arg8[%c0_18, %c0_19] : memref<16x16xbf16, #tpu.memory_space<vmem>>, vector<16x16xbf16>
    %cst_20 = arith.constant dense<0.000000e+00> : vector<56x16xf32>
    %34 = tpu.matmul %32, %33, %cst_20 {dimension_numbers = #tpu.dot_dimension_numbers<[1], [0], [0], [1], [0, 0, 1, 1], [], []>} : vector<56x16xbf16>, vector<16x16xbf16>, vector<56x16xf32> -> vector<56x16xf32>
    %c0_21 = arith.constant 0 : index
    %c0_22 = arith.constant 0 : index
    %35 = vector.load %arg9[%c0_21, %c0_22] : memref<1x16xf32, #tpu.memory_space<vmem>>, vector<1x16xf32>
    %36 = vector.broadcast %35 : vector<1x16xf32> to vector<56x16xf32>
    %37 = arith.addf %34, %36 : vector<56x16xf32>
    %38 = arith.addf %10, %37 : vector<56x16xf32>
    %39 = arith.truncf %38 : vector<56x16xf32> to vector<56x16xbf16>
    %c0_23 = arith.constant 0 : index
    %c0_24 = arith.constant 0 : index
    %c0_25 = arith.constant 0 : index
    %40 = vector.load %arg10[%c0_23, %c0_24, %c0_25] : memref<1x56x16xbf16, #tpu.memory_space<vmem>>, vector<1x56x16xbf16>
    %41 = vector.shape_cast %40 : vector<1x56x16xbf16> to vector<56x16xbf16>
    %42 = vector.shape_cast %39 : vector<56x16xbf16> to vector<1x56x16xbf16>
    tpu.vector_store %arg10[%c0_23, %c0_24, %c0_25], %42 {strides = array<i32>} : memref<1x56x16xbf16, #tpu.memory_space<vmem>>, vector<1x56x16xbf16>,
    return
  }
  func.func @transform_0(%arg0: i32, %arg1: i32) -> (i32, i32, i32) {
    %c0_i32 = arith.constant 0 : i32
    %c0_i32_0 = arith.constant 0 : i32
    return %arg0, %arg1, %c0_i32 : i32, i32, i32
  }
  func.func @transform_1(%arg0: i32, %arg1: i32) -> (i32, i32, i32) {
    %c1_i32 = arith.constant 1 : i32
    %0 = arith.addi %arg1, %c1_i32 : i32
    %c7_i32 = arith.constant 7 : i32
    %1 = arith.muli %0, %c7_i32 : i32
    %c0_i32 = arith.constant 0 : i32
    %c0_i32_0 = arith.constant 0 : i32
    return %arg0, %1, %c0_i32 : i32, i32, i32
  }
  func.func @transform_2(%arg0: i32, %arg1: i32) -> (i32, i32) {
    %c0_i32 = arith.constant 0 : i32
    %c0_i32_0 = arith.constant 0 : i32
    %c0_i32_1 = arith.constant 0 : i32
    return %c0_i32, %c0_i32_0 : i32, i32
  }
  func.func @transform_3(%arg0: i32, %arg1: i32) -> (i32, i32) {
    %c0_i32 = arith.constant 0 : i32
    %c0_i32_0 = arith.constant 0 : i32
    %c0_i32_1 = arith.constant 0 : i32
    return %c0_i32, %c0_i32_0 : i32, i32
  }
  func.func @transform_4(%arg0: i32, %arg1: i32) -> (i32, i32) {
    %c0_i32 = arith.constant 0 : i32
    %c0_i32_0 = arith.constant 0 : i32
    %c0_i32_1 = arith.constant 0 : i32
    return %c0_i32, %c0_i32_0 : i32, i32
  }
  func.func @transform_5(%arg0: i32, %arg1: i32) -> (i32, i32) {
    %c0_i32 = arith.constant 0 : i32
    %c0_i32_0 = arith.constant 0 : i32
    %c0_i32_1 = arith.constant 0 : i32
    return %c0_i32, %c0_i32_0 : i32, i32
  }
  func.func @transform_6(%arg0: i32, %arg1: i32) -> (i32, i32) {
    %c0_i32 = arith.constant 0 : i32
    %c0_i32_0 = arith.constant 0 : i32
    %c0_i32_1 = arith.constant 0 : i32
    return %c0_i32, %c0_i32_0 : i32, i32
  }
  func.func @transform_7(%arg0: i32, %arg1: i32) -> (i32, i32) {
    %c0_i32 = arith.constant 0 : i32
    %c0_i32_0 = arith.constant 0 : i32
    %c0_i32_1 = arith.constant 0 : i32
    return %c0_i32, %c0_i32_0 : i32, i32
  }
  func.func @transform_8(%arg0: i32, %arg1: i32) -> (i32, i32, i32) {
    %c0_i32 = arith.constant 0 : i32
    %c0_i32_0 = arith.constant 0 : i32
    return %arg0, %arg1, %c0_i32 : i32, i32, i32
  }
}

module attributes {stable_mosaic.version = 11 : i64} {
  func.func @_conv_kernel(%arg0: i32, %arg1: i32, %arg2: memref<1x56x16xbf16, #tpu.memory_space<vmem>>, %arg3: memref<1x8x16xbf16, #tpu.memory_space<vmem>>, %arg4: memref<32x16xbf16, #tpu.memory_space<vmem>>, %arg5: memref<1x16xf32, #tpu.memory_space<vmem>>, %arg6: memref<1x56x16xbf16, #tpu.memory_space<vmem>>) attributes {dimension_semantics = [#tpu.dimension_semantics<parallel>, #tpu.dimension_semantics<parallel>], iteration_bounds = array<i64: 2, 1>, scalar_prefetch = 0 : i64, scratch_operands = 0 : i64, tpu.core_type = #tpu.core_type<tc>, window_params = [{transform_indices = @transform_0, window_bounds = array<i64: 1, 56, 16>}, {transform_indices = @transform_1, window_bounds = array<i64: 1, 8, 16>}, {pipeline_mode = #tpu.pipeline_mode<synchronous>, transform_indices = @transform_2, window_bounds = array<i64: 32, 16>}, {pipeline_mode = #tpu.pipeline_mode<synchronous>, transform_indices = @transform_3, window_bounds = array<i64: 1, 16>}, {transform_indices = @transform_4, window_bounds = array<i64: 1, 56, 16>}]} {
    %c0 = arith.constant 0 : index
    %c0_0 = arith.constant 0 : index
    %c0_1 = arith.constant 0 : index
    %0 = vector.load %arg2[%c0, %c0_0, %c0_1] : memref<1x56x16xbf16, #tpu.memory_space<vmem>>, vector<1x56x16xbf16>
    %1 = vector.shape_cast %0 : vector<1x56x16xbf16> to vector<56x16xbf16>
    %c0_2 = arith.constant 0 : index
    %c0_3 = arith.constant 0 : index
    %c0_4 = arith.constant 0 : index
    %2 = vector.load %arg3[%c0_2, %c0_3, %c0_4] : memref<1x8x16xbf16, #tpu.memory_space<vmem>>, vector<1x8x16xbf16>
    %3 = vector.shape_cast %2 : vector<1x8x16xbf16> to vector<8x16xbf16>
    %4 = tpu.concatenate %1, %3 in 0 : vector<56x16xbf16>, vector<8x16xbf16> -> vector<64x16xbf16>
    %5 = arith.extf %4 : vector<64x16xbf16> to vector<64x16xf32>
    %cst = arith.constant 0.000000e+00 : f32
    %6 = vector.broadcast %cst : f32 to vector<64x16xf32>
    %7 = arith.cmpf oge, %5, %6 : vector<64x16xf32>
    %cst_5 = arith.constant 2.000000e-01 : f32
    %8 = vector.broadcast %cst_5 : f32 to vector<64x16xf32>
    %9 = arith.mulf %8, %5 : vector<64x16xf32>
    %10 = arith.select %7, %5, %9 : vector<64x16xi1>, vector<64x16xf32>
    %11 = arith.truncf %10 : vector<64x16xf32> to vector<64x16xbf16>
    %12 = vector.extract_strided_slice %11 {offsets = [0, 0], sizes = [56, 16], strides = [1, 1]} : vector<64x16xbf16> to vector<56x16xbf16>
    %13 = vector.extract_strided_slice %11 {offsets = [1, 0], sizes = [56, 16], strides = [1, 1]} : vector<64x16xbf16> to vector<56x16xbf16>
    %14 = tpu.concatenate %12, %13 in 1 : vector<56x16xbf16>, vector<56x16xbf16> -> vector<56x32xbf16>
    %c0_6 = arith.constant 0 : index
    %c0_7 = arith.constant 0 : index
    %15 = vector.load %arg4[%c0_6, %c0_7] : memref<32x16xbf16, #tpu.memory_space<vmem>>, vector<32x16xbf16>
    %cst_8 = arith.constant dense<0.000000e+00> : vector<56x16xf32>
    %16 = tpu.matmul %14, %15, %cst_8 {dimension_numbers = #tpu.dot_dimension_numbers<[1], [0], [0], [1], [0, 0, 1, 1], [], []>} : vector<56x32xbf16>, vector<32x16xbf16>, vector<56x16xf32> -> vector<56x16xf32>
    %c0_9 = arith.constant 0 : index
    %c0_10 = arith.constant 0 : index
    %17 = vector.load %arg5[%c0_9, %c0_10] : memref<1x16xf32, #tpu.memory_space<vmem>>, vector<1x16xf32>
    %18 = vector.broadcast %17 : vector<1x16xf32> to vector<56x16xf32>
    %19 = arith.addf %16, %18 : vector<56x16xf32>
    %20 = arith.truncf %19 : vector<56x16xf32> to vector<56x16xbf16>
    %c0_11 = arith.constant 0 : index
    %c0_12 = arith.constant 0 : index
    %c0_13 = arith.constant 0 : index
    %21 = vector.load %arg6[%c0_11, %c0_12, %c0_13] : memref<1x56x16xbf16, #tpu.memory_space<vmem>>, vector<1x56x16xbf16>
    %22 = vector.shape_cast %21 : vector<1x56x16xbf16> to vector<56x16xbf16>
    %23 = vector.shape_cast %20 : vector<56x16xbf16> to vector<1x56x16xbf16>
    tpu.vector_store %arg6[%c0_11, %c0_12, %c0_13], %23 {strides = array<i32>} : memref<1x56x16xbf16, #tpu.memory_space<vmem>>, vector<1x56x16xbf16>,
    return
  }
  func.func @transform_0(%arg0: i32, %arg1: i32) -> (i32, i32, i32) {
    %c0_i32 = arith.constant 0 : i32
    %c0_i32_0 = arith.constant 0 : i32
    return %arg0, %arg1, %c0_i32 : i32, i32, i32
  }
  func.func @transform_1(%arg0: i32, %arg1: i32) -> (i32, i32, i32) {
    %c1_i32 = arith.constant 1 : i32
    %0 = arith.addi %arg1, %c1_i32 : i32
    %c7_i32 = arith.constant 7 : i32
    %1 = arith.muli %0, %c7_i32 : i32
    %c0_i32 = arith.constant 0 : i32
    %c0_i32_0 = arith.constant 0 : i32
    return %arg0, %1, %c0_i32 : i32, i32, i32
  }
  func.func @transform_2(%arg0: i32, %arg1: i32) -> (i32, i32) {
    %c0_i32 = arith.constant 0 : i32
    %c0_i32_0 = arith.constant 0 : i32
    %c0_i32_1 = arith.constant 0 : i32
    return %c0_i32, %c0_i32_0 : i32, i32
  }
  func.func @transform_3(%arg0: i32, %arg1: i32) -> (i32, i32) {
    %c0_i32 = arith.constant 0 : i32
    %c0_i32_0 = arith.constant 0 : i32
    %c0_i32_1 = arith.constant 0 : i32
    return %c0_i32, %c0_i32_0 : i32, i32
  }
  func.func @transform_4(%arg0: i32, %arg1: i32) -> (i32, i32, i32) {
    %c0_i32 = arith.constant 0 : i32
    %c0_i32_0 = arith.constant 0 : i32
    return %arg0, %arg1, %c0_i32 : i32, i32, i32
  }
}

module attributes {stable_mosaic.version = 11 : i64} {
  func.func @_resblock_kernel(%arg0: i32, %arg1: i32, %arg2: memref<1x56x16xbf16, #tpu.memory_space<vmem>>, %arg3: memref<1x8x16xbf16, #tpu.memory_space<vmem>>, %arg4: memref<16x16xbf16, #tpu.memory_space<vmem>>, %arg5: memref<1x16xf32, #tpu.memory_space<vmem>>, %arg6: memref<48x16xbf16, #tpu.memory_space<vmem>>, %arg7: memref<1x16xf32, #tpu.memory_space<vmem>>, %arg8: memref<16x16xbf16, #tpu.memory_space<vmem>>, %arg9: memref<1x16xf32, #tpu.memory_space<vmem>>, %arg10: memref<1x56x16xbf16, #tpu.memory_space<vmem>>) attributes {dimension_semantics = [#tpu.dimension_semantics<parallel>, #tpu.dimension_semantics<parallel>], iteration_bounds = array<i64: 2, 1>, scalar_prefetch = 0 : i64, scratch_operands = 0 : i64, tpu.core_type = #tpu.core_type<tc>, window_params = [{transform_indices = @transform_0, window_bounds = array<i64: 1, 56, 16>}, {transform_indices = @transform_1, window_bounds = array<i64: 1, 8, 16>}, {pipeline_mode = #tpu.pipeline_mode<synchronous>, transform_indices = @transform_2, window_bounds = array<i64: 16, 16>}, {pipeline_mode = #tpu.pipeline_mode<synchronous>, transform_indices = @transform_3, window_bounds = array<i64: 1, 16>}, {pipeline_mode = #tpu.pipeline_mode<synchronous>, transform_indices = @transform_4, window_bounds = array<i64: 48, 16>}, {pipeline_mode = #tpu.pipeline_mode<synchronous>, transform_indices = @transform_5, window_bounds = array<i64: 1, 16>}, {pipeline_mode = #tpu.pipeline_mode<synchronous>, transform_indices = @transform_6, window_bounds = array<i64: 16, 16>}, {pipeline_mode = #tpu.pipeline_mode<synchronous>, transform_indices = @transform_7, window_bounds = array<i64: 1, 16>}, {transform_indices = @transform_8, window_bounds = array<i64: 1, 56, 16>}]} {
    %c0 = arith.constant 0 : index
    %c0_0 = arith.constant 0 : index
    %c0_1 = arith.constant 0 : index
    %0 = vector.load %arg2[%c0, %c0_0, %c0_1] : memref<1x56x16xbf16, #tpu.memory_space<vmem>>, vector<1x56x16xbf16>
    %1 = vector.shape_cast %0 : vector<1x56x16xbf16> to vector<56x16xbf16>
    %c0_2 = arith.constant 0 : index
    %c0_3 = arith.constant 0 : index
    %c0_4 = arith.constant 0 : index
    %2 = vector.load %arg3[%c0_2, %c0_3, %c0_4] : memref<1x8x16xbf16, #tpu.memory_space<vmem>>, vector<1x8x16xbf16>
    %3 = vector.shape_cast %2 : vector<1x8x16xbf16> to vector<8x16xbf16>
    %4 = tpu.concatenate %1, %3 in 0 : vector<56x16xbf16>, vector<8x16xbf16> -> vector<64x16xbf16>
    %5 = vector.extract_strided_slice %4 {offsets = [3, 0], sizes = [56, 16], strides = [1, 1]} : vector<64x16xbf16> to vector<56x16xbf16>
    %c0_5 = arith.constant 0 : index
    %c0_6 = arith.constant 0 : index
    %6 = vector.load %arg4[%c0_5, %c0_6] : memref<16x16xbf16, #tpu.memory_space<vmem>>, vector<16x16xbf16>
    %cst = arith.constant dense<0.000000e+00> : vector<56x16xf32>
    %7 = tpu.matmul %5, %6, %cst {dimension_numbers = #tpu.dot_dimension_numbers<[1], [0], [0], [1], [0, 0, 1, 1], [], []>} : vector<56x16xbf16>, vector<16x16xbf16>, vector<56x16xf32> -> vector<56x16xf32>
    %c0_7 = arith.constant 0 : index
    %c0_8 = arith.constant 0 : index
    %8 = vector.load %arg5[%c0_7, %c0_8] : memref<1x16xf32, #tpu.memory_space<vmem>>, vector<1x16xf32>
    %9 = vector.broadcast %8 : vector<1x16xf32> to vector<56x16xf32>
    %10 = arith.addf %7, %9 : vector<56x16xf32>
    %11 = arith.extf %4 : vector<64x16xbf16> to vector<64x16xf32>
    %cst_9 = arith.constant 0.000000e+00 : f32
    %12 = vector.broadcast %cst_9 : f32 to vector<64x16xf32>
    %13 = arith.cmpf oge, %11, %12 : vector<64x16xf32>
    %cst_10 = arith.constant 2.000000e-01 : f32
    %14 = vector.broadcast %cst_10 : f32 to vector<64x16xf32>
    %15 = arith.mulf %14, %11 : vector<64x16xf32>
    %16 = arith.select %13, %11, %15 : vector<64x16xi1>, vector<64x16xf32>
    %17 = arith.truncf %16 : vector<64x16xf32> to vector<64x16xbf16>
    %18 = vector.extract_strided_slice %17 {offsets = [0, 0], sizes = [56, 16], strides = [1, 1]} : vector<64x16xbf16> to vector<56x16xbf16>
    %19 = vector.extract_strided_slice %17 {offsets = [3, 0], sizes = [56, 16], strides = [1, 1]} : vector<64x16xbf16> to vector<56x16xbf16>
    %20 = vector.extract_strided_slice %17 {offsets = [6, 0], sizes = [56, 16], strides = [1, 1]} : vector<64x16xbf16> to vector<56x16xbf16>
    %21 = tpu.concatenate %18, %19, %20 in 1 : vector<56x16xbf16>, vector<56x16xbf16>, vector<56x16xbf16> -> vector<56x48xbf16>
    %c0_11 = arith.constant 0 : index
    %c0_12 = arith.constant 0 : index
    %22 = vector.load %arg6[%c0_11, %c0_12] : memref<48x16xbf16, #tpu.memory_space<vmem>>, vector<48x16xbf16>
    %cst_13 = arith.constant dense<0.000000e+00> : vector<56x16xf32>
    %23 = tpu.matmul %21, %22, %cst_13 {dimension_numbers = #tpu.dot_dimension_numbers<[1], [0], [0], [1], [0, 0, 1, 1], [], []>} : vector<56x48xbf16>, vector<48x16xbf16>, vector<56x16xf32> -> vector<56x16xf32>
    %c0_14 = arith.constant 0 : index
    %c0_15 = arith.constant 0 : index
    %24 = vector.load %arg7[%c0_14, %c0_15] : memref<1x16xf32, #tpu.memory_space<vmem>>, vector<1x16xf32>
    %25 = vector.broadcast %24 : vector<1x16xf32> to vector<56x16xf32>
    %26 = arith.addf %23, %25 : vector<56x16xf32>
    %cst_16 = arith.constant 0.000000e+00 : f32
    %27 = vector.broadcast %cst_16 : f32 to vector<56x16xf32>
    %28 = arith.cmpf oge, %26, %27 : vector<56x16xf32>
    %cst_17 = arith.constant 2.000000e-01 : f32
    %29 = vector.broadcast %cst_17 : f32 to vector<56x16xf32>
    %30 = arith.mulf %29, %26 : vector<56x16xf32>
    %31 = arith.select %28, %26, %30 : vector<56x16xi1>, vector<56x16xf32>
    %32 = arith.truncf %31 : vector<56x16xf32> to vector<56x16xbf16>
    %c0_18 = arith.constant 0 : index
    %c0_19 = arith.constant 0 : index
    %33 = vector.load %arg8[%c0_18, %c0_19] : memref<16x16xbf16, #tpu.memory_space<vmem>>, vector<16x16xbf16>
    %cst_20 = arith.constant dense<0.000000e+00> : vector<56x16xf32>
    %34 = tpu.matmul %32, %33, %cst_20 {dimension_numbers = #tpu.dot_dimension_numbers<[1], [0], [0], [1], [0, 0, 1, 1], [], []>} : vector<56x16xbf16>, vector<16x16xbf16>, vector<56x16xf32> -> vector<56x16xf32>
    %c0_21 = arith.constant 0 : index
    %c0_22 = arith.constant 0 : index
    %35 = vector.load %arg9[%c0_21, %c0_22] : memref<1x16xf32, #tpu.memory_space<vmem>>, vector<1x16xf32>
    %36 = vector.broadcast %35 : vector<1x16xf32> to vector<56x16xf32>
    %37 = arith.addf %34, %36 : vector<56x16xf32>
    %38 = arith.addf %10, %37 : vector<56x16xf32>
    %39 = arith.truncf %38 : vector<56x16xf32> to vector<56x16xbf16>
    %c0_23 = arith.constant 0 : index
    %c0_24 = arith.constant 0 : index
    %c0_25 = arith.constant 0 : index
    %40 = vector.load %arg10[%c0_23, %c0_24, %c0_25] : memref<1x56x16xbf16, #tpu.memory_space<vmem>>, vector<1x56x16xbf16>
    %41 = vector.shape_cast %40 : vector<1x56x16xbf16> to vector<56x16xbf16>
    %42 = vector.shape_cast %39 : vector<56x16xbf16> to vector<1x56x16xbf16>
    tpu.vector_store %arg10[%c0_23, %c0_24, %c0_25], %42 {strides = array<i32>} : memref<1x56x16xbf16, #tpu.memory_space<vmem>>, vector<1x56x16xbf16>,
    return
  }
  func.func @transform_0(%arg0: i32, %arg1: i32) -> (i32, i32, i32) {
    %c0_i32 = arith.constant 0 : i32
    %c0_i32_0 = arith.constant 0 : i32
    return %arg0, %arg1, %c0_i32 : i32, i32, i32
  }
  func.func @transform_1(%arg0: i32, %arg1: i32) -> (i32, i32, i32) {
    %c1_i32 = arith.constant 1 : i32
    %0 = arith.addi %arg1, %c1_i32 : i32
    %c7_i32 = arith.constant 7 : i32
    %1 = arith.muli %0, %c7_i32 : i32
    %c0_i32 = arith.constant 0 : i32
    %c0_i32_0 = arith.constant 0 : i32
    return %arg0, %1, %c0_i32 : i32, i32, i32
  }
  func.func @transform_2(%arg0: i32, %arg1: i32) -> (i32, i32) {
    %c0_i32 = arith.constant 0 : i32
    %c0_i32_0 = arith.constant 0 : i32
    %c0_i32_1 = arith.constant 0 : i32
    return %c0_i32, %c0_i32_0 : i32, i32
  }
  func.func @transform_3(%arg0: i32, %arg1: i32) -> (i32, i32) {
    %c0_i32 = arith.constant 0 : i32
    %c0_i32_0 = arith.constant 0 : i32
    %c0_i32_1 = arith.constant 0 : i32
    return %c0_i32, %c0_i32_0 : i32, i32
  }
  func.func @transform_4(%arg0: i32, %arg1: i32) -> (i32, i32) {
    %c0_i32 = arith.constant 0 : i32
    %c0_i32_0 = arith.constant 0 : i32
    %c0_i32_1 = arith.constant 0 : i32
    return %c0_i32, %c0_i32_0 : i32, i32
  }
  func.func @transform_5(%arg0: i32, %arg1: i32) -> (i32, i32) {
    %c0_i32 = arith.constant 0 : i32
    %c0_i32_0 = arith.constant 0 : i32
    %c0_i32_1 = arith.constant 0 : i32
    return %c0_i32, %c0_i32_0 : i32, i32
  }
  func.func @transform_6(%arg0: i32, %arg1: i32) -> (i32, i32) {
    %c0_i32 = arith.constant 0 : i32
    %c0_i32_0 = arith.constant 0 : i32
    %c0_i32_1 = arith.constant 0 : i32
    return %c0_i32, %c0_i32_0 : i32, i32
  }
  func.func @transform_7(%arg0: i32, %arg1: i32) -> (i32, i32) {
    %c0_i32 = arith.constant 0 : i32
    %c0_i32_0 = arith.constant 0 : i32
    %c0_i32_1 = arith.constant 0 : i32
    return %c0_i32, %c0_i32_0 : i32, i32
  }
  func.func @transform_8(%arg0: i32, %arg1: i32) -> (i32, i32, i32) {
    %c0_i32 = arith.constant 0 : i32
    %c0_i32_0 = arith.constant 0 : i32
    return %arg0, %arg1, %c0_i32 : i32, i32, i32
  }
}

module attributes {stable_mosaic.version = 11 : i64} {
  func.func @_resblock_kernel(%arg0: i32, %arg1: i32, %arg2: memref<1x72x16xbf16, #tpu.memory_space<vmem>>, %arg3: memref<1x24x16xbf16, #tpu.memory_space<vmem>>, %arg4: memref<16x16xbf16, #tpu.memory_space<vmem>>, %arg5: memref<1x16xf32, #tpu.memory_space<vmem>>, %arg6: memref<48x16xbf16, #tpu.memory_space<vmem>>, %arg7: memref<1x16xf32, #tpu.memory_space<vmem>>, %arg8: memref<16x16xbf16, #tpu.memory_space<vmem>>, %arg9: memref<1x16xf32, #tpu.memory_space<vmem>>, %arg10: memref<1x72x16xbf16, #tpu.memory_space<vmem>>) attributes {dimension_semantics = [#tpu.dimension_semantics<parallel>, #tpu.dimension_semantics<parallel>], iteration_bounds = array<i64: 2, 1>, scalar_prefetch = 0 : i64, scratch_operands = 0 : i64, tpu.core_type = #tpu.core_type<tc>, window_params = [{transform_indices = @transform_0, window_bounds = array<i64: 1, 72, 16>}, {transform_indices = @transform_1, window_bounds = array<i64: 1, 24, 16>}, {pipeline_mode = #tpu.pipeline_mode<synchronous>, transform_indices = @transform_2, window_bounds = array<i64: 16, 16>}, {pipeline_mode = #tpu.pipeline_mode<synchronous>, transform_indices = @transform_3, window_bounds = array<i64: 1, 16>}, {pipeline_mode = #tpu.pipeline_mode<synchronous>, transform_indices = @transform_4, window_bounds = array<i64: 48, 16>}, {pipeline_mode = #tpu.pipeline_mode<synchronous>, transform_indices = @transform_5, window_bounds = array<i64: 1, 16>}, {pipeline_mode = #tpu.pipeline_mode<synchronous>, transform_indices = @transform_6, window_bounds = array<i64: 16, 16>}, {pipeline_mode = #tpu.pipeline_mode<synchronous>, transform_indices = @transform_7, window_bounds = array<i64: 1, 16>}, {transform_indices = @transform_8, window_bounds = array<i64: 1, 72, 16>}]} {
    %c0 = arith.constant 0 : index
    %c0_0 = arith.constant 0 : index
    %c0_1 = arith.constant 0 : index
    %0 = vector.load %arg2[%c0, %c0_0, %c0_1] : memref<1x72x16xbf16, #tpu.memory_space<vmem>>, vector<1x72x16xbf16>
    %1 = vector.shape_cast %0 : vector<1x72x16xbf16> to vector<72x16xbf16>
    %c0_2 = arith.constant 0 : index
    %c0_3 = arith.constant 0 : index
    %c0_4 = arith.constant 0 : index
    %2 = vector.load %arg3[%c0_2, %c0_3, %c0_4] : memref<1x24x16xbf16, #tpu.memory_space<vmem>>, vector<1x24x16xbf16>
    %3 = vector.shape_cast %2 : vector<1x24x16xbf16> to vector<24x16xbf16>
    %4 = tpu.concatenate %1, %3 in 0 : vector<72x16xbf16>, vector<24x16xbf16> -> vector<96x16xbf16>
    %5 = vector.extract_strided_slice %4 {offsets = [9, 0], sizes = [72, 16], strides = [1, 1]} : vector<96x16xbf16> to vector<72x16xbf16>
    %c0_5 = arith.constant 0 : index
    %c0_6 = arith.constant 0 : index
    %6 = vector.load %arg4[%c0_5, %c0_6] : memref<16x16xbf16, #tpu.memory_space<vmem>>, vector<16x16xbf16>
    %cst = arith.constant dense<0.000000e+00> : vector<72x16xf32>
    %7 = tpu.matmul %5, %6, %cst {dimension_numbers = #tpu.dot_dimension_numbers<[1], [0], [0], [1], [0, 0, 1, 1], [], []>} : vector<72x16xbf16>, vector<16x16xbf16>, vector<72x16xf32> -> vector<72x16xf32>
    %c0_7 = arith.constant 0 : index
    %c0_8 = arith.constant 0 : index
    %8 = vector.load %arg5[%c0_7, %c0_8] : memref<1x16xf32, #tpu.memory_space<vmem>>, vector<1x16xf32>
    %9 = vector.broadcast %8 : vector<1x16xf32> to vector<72x16xf32>
    %10 = arith.addf %7, %9 : vector<72x16xf32>
    %11 = arith.extf %4 : vector<96x16xbf16> to vector<96x16xf32>
    %cst_9 = arith.constant 0.000000e+00 : f32
    %12 = vector.broadcast %cst_9 : f32 to vector<96x16xf32>
    %13 = arith.cmpf oge, %11, %12 : vector<96x16xf32>
    %cst_10 = arith.constant 2.000000e-01 : f32
    %14 = vector.broadcast %cst_10 : f32 to vector<96x16xf32>
    %15 = arith.mulf %14, %11 : vector<96x16xf32>
    %16 = arith.select %13, %11, %15 : vector<96x16xi1>, vector<96x16xf32>
    %17 = arith.truncf %16 : vector<96x16xf32> to vector<96x16xbf16>
    %18 = vector.extract_strided_slice %17 {offsets = [0, 0], sizes = [72, 16], strides = [1, 1]} : vector<96x16xbf16> to vector<72x16xbf16>
    %19 = vector.extract_strided_slice %17 {offsets = [9, 0], sizes = [72, 16], strides = [1, 1]} : vector<96x16xbf16> to vector<72x16xbf16>
    %20 = vector.extract_strided_slice %17 {offsets = [18, 0], sizes = [72, 16], strides = [1, 1]} : vector<96x16xbf16> to vector<72x16xbf16>
    %21 = tpu.concatenate %18, %19, %20 in 1 : vector<72x16xbf16>, vector<72x16xbf16>, vector<72x16xbf16> -> vector<72x48xbf16>
    %c0_11 = arith.constant 0 : index
    %c0_12 = arith.constant 0 : index
    %22 = vector.load %arg6[%c0_11, %c0_12] : memref<48x16xbf16, #tpu.memory_space<vmem>>, vector<48x16xbf16>
    %cst_13 = arith.constant dense<0.000000e+00> : vector<72x16xf32>
    %23 = tpu.matmul %21, %22, %cst_13 {dimension_numbers = #tpu.dot_dimension_numbers<[1], [0], [0], [1], [0, 0, 1, 1], [], []>} : vector<72x48xbf16>, vector<48x16xbf16>, vector<72x16xf32> -> vector<72x16xf32>
    %c0_14 = arith.constant 0 : index
    %c0_15 = arith.constant 0 : index
    %24 = vector.load %arg7[%c0_14, %c0_15] : memref<1x16xf32, #tpu.memory_space<vmem>>, vector<1x16xf32>
    %25 = vector.broadcast %24 : vector<1x16xf32> to vector<72x16xf32>
    %26 = arith.addf %23, %25 : vector<72x16xf32>
    %cst_16 = arith.constant 0.000000e+00 : f32
    %27 = vector.broadcast %cst_16 : f32 to vector<72x16xf32>
    %28 = arith.cmpf oge, %26, %27 : vector<72x16xf32>
    %cst_17 = arith.constant 2.000000e-01 : f32
    %29 = vector.broadcast %cst_17 : f32 to vector<72x16xf32>
    %30 = arith.mulf %29, %26 : vector<72x16xf32>
    %31 = arith.select %28, %26, %30 : vector<72x16xi1>, vector<72x16xf32>
    %32 = arith.truncf %31 : vector<72x16xf32> to vector<72x16xbf16>
    %c0_18 = arith.constant 0 : index
    %c0_19 = arith.constant 0 : index
    %33 = vector.load %arg8[%c0_18, %c0_19] : memref<16x16xbf16, #tpu.memory_space<vmem>>, vector<16x16xbf16>
    %cst_20 = arith.constant dense<0.000000e+00> : vector<72x16xf32>
    %34 = tpu.matmul %32, %33, %cst_20 {dimension_numbers = #tpu.dot_dimension_numbers<[1], [0], [0], [1], [0, 0, 1, 1], [], []>} : vector<72x16xbf16>, vector<16x16xbf16>, vector<72x16xf32> -> vector<72x16xf32>
    %c0_21 = arith.constant 0 : index
    %c0_22 = arith.constant 0 : index
    %35 = vector.load %arg9[%c0_21, %c0_22] : memref<1x16xf32, #tpu.memory_space<vmem>>, vector<1x16xf32>
    %36 = vector.broadcast %35 : vector<1x16xf32> to vector<72x16xf32>
    %37 = arith.addf %34, %36 : vector<72x16xf32>
    %38 = arith.addf %10, %37 : vector<72x16xf32>
    %39 = arith.truncf %38 : vector<72x16xf32> to vector<72x16xbf16>
    %c0_23 = arith.constant 0 : index
    %c0_24 = arith.constant 0 : index
    %c0_25 = arith.constant 0 : index
    %40 = vector.load %arg10[%c0_23, %c0_24, %c0_25] : memref<1x72x16xbf16, #tpu.memory_space<vmem>>, vector<1x72x16xbf16>
    %41 = vector.shape_cast %40 : vector<1x72x16xbf16> to vector<72x16xbf16>
    %42 = vector.shape_cast %39 : vector<72x16xbf16> to vector<1x72x16xbf16>
    tpu.vector_store %arg10[%c0_23, %c0_24, %c0_25], %42 {strides = array<i32>} : memref<1x72x16xbf16, #tpu.memory_space<vmem>>, vector<1x72x16xbf16>,
    return
  }
  func.func @transform_0(%arg0: i32, %arg1: i32) -> (i32, i32, i32) {
    %c0_i32 = arith.constant 0 : i32
    %c0_i32_0 = arith.constant 0 : i32
    return %arg0, %arg1, %c0_i32 : i32, i32, i32
  }
  func.func @transform_1(%arg0: i32, %arg1: i32) -> (i32, i32, i32) {
    %c1_i32 = arith.constant 1 : i32
    %0 = arith.addi %arg1, %c1_i32 : i32
    %c3_i32 = arith.constant 3 : i32
    %1 = arith.muli %0, %c3_i32 : i32
    %c0_i32 = arith.constant 0 : i32
    %c0_i32_0 = arith.constant 0 : i32
    return %arg0, %1, %c0_i32 : i32, i32, i32
  }
  func.func @transform_2(%arg0: i32, %arg1: i32) -> (i32, i32) {
    %c0_i32 = arith.constant 0 : i32
    %c0_i32_0 = arith.constant 0 : i32
    %c0_i32_1 = arith.constant 0 : i32
    return %c0_i32, %c0_i32_0 : i32, i32
  }
  func.func @transform_3(%arg0: i32, %arg1: i32) -> (i32, i32) {
    %c0_i32 = arith.constant 0 : i32
    %c0_i32_0 = arith.constant 0 : i32
    %c0_i32_1 = arith.constant 0 : i32
    return %c0_i32, %c0_i32_0 : i32, i32
  }
  func.func @transform_4(%arg0: i32, %arg1: i32) -> (i32, i32) {
    %c0_i32 = arith.constant 0 : i32
    %c0_i32_0 = arith.constant 0 : i32
    %c0_i32_1 = arith.constant 0 : i32
    return %c0_i32, %c0_i32_0 : i32, i32
  }
  func.func @transform_5(%arg0: i32, %arg1: i32) -> (i32, i32) {
    %c0_i32 = arith.constant 0 : i32
    %c0_i32_0 = arith.constant 0 : i32
    %c0_i32_1 = arith.constant 0 : i32
    return %c0_i32, %c0_i32_0 : i32, i32
  }
  func.func @transform_6(%arg0: i32, %arg1: i32) -> (i32, i32) {
    %c0_i32 = arith.constant 0 : i32
    %c0_i32_0 = arith.constant 0 : i32
    %c0_i32_1 = arith.constant 0 : i32
    return %c0_i32, %c0_i32_0 : i32, i32
  }
  func.func @transform_7(%arg0: i32, %arg1: i32) -> (i32, i32) {
    %c0_i32 = arith.constant 0 : i32
    %c0_i32_0 = arith.constant 0 : i32
    %c0_i32_1 = arith.constant 0 : i32
    return %c0_i32, %c0_i32_0 : i32, i32
  }
  func.func @transform_8(%arg0: i32, %arg1: i32) -> (i32, i32, i32) {
    %c0_i32 = arith.constant 0 : i32
    %c0_i32_0 = arith.constant 0 : i32
    return %arg0, %arg1, %c0_i32 : i32, i32, i32
  }
}

module attributes {stable_mosaic.version = 11 : i64} {
  func.func @_conv_kernel(%arg0: i32, %arg1: i32, %arg2: memref<1x16x64xbf16, #tpu.memory_space<vmem>>, %arg3: memref<1x8x64xbf16, #tpu.memory_space<vmem>>, %arg4: memref<128x32xbf16, #tpu.memory_space<vmem>>, %arg5: memref<1x32xf32, #tpu.memory_space<vmem>>, %arg6: memref<1x16x32xbf16, #tpu.memory_space<vmem>>) attributes {dimension_semantics = [#tpu.dimension_semantics<parallel>, #tpu.dimension_semantics<parallel>], iteration_bounds = array<i64: 2, 1>, scalar_prefetch = 0 : i64, scratch_operands = 0 : i64, tpu.core_type = #tpu.core_type<tc>, window_params = [{transform_indices = @transform_0, window_bounds = array<i64: 1, 16, 64>}, {transform_indices = @transform_1, window_bounds = array<i64: 1, 8, 64>}, {pipeline_mode = #tpu.pipeline_mode<synchronous>, transform_indices = @transform_2, window_bounds = array<i64: 128, 32>}, {pipeline_mode = #tpu.pipeline_mode<synchronous>, transform_indices = @transform_3, window_bounds = array<i64: 1, 32>}, {transform_indices = @transform_4, window_bounds = array<i64: 1, 16, 32>}]} {
    %c0 = arith.constant 0 : index
    %c0_0 = arith.constant 0 : index
    %c0_1 = arith.constant 0 : index
    %0 = vector.load %arg2[%c0, %c0_0, %c0_1] : memref<1x16x64xbf16, #tpu.memory_space<vmem>>, vector<1x16x64xbf16>
    %1 = vector.shape_cast %0 : vector<1x16x64xbf16> to vector<16x64xbf16>
    %c0_2 = arith.constant 0 : index
    %c0_3 = arith.constant 0 : index
    %c0_4 = arith.constant 0 : index
    %2 = vector.load %arg3[%c0_2, %c0_3, %c0_4] : memref<1x8x64xbf16, #tpu.memory_space<vmem>>, vector<1x8x64xbf16>
    %3 = vector.shape_cast %2 : vector<1x8x64xbf16> to vector<8x64xbf16>
    %4 = tpu.concatenate %1, %3 in 0 : vector<16x64xbf16>, vector<8x64xbf16> -> vector<24x64xbf16>
    %5 = arith.extf %4 : vector<24x64xbf16> to vector<24x64xf32>
    %cst = arith.constant 0.000000e+00 : f32
    %6 = vector.broadcast %cst : f32 to vector<24x64xf32>
    %7 = arith.cmpf oge, %5, %6 : vector<24x64xf32>
    %cst_5 = arith.constant 2.000000e-01 : f32
    %8 = vector.broadcast %cst_5 : f32 to vector<24x64xf32>
    %9 = arith.mulf %8, %5 : vector<24x64xf32>
    %10 = arith.select %7, %5, %9 : vector<24x64xi1>, vector<24x64xf32>
    %11 = arith.truncf %10 : vector<24x64xf32> to vector<24x64xbf16>
    %12 = vector.extract_strided_slice %11 {offsets = [0, 0], sizes = [16, 64], strides = [1, 1]} : vector<24x64xbf16> to vector<16x64xbf16>
    %13 = vector.extract_strided_slice %11 {offsets = [1, 0], sizes = [16, 64], strides = [1, 1]} : vector<24x64xbf16> to vector<16x64xbf16>
    %14 = tpu.concatenate %12, %13 in 1 : vector<16x64xbf16>, vector<16x64xbf16> -> vector<16x128xbf16>
    %c0_6 = arith.constant 0 : index
    %c0_7 = arith.constant 0 : index
    %15 = vector.load %arg4[%c0_6, %c0_7] : memref<128x32xbf16, #tpu.memory_space<vmem>>, vector<128x32xbf16>
    %cst_8 = arith.constant dense<0.000000e+00> : vector<16x32xf32>
    %16 = tpu.matmul %14, %15, %cst_8 {dimension_numbers = #tpu.dot_dimension_numbers<[1], [0], [0], [1], [0, 0, 1, 1], [], []>} : vector<16x128xbf16>, vector<128x32xbf16>, vector<16x32xf32> -> vector<16x32xf32>
    %c0_9 = arith.constant 0 : index
    %c0_10 = arith.constant 0 : index
    %17 = vector.load %arg5[%c0_9, %c0_10] : memref<1x32xf32, #tpu.memory_space<vmem>>, vector<1x32xf32>
    %18 = vector.broadcast %17 : vector<1x32xf32> to vector<16x32xf32>
    %19 = arith.addf %16, %18 : vector<16x32xf32>
    %20 = arith.truncf %19 : vector<16x32xf32> to vector<16x32xbf16>
    %c0_11 = arith.constant 0 : index
    %c0_12 = arith.constant 0 : index
    %c0_13 = arith.constant 0 : index
    %21 = vector.load %arg6[%c0_11, %c0_12, %c0_13] : memref<1x16x32xbf16, #tpu.memory_space<vmem>>, vector<1x16x32xbf16>
    %22 = vector.shape_cast %21 : vector<1x16x32xbf16> to vector<16x32xbf16>
    %23 = vector.shape_cast %20 : vector<16x32xbf16> to vector<1x16x32xbf16>
    tpu.vector_store %arg6[%c0_11, %c0_12, %c0_13], %23 {strides = array<i32>} : memref<1x16x32xbf16, #tpu.memory_space<vmem>>, vector<1x16x32xbf16>,
    return
  }
  func.func @transform_0(%arg0: i32, %arg1: i32) -> (i32, i32, i32) {
    %c0_i32 = arith.constant 0 : i32
    %c0_i32_0 = arith.constant 0 : i32
    return %arg0, %arg1, %c0_i32 : i32, i32, i32
  }
  func.func @transform_1(%arg0: i32, %arg1: i32) -> (i32, i32, i32) {
    %c1_i32 = arith.constant 1 : i32
    %0 = arith.addi %arg1, %c1_i32 : i32
    %c2_i32 = arith.constant 2 : i32
    %1 = arith.muli %0, %c2_i32 : i32
    %c0_i32 = arith.constant 0 : i32
    %c0_i32_0 = arith.constant 0 : i32
    return %arg0, %1, %c0_i32 : i32, i32, i32
  }
  func.func @transform_2(%arg0: i32, %arg1: i32) -> (i32, i32) {
    %c0_i32 = arith.constant 0 : i32
    %c0_i32_0 = arith.constant 0 : i32
    %c0_i32_1 = arith.constant 0 : i32
    return %c0_i32, %c0_i32_0 : i32, i32
  }
  func.func @transform_3(%arg0: i32, %arg1: i32) -> (i32, i32) {
    %c0_i32 = arith.constant 0 : i32
    %c0_i32_0 = arith.constant 0 : i32
    %c0_i32_1 = arith.constant 0 : i32
    return %c0_i32, %c0_i32_0 : i32, i32
  }
  func.func @transform_4(%arg0: i32, %arg1: i32) -> (i32, i32, i32) {
    %c0_i32 = arith.constant 0 : i32
    %c0_i32_0 = arith.constant 0 : i32
    return %arg0, %arg1, %c0_i32 : i32, i32, i32
  }
}

module attributes {stable_mosaic.version = 11 : i64} {
  func.func @_conv_kernel(%arg0: i32, %arg1: i32, %arg2: memref<1x16x32xbf16, #tpu.memory_space<vmem>>, %arg3: memref<1x8x32xbf16, #tpu.memory_space<vmem>>, %arg4: memref<224x32xbf16, #tpu.memory_space<vmem>>, %arg5: memref<1x32xf32, #tpu.memory_space<vmem>>, %arg6: memref<1x16x32xbf16, #tpu.memory_space<vmem>>) attributes {dimension_semantics = [#tpu.dimension_semantics<parallel>, #tpu.dimension_semantics<parallel>], iteration_bounds = array<i64: 2, 1>, scalar_prefetch = 0 : i64, scratch_operands = 0 : i64, tpu.core_type = #tpu.core_type<tc>, window_params = [{transform_indices = @transform_0, window_bounds = array<i64: 1, 16, 32>}, {transform_indices = @transform_1, window_bounds = array<i64: 1, 8, 32>}, {pipeline_mode = #tpu.pipeline_mode<synchronous>, transform_indices = @transform_2, window_bounds = array<i64: 224, 32>}, {pipeline_mode = #tpu.pipeline_mode<synchronous>, transform_indices = @transform_3, window_bounds = array<i64: 1, 32>}, {transform_indices = @transform_4, window_bounds = array<i64: 1, 16, 32>}]} {
    %c0 = arith.constant 0 : index
    %c0_0 = arith.constant 0 : index
    %c0_1 = arith.constant 0 : index
    %0 = vector.load %arg2[%c0, %c0_0, %c0_1] : memref<1x16x32xbf16, #tpu.memory_space<vmem>>, vector<1x16x32xbf16>
    %1 = vector.shape_cast %0 : vector<1x16x32xbf16> to vector<16x32xbf16>
    %c0_2 = arith.constant 0 : index
    %c0_3 = arith.constant 0 : index
    %c0_4 = arith.constant 0 : index
    %2 = vector.load %arg3[%c0_2, %c0_3, %c0_4] : memref<1x8x32xbf16, #tpu.memory_space<vmem>>, vector<1x8x32xbf16>
    %3 = vector.shape_cast %2 : vector<1x8x32xbf16> to vector<8x32xbf16>
    %4 = tpu.concatenate %1, %3 in 0 : vector<16x32xbf16>, vector<8x32xbf16> -> vector<24x32xbf16>
    %5 = arith.extf %4 : vector<24x32xbf16> to vector<24x32xf32>
    %cst = arith.constant 0.000000e+00 : f32
    %6 = vector.broadcast %cst : f32 to vector<24x32xf32>
    %7 = arith.cmpf oge, %5, %6 : vector<24x32xf32>
    %cst_5 = arith.constant 2.000000e-01 : f32
    %8 = vector.broadcast %cst_5 : f32 to vector<24x32xf32>
    %9 = arith.mulf %8, %5 : vector<24x32xf32>
    %10 = arith.select %7, %5, %9 : vector<24x32xi1>, vector<24x32xf32>
    %11 = arith.truncf %10 : vector<24x32xf32> to vector<24x32xbf16>
    %12 = vector.extract_strided_slice %11 {offsets = [0, 0], sizes = [16, 32], strides = [1, 1]} : vector<24x32xbf16> to vector<16x32xbf16>
    %13 = vector.extract_strided_slice %11 {offsets = [1, 0], sizes = [16, 32], strides = [1, 1]} : vector<24x32xbf16> to vector<16x32xbf16>
    %14 = vector.extract_strided_slice %11 {offsets = [2, 0], sizes = [16, 32], strides = [1, 1]} : vector<24x32xbf16> to vector<16x32xbf16>
    %15 = vector.extract_strided_slice %11 {offsets = [3, 0], sizes = [16, 32], strides = [1, 1]} : vector<24x32xbf16> to vector<16x32xbf16>
    %16 = vector.extract_strided_slice %11 {offsets = [4, 0], sizes = [16, 32], strides = [1, 1]} : vector<24x32xbf16> to vector<16x32xbf16>
    %17 = vector.extract_strided_slice %11 {offsets = [5, 0], sizes = [16, 32], strides = [1, 1]} : vector<24x32xbf16> to vector<16x32xbf16>
    %18 = vector.extract_strided_slice %11 {offsets = [6, 0], sizes = [16, 32], strides = [1, 1]} : vector<24x32xbf16> to vector<16x32xbf16>
    %19 = tpu.concatenate %12, %13, %14, %15, %16, %17, %18 in 1 : vector<16x32xbf16>, vector<16x32xbf16>, vector<16x32xbf16>, vector<16x32xbf16>, vector<16x32xbf16>, vector<16x32xbf16>, vector<16x32xbf16> -> vector<16x224xbf16>
    %c0_6 = arith.constant 0 : index
    %c0_7 = arith.constant 0 : index
    %20 = vector.load %arg4[%c0_6, %c0_7] : memref<224x32xbf16, #tpu.memory_space<vmem>>, vector<224x32xbf16>
    %cst_8 = arith.constant dense<0.000000e+00> : vector<16x32xf32>
    %21 = tpu.matmul %19, %20, %cst_8 {dimension_numbers = #tpu.dot_dimension_numbers<[1], [0], [0], [1], [0, 0, 1, 1], [], []>} : vector<16x224xbf16>, vector<224x32xbf16>, vector<16x32xf32> -> vector<16x32xf32>
    %c0_9 = arith.constant 0 : index
    %c0_10 = arith.constant 0 : index
    %22 = vector.load %arg5[%c0_9, %c0_10] : memref<1x32xf32, #tpu.memory_space<vmem>>, vector<1x32xf32>
    %23 = vector.broadcast %22 : vector<1x32xf32> to vector<16x32xf32>
    %24 = arith.addf %21, %23 : vector<16x32xf32>
    %25 = arith.truncf %24 : vector<16x32xf32> to vector<16x32xbf16>
    %c0_11 = arith.constant 0 : index
    %c0_12 = arith.constant 0 : index
    %c0_13 = arith.constant 0 : index
    %26 = vector.load %arg6[%c0_11, %c0_12, %c0_13] : memref<1x16x32xbf16, #tpu.memory_space<vmem>>, vector<1x16x32xbf16>
    %27 = vector.shape_cast %26 : vector<1x16x32xbf16> to vector<16x32xbf16>
    %28 = vector.shape_cast %25 : vector<16x32xbf16> to vector<1x16x32xbf16>
    tpu.vector_store %arg6[%c0_11, %c0_12, %c0_13], %28 {strides = array<i32>} : memref<1x16x32xbf16, #tpu.memory_space<vmem>>, vector<1x16x32xbf16>,
    return
  }
  func.func @transform_0(%arg0: i32, %arg1: i32) -> (i32, i32, i32) {
    %c0_i32 = arith.constant 0 : i32
    %c0_i32_0 = arith.constant 0 : i32
    return %arg0, %arg1, %c0_i32 : i32, i32, i32
  }
  func.func @transform_1(%arg0: i32, %arg1: i32) -> (i32, i32, i32) {
    %c1_i32 = arith.constant 1 : i32
    %0 = arith.addi %arg1, %c1_i32 : i32
    %c2_i32 = arith.constant 2 : i32
    %1 = arith.muli %0, %c2_i32 : i32
    %c0_i32 = arith.constant 0 : i32
    %c0_i32_0 = arith.constant 0 : i32
    return %arg0, %1, %c0_i32 : i32, i32, i32
  }
  func.func @transform_2(%arg0: i32, %arg1: i32) -> (i32, i32) {
    %c0_i32 = arith.constant 0 : i32
    %c0_i32_0 = arith.constant 0 : i32
    %c0_i32_1 = arith.constant 0 : i32
    return %c0_i32, %c0_i32_0 : i32, i32
  }
  func.func @transform_3(%arg0: i32, %arg1: i32) -> (i32, i32) {
    %c0_i32 = arith.constant 0 : i32
    %c0_i32_0 = arith.constant 0 : i32
    %c0_i32_1 = arith.constant 0 : i32
    return %c0_i32, %c0_i32_0 : i32, i32
  }
  func.func @transform_4(%arg0: i32, %arg1: i32) -> (i32, i32, i32) {
    %c0_i32 = arith.constant 0 : i32
    %c0_i32_0 = arith.constant 0 : i32
    return %arg0, %arg1, %c0_i32 : i32, i32, i32
  }
}

module attributes {stable_mosaic.version = 11 : i64} {
  func.func @_conv_kernel(%arg0: i32, %arg1: i32, %arg2: memref<1x16x32xbf16, #tpu.memory_space<vmem>>, %arg3: memref<1x8x32xbf16, #tpu.memory_space<vmem>>, %arg4: memref<64x64xbf16, #tpu.memory_space<vmem>>, %arg5: memref<1x64xf32, #tpu.memory_space<vmem>>, %arg6: memref<1x16x64xbf16, #tpu.memory_space<vmem>>) attributes {dimension_semantics = [#tpu.dimension_semantics<parallel>, #tpu.dimension_semantics<parallel>], iteration_bounds = array<i64: 2, 1>, scalar_prefetch = 0 : i64, scratch_operands = 0 : i64, tpu.core_type = #tpu.core_type<tc>, window_params = [{transform_indices = @transform_0, window_bounds = array<i64: 1, 16, 32>}, {transform_indices = @transform_1, window_bounds = array<i64: 1, 8, 32>}, {pipeline_mode = #tpu.pipeline_mode<synchronous>, transform_indices = @transform_2, window_bounds = array<i64: 64, 64>}, {pipeline_mode = #tpu.pipeline_mode<synchronous>, transform_indices = @transform_3, window_bounds = array<i64: 1, 64>}, {transform_indices = @transform_4, window_bounds = array<i64: 1, 16, 64>}]} {
    %c0 = arith.constant 0 : index
    %c0_0 = arith.constant 0 : index
    %c0_1 = arith.constant 0 : index
    %0 = vector.load %arg2[%c0, %c0_0, %c0_1] : memref<1x16x32xbf16, #tpu.memory_space<vmem>>, vector<1x16x32xbf16>
    %1 = vector.shape_cast %0 : vector<1x16x32xbf16> to vector<16x32xbf16>
    %c0_2 = arith.constant 0 : index
    %c0_3 = arith.constant 0 : index
    %c0_4 = arith.constant 0 : index
    %2 = vector.load %arg3[%c0_2, %c0_3, %c0_4] : memref<1x8x32xbf16, #tpu.memory_space<vmem>>, vector<1x8x32xbf16>
    %3 = vector.shape_cast %2 : vector<1x8x32xbf16> to vector<8x32xbf16>
    %4 = tpu.concatenate %1, %3 in 0 : vector<16x32xbf16>, vector<8x32xbf16> -> vector<24x32xbf16>
    %5 = arith.extf %4 : vector<24x32xbf16> to vector<24x32xf32>
    %cst = arith.constant 0.000000e+00 : f32
    %6 = vector.broadcast %cst : f32 to vector<24x32xf32>
    %7 = arith.cmpf oge, %5, %6 : vector<24x32xf32>
    %cst_5 = arith.constant 2.000000e-01 : f32
    %8 = vector.broadcast %cst_5 : f32 to vector<24x32xf32>
    %9 = arith.mulf %8, %5 : vector<24x32xf32>
    %10 = arith.select %7, %5, %9 : vector<24x32xi1>, vector<24x32xf32>
    %11 = arith.truncf %10 : vector<24x32xf32> to vector<24x32xbf16>
    %12 = vector.extract_strided_slice %11 {offsets = [0, 0], sizes = [16, 32], strides = [1, 1]} : vector<24x32xbf16> to vector<16x32xbf16>
    %13 = vector.extract_strided_slice %11 {offsets = [1, 0], sizes = [16, 32], strides = [1, 1]} : vector<24x32xbf16> to vector<16x32xbf16>
    %14 = tpu.concatenate %12, %13 in 1 : vector<16x32xbf16>, vector<16x32xbf16> -> vector<16x64xbf16>
    %c0_6 = arith.constant 0 : index
    %c0_7 = arith.constant 0 : index
    %15 = vector.load %arg4[%c0_6, %c0_7] : memref<64x64xbf16, #tpu.memory_space<vmem>>, vector<64x64xbf16>
    %cst_8 = arith.constant dense<0.000000e+00> : vector<16x64xf32>
    %16 = tpu.matmul %14, %15, %cst_8 {dimension_numbers = #tpu.dot_dimension_numbers<[1], [0], [0], [1], [0, 0, 1, 1], [], []>} : vector<16x64xbf16>, vector<64x64xbf16>, vector<16x64xf32> -> vector<16x64xf32>
    %c0_9 = arith.constant 0 : index
    %c0_10 = arith.constant 0 : index
    %17 = vector.load %arg5[%c0_9, %c0_10] : memref<1x64xf32, #tpu.memory_space<vmem>>, vector<1x64xf32>
    %18 = vector.broadcast %17 : vector<1x64xf32> to vector<16x64xf32>
    %19 = arith.addf %16, %18 : vector<16x64xf32>
    %20 = arith.truncf %19 : vector<16x64xf32> to vector<16x64xbf16>
    %c0_11 = arith.constant 0 : index
    %c0_12 = arith.constant 0 : index
    %c0_13 = arith.constant 0 : index
    %21 = vector.load %arg6[%c0_11, %c0_12, %c0_13] : memref<1x16x64xbf16, #tpu.memory_space<vmem>>, vector<1x16x64xbf16>
    %22 = vector.shape_cast %21 : vector<1x16x64xbf16> to vector<16x64xbf16>
    %23 = vector.shape_cast %20 : vector<16x64xbf16> to vector<1x16x64xbf16>
    tpu.vector_store %arg6[%c0_11, %c0_12, %c0_13], %23 {strides = array<i32>} : memref<1x16x64xbf16, #tpu.memory_space<vmem>>, vector<1x16x64xbf16>,
    return
  }
  func.func @transform_0(%arg0: i32, %arg1: i32) -> (i32, i32, i32) {
    %c0_i32 = arith.constant 0 : i32
    %c0_i32_0 = arith.constant 0 : i32
    return %arg0, %arg1, %c0_i32 : i32, i32, i32
  }
  func.func @transform_1(%arg0: i32, %arg1: i32) -> (i32, i32, i32) {
    %c1_i32 = arith.constant 1 : i32
    %0 = arith.addi %arg1, %c1_i32 : i32
    %c2_i32 = arith.constant 2 : i32
    %1 = arith.muli %0, %c2_i32 : i32
    %c0_i32 = arith.constant 0 : i32
    %c0_i32_0 = arith.constant 0 : i32
    return %arg0, %1, %c0_i32 : i32, i32, i32
  }
  func.func @transform_2(%arg0: i32, %arg1: i32) -> (i32, i32) {
    %c0_i32 = arith.constant 0 : i32
    %c0_i32_0 = arith.constant 0 : i32
    %c0_i32_1 = arith.constant 0 : i32
    return %c0_i32, %c0_i32_0 : i32, i32
  }
  func.func @transform_3(%arg0: i32, %arg1: i32) -> (i32, i32) {
    %c0_i32 = arith.constant 0 : i32
    %c0_i32_0 = arith.constant 0 : i32
    %c0_i32_1 = arith.constant 0 : i32
    return %c0_i32, %c0_i32_0 : i32, i32
  }
  func.func @transform_4(%arg0: i32, %arg1: i32) -> (i32, i32, i32) {
    %c0_i32 = arith.constant 0 : i32
    %c0_i32_0 = arith.constant 0 : i32
    return %arg0, %arg1, %c0_i32 : i32, i32, i32
  }
}

module attributes {stable_mosaic.version = 11 : i64} {
  func.func @_conv_kernel(%arg0: i32, %arg1: i32, %arg2: memref<1x104x8xbf16, #tpu.memory_space<vmem>>, %arg3: memref<1x8x8xbf16, #tpu.memory_space<vmem>>, %arg4: memref<56x8xbf16, #tpu.memory_space<vmem>>, %arg5: memref<1x8xf32, #tpu.memory_space<vmem>>, %arg6: memref<1x104x8xbf16, #tpu.memory_space<vmem>>) attributes {dimension_semantics = [#tpu.dimension_semantics<parallel>, #tpu.dimension_semantics<parallel>], iteration_bounds = array<i64: 2, 1>, scalar_prefetch = 0 : i64, scratch_operands = 0 : i64, tpu.core_type = #tpu.core_type<tc>, window_params = [{transform_indices = @transform_0, window_bounds = array<i64: 1, 104, 8>}, {transform_indices = @transform_1, window_bounds = array<i64: 1, 8, 8>}, {pipeline_mode = #tpu.pipeline_mode<synchronous>, transform_indices = @transform_2, window_bounds = array<i64: 56, 8>}, {pipeline_mode = #tpu.pipeline_mode<synchronous>, transform_indices = @transform_3, window_bounds = array<i64: 1, 8>}, {transform_indices = @transform_4, window_bounds = array<i64: 1, 104, 8>}]} {
    %c0 = arith.constant 0 : index
    %c0_0 = arith.constant 0 : index
    %c0_1 = arith.constant 0 : index
    %0 = vector.load %arg2[%c0, %c0_0, %c0_1] : memref<1x104x8xbf16, #tpu.memory_space<vmem>>, vector<1x104x8xbf16>
    %1 = vector.shape_cast %0 : vector<1x104x8xbf16> to vector<104x8xbf16>
    %c0_2 = arith.constant 0 : index
    %c0_3 = arith.constant 0 : index
    %c0_4 = arith.constant 0 : index
    %2 = vector.load %arg3[%c0_2, %c0_3, %c0_4] : memref<1x8x8xbf16, #tpu.memory_space<vmem>>, vector<1x8x8xbf16>
    %3 = vector.shape_cast %2 : vector<1x8x8xbf16> to vector<8x8xbf16>
    %4 = tpu.concatenate %1, %3 in 0 : vector<104x8xbf16>, vector<8x8xbf16> -> vector<112x8xbf16>
    %5 = arith.extf %4 : vector<112x8xbf16> to vector<112x8xf32>
    %cst = arith.constant 0.000000e+00 : f32
    %6 = vector.broadcast %cst : f32 to vector<112x8xf32>
    %7 = arith.cmpf oge, %5, %6 : vector<112x8xf32>
    %cst_5 = arith.constant 2.000000e-01 : f32
    %8 = vector.broadcast %cst_5 : f32 to vector<112x8xf32>
    %9 = arith.mulf %8, %5 : vector<112x8xf32>
    %10 = arith.select %7, %5, %9 : vector<112x8xi1>, vector<112x8xf32>
    %11 = arith.truncf %10 : vector<112x8xf32> to vector<112x8xbf16>
    %12 = vector.extract_strided_slice %11 {offsets = [0, 0], sizes = [104, 8], strides = [1, 1]} : vector<112x8xbf16> to vector<104x8xbf16>
    %13 = vector.extract_strided_slice %11 {offsets = [1, 0], sizes = [104, 8], strides = [1, 1]} : vector<112x8xbf16> to vector<104x8xbf16>
    %14 = vector.extract_strided_slice %11 {offsets = [2, 0], sizes = [104, 8], strides = [1, 1]} : vector<112x8xbf16> to vector<104x8xbf16>
    %15 = vector.extract_strided_slice %11 {offsets = [3, 0], sizes = [104, 8], strides = [1, 1]} : vector<112x8xbf16> to vector<104x8xbf16>
    %16 = vector.extract_strided_slice %11 {offsets = [4, 0], sizes = [104, 8], strides = [1, 1]} : vector<112x8xbf16> to vector<104x8xbf16>
    %17 = vector.extract_strided_slice %11 {offsets = [5, 0], sizes = [104, 8], strides = [1, 1]} : vector<112x8xbf16> to vector<104x8xbf16>
    %18 = vector.extract_strided_slice %11 {offsets = [6, 0], sizes = [104, 8], strides = [1, 1]} : vector<112x8xbf16> to vector<104x8xbf16>
    %19 = tpu.concatenate %12, %13, %14, %15, %16, %17, %18 in 1 : vector<104x8xbf16>, vector<104x8xbf16>, vector<104x8xbf16>, vector<104x8xbf16>, vector<104x8xbf16>, vector<104x8xbf16>, vector<104x8xbf16> -> vector<104x56xbf16>
    %c0_6 = arith.constant 0 : index
    %c0_7 = arith.constant 0 : index
    %20 = vector.load %arg4[%c0_6, %c0_7] : memref<56x8xbf16, #tpu.memory_space<vmem>>, vector<56x8xbf16>
    %cst_8 = arith.constant dense<0.000000e+00> : vector<104x8xf32>
    %21 = tpu.matmul %19, %20, %cst_8 {dimension_numbers = #tpu.dot_dimension_numbers<[1], [0], [0], [1], [0, 0, 1, 1], [], []>} : vector<104x56xbf16>, vector<56x8xbf16>, vector<104x8xf32> -> vector<104x8xf32>
    %c0_9 = arith.constant 0 : index
    %c0_10 = arith.constant 0 : index
    %22 = vector.load %arg5[%c0_9, %c0_10] : memref<1x8xf32, #tpu.memory_space<vmem>>, vector<1x8xf32>
    %23 = vector.broadcast %22 : vector<1x8xf32> to vector<104x8xf32>
    %24 = arith.addf %21, %23 : vector<104x8xf32>
    %25 = math.tanh %24 : vector<104x8xf32>
    %26 = arith.truncf %25 : vector<104x8xf32> to vector<104x8xbf16>
    %c0_11 = arith.constant 0 : index
    %c0_12 = arith.constant 0 : index
    %c0_13 = arith.constant 0 : index
    %27 = vector.load %arg6[%c0_11, %c0_12, %c0_13] : memref<1x104x8xbf16, #tpu.memory_space<vmem>>, vector<1x104x8xbf16>
    %28 = vector.shape_cast %27 : vector<1x104x8xbf16> to vector<104x8xbf16>
    %29 = vector.shape_cast %26 : vector<104x8xbf16> to vector<1x104x8xbf16>
    tpu.vector_store %arg6[%c0_11, %c0_12, %c0_13], %29 {strides = array<i32>} : memref<1x104x8xbf16, #tpu.memory_space<vmem>>, vector<1x104x8xbf16>,
    return
  }
  func.func @transform_0(%arg0: i32, %arg1: i32) -> (i32, i32, i32) {
    %c0_i32 = arith.constant 0 : i32
    %c0_i32_0 = arith.constant 0 : i32
    return %arg0, %arg1, %c0_i32 : i32, i32, i32
  }
  func.func @transform_1(%arg0: i32, %arg1: i32) -> (i32, i32, i32) {
    %c1_i32 = arith.constant 1 : i32
    %0 = arith.addi %arg1, %c1_i32 : i32
    %c13_i32 = arith.constant 13 : i32
    %1 = arith.muli %0, %c13_i32 : i32
    %c0_i32 = arith.constant 0 : i32
    %c0_i32_0 = arith.constant 0 : i32
    return %arg0, %1, %c0_i32 : i32, i32, i32
  }
  func.func @transform_2(%arg0: i32, %arg1: i32) -> (i32, i32) {
    %c0_i32 = arith.constant 0 : i32
    %c0_i32_0 = arith.constant 0 : i32
    %c0_i32_1 = arith.constant 0 : i32
    return %c0_i32, %c0_i32_0 : i32, i32
  }
  func.func @transform_3(%arg0: i32, %arg1: i32) -> (i32, i32) {
    %c0_i32 = arith.constant 0 : i32
    %c0_i32_0 = arith.constant 0 : i32
    %c0_i32_1 = arith.constant 0 : i32
    return %c0_i32, %c0_i32_0 : i32, i32
  }
  func.func @transform_4(%arg0: i32, %arg1: i32) -> (i32, i32, i32) {
    %c0_i32 = arith.constant 0 : i32
    %c0_i32_0 = arith.constant 0 : i32
    return %arg0, %arg1, %c0_i32 : i32, i32, i32
  }
}

</mosaic_0001>

<llo_original>
// kernel: forward.21
$region0: #{forward.21}
  #allocation0 [shape = 'u32[]', space=smem, size = 0x4, offset = 0x4, fixed_abs, tag = 'smem constant byte address 0x4 - core index']
  #allocation1 [shape = 'u32[72,128]{1,0:T(1,128)}', space=vmem, size = 0x9000, scoped, tag = 'internal scratch']
  %s0 = inlined_call_operand.hbm [shape: f32[2,100], index: 0, kind: input, shape index: {}]
  %s1 = inlined_call_operand.vmem [shape: f32[2,1], index: 1, kind: output, shape index: {}]
  %s2 = sld [smem:[#allocation0]]
  $region18: #{forward.21} parent=0
    _
  %s4 = ssub.s32 1, %s2
  %s5 = scalar_select 0, %s4, %s2
  $region1: #{forward.21} parent=0
    #allocation2 [shape = 'u8[1024]{0}', space=vmem, size = 0x400, scoped, tag = 'input window, operand 0, single buffered']
    #allocation3 [shape = 's32[1]{0}', space=sflag, size = 0x4, scoped, tag = 'scoped memory for forward.21']
    %6 = vsyncpa [#allocation3], 0
    // Predicated region
    $region2: #{forward.21} parent=1 // pred_check
      _
    $region3: #{forward.21} parent=1 // pred_check_branch
      %8 = sbr.rel (0) target = $region5
    $region4: #{forward.21} parent=1 // pred_region
      %10 = vsyncadd [#allocation3], 0
      %s12 = sshll.u32 %s0, 4
      %s13 = int_to_ptr.hbm [resolvable:$true] %s12
      %s14 = sshll.u32 [#allocation2], 4
      %s15 = int_to_ptr.vmem [resolvable:$true] %s14
      %17 = dma.hbm_to_vmem [thread:$0]  %s13, 32, %s15, [#allocation3]
    $region5: #{forward.21} parent=1 // pred_fallthru
      _
    // Predicated region
    $region6: #{forward.21} parent=1 // pred_check
      _
    $region7: #{forward.21} parent=1 // pred_check_branch
      %19 = sbr.rel (0) target = $region9
    $region8: #{forward.21} parent=1 // pred_region
      %21 = dma.done [#allocation3], 32
    $region9: #{forward.21} parent=1 // pred_fallthru
      _
    %v22 = vld [vmem:[#allocation2] sm:$0x3]
    %vm23 = vcmask 812032
    %v24 = vsel %vm23, %v22, 0.0
    %25 = vadd.xlane.f32.xlu0 %v24
    %v26 = vpop.xlane.xlu0 %25
    %v27 = vmul.f32 %v26, 0.01
    %v28 = vsub.f32 %v22, %v27
    %v29 = vmul.f32 %v28, %v28
    %v30 = vsel %vm23, %v29, 0.0
    %31 = vadd.xlane.f32.xlu0 %v30
    %v32 = vpop.xlane.xlu0 %31
    %v33 = vmul.f32 %v32, 0.01010101
    %v34 = vrsqrt.pop %v33
    %v35 = vmul.f32 %v34, %v33
    %v36 = vmul.f32 %v35, %v34
    %v37 = vmul.f32 0.5, %v36
    %v38 = vsub.f32 1.5, %v37
    %v39 = vmul.f32 %v34, %v38
    %v40 = vmul.f32 %v33, %v39
    %vm41 = vcmp.eq.f32.partialorder %v33, inf
    %v42 = vsel %vm41, %v33, %v40
    %vm43 = vcmp.eq.f32.partialorder %v33, 0.0
    %v44 = vand.u32 %v33, 2147483648
    %v45 = vsel %vm43, %v44, %v42
    %vm46 = vcmask 1024
    %47 = vst.msk [vmem:[%s1] sm:$0x3] %vm46, %v45
    // Predicated region
    $region10: #{forward.21} parent=1 // pred_check
      _
    $region11: #{forward.21} parent=1 // pred_check_branch
      %49 = sbr.rel (0) target = $region13
    $region12: #{forward.21} parent=1 // pred_region
      _
    $region13: #{forward.21} parent=1 // pred_fallthru
      _
    // Predicated region
    $region14: #{forward.21} parent=1 // pred_check
      _
    $region15: #{forward.21} parent=1 // pred_check_branch
      %51 = sbr.rel (0) target = $region17
    $region16: #{forward.21} parent=1 // pred_region
      _
    $region17: #{forward.21} parent=1 // pred_fallthru
      _
    %52 = vsyncpa [#allocation3], 1

// kernel: forward.22
$region0: #{forward.22}
  #allocation0 [shape = 'u32[]', space=smem, size = 0x4, offset = 0x4, fixed_abs, tag = 'smem constant byte address 0x4 - core index']
  #allocation1 [shape = 'u32[72,128]{1,0:T(1,128)}', space=vmem, size = 0x9000, scoped, tag = 'internal scratch']
  %s0 = inlined_call_operand.vmem [shape: bf16[2,112,8], index: 0, kind: input, shape index: {}, may-alias: {0,1}]
  %s1 = inlined_call_operand.vmem [shape: bf16[2,112,8], index: 1, kind: input, shape index: {}, may-alias: {0,1}]
  %s2 = inlined_call_operand.vmem [shape: bf16[56,8], index: 2, kind: input, shape index: {}]
  %s3 = inlined_call_operand.vmem [shape: f32[1,8], index: 3, kind: input, shape index: {}]
  %s4 = inlined_call_operand.vmem [shape: bf16[2,104,8], index: 4, kind: output, shape index: {}]
  %s5 = sld [smem:[#allocation0]]
  $region49: #{forward.22} parent=0
    _
  %s7 = ssub.s32 1, %s5
  %s8 = scalar_select 0, %s7, %s5
  loop: start=0, step=1, limit=4
  $region2: #{forward.22} parent=0 // loop_pre_header
    _
  $region3: #{forward.22} parent=0 // loop_header
    %s10 = sphi 0, %s14
    %p11 = scmp.ge.s32.totalorder %s10, 4
    %s17 = sphi 0, %s29
    %s18 = sphi 0, %s25
    %s19 = sphi 0, %s17
    %s20 = sphi 0, %s18
    %s21 = sphi 0, %s19
    %s22 = sphi 0, %s20
    %s34 = sphi 0, %s36
    %s37 = sphi 0, %s34
    %s38 = sphi 0, %s37
    %s54 = sphi 0, %s38
    %s66 = sphi 0, %s68
    %s69 = sphi 0, %s66
    %s70 = sphi 0, %s69
    %s86 = sphi 0, %s70
    %s90 = sphi 0, %s90
    %s92 = sphi 0, %s90
    %s93 = sphi 0, %s92
    %s107 = sphi 0, %s93
    %s111 = sphi 0, %s111
    %s113 = sphi 0, %s111
    %s114 = sphi 0, %s113
    %s128 = sphi 0, %s114
    %s136 = sphi 0, %s138
    %s139 = sphi 0, %s136
    %s140 = sphi 0, %s139
    %s156 = sphi 0, %s140
  $region4: #{forward.22} parent=0 // loop_header_branch
    %13 = sbr.rel (%p11) target = $region8
  $region5: #{forward.22} parent=0 // loop_body
    %s15 = ssub.s32 %s10, 1
    %s16 = ssub.s32 %s10, 2
    %s23 = sadd.s32 1, %s18
    %p24 = scmp.ge.s32.totalorder %s23, 1
    %s25 = scalar_select %p24, 0, %s23
    %s26 = sadd.s32 1, %s17
    %s27 = scalar_select %p24, %s26, %s17
    %p28 = scmp.ge.s32.totalorder %s27, 2
    %s29 = scalar_select %p28, 0, %s27
    %s30 = ssub.s32 %s17, %s29
    %s31 = ssub.s32 %s18, %s25
    %s32 = sor.u32 %s30, %s31
    %p33 = scmp.eq.s32.totalorder %s32, 0
    %s35 = sadd.s32 %s34, 1
    %s36 = scalar_select %p33, %s34, %s35
    %p39 = pneg %p33
    %p40 = scmp.eq.s32.totalorder %s10, 1
    %p41 = por %p39, %p40
    %p42 = scmp.ne.s32.totalorder %s34, %s37
    %p43 = scmp.eq.s32.totalorder %s10, 0
    %p44 = por %p42, %p43
    %p45 = scmp.ne.s32.totalorder %s34, %s37
    %p46 = scmp.eq.s32.totalorder %s15, 1
    %p47 = por %p45, %p46
    %p48 = scmp.ne.s32.totalorder %s37, %s38
    %p49 = scmp.eq.s32.totalorder %s15, 0
    %p50 = por %p48, %p49
    %p51 = scmp.ne.s32.totalorder %s37, %s38
    %p52 = scmp.eq.s32.totalorder %s16, 1
    %p53 = por %p51, %p52
    %p55 = scmp.ne.s32.totalorder %s38, %s54
    %p56 = scmp.eq.s32.totalorder %s16, 0
    %p57 = por %p55, %p56
    %s58 = sadd.s32 %s18, 1
    %s59 = smul.u32 %s58, 13
    %s60 = sadd.s32 %s25, 1
    %s61 = smul.u32 %s60, 13
    %s62 = ssub.s32 %s17, %s29
    %s63 = ssub.s32 %s59, %s61
    %s64 = sor.u32 %s62, %s63
    %p65 = scmp.eq.s32.totalorder %s64, 0
    %s67 = sadd.s32 %s66, 1
    %s68 = scalar_select %p65, %s66, %s67
    %p71 = pneg %p65
    %p72 = scmp.eq.s32.totalorder %s10, 1
    %p73 = por %p71, %p72
    %p74 = scmp.ne.s32.totalorder %s66, %s69
    %p75 = scmp.eq.s32.totalorder %s10, 0
    %p76 = por %p74, %p75
    %p77 = scmp.ne.s32.totalorder %s66, %s69
    %p78 = scmp.eq.s32.totalorder %s15, 1
    %p79 = por %p77, %p78
    %p80 = scmp.ne.s32.totalorder %s69, %s70
    %p81 = scmp.eq.s32.totalorder %s15, 0
    %p82 = por %p80, %p81
    %p83 = scmp.ne.s32.totalorder %s69, %s70
    %p84 = scmp.eq.s32.totalorder %s16, 1
    %p85 = por %p83, %p84
    %p87 = scmp.ne.s32.totalorder %s70, %s86
    %p88 = scmp.eq.s32.totalorder %s16, 0
    %p89 = por %p87, %p88
    %s91 = sadd.s32 %s90, 1
    %p94 = scmp.eq.s32.totalorder %s10, 1
    %p95 = scmp.ne.s32.totalorder %s90, %s92
    %p96 = scmp.eq.s32.totalorder %s10, 0
    %p97 = por %p95, %p96
    %p98 = scmp.ne.s32.totalorder %s90, %s92
    %p99 = scmp.eq.s32.totalorder %s15, 1
    %p100 = por %p98, %p99
    %p101 = scmp.ne.s32.totalorder %s92, %s93
    %p102 = scmp.eq.s32.totalorder %s15, 0
    %p103 = por %p101, %p102
    %p104 = scmp.ne.s32.totalorder %s92, %s93
    %p105 = scmp.eq.s32.totalorder %s16, 1
    %p106 = por %p104, %p105
    %p108 = scmp.ne.s32.totalorder %s93, %s107
    %p109 = scmp.eq.s32.totalorder %s16, 0
    %p110 = por %p108, %p109
    %s112 = sadd.s32 %s111, 1
    %p115 = scmp.eq.s32.totalorder %s10, 1
    %p116 = scmp.ne.s32.totalorder %s111, %s113
    %p117 = scmp.eq.s32.totalorder %s10, 0
    %p118 = por %p116, %p117
    %p119 = scmp.ne.s32.totalorder %s111, %s113
    %p120 = scmp.eq.s32.totalorder %s15, 1
    %p121 = por %p119, %p120
    %p122 = scmp.ne.s32.totalorder %s113, %s114
    %p123 = scmp.eq.s32.totalorder %s15, 0
    %p124 = por %p122, %p123
    %p125 = scmp.ne.s32.totalorder %s113, %s114
    %p126 = scmp.eq.s32.totalorder %s16, 1
    %p127 = por %p125, %p126
    %p129 = scmp.ne.s32.totalorder %s114, %s128
    %p130 = scmp.eq.s32.totalorder %s16, 0
    %p131 = por %p129, %p130
    %s132 = ssub.s32 %s17, %s29
    %s133 = ssub.s32 %s18, %s25
    %s134 = sor.u32 %s132, %s133
    %p135 = scmp.eq.s32.totalorder %s134, 0
    %s137 = sadd.s32 %s136, 1
    %s138 = scalar_select %p135, %s136, %s137
    %p141 = pneg %p135
    %p142 = scmp.eq.s32.totalorder %s10, 1
    %p143 = por %p141, %p142
    %p144 = scmp.ne.s32.totalorder %s136, %s139
    %p145 = scmp.eq.s32.totalorder %s10, 0
    %p146 = por %p144, %p145
    %p147 = scmp.ne.s32.totalorder %s136, %s139
    %p148 = scmp.eq.s32.totalorder %s15, 1
    %p149 = por %p147, %p148
    %p150 = scmp.ne.s32.totalorder %s139, %s140
    %p151 = scmp.eq.s32.totalorder %s15, 0
    %p152 = por %p150, %p151
    %p153 = scmp.ne.s32.totalorder %s139, %s140
    %p154 = scmp.eq.s32.totalorder %s16, 1
    %p155 = por %p153, %p154
    %p157 = scmp.ne.s32.totalorder %s140, %s156
    %p158 = scmp.eq.s32.totalorder %s16, 0
    %p159 = por %p157, %p158
    %p160 = scmp.le.s32.totalorder 1, %s10
    %p161 = scmp.lt.s32.totalorder %s10, 3
    %p162 = pnand %p160, %p161
    %p163 = pneg %p162
    // Predicated region
    $region9: #{forward.22} parent=5 // pred_check
      _
    $region10: #{forward.22} parent=5 // pred_check_branch
      %165 = sbr.rel (%p162) target = $region12
    $region11: #{forward.22} parent=5 // pred_region
      %s166 = ssub.s32 %s10, 1
      // Predicated region
      $region13: #{forward.22} parent=11 // pred_check
        %p167 = pneg %p103
      $region14: #{forward.22} parent=11 // pred_check_branch
        %169 = sbr.rel (%p167) target = $region16
      $region15: #{forward.22} parent=11 // pred_region
        _
      $region16: #{forward.22} parent=11 // pred_fallthru
        _
      // Predicated region
      $region17: #{forward.22} parent=11 // pred_check
        %p170 = pneg %p124
      $region18: #{forward.22} parent=11 // pred_check_branch
        %172 = sbr.rel (%p170) target = $region20
      $region19: #{forward.22} parent=11 // pred_region
        _
      $region20: #{forward.22} parent=11 // pred_fallthru
        _
    $region12: #{forward.22} parent=5 // pred_fallthru
      _
    %p173 = scmp.lt.s32.totalorder %s10, 2
    // Predicated region
    $region21: #{forward.22} parent=5 // pred_check
      %p174 = pneg %p173
    $region22: #{forward.22} parent=5 // pred_check_branch
      %176 = sbr.rel (%p174) target = $region24
    $region23: #{forward.22} parent=5 // pred_region
      // Predicated region
      $region25: #{forward.22} parent=23 // pred_check
        %p177 = pneg %p44
      $region26: #{forward.22} parent=23 // pred_check_branch
        %179 = sbr.rel (%p177) target = $region28
      $region27: #{forward.22} parent=23 // pred_region
        %s180 = smul.u32 13, %s18
        %s181 = ssub.s32 14, %s180
        %p182 = scmp.lt.s32.totalorder %s181, 13
        %s183 = scalar_select %p182, %s181, 13
        %s184 = smul.u32 4, %s183
        %p185 = scmp.lt.s32.totalorder %s17, 1
        %s186 = scalar_select %p185, %s17, 1
        %p187 = scmp.lt.s32.totalorder %s180, 13
        %s188 = scalar_select %p187, %s180, 13
        %s189 = smul.addr %s186, 14
        %s190 = sadd.s32 %s188, %s189
        %s191 = smul.addr %s190, 4
        %s192 = scalar_lea.vmem %s0, %s191
        %s193 = smul.u32 13, %s18
        %s194 = ssub.s32 14, %s193
        %p195 = scmp.lt.s32.totalorder %s194, 13
        %s196 = scalar_select %p195, %s194, 13
        %s197 = smul.u32 4, %s196
      $region28: #{forward.22} parent=23 // pred_fallthru
        _
      // Predicated region
      $region29: #{forward.22} parent=23 // pred_check
        %p198 = pneg %p76
      $region30: #{forward.22} parent=23 // pred_check_branch
        %200 = sbr.rel (%p198) target = $region32
      $region31: #{forward.22} parent=23 // pred_region
        %s201 = sadd.s32 %s18, 1
        %s202 = smul.u32 %s201, 13
        %p203 = scmp.lt.s32.totalorder %s17, 1
        %s204 = scalar_select %p203, %s17, 1
        %p205 = scmp.lt.s32.totalorder %s202, 13
        %s206 = scalar_select %p205, %s202, 13
        %s207 = smul.addr %s204, 14
        %s208 = sadd.s32 %s206, %s207
        %s209 = smul.addr %s208, 4
        %s210 = scalar_lea.vmem %s1, %s209
        %s211 = sadd.s32 %s18, 1
        %s212 = smul.u32 %s211, 13
      $region32: #{forward.22} parent=23 // pred_fallthru
        _
    $region24: #{forward.22} parent=5 // pred_fallthru
      _
    %p213 = scmp.le.s32.totalorder 1, %s10
    %p214 = scmp.lt.s32.totalorder %s10, 3
    %p215 = pnand %p213, %p214
    %p216 = pneg %p215
    // Predicated region
    $region33: #{forward.22} parent=5 // pred_check
      _
    $region34: #{forward.22} parent=5 // pred_check_branch
      %218 = sbr.rel (%p215) target = $region36
    $region35: #{forward.22} parent=5 // pred_region
      %s219 = ssub.s32 %s10, 1
      %s220 = smul.u32 13, %s20
      %s221 = ssub.s32 14, %s220
      %p222 = scmp.lt.s32.totalorder %s221, 13
      %s223 = scalar_select %p222, %s221, 13
      %s224 = smul.u32 4, %s223
      %p225 = scmp.lt.s32.totalorder %s19, 1
      %s226 = scalar_select %p225, %s19, 1
      %p227 = scmp.lt.s32.totalorder %s220, 13
      %s228 = scalar_select %p227, %s220, 13
      %s229 = smul.addr %s226, 14
      %s230 = sadd.s32 %s228, %s229
      %s231 = smul.addr %s230, 4
      %s232 = scalar_lea.vmem %s0, %s231
      %p233 = pneg %p50
      %p234 = pneg %p47
      %s235 = sadd.s32 %s20, 1
      %s236 = smul.u32 %s235, 13
      %p237 = scmp.lt.s32.totalorder %s19, 1
      %s238 = scalar_select %p237, %s19, 1
      %p239 = scmp.lt.s32.totalorder %s236, 13
      %s240 = scalar_select %p239, %s236, 13
      %s241 = smul.addr %s238, 14
      %s242 = sadd.s32 %s240, %s241
      %s243 = smul.addr %s242, 4
      %s244 = scalar_lea.vmem %s1, %s243
      %p245 = pneg %p82
      %p246 = pneg %p79
      %p247 = pneg %p103
      %p248 = pneg %p100
      %p249 = pneg %p124
      %p250 = pneg %p121
      %p251 = pneg %p152
      %p252 = pneg %p149
      %s253 = smul.u32 13, %s20
      %p254 = scmp.lt.s32.totalorder %s19, 1
      %s255 = scalar_select %p254, %s19, 1
      %p256 = scmp.lt.s32.totalorder %s253, 12
      %s257 = scalar_select %p256, %s253, 12
      %s258 = smul.addr %s255, 13
      %s259 = sadd.s32 %s257, %s258
      %s260 = smul.addr %s259, 4
      %s261 = scalar_lea.vmem %s4, %s260
      %s262 = smul.u32 13, %s20
      %s263 = ssub.s32 14, %s262
      %p264 = scmp.lt.s32.totalorder %s263, 13
      %s265 = scalar_select %p264, %s263, 13
      %s266 = smul.u32 4, %s265
      %p267 = scmp.lt.s32.totalorder %s19, 1
      %s268 = scalar_select %p267, %s19, 1
      %p269 = scmp.lt.s32.totalorder %s262, 13
      %s270 = scalar_select %p269, %s262, 13
      %s271 = smul.addr %s268, 14
      %s272 = sadd.s32 %s270, %s271
      %s273 = smul.addr %s272, 4
      %s274 = scalar_lea.vmem %s0, %s273
      %s275 = smul.u32 13, %s20
      %s276 = ssub.s32 14, %s275
      %p277 = scmp.lt.s32.totalorder %s276, 13
      %s278 = scalar_select %p277, %s276, 13
      %s279 = smul.u32 4, %s278
      %s280 = sadd.s32 %s20, 1
      %s281 = smul.u32 %s280, 13
      %p282 = scmp.lt.s32.totalorder %s19, 1
      %s283 = scalar_select %p282, %s19, 1
      %p284 = scmp.lt.s32.totalorder %s281, 13
      %s285 = scalar_select %p284, %s281, 13
      %s286 = smul.addr %s283, 14
      %s287 = sadd.s32 %s285, %s286
      %s288 = smul.addr %s287, 4
      %s289 = scalar_lea.vmem %s1, %s288
      %s290 = sadd.s32 %s20, 1
      %s291 = smul.u32 %s290, 13
      %s292 = smul.u32 13, %s20
      %p293 = scmp.lt.s32.totalorder %s19, 1
      %s294 = scalar_select %p293, %s19, 1
      %p295 = scmp.lt.s32.totalorder %s292, 12
      %s296 = scalar_select %p295, %s292, 12
      %s297 = smul.addr %s294, 13
      %s298 = sadd.s32 %s296, %s297
      %s299 = smul.addr %s298, 4
      %s300 = scalar_lea.vmem %s4, %s299
      %s301 = smul.u32 13, %s20
      %v303 = vld [vmem:[%s274] sm:$0xf]
      %v304 = vld [vmem:[%s274 + $0x4] sm:$0xf]
      %v305 = vld [vmem:[%s274 + $0x8] sm:$0xf]
      %v306 = vld [vmem:[%s274 + $0xc] sm:$0xf]
      %v307 = vld [vmem:[%s274 + $0x10] sm:$0xf]
      %v308 = vld [vmem:[%s274 + $0x14] sm:$0xf]
      %v309 = vld [vmem:[%s274 + $0x18] sm:$0xf]
      %v310 = vld [vmem:[%s274 + $0x1c] sm:$0xf]
      %v311 = vld [vmem:[%s274 + $0x20] sm:$0xf]
      %v312 = vld [vmem:[%s274 + $0x24] sm:$0xf]
      %v313 = vld [vmem:[%s274 + $0x28] sm:$0xf]
      %v314 = vld [vmem:[%s274 + $0x2c] sm:$0xf]
      %v315 = vld [vmem:[%s274 + $0x30] sm:$0xf]
      %v316 = vld [vmem:[%s289] sm:$0xf]
      %v330 = vunpack.c.l.b16 %v303
      %v331 = vunpack.c.l.b16 %v304
      %v332 = vunpack.c.l.b16 %v305
      %v333 = vunpack.c.l.b16 %v306
      %v334 = vunpack.c.l.b16 %v307
      %v335 = vunpack.c.l.b16 %v308
      %v336 = vunpack.c.l.b16 %v309
      %v337 = vunpack.c.l.b16 %v310
      %v338 = vunpack.c.l.b16 %v311
      %v339 = vunpack.c.l.b16 %v312
      %v340 = vunpack.c.l.b16 %v313
      %v341 = vunpack.c.l.b16 %v314
      %v342 = vunpack.c.l.b16 %v315
      %v343 = vpack.c.b16 %v331, %v330
      %v344 = vpack.c.b16 %v333, %v332
      %v345 = vpack.c.b16 %v335, %v334
      %v346 = vpack.c.b16 %v337, %v336
      %v347 = vpack.c.b16 %v339, %v338
      %v348 = vpack.c.b16 %v341, %v340
      %v349 = vpack.c.b16 %v342, %v342
      %v351 = vunpack.c.l.b16 %v316
      %v352 = vpack.c.b16 %v351, %v351
      %vm353 = vcmask 1043456
      %v356 = vsel %vm353, %v349, %v352
      %vm357 = vsmask.f32 7424
      %v359 = vshrl.u32 %v343, 16
      %v361 = vshll.u32 %v343, 16
      %v363 = vrot.slane %v361, 1
      %v364 = vor.u32 %v359, %v363
      %v366 = vshll.u32 %v344, 16
      %v368 = vrot.slane %v366, 1
      %v369 = vsel %vm357, %v364, %v368
      %v370 = vshrl.u32 %v344, 16
      %v372 = vor.u32 %v370, %v368
      %v374 = vshll.u32 %v345, 16
      %v376 = vrot.slane %v374, 1
      %v377 = vsel %vm357, %v372, %v376
      %v378 = vshrl.u32 %v345, 16
      %v380 = vor.u32 %v378, %v376
      %v382 = vshll.u32 %v346, 16
      %v384 = vrot.slane %v382, 1
      %v385 = vsel %vm357, %v380, %v384
      %v386 = vshrl.u32 %v346, 16
      %v388 = vor.u32 %v386, %v384
      %v390 = vshll.u32 %v347, 16
      %v392 = vrot.slane %v390, 1
      %v393 = vsel %vm357, %v388, %v392
      %v394 = vshrl.u32 %v347, 16
      %v396 = vor.u32 %v394, %v392
      %v398 = vshll.u32 %v348, 16
      %v400 = vrot.slane %v398, 1
      %v401 = vsel %vm357, %v396, %v400
      %v402 = vshrl.u32 %v348, 16
      %v404 = vor.u32 %v402, %v400
      %v405 = vshll.u32 %v356, 16
      %v407 = vrot.slane %v405, 1
      %v408 = vsel %vm357, %v404, %v407
      %v409 = vshrl.u32 %v356, 16
      %v411 = vor.u32 %v409, %v407
      %412 = vrot.lane.b32.xlu0 %v369, 8
      %v413 = vpop.permute.xlu0 %412
      %414 = vrot.lane.b32.xlu0 %v377, 8
      %v415 = vpop.permute.xlu0 %414
      %416 = vrot.lane.b32.xlu0 %v385, 8
      %v417 = vpop.permute.xlu0 %416
      %418 = vrot.lane.b32.xlu0 %v393, 8
      %v419 = vpop.permute.xlu0 %418
      %420 = vrot.lane.b32.xlu0 %v401, 8
      %v421 = vpop.permute.xlu0 %420
      %422 = vrot.lane.b32.xlu0 %v408, 8
      %v423 = vpop.permute.xlu0 %422
      %424 = vrot.lane.b32.xlu0 %v411, 8
      %v425 = vpop.permute.xlu0 %424
      %vm427 = vcmask 1046528
      %v428 = vrot.slane %v343, 1
      %v429 = vrot.slane %v344, 1
      %v430 = vsel %vm427, %v428, %v429
      %v431 = vrot.slane %v345, 1
      %v432 = vsel %vm427, %v429, %v431
      %v433 = vrot.slane %v346, 1
      %v434 = vsel %vm427, %v431, %v433
      %v435 = vrot.slane %v347, 1
      %v436 = vsel %vm427, %v433, %v435
      %v437 = vrot.slane %v348, 1
      %v438 = vsel %vm427, %v435, %v437
      %v439 = vrot.slane %v356, 1
      %v440 = vsel %vm427, %v437, %v439
      %441 = vrot.lane.b32.xlu0 %v430, 16
      %v442 = vpop.permute.xlu0 %441
      %443 = vrot.lane.b32.xlu0 %v432, 16
      %v444 = vpop.permute.xlu0 %443
      %445 = vrot.lane.b32.xlu0 %v434, 16
      %v446 = vpop.permute.xlu0 %445
      %447 = vrot.lane.b32.xlu0 %v436, 16
      %v448 = vpop.permute.xlu0 %447
      %449 = vrot.lane.b32.xlu0 %v438, 16
      %v450 = vpop.permute.xlu0 %449
      %451 = vrot.lane.b32.xlu0 %v440, 16
      %v452 = vpop.permute.xlu0 %451
      %453 = vrot.lane.b32.xlu0 %v439, 16
      %v454 = vpop.permute.xlu0 %453
      %vm455 = vsmask.f32 6400
      %v456 = vrot.slane %v359, 1
      %v457 = vrot.slane %v361, 2
      %v458 = vor.u32 %v456, %v457
      %v459 = vrot.slane %v370, 1
      %v460 = vrot.slane %v366, 2
      %v461 = vor.u32 %v459, %v460
      %v462 = vsel %vm455, %v458, %v461
      %v463 = vrot.slane %v378, 1
      %v464 = vrot.slane %v374, 2
      %v465 = vor.u32 %v463, %v464
      %v466 = vsel %vm455, %v461, %v465
      %v467 = vrot.slane %v386, 1
      %v468 = vrot.slane %v382, 2
      %v469 = vor.u32 %v467, %v468
      %v470 = vsel %vm455, %v465, %v469
      %v471 = vrot.slane %v394, 1
      %v472 = vrot.slane %v390, 2
      %v473 = vor.u32 %v471, %v472
      %v474 = vsel %vm455, %v469, %v473
      %v475 = vrot.slane %v402, 1
      %v476 = vrot.slane %v398, 2
      %v477 = vor.u32 %v475, %v476
      %v478 = vsel %vm455, %v473, %v477
      %v479 = vrot.slane %v409, 1
      %v480 = vrot.slane %v405, 2
      %v481 = vor.u32 %v479, %v480
      %v482 = vsel %vm455, %v477, %v481
      %483 = vrot.lane.b32.xlu0 %v462, 24
      %v484 = vpop.permute.xlu0 %483
      %485 = vrot.lane.b32.xlu0 %v466, 24
      %v486 = vpop.permute.xlu0 %485
      %487 = vrot.lane.b32.xlu0 %v470, 24
      %v488 = vpop.permute.xlu0 %487
      %489 = vrot.lane.b32.xlu0 %v474, 24
      %v490 = vpop.permute.xlu0 %489
      %491 = vrot.lane.b32.xlu0 %v478, 24
      %v492 = vpop.permute.xlu0 %491
      %493 = vrot.lane.b32.xlu0 %v482, 24
      %v494 = vpop.permute.xlu0 %493
      %495 = vrot.lane.b32.xlu0 %v481, 24
      %v496 = vpop.permute.xlu0 %495
      %vm497 = vcmask 1045504
      %v498 = vrot.slane %v343, 2
      %v499 = vrot.slane %v344, 2
      %v500 = vsel %vm497, %v498, %v499
      %v501 = vrot.slane %v345, 2
      %v502 = vsel %vm497, %v499, %v501
      %v503 = vrot.slane %v346, 2
      %v504 = vsel %vm497, %v501, %v503
      %v505 = vrot.slane %v347, 2
      %v506 = vsel %vm497, %v503, %v505
      %v507 = vrot.slane %v348, 2
      %v508 = vsel %vm497, %v505, %v507
      %v509 = vrot.slane %v356, 2
      %v510 = vsel %vm497, %v507, %v509
      %511 = vrot.lane.b32.xlu0 %v500, 32
      %v512 = vpop.permute.xlu0 %511
      %513 = vrot.lane.b32.xlu0 %v502, 32
      %v514 = vpop.permute.xlu0 %513
      %515 = vrot.lane.b32.xlu0 %v504, 32
      %v516 = vpop.permute.xlu0 %515
      %517 = vrot.lane.b32.xlu0 %v506, 32
      %v518 = vpop.permute.xlu0 %517
      %519 = vrot.lane.b32.xlu0 %v508, 32
      %v520 = vpop.permute.xlu0 %519
      %521 = vrot.lane.b32.xlu0 %v510, 32
      %v522 = vpop.permute.xlu0 %521
      %523 = vrot.lane.b32.xlu0 %v509, 32
      %v524 = vpop.permute.xlu0 %523
      %vm525 = vsmask.f32 5376
      %v526 = vrot.slane %v359, 2
      %v527 = vrot.slane %v361, 3
      %v528 = vor.u32 %v526, %v527
      %v529 = vrot.slane %v370, 2
      %v530 = vrot.slane %v366, 3
      %v531 = vor.u32 %v529, %v530
      %v532 = vsel %vm525, %v528, %v531
      %v533 = vrot.slane %v378, 2
      %v534 = vrot.slane %v374, 3
      %v535 = vor.u32 %v533, %v534
      %v536 = vsel %vm525, %v531, %v535
      %v537 = vrot.slane %v386, 2
      %v538 = vrot.slane %v382, 3
      %v539 = vor.u32 %v537, %v538
      %v540 = vsel %vm525, %v535, %v539
      %v541 = vrot.slane %v394, 2
      %v542 = vrot.slane %v390, 3
      %v543 = vor.u32 %v541, %v542
      %v544 = vsel %vm525, %v539, %v543
      %v545 = vrot.slane %v402, 2
      %v546 = vrot.slane %v398, 3
      %v547 = vor.u32 %v545, %v546
      %v548 = vsel %vm525, %v543, %v547
      %v549 = vrot.slane %v409, 2
      %v550 = vrot.slane %v405, 3
      %v551 = vor.u32 %v549, %v550
      %v552 = vsel %vm525, %v547, %v551
      %553 = vrot.lane.b32.xlu0 %v532, 40
      %v554 = vpop.permute.xlu0 %553
      %555 = vrot.lane.b32.xlu0 %v536, 40
      %v556 = vpop.permute.xlu0 %555
      %557 = vrot.lane.b32.xlu0 %v540, 40
      %v558 = vpop.permute.xlu0 %557
      %559 = vrot.lane.b32.xlu0 %v544, 40
      %v560 = vpop.permute.xlu0 %559
      %561 = vrot.lane.b32.xlu0 %v548, 40
      %v562 = vpop.permute.xlu0 %561
      %563 = vrot.lane.b32.xlu0 %v552, 40
      %v564 = vpop.permute.xlu0 %563
      %565 = vrot.lane.b32.xlu0 %v551, 40
      %v566 = vpop.permute.xlu0 %565
      %vm567 = vcmask 1044480
      %v568 = vrot.slane %v343, 3
      %v569 = vrot.slane %v344, 3
      %v570 = vsel %vm567, %v568, %v569
      %v571 = vrot.slane %v345, 3
      %v572 = vsel %vm567, %v569, %v571
      %v573 = vrot.slane %v346, 3
      %v574 = vsel %vm567, %v571, %v573
      %v575 = vrot.slane %v347, 3
      %v576 = vsel %vm567, %v573, %v575
      %v577 = vrot.slane %v348, 3
      %v578 = vsel %vm567, %v575, %v577
      %v579 = vrot.slane %v356, 3
      %v580 = vsel %vm567, %v577, %v579
      %581 = vrot.lane.b32.xlu0 %v570, 48
      %v582 = vpop.permute.xlu0 %581
      %583 = vrot.lane.b32.xlu0 %v572, 48
      %v584 = vpop.permute.xlu0 %583
      %585 = vrot.lane.b32.xlu0 %v574, 48
      %v586 = vpop.permute.xlu0 %585
      %587 = vrot.lane.b32.xlu0 %v576, 48
      %v588 = vpop.permute.xlu0 %587
      %589 = vrot.lane.b32.xlu0 %v578, 48
      %v590 = vpop.permute.xlu0 %589
      %591 = vrot.lane.b32.xlu0 %v580, 48
      %v592 = vpop.permute.xlu0 %591
      %593 = vrot.lane.b32.xlu0 %v579, 48
      %v594 = vpop.permute.xlu0 %593
      %vm595 = vcmask 64512
      %v597 = vsel %vm595, %v343, %v413
      %v599 = vsel %vm595, %v344, %v415
      %v601 = vsel %vm595, %v345, %v417
      %v603 = vsel %vm595, %v346, %v419
      %v605 = vsel %vm595, %v347, %v421
      %v607 = vsel %vm595, %v348, %v423
      %v609 = vsel %vm595, %v356, %v425
      %vm610 = vcmask 130048
      %v612 = vsel %vm610, %v597, %v442
      %v614 = vsel %vm610, %v599, %v444
      %v616 = vsel %vm610, %v601, %v446
      %v618 = vsel %vm610, %v603, %v448
      %v620 = vsel %vm610, %v605, %v450
      %v622 = vsel %vm610, %v607, %v452
      %v624 = vsel %vm610, %v609, %v454
      %vm625 = vcmask 195584
      %v627 = vsel %vm625, %v612, %v484
      %v629 = vsel %vm625, %v614, %v486
      %v631 = vsel %vm625, %v616, %v488
      %v633 = vsel %vm625, %v618, %v490
      %v635 = vsel %vm625, %v620, %v492
      %v637 = vsel %vm625, %v622, %v494
      %v639 = vsel %vm625, %v624, %v496
      %vm640 = vcmask 261120
      %v642 = vsel %vm640, %v627, %v512
      %v644 = vsel %vm640, %v629, %v514
      %v646 = vsel %vm640, %v631, %v516
      %v648 = vsel %vm640, %v633, %v518
      %v650 = vsel %vm640, %v635, %v520
      %v652 = vsel %vm640, %v637, %v522
      %v654 = vsel %vm640, %v639, %v524
      %vm655 = vcmask 326656
      %v657 = vsel %vm655, %v642, %v554
      %v659 = vsel %vm655, %v644, %v556
      %v661 = vsel %vm655, %v646, %v558
      %v663 = vsel %vm655, %v648, %v560
      %v665 = vsel %vm655, %v650, %v562
      %v667 = vsel %vm655, %v652, %v564
      %v669 = vsel %vm655, %v654, %v566
      %vm670 = vcmask 392192
      %v672 = vsel %vm670, %v657, %v582
      %v674 = vsel %vm670, %v659, %v584
      %v676 = vsel %vm670, %v661, %v586
      %v678 = vsel %vm670, %v663, %v588
      %v680 = vsel %vm670, %v665, %v590
      %v682 = vsel %vm670, %v667, %v592
      %v684 = vsel %vm670, %v669, %v594
      %v685 = vld [vmem:[%s2] sm:$0xf]
      %v686 = vld [vmem:[%s2 + $0x4] sm:$0xf]
      %v687 = vld [vmem:[%s2 + $0x8] sm:$0xf]
      %v688 = vld [vmem:[%s2 + $0xc] sm:$0xf]
      %v689 = vld [vmem:[%s2 + $0x10] sm:$0xf]
      %v690 = vld [vmem:[%s2 + $0x14] sm:$0xf]
      %v691 = vld [vmem:[%s2 + $0x18] sm:$0xf]
      %v692 = vld [vmem:[%s3] sm:$0x1]
      %v694 = vperm.slane %v692, 0
      %v703 = vunpack.c.l.b16 %v685
      %v704 = vunpack.c.l.b16 %v686
      %v705 = vunpack.c.l.b16 %v687
      %v706 = vunpack.c.l.b16 %v688
      %v707 = vunpack.c.l.b16 %v689
      %v708 = vunpack.c.l.b16 %v690
      %v709 = vunpack.c.l.b16 %v691
      %v710 = vpack.c.b16 %v704, %v703
      %v711 = vpack.c.b16 %v706, %v705
      %v712 = vpack.c.b16 %v708, %v707
      %v713 = vpack.c.b16 %v709, %v709
      %vm717 = vcmask 457728
      %v718 = vsel %vm717, %v672, 0
      %v720 = vsel %vm717, %v674, 0
      %v722 = vsel %vm717, %v676, 0
      %v724 = vsel %vm717, %v678, 0
      %v726 = vsel %vm717, %v680, 0
      %v728 = vsel %vm717, %v682, 0
      %v730 = vsel %vm717, %v684, 0
      %v733 = vsel %vm353, %v713, 0
      %735 = vmatpush.bf16.msra.mxu0 0
      %736 = vmatpush.bf16.msra.mxu0 0
      %737 = vmatpush.bf16.msra.mxu0 0
      %738 = vmatpush.bf16.msra.mxu0 0
      %739 = vmatpush.bf16.msra.mxu0 %v733
      %740 = vmatpush.bf16.msra.mxu0 %v712
      %741 = vmatpush.bf16.msra.mxu0 %v711
      %742 = vmatpush.bf16.msra.mxu0 %v710
      %743 = vmatmul.bf16.gmra.mxu0 %v718
      %v744 = vpop.f32.mrf.mxu0
      %v745 = vadd.f32 %v694, %v744
      %v746 = vpop.f32.mrf.mxu0
      %v747 = vadd.f32 %v694, %v746
      %748 = vmatmul.bf16.gmra.mxu0 %v720
      %v749 = vpop.f32.mrf.mxu0
      %v750 = vadd.f32 %v694, %v749
      %v751 = vpop.f32.mrf.mxu0
      %v752 = vadd.f32 %v694, %v751
      %753 = vmatmul.bf16.gmra.mxu0 %v722
      %v754 = vpop.f32.mrf.mxu0
      %v755 = vadd.f32 %v694, %v754
      %v756 = vpop.f32.mrf.mxu0
      %v757 = vadd.f32 %v694, %v756
      %758 = vmatmul.bf16.gmra.mxu0 %v724
      %v759 = vpop.f32.mrf.mxu0
      %v760 = vadd.f32 %v694, %v759
      %v761 = vpop.f32.mrf.mxu0
      %v762 = vadd.f32 %v694, %v761
      %763 = vmatmul.bf16.gmra.mxu0 %v726
      %v764 = vpop.f32.mrf.mxu0
      %v765 = vadd.f32 %v694, %v764
      %v766 = vpop.f32.mrf.mxu0
      %v767 = vadd.f32 %v694, %v766
      %768 = vmatmul.bf16.gmra.mxu0 %v728
      %v769 = vpop.f32.mrf.mxu0
      %v770 = vadd.f32 %v694, %v769
      %v771 = vpop.f32.mrf.mxu0
      %v772 = vadd.f32 %v694, %v771
      %773 = vmatmul.bf16.gmra.mxu0 %v730
      %v774 = vpop.f32.mrf.mxu0
      %v775 = vadd.f32 %v694, %v774
      %v776 = vpop.f32.mrf.mxu0
      %777 = vdwg.mxu0
      %v778 = vtanh.pop %v745
      %v779 = vtanh.pop %v747
      %v780 = vtanh.pop %v750
      %v781 = vtanh.pop %v752
      %v782 = vtanh.pop %v755
      %v783 = vtanh.pop %v757
      %v784 = vtanh.pop %v760
      %v785 = vtanh.pop %v762
      %v786 = vtanh.pop %v765
      %v787 = vtanh.pop %v767
      %v788 = vtanh.pop %v770
      %v789 = vtanh.pop %v772
      %v790 = vtanh.pop %v775
      %v791 = vpack.c.bf16 %v778, %v778
      %v792 = vpack.c.bf16 %v779, %v779
      %v793 = vpack.c.bf16 %v780, %v780
      %v794 = vpack.c.bf16 %v781, %v781
      %v795 = vpack.c.bf16 %v782, %v782
      %v796 = vpack.c.bf16 %v783, %v783
      %v797 = vpack.c.bf16 %v784, %v784
      %v798 = vpack.c.bf16 %v785, %v785
      %v799 = vpack.c.bf16 %v786, %v786
      %v800 = vpack.c.bf16 %v787, %v787
      %v801 = vpack.c.bf16 %v788, %v788
      %v802 = vpack.c.bf16 %v789, %v789
      %v803 = vpack.c.bf16 %v790, %v790
      %vm804 = vcmask 60416
      %805 = vst.msk [vmem:[%s300] sm:$0xf] %vm804, %v791
      %806 = vst.msk [vmem:[%s300 + $0x4] sm:$0xf] %vm804, %v792
      %807 = vst.msk [vmem:[%s300 + $0x8] sm:$0xf] %vm804, %v793
      %808 = vst.msk [vmem:[%s300 + $0xc] sm:$0xf] %vm804, %v794
      %809 = vst.msk [vmem:[%s300 + $0x10] sm:$0xf] %vm804, %v795
      %810 = vst.msk [vmem:[%s300 + $0x14] sm:$0xf] %vm804, %v796
      %811 = vst.msk [vmem:[%s300 + $0x18] sm:$0xf] %vm804, %v797
      %812 = vst.msk [vmem:[%s300 + $0x1c] sm:$0xf] %vm804, %v798
      %813 = vst.msk [vmem:[%s300 + $0x20] sm:$0xf] %vm804, %v799
      %814 = vst.msk [vmem:[%s300 + $0x24] sm:$0xf] %vm804, %v800
      %815 = vst.msk [vmem:[%s300 + $0x28] sm:$0xf] %vm804, %v801
      %816 = vst.msk [vmem:[%s300 + $0x2c] sm:$0xf] %vm804, %v802
      %817 = vst.msk [vmem:[%s300 + $0x30] sm:$0xf] %vm804, %v803
      %s818 = smul.u32 13, %s20
      %p819 = scmp.lt.s32.totalorder %s19, 1
      %s820 = scalar_select %p819, %s19, 1
      %p821 = scmp.lt.s32.totalorder %s818, 12
      %s822 = scalar_select %p821, %s818, 12
      %s823 = smul.addr %s820, 13
      %s824 = sadd.s32 %s822, %s823
      %s825 = smul.addr %s824, 4
      %s826 = scalar_lea.vmem %s4, %s825
      // Predicated region
      $region37: #{forward.22} parent=35 // pred_check
        %p827 = pneg %p149
      $region38: #{forward.22} parent=35 // pred_check_branch
        %829 = sbr.rel (%p827) target = $region40
      $region39: #{forward.22} parent=35 // pred_region
        %s830 = smul.u32 13, %s20
      $region40: #{forward.22} parent=35 // pred_fallthru
        _
    $region36: #{forward.22} parent=5 // pred_fallthru
      _
    %p831 = scmp.le.s32.totalorder 2, %s10
    // Predicated region
    $region41: #{forward.22} parent=5 // pred_check
      %p832 = pneg %p831
    $region42: #{forward.22} parent=5 // pred_check_branch
      %834 = sbr.rel (%p832) target = $region44
    $region43: #{forward.22} parent=5 // pred_region
      %s835 = ssub.s32 %s10, 2
      // Predicated region
      $region45: #{forward.22} parent=43 // pred_check
        %p836 = pneg %p155
      $region46: #{forward.22} parent=43 // pred_check_branch
        %838 = sbr.rel (%p836) target = $region48
      $region47: #{forward.22} parent=43 // pred_region
        %s839 = smul.u32 13, %s22
        %p840 = scmp.lt.s32.totalorder %s21, 1
        %s841 = scalar_select %p840, %s21, 1
        %p842 = scmp.lt.s32.totalorder %s839, 12
        %s843 = scalar_select %p842, %s839, 12
        %s844 = smul.addr %s841, 13
        %s845 = sadd.s32 %s843, %s844
        %s846 = smul.addr %s845, 4
        %s847 = scalar_lea.vmem %s4, %s846
      $region48: #{forward.22} parent=43 // pred_fallthru
        _
    $region44: #{forward.22} parent=5 // pred_fallthru
      _
  $region6: #{forward.22} parent=0 // loop_footer
    %s14 = sadd.s32 1, %s10
  $region7: #{forward.22} parent=0 // loop_footer_branch
    %9 = sbr.rel target = $region3
  $region8: #{forward.22} parent=0 // loop_exit
    _

// kernel: forward.23
$region0: #{forward.23}
  #allocation0 [shape = 'u32[]', space=smem, size = 0x4, offset = 0x4, fixed_abs, tag = 'smem constant byte address 0x4 - core index']
  #allocation1 [shape = 'u32[72,128]{1,0:T(1,128)}', space=vmem, size = 0x9000, scoped, tag = 'internal scratch']
  %s0 = inlined_call_operand.vmem [shape: bf16[2,112,8], index: 0, kind: input, shape index: {}, may-alias: {0,1}]
  %s1 = inlined_call_operand.vmem [shape: bf16[2,112,8], index: 1, kind: input, shape index: {}, may-alias: {0,1}]
  %s2 = inlined_call_operand.vmem [shape: bf16[8,8], index: 2, kind: input, shape index: {}]
  %s3 = inlined_call_operand.vmem [shape: f32[1,8], index: 3, kind: input, shape index: {}]
  %s4 = inlined_call_operand.vmem [shape: bf16[24,8], index: 4, kind: input, shape index: {}]
  %s5 = inlined_call_operand.vmem [shape: f32[1,8], index: 5, kind: input, shape index: {}]
  %s6 = inlined_call_operand.vmem [shape: bf16[8,8], index: 6, kind: input, shape index: {}]
  %s7 = inlined_call_operand.vmem [shape: f32[1,8], index: 7, kind: input, shape index: {}]
  %s8 = inlined_call_operand.vmem [shape: bf16[2,104,8], index: 8, kind: output, shape index: {}]
  %s9 = sld [smem:[#allocation0]]
  $region65: #{forward.23} parent=0
    _
  %s11 = ssub.s32 1, %s9
  %s12 = scalar_select 0, %s11, %s9
  loop: start=0, step=1, limit=4
  $region2: #{forward.23} parent=0 // loop_pre_header
    _
  $region3: #{forward.23} parent=0 // loop_header
    %s14 = sphi 0, %s18
    %p15 = scmp.ge.s32.totalorder %s14, 4
    %s21 = sphi 0, %s33
    %s22 = sphi 0, %s29
    %s23 = sphi 0, %s21
    %s24 = sphi 0, %s22
    %s25 = sphi 0, %s23
    %s26 = sphi 0, %s24
    %s38 = sphi 0, %s40
    %s41 = sphi 0, %s38
    %s42 = sphi 0, %s41
    %s58 = sphi 0, %s42
    %s70 = sphi 0, %s72
    %s73 = sphi 0, %s70
    %s74 = sphi 0, %s73
    %s90 = sphi 0, %s74
    %s94 = sphi 0, %s94
    %s96 = sphi 0, %s94
    %s97 = sphi 0, %s96
    %s111 = sphi 0, %s97
    %s115 = sphi 0, %s115
    %s117 = sphi 0, %s115
    %s118 = sphi 0, %s117
    %s132 = sphi 0, %s118
    %s136 = sphi 0, %s136
    %s138 = sphi 0, %s136
    %s139 = sphi 0, %s138
    %s153 = sphi 0, %s139
    %s157 = sphi 0, %s157
    %s159 = sphi 0, %s157
    %s160 = sphi 0, %s159
    %s174 = sphi 0, %s160
    %s178 = sphi 0, %s178
    %s180 = sphi 0, %s178
    %s181 = sphi 0, %s180
    %s195 = sphi 0, %s181
    %s199 = sphi 0, %s199
    %s201 = sphi 0, %s199
    %s202 = sphi 0, %s201
    %s216 = sphi 0, %s202
    %s224 = sphi 0, %s226
    %s227 = sphi 0, %s224
    %s228 = sphi 0, %s227
    %s244 = sphi 0, %s228
  $region4: #{forward.23} parent=0 // loop_header_branch
    %17 = sbr.rel (%p15) target = $region8
  $region5: #{forward.23} parent=0 // loop_body
    %s19 = ssub.s32 %s14, 1
    %s20 = ssub.s32 %s14, 2
    %s27 = sadd.s32 1, %s22
    %p28 = scmp.ge.s32.totalorder %s27, 1
    %s29 = scalar_select %p28, 0, %s27
    %s30 = sadd.s32 1, %s21
    %s31 = scalar_select %p28, %s30, %s21
    %p32 = scmp.ge.s32.totalorder %s31, 2
    %s33 = scalar_select %p32, 0, %s31
    %s34 = ssub.s32 %s21, %s33
    %s35 = ssub.s32 %s22, %s29
    %s36 = sor.u32 %s34, %s35
    %p37 = scmp.eq.s32.totalorder %s36, 0
    %s39 = sadd.s32 %s38, 1
    %s40 = scalar_select %p37, %s38, %s39
    %p43 = pneg %p37
    %p44 = scmp.eq.s32.totalorder %s14, 1
    %p45 = por %p43, %p44
    %p46 = scmp.ne.s32.totalorder %s38, %s41
    %p47 = scmp.eq.s32.totalorder %s14, 0
    %p48 = por %p46, %p47
    %p49 = scmp.ne.s32.totalorder %s38, %s41
    %p50 = scmp.eq.s32.totalorder %s19, 1
    %p51 = por %p49, %p50
    %p52 = scmp.ne.s32.totalorder %s41, %s42
    %p53 = scmp.eq.s32.totalorder %s19, 0
    %p54 = por %p52, %p53
    %p55 = scmp.ne.s32.totalorder %s41, %s42
    %p56 = scmp.eq.s32.totalorder %s20, 1
    %p57 = por %p55, %p56
    %p59 = scmp.ne.s32.totalorder %s42, %s58
    %p60 = scmp.eq.s32.totalorder %s20, 0
    %p61 = por %p59, %p60
    %s62 = sadd.s32 %s22, 1
    %s63 = smul.u32 %s62, 13
    %s64 = sadd.s32 %s29, 1
    %s65 = smul.u32 %s64, 13
    %s66 = ssub.s32 %s21, %s33
    %s67 = ssub.s32 %s63, %s65
    %s68 = sor.u32 %s66, %s67
    %p69 = scmp.eq.s32.totalorder %s68, 0
    %s71 = sadd.s32 %s70, 1
    %s72 = scalar_select %p69, %s70, %s71
    %p75 = pneg %p69
    %p76 = scmp.eq.s32.totalorder %s14, 1
    %p77 = por %p75, %p76
    %p78 = scmp.ne.s32.totalorder %s70, %s73
    %p79 = scmp.eq.s32.totalorder %s14, 0
    %p80 = por %p78, %p79
    %p81 = scmp.ne.s32.totalorder %s70, %s73
    %p82 = scmp.eq.s32.totalorder %s19, 1
    %p83 = por %p81, %p82
    %p84 = scmp.ne.s32.totalorder %s73, %s74
    %p85 = scmp.eq.s32.totalorder %s19, 0
    %p86 = por %p84, %p85
    %p87 = scmp.ne.s32.totalorder %s73, %s74
    %p88 = scmp.eq.s32.totalorder %s20, 1
    %p89 = por %p87, %p88
    %p91 = scmp.ne.s32.totalorder %s74, %s90
    %p92 = scmp.eq.s32.totalorder %s20, 0
    %p93 = por %p91, %p92
    %s95 = sadd.s32 %s94, 1
    %p98 = scmp.eq.s32.totalorder %s14, 1
    %p99 = scmp.ne.s32.totalorder %s94, %s96
    %p100 = scmp.eq.s32.totalorder %s14, 0
    %p101 = por %p99, %p100
    %p102 = scmp.ne.s32.totalorder %s94, %s96
    %p103 = scmp.eq.s32.totalorder %s19, 1
    %p104 = por %p102, %p103
    %p105 = scmp.ne.s32.totalorder %s96, %s97
    %p106 = scmp.eq.s32.totalorder %s19, 0
    %p107 = por %p105, %p106
    %p108 = scmp.ne.s32.totalorder %s96, %s97
    %p109 = scmp.eq.s32.totalorder %s20, 1
    %p110 = por %p108, %p109
    %p112 = scmp.ne.s32.totalorder %s97, %s111
    %p113 = scmp.eq.s32.totalorder %s20, 0
    %p114 = por %p112, %p113
    %s116 = sadd.s32 %s115, 1
    %p119 = scmp.eq.s32.totalorder %s14, 1
    %p120 = scmp.ne.s32.totalorder %s115, %s117
    %p121 = scmp.eq.s32.totalorder %s14, 0
    %p122 = por %p120, %p121
    %p123 = scmp.ne.s32.totalorder %s115, %s117
    %p124 = scmp.eq.s32.totalorder %s19, 1
    %p125 = por %p123, %p124
    %p126 = scmp.ne.s32.totalorder %s117, %s118
    %p127 = scmp.eq.s32.totalorder %s19, 0
    %p128 = por %p126, %p127
    %p129 = scmp.ne.s32.totalorder %s117, %s118
    %p130 = scmp.eq.s32.totalorder %s20, 1
    %p131 = por %p129, %p130
    %p133 = scmp.ne.s32.totalorder %s118, %s132
    %p134 = scmp.eq.s32.totalorder %s20, 0
    %p135 = por %p133, %p134
    %s137 = sadd.s32 %s136, 1
    %p140 = scmp.eq.s32.totalorder %s14, 1
    %p141 = scmp.ne.s32.totalorder %s136, %s138
    %p142 = scmp.eq.s32.totalorder %s14, 0
    %p143 = por %p141, %p142
    %p144 = scmp.ne.s32.totalorder %s136, %s138
    %p145 = scmp.eq.s32.totalorder %s19, 1
    %p146 = por %p144, %p145
    %p147 = scmp.ne.s32.totalorder %s138, %s139
    %p148 = scmp.eq.s32.totalorder %s19, 0
    %p149 = por %p147, %p148
    %p150 = scmp.ne.s32.totalorder %s138, %s139
    %p151 = scmp.eq.s32.totalorder %s20, 1
    %p152 = por %p150, %p151
    %p154 = scmp.ne.s32.totalorder %s139, %s153
    %p155 = scmp.eq.s32.totalorder %s20, 0
    %p156 = por %p154, %p155
    %s158 = sadd.s32 %s157, 1
    %p161 = scmp.eq.s32.totalorder %s14, 1
    %p162 = scmp.ne.s32.totalorder %s157, %s159
    %p163 = scmp.eq.s32.totalorder %s14, 0
    %p164 = por %p162, %p163
    %p165 = scmp.ne.s32.totalorder %s157, %s159
    %p166 = scmp.eq.s32.totalorder %s19, 1
    %p167 = por %p165, %p166
    %p168 = scmp.ne.s32.totalorder %s159, %s160
    %p169 = scmp.eq.s32.totalorder %s19, 0
    %p170 = por %p168, %p169
    %p171 = scmp.ne.s32.totalorder %s159, %s160
    %p172 = scmp.eq.s32.totalorder %s20, 1
    %p173 = por %p171, %p172
    %p175 = scmp.ne.s32.totalorder %s160, %s174
    %p176 = scmp.eq.s32.totalorder %s20, 0
    %p177 = por %p175, %p176
    %s179 = sadd.s32 %s178, 1
    %p182 = scmp.eq.s32.totalorder %s14, 1
    %p183 = scmp.ne.s32.totalorder %s178, %s180
    %p184 = scmp.eq.s32.totalorder %s14, 0
    %p185 = por %p183, %p184
    %p186 = scmp.ne.s32.totalorder %s178, %s180
    %p187 = scmp.eq.s32.totalorder %s19, 1
    %p188 = por %p186, %p187
    %p189 = scmp.ne.s32.totalorder %s180, %s181
    %p190 = scmp.eq.s32.totalorder %s19, 0
    %p191 = por %p189, %p190
    %p192 = scmp.ne.s32.totalorder %s180, %s181
    %p193 = scmp.eq.s32.totalorder %s20, 1
    %p194 = por %p192, %p193
    %p196 = scmp.ne.s32.totalorder %s181, %s195
    %p197 = scmp.eq.s32.totalorder %s20, 0
    %p198 = por %p196, %p197
    %s200 = sadd.s32 %s199, 1
    %p203 = scmp.eq.s32.totalorder %s14, 1
    %p204 = scmp.ne.s32.totalorder %s199, %s201
    %p205 = scmp.eq.s32.totalorder %s14, 0
    %p206 = por %p204, %p205
    %p207 = scmp.ne.s32.totalorder %s199, %s201
    %p208 = scmp.eq.s32.totalorder %s19, 1
    %p209 = por %p207, %p208
    %p210 = scmp.ne.s32.totalorder %s201, %s202
    %p211 = scmp.eq.s32.totalorder %s19, 0
    %p212 = por %p210, %p211
    %p213 = scmp.ne.s32.totalorder %s201, %s202
    %p214 = scmp.eq.s32.totalorder %s20, 1
    %p215 = por %p213, %p214
    %p217 = scmp.ne.s32.totalorder %s202, %s216
    %p218 = scmp.eq.s32.totalorder %s20, 0
    %p219 = por %p217, %p218
    %s220 = ssub.s32 %s21, %s33
    %s221 = ssub.s32 %s22, %s29
    %s222 = sor.u32 %s220, %s221
    %p223 = scmp.eq.s32.totalorder %s222, 0
    %s225 = sadd.s32 %s224, 1
    %s226 = scalar_select %p223, %s224, %s225
    %p229 = pneg %p223
    %p230 = scmp.eq.s32.totalorder %s14, 1
    %p231 = por %p229, %p230
    %p232 = scmp.ne.s32.totalorder %s224, %s227
    %p233 = scmp.eq.s32.totalorder %s14, 0
    %p234 = por %p232, %p233
    %p235 = scmp.ne.s32.totalorder %s224, %s227
    %p236 = scmp.eq.s32.totalorder %s19, 1
    %p237 = por %p235, %p236
    %p238 = scmp.ne.s32.totalorder %s227, %s228
    %p239 = scmp.eq.s32.totalorder %s19, 0
    %p240 = por %p238, %p239
    %p241 = scmp.ne.s32.totalorder %s227, %s228
    %p242 = scmp.eq.s32.totalorder %s20, 1
    %p243 = por %p241, %p242
    %p245 = scmp.ne.s32.totalorder %s228, %s244
    %p246 = scmp.eq.s32.totalorder %s20, 0
    %p247 = por %p245, %p246
    %p248 = scmp.le.s32.totalorder 1, %s14
    %p249 = scmp.lt.s32.totalorder %s14, 3
    %p250 = pnand %p248, %p249
    %p251 = pneg %p250
    // Predicated region
    $region9: #{forward.23} parent=5 // pred_check
      _
    $region10: #{forward.23} parent=5 // pred_check_branch
      %253 = sbr.rel (%p250) target = $region12
    $region11: #{forward.23} parent=5 // pred_region
      %s254 = ssub.s32 %s14, 1
      // Predicated region
      $region13: #{forward.23} parent=11 // pred_check
        %p255 = pneg %p107
      $region14: #{forward.23} parent=11 // pred_check_branch
        %257 = sbr.rel (%p255) target = $region16
      $region15: #{forward.23} parent=11 // pred_region
        _
      $region16: #{forward.23} parent=11 // pred_fallthru
        _
      // Predicated region
      $region17: #{forward.23} parent=11 // pred_check
        %p258 = pneg %p128
      $region18: #{forward.23} parent=11 // pred_check_branch
        %260 = sbr.rel (%p258) target = $region20
      $region19: #{forward.23} parent=11 // pred_region
        _
      $region20: #{forward.23} parent=11 // pred_fallthru
        _
      // Predicated region
      $region21: #{forward.23} parent=11 // pred_check
        %p261 = pneg %p149
      $region22: #{forward.23} parent=11 // pred_check_branch
        %263 = sbr.rel (%p261) target = $region24
      $region23: #{forward.23} parent=11 // pred_region
        _
      $region24: #{forward.23} parent=11 // pred_fallthru
        _
      // Predicated region
      $region25: #{forward.23} parent=11 // pred_check
        %p264 = pneg %p170
      $region26: #{forward.23} parent=11 // pred_check_branch
        %266 = sbr.rel (%p264) target = $region28
      $region27: #{forward.23} parent=11 // pred_region
        _
      $region28: #{forward.23} parent=11 // pred_fallthru
        _
      // Predicated region
      $region29: #{forward.23} parent=11 // pred_check
        %p267 = pneg %p191
      $region30: #{forward.23} parent=11 // pred_check_branch
        %269 = sbr.rel (%p267) target = $region32
      $region31: #{forward.23} parent=11 // pred_region
        _
      $region32: #{forward.23} parent=11 // pred_fallthru
        _
      // Predicated region
      $region33: #{forward.23} parent=11 // pred_check
        %p270 = pneg %p212
      $region34: #{forward.23} parent=11 // pred_check_branch
        %272 = sbr.rel (%p270) target = $region36
      $region35: #{forward.23} parent=11 // pred_region
        _
      $region36: #{forward.23} parent=11 // pred_fallthru
        _
    $region12: #{forward.23} parent=5 // pred_fallthru
      _
    %p273 = scmp.lt.s32.totalorder %s14, 2
    // Predicated region
    $region37: #{forward.23} parent=5 // pred_check
      %p274 = pneg %p273
    $region38: #{forward.23} parent=5 // pred_check_branch
      %276 = sbr.rel (%p274) target = $region40
    $region39: #{forward.23} parent=5 // pred_region
      // Predicated region
      $region41: #{forward.23} parent=39 // pred_check
        %p277 = pneg %p48
      $region42: #{forward.23} parent=39 // pred_check_branch
        %279 = sbr.rel (%p277) target = $region44
      $region43: #{forward.23} parent=39 // pred_region
        %s280 = smul.u32 13, %s22
        %s281 = ssub.s32 14, %s280
        %p282 = scmp.lt.s32.totalorder %s281, 13
        %s283 = scalar_select %p282, %s281, 13
        %s284 = smul.u32 4, %s283
        %p285 = scmp.lt.s32.totalorder %s21, 1
        %s286 = scalar_select %p285, %s21, 1
        %p287 = scmp.lt.s32.totalorder %s280, 13
        %s288 = scalar_select %p287, %s280, 13
        %s289 = smul.addr %s286, 14
        %s290 = sadd.s32 %s288, %s289
        %s291 = smul.addr %s290, 4
        %s292 = scalar_lea.vmem %s0, %s291
        %s293 = smul.u32 13, %s22
        %s294 = ssub.s32 14, %s293
        %p295 = scmp.lt.s32.totalorder %s294, 13
        %s296 = scalar_select %p295, %s294, 13
        %s297 = smul.u32 4, %s296
      $region44: #{forward.23} parent=39 // pred_fallthru
        _
      // Predicated region
      $region45: #{forward.23} parent=39 // pred_check
        %p298 = pneg %p80
      $region46: #{forward.23} parent=39 // pred_check_branch
        %300 = sbr.rel (%p298) target = $region48
      $region47: #{forward.23} parent=39 // pred_region
        %s301 = sadd.s32 %s22, 1
        %s302 = smul.u32 %s301, 13
        %p303 = scmp.lt.s32.totalorder %s21, 1
        %s304 = scalar_select %p303, %s21, 1
        %p305 = scmp.lt.s32.totalorder %s302, 13
        %s306 = scalar_select %p305, %s302, 13
        %s307 = smul.addr %s304, 14
        %s308 = sadd.s32 %s306, %s307
        %s309 = smul.addr %s308, 4
        %s310 = scalar_lea.vmem %s1, %s309
        %s311 = sadd.s32 %s22, 1
        %s312 = smul.u32 %s311, 13
      $region48: #{forward.23} parent=39 // pred_fallthru
        _
    $region40: #{forward.23} parent=5 // pred_fallthru
      _
    %p313 = scmp.le.s32.totalorder 1, %s14
    %p314 = scmp.lt.s32.totalorder %s14, 3
    %p315 = pnand %p313, %p314
    %p316 = pneg %p315
    // Predicated region
    $region49: #{forward.23} parent=5 // pred_check
      _
    $region50: #{forward.23} parent=5 // pred_check_branch
      %318 = sbr.rel (%p315) target = $region52
    $region51: #{forward.23} parent=5 // pred_region
      %s319 = ssub.s32 %s14, 1
      %s320 = smul.u32 13, %s24
      %s321 = ssub.s32 14, %s320
      %p322 = scmp.lt.s32.totalorder %s321, 13
      %s323 = scalar_select %p322, %s321, 13
      %s324 = smul.u32 4, %s323
      %p325 = scmp.lt.s32.totalorder %s23, 1
      %s326 = scalar_select %p325, %s23, 1
      %p327 = scmp.lt.s32.totalorder %s320, 13
      %s328 = scalar_select %p327, %s320, 13
      %s329 = smul.addr %s326, 14
      %s330 = sadd.s32 %s328, %s329
      %s331 = smul.addr %s330, 4
      %s332 = scalar_lea.vmem %s0, %s331
      %p333 = pneg %p54
      %p334 = pneg %p51
      %s335 = sadd.s32 %s24, 1
      %s336 = smul.u32 %s335, 13
      %p337 = scmp.lt.s32.totalorder %s23, 1
      %s338 = scalar_select %p337, %s23, 1
      %p339 = scmp.lt.s32.totalorder %s336, 13
      %s340 = scalar_select %p339, %s336, 13
      %s341 = smul.addr %s338, 14
      %s342 = sadd.s32 %s340, %s341
      %s343 = smul.addr %s342, 4
      %s344 = scalar_lea.vmem %s1, %s343
      %p345 = pneg %p86
      %p346 = pneg %p83
      %p347 = pneg %p107
      %p348 = pneg %p104
      %p349 = pneg %p128
      %p350 = pneg %p125
      %p351 = pneg %p149
      %p352 = pneg %p146
      %p353 = pneg %p170
      %p354 = pneg %p167
      %p355 = pneg %p191
      %p356 = pneg %p188
      %p357 = pneg %p212
      %p358 = pneg %p209
      %p359 = pneg %p240
      %p360 = pneg %p237
      %s361 = smul.u32 13, %s24
      %p362 = scmp.lt.s32.totalorder %s23, 1
      %s363 = scalar_select %p362, %s23, 1
      %p364 = scmp.lt.s32.totalorder %s361, 12
      %s365 = scalar_select %p364, %s361, 12
      %s366 = smul.addr %s363, 13
      %s367 = sadd.s32 %s365, %s366
      %s368 = smul.addr %s367, 4
      %s369 = scalar_lea.vmem %s8, %s368
      %s370 = smul.u32 13, %s24
      %s371 = ssub.s32 14, %s370
      %p372 = scmp.lt.s32.totalorder %s371, 13
      %s373 = scalar_select %p372, %s371, 13
      %s374 = smul.u32 4, %s373
      %p375 = scmp.lt.s32.totalorder %s23, 1
      %s376 = scalar_select %p375, %s23, 1
      %p377 = scmp.lt.s32.totalorder %s370, 13
      %s378 = scalar_select %p377, %s370, 13
      %s379 = smul.addr %s376, 14
      %s380 = sadd.s32 %s378, %s379
      %s381 = smul.addr %s380, 4
      %s382 = scalar_lea.vmem %s0, %s381
      %s383 = smul.u32 13, %s24
      %s384 = ssub.s32 14, %s383
      %p385 = scmp.lt.s32.totalorder %s384, 13
      %s386 = scalar_select %p385, %s384, 13
      %s387 = smul.u32 4, %s386
      %s388 = sadd.s32 %s24, 1
      %s389 = smul.u32 %s388, 13
      %p390 = scmp.lt.s32.totalorder %s23, 1
      %s391 = scalar_select %p390, %s23, 1
      %p392 = scmp.lt.s32.totalorder %s389, 13
      %s393 = scalar_select %p392, %s389, 13
      %s394 = smul.addr %s391, 14
      %s395 = sadd.s32 %s393, %s394
      %s396 = smul.addr %s395, 4
      %s397 = scalar_lea.vmem %s1, %s396
      %s398 = sadd.s32 %s24, 1
      %s399 = smul.u32 %s398, 13
      %s400 = smul.u32 13, %s24
      %p401 = scmp.lt.s32.totalorder %s23, 1
      %s402 = scalar_select %p401, %s23, 1
      %p403 = scmp.lt.s32.totalorder %s400, 12
      %s404 = scalar_select %p403, %s400, 12
      %s405 = smul.addr %s402, 13
      %s406 = sadd.s32 %s404, %s405
      %s407 = smul.addr %s406, 4
      %s408 = scalar_lea.vmem %s8, %s407
      %s409 = smul.u32 13, %s24
      %v411 = vld [vmem:[%s382] sm:$0xf]
      %v412 = vld [vmem:[%s382 + $0x4] sm:$0xf]
      %v413 = vld [vmem:[%s382 + $0x8] sm:$0xf]
      %v414 = vld [vmem:[%s382 + $0xc] sm:$0xf]
      %v415 = vld [vmem:[%s382 + $0x10] sm:$0xf]
      %v416 = vld [vmem:[%s382 + $0x14] sm:$0xf]
      %v417 = vld [vmem:[%s382 + $0x18] sm:$0xf]
      %v418 = vld [vmem:[%s382 + $0x1c] sm:$0xf]
      %v419 = vld [vmem:[%s382 + $0x20] sm:$0xf]
      %v420 = vld [vmem:[%s382 + $0x24] sm:$0xf]
      %v421 = vld [vmem:[%s382 + $0x28] sm:$0xf]
      %v422 = vld [vmem:[%s382 + $0x2c] sm:$0xf]
      %v423 = vld [vmem:[%s382 + $0x30] sm:$0xf]
      %v424 = vld [vmem:[%s397] sm:$0xf]
      %v438 = vunpack.c.l.b16 %v411
      %v439 = vunpack.c.l.b16 %v412
      %v440 = vunpack.c.l.b16 %v413
      %v441 = vunpack.c.l.b16 %v414
      %v442 = vunpack.c.l.b16 %v415
      %v443 = vunpack.c.l.b16 %v416
      %v444 = vunpack.c.l.b16 %v417
      %v445 = vunpack.c.l.b16 %v418
      %v446 = vunpack.c.l.b16 %v419
      %v447 = vunpack.c.l.b16 %v420
      %v448 = vunpack.c.l.b16 %v421
      %v449 = vunpack.c.l.b16 %v422
      %v450 = vunpack.c.l.b16 %v423
      %v451 = vpack.c.b16 %v439, %v438
      %v452 = vpack.c.b16 %v441, %v440
      %v453 = vpack.c.b16 %v443, %v442
      %v454 = vpack.c.b16 %v445, %v444
      %v455 = vpack.c.b16 %v447, %v446
      %v456 = vpack.c.b16 %v449, %v448
      %v457 = vpack.c.b16 %v450, %v450
      %v465 = vunpack.c.l.b16 %v424
      %v466 = vpack.c.b16 %v465, %v465
      %vm467 = vcmask 1043456
      %v470 = vsel %vm467, %v457, %v466
      %v472 = vld [vmem:[%s2] sm:$0xf]
      %v473 = vld [vmem:[%s3] sm:$0x1]
      %v475 = vperm.slane %v473, 0
      %vm477 = vsmask.f32 7424
      %v479 = vshrl.u32 %v451, 16
      %v481 = vshll.u32 %v451, 16
      %v483 = vrot.slane %v481, 1
      %v484 = vor.u32 %v479, %v483
      %v486 = vshll.u32 %v452, 16
      %v488 = vrot.slane %v486, 1
      %v489 = vsel %vm477, %v484, %v488
      %v490 = vshrl.u32 %v452, 16
      %v492 = vor.u32 %v490, %v488
      %v494 = vshll.u32 %v453, 16
      %v496 = vrot.slane %v494, 1
      %v497 = vsel %vm477, %v492, %v496
      %v498 = vshrl.u32 %v453, 16
      %v500 = vor.u32 %v498, %v496
      %v502 = vshll.u32 %v454, 16
      %v504 = vrot.slane %v502, 1
      %v505 = vsel %vm477, %v500, %v504
      %v506 = vshrl.u32 %v454, 16
      %v508 = vor.u32 %v506, %v504
      %v510 = vshll.u32 %v455, 16
      %v512 = vrot.slane %v510, 1
      %v513 = vsel %vm477, %v508, %v512
      %v514 = vshrl.u32 %v455, 16
      %v516 = vor.u32 %v514, %v512
      %v518 = vshll.u32 %v456, 16
      %v520 = vrot.slane %v518, 1
      %v521 = vsel %vm477, %v516, %v520
      %v522 = vshrl.u32 %v456, 16
      %v524 = vor.u32 %v522, %v520
      %v525 = vshll.u32 %v470, 16
      %v527 = vrot.slane %v525, 1
      %v528 = vsel %vm477, %v524, %v527
      %v529 = vshrl.u32 %v470, 16
      %v531 = vor.u32 %v529, %v527
      %vm532 = vcmask 64512
      %v534 = vsel %vm532, %v489, 0
      %v537 = vsel %vm532, %v497, 0
      %v540 = vsel %vm532, %v505, 0
      %v543 = vsel %vm532, %v513, 0
      %v546 = vsel %vm532, %v521, 0
      %v549 = vsel %vm532, %v528, 0
      %v552 = vsel %vm532, %v531, 0
      %v555 = vsel %vm467, %v472, 0
      %557 = vmatpush.bf16.msra.mxu0 0
      %558 = vmatpush.bf16.msra.mxu0 0
      %559 = vmatpush.bf16.msra.mxu0 0
      %560 = vmatpush.bf16.msra.mxu0 0
      %561 = vmatpush.bf16.msra.mxu0 0
      %562 = vmatpush.bf16.msra.mxu0 0
      %563 = vmatpush.bf16.msra.mxu0 0
      %564 = vmatpush.bf16.msra.mxu0 %v555
      %565 = vmatmul.bf16.gmra.mxu0 %v534
      %v566 = vpop.f32.mrf.mxu0
      %v567 = vadd.f32 %v475, %v566
      %v568 = vpop.f32.mrf.mxu0
      %v569 = vadd.f32 %v475, %v568
      %570 = vmatmul.bf16.gmra.mxu0 %v537
      %v571 = vpop.f32.mrf.mxu0
      %v572 = vadd.f32 %v475, %v571
      %v573 = vpop.f32.mrf.mxu0
      %v574 = vadd.f32 %v475, %v573
      %575 = vmatmul.bf16.gmra.mxu0 %v540
      %v576 = vpop.f32.mrf.mxu0
      %v577 = vadd.f32 %v475, %v576
      %v578 = vpop.f32.mrf.mxu0
      %v579 = vadd.f32 %v475, %v578
      %580 = vmatmul.bf16.gmra.mxu0 %v543
      %v581 = vpop.f32.mrf.mxu0
      %v582 = vadd.f32 %v475, %v581
      %v583 = vpop.f32.mrf.mxu0
      %v584 = vadd.f32 %v475, %v583
      %585 = vmatmul.bf16.gmra.mxu0 %v546
      %v586 = vpop.f32.mrf.mxu0
      %v587 = vadd.f32 %v475, %v586
      %v588 = vpop.f32.mrf.mxu0
      %v589 = vadd.f32 %v475, %v588
      %590 = vmatmul.bf16.gmra.mxu0 %v549
      %v591 = vpop.f32.mrf.mxu0
      %v592 = vadd.f32 %v475, %v591
      %v593 = vpop.f32.mrf.mxu0
      %v594 = vadd.f32 %v475, %v593
      %595 = vmatmul.bf16.gmra.mxu0 %v552
      %v596 = vpop.f32.mrf.mxu0
      %v597 = vadd.f32 %v475, %v596
      %v598 = vpop.f32.mrf.mxu0
      %599 = vdwg.mxu0
      %v600 = vunpack.c.l.bf16 %v451
      %v601 = vunpack.c.h.bf16 %v451
      %v602 = vunpack.c.l.bf16 %v452
      %v603 = vunpack.c.h.bf16 %v452
      %v604 = vunpack.c.l.bf16 %v453
      %v605 = vunpack.c.h.bf16 %v453
      %v606 = vunpack.c.l.bf16 %v454
      %v607 = vunpack.c.h.bf16 %v454
      %v608 = vunpack.c.l.bf16 %v455
      %v609 = vunpack.c.h.bf16 %v455
      %v610 = vunpack.c.l.bf16 %v456
      %v611 = vunpack.c.h.bf16 %v456
      %v612 = vunpack.c.l.bf16 %v470
      %v613 = vunpack.c.h.bf16 %v470
      %vm614 = vcmp.ge.f32.partialorder %v600, 0.0
      %vm615 = vcmp.ge.f32.partialorder %v601, 0.0
      %vm616 = vcmp.ge.f32.partialorder %v602, 0.0
      %vm617 = vcmp.ge.f32.partialorder %v603, 0.0
      %vm618 = vcmp.ge.f32.partialorder %v604, 0.0
      %vm619 = vcmp.ge.f32.partialorder %v605, 0.0
      %vm620 = vcmp.ge.f32.partialorder %v606, 0.0
      %vm621 = vcmp.ge.f32.partialorder %v607, 0.0
      %vm622 = vcmp.ge.f32.partialorder %v608, 0.0
      %vm623 = vcmp.ge.f32.partialorder %v609, 0.0
      %vm624 = vcmp.ge.f32.partialorder %v610, 0.0
      %vm625 = vcmp.ge.f32.partialorder %v611, 0.0
      %vm626 = vcmp.ge.f32.partialorder %v612, 0.0
      %vm627 = vcmp.ge.f32.partialorder %v613, 0.0
      %v628 = vmul.f32 %v600, 0.2
      %v629 = vmul.f32 %v601, 0.2
      %v630 = vmul.f32 %v602, 0.2
      %v631 = vmul.f32 %v603, 0.2
      %v632 = vmul.f32 %v604, 0.2
      %v633 = vmul.f32 %v605, 0.2
      %v634 = vmul.f32 %v606, 0.2
      %v635 = vmul.f32 %v607, 0.2
      %v636 = vmul.f32 %v608, 0.2
      %v637 = vmul.f32 %v609, 0.2
      %v638 = vmul.f32 %v610, 0.2
      %v639 = vmul.f32 %v611, 0.2
      %v640 = vmul.f32 %v612, 0.2
      %v641 = vmul.f32 %v613, 0.2
      %v642 = vsel %vm614, %v600, %v628
      %v643 = vsel %vm615, %v601, %v629
      %v644 = vsel %vm616, %v602, %v630
      %v645 = vsel %vm617, %v603, %v631
      %v646 = vsel %vm618, %v604, %v632
      %v647 = vsel %vm619, %v605, %v633
      %v648 = vsel %vm620, %v606, %v634
      %v649 = vsel %vm621, %v607, %v635
      %v650 = vsel %vm622, %v608, %v636
      %v651 = vsel %vm623, %v609, %v637
      %v652 = vsel %vm624, %v610, %v638
      %v653 = vsel %vm625, %v611, %v639
      %v654 = vsel %vm626, %v612, %v640
      %v655 = vsel %vm627, %v613, %v641
      %v656 = vpack.c.bf16 %v642, %v642
      %v657 = vpack.c.bf16 %v643, %v643
      %v658 = vpack.c.bf16 %v644, %v644
      %v659 = vpack.c.bf16 %v645, %v645
      %v660 = vpack.c.bf16 %v646, %v646
      %v661 = vpack.c.bf16 %v647, %v647
      %v662 = vpack.c.bf16 %v648, %v648
      %v663 = vpack.c.bf16 %v649, %v649
      %v664 = vpack.c.bf16 %v650, %v650
      %v665 = vpack.c.bf16 %v651, %v651
      %v666 = vpack.c.bf16 %v652, %v652
      %v667 = vpack.c.bf16 %v653, %v653
      %v668 = vpack.c.bf16 %v654, %v654
      %v669 = vpack.c.bf16 %v655, %v655
      %v683 = vunpack.c.l.b16 %v656
      %v684 = vunpack.c.l.b16 %v657
      %v685 = vunpack.c.l.b16 %v658
      %v686 = vunpack.c.l.b16 %v659
      %v687 = vunpack.c.l.b16 %v660
      %v688 = vunpack.c.l.b16 %v661
      %v689 = vunpack.c.l.b16 %v662
      %v690 = vunpack.c.l.b16 %v663
      %v691 = vunpack.c.l.b16 %v664
      %v692 = vunpack.c.l.b16 %v665
      %v693 = vunpack.c.l.b16 %v666
      %v694 = vunpack.c.l.b16 %v667
      %v695 = vunpack.c.l.b16 %v668
      %v696 = vpack.c.b16 %v684, %v683
      %v697 = vpack.c.b16 %v686, %v685
      %v698 = vpack.c.b16 %v688, %v687
      %v699 = vpack.c.b16 %v690, %v689
      %v700 = vpack.c.b16 %v692, %v691
      %v701 = vpack.c.b16 %v694, %v693
      %v702 = vpack.c.b16 %v695, %v695
      %v704 = vunpack.c.l.b16 %v669
      %v705 = vpack.c.b16 %v704, %v695
      %v707 = vshrl.u32 %v696, 16
      %v709 = vshll.u32 %v696, 16
      %v711 = vrot.slane %v709, 1
      %v712 = vor.u32 %v707, %v711
      %v714 = vshll.u32 %v697, 16
      %v716 = vrot.slane %v714, 1
      %v717 = vsel %vm477, %v712, %v716
      %v718 = vshrl.u32 %v697, 16
      %v720 = vor.u32 %v718, %v716
      %v722 = vshll.u32 %v698, 16
      %v724 = vrot.slane %v722, 1
      %v725 = vsel %vm477, %v720, %v724
      %v726 = vshrl.u32 %v698, 16
      %v728 = vor.u32 %v726, %v724
      %v730 = vshll.u32 %v699, 16
      %v732 = vrot.slane %v730, 1
      %v733 = vsel %vm477, %v728, %v732
      %v734 = vshrl.u32 %v699, 16
      %v736 = vor.u32 %v734, %v732
      %v738 = vshll.u32 %v700, 16
      %v740 = vrot.slane %v738, 1
      %v741 = vsel %vm477, %v736, %v740
      %v742 = vshrl.u32 %v700, 16
      %v744 = vor.u32 %v742, %v740
      %v746 = vshll.u32 %v701, 16
      %v748 = vrot.slane %v746, 1
      %v749 = vsel %vm477, %v744, %v748
      %v750 = vshrl.u32 %v701, 16
      %v752 = vor.u32 %v750, %v748
      %v754 = vshll.u32 %v705, 16
      %v756 = vrot.slane %v754, 1
      %v757 = vsel %vm477, %v752, %v756
      %v758 = vshrl.u32 %v705, 16
      %v760 = vor.u32 %v758, %v756
      %761 = vrot.lane.b32.xlu0 %v717, 8
      %v762 = vpop.permute.xlu0 %761
      %763 = vrot.lane.b32.xlu0 %v725, 8
      %v764 = vpop.permute.xlu0 %763
      %765 = vrot.lane.b32.xlu0 %v733, 8
      %v766 = vpop.permute.xlu0 %765
      %767 = vrot.lane.b32.xlu0 %v741, 8
      %v768 = vpop.permute.xlu0 %767
      %769 = vrot.lane.b32.xlu0 %v749, 8
      %v770 = vpop.permute.xlu0 %769
      %771 = vrot.lane.b32.xlu0 %v757, 8
      %v772 = vpop.permute.xlu0 %771
      %773 = vrot.lane.b32.xlu0 %v760, 8
      %v774 = vpop.permute.xlu0 %773
      %vm775 = vcmask 1046528
      %v776 = vrot.slane %v696, 1
      %v777 = vrot.slane %v697, 1
      %v778 = vsel %vm775, %v776, %v777
      %v779 = vrot.slane %v698, 1
      %v780 = vsel %vm775, %v777, %v779
      %v781 = vrot.slane %v699, 1
      %v782 = vsel %vm775, %v779, %v781
      %v783 = vrot.slane %v700, 1
      %v784 = vsel %vm775, %v781, %v783
      %v785 = vrot.slane %v701, 1
      %v786 = vsel %vm775, %v783, %v785
      %v787 = vrot.slane %v705, 1
      %v788 = vsel %vm775, %v785, %v787
      %789 = vrot.lane.b32.xlu0 %v778, 16
      %v790 = vpop.permute.xlu0 %789
      %791 = vrot.lane.b32.xlu0 %v780, 16
      %v792 = vpop.permute.xlu0 %791
      %793 = vrot.lane.b32.xlu0 %v782, 16
      %v794 = vpop.permute.xlu0 %793
      %795 = vrot.lane.b32.xlu0 %v784, 16
      %v796 = vpop.permute.xlu0 %795
      %797 = vrot.lane.b32.xlu0 %v786, 16
      %v798 = vpop.permute.xlu0 %797
      %799 = vrot.lane.b32.xlu0 %v788, 16
      %v800 = vpop.permute.xlu0 %799
      %801 = vrot.lane.b32.xlu0 %v787, 16
      %v802 = vpop.permute.xlu0 %801
      %v804 = vsel %vm532, %v696, %v762
      %v806 = vsel %vm532, %v697, %v764
      %v808 = vsel %vm532, %v698, %v766
      %v810 = vsel %vm532, %v699, %v768
      %v812 = vsel %vm532, %v700, %v770
      %v814 = vsel %vm532, %v701, %v772
      %v817 = vsel %vm532, %v702, %v774
      %vm818 = vcmask 130048
      %v820 = vsel %vm818, %v804, %v790
      %v822 = vsel %vm818, %v806, %v792
      %v824 = vsel %vm818, %v808, %v794
      %v826 = vsel %vm818, %v810, %v796
      %v828 = vsel %vm818, %v812, %v798
      %v830 = vsel %vm818, %v814, %v800
      %v832 = vsel %vm818, %v817, %v802
      %v833 = vld [vmem:[%s4] sm:$0xf]
      %v834 = vld [vmem:[%s4 + $0x4] sm:$0xf]
      %v835 = vld [vmem:[%s4 + $0x8] sm:$0xf]
      %v836 = vld [vmem:[%s5] sm:$0x1]
      %v838 = vperm.slane %v836, 0
      %v843 = vunpack.c.l.b16 %v833
      %v844 = vunpack.c.l.b16 %v834
      %v845 = vunpack.c.l.b16 %v835
      %v846 = vpack.c.b16 %v844, %v843
      %v847 = vpack.c.b16 %v845, %v845
      %vm849 = vcmask 195584
      %v850 = vsel %vm849, %v820, 0
      %v852 = vsel %vm849, %v822, 0
      %v854 = vsel %vm849, %v824, 0
      %v856 = vsel %vm849, %v826, 0
      %v858 = vsel %vm849, %v828, 0
      %v860 = vsel %vm849, %v830, 0
      %v862 = vsel %vm849, %v832, 0
      %v865 = vsel %vm467, %v847, 0
      %867 = vmatpush.bf16.msra.mxu0 0
      %868 = vmatpush.bf16.msra.mxu0 0
      %869 = vmatpush.bf16.msra.mxu0 0
      %870 = vmatpush.bf16.msra.mxu0 0
      %871 = vmatpush.bf16.msra.mxu0 0
      %872 = vmatpush.bf16.msra.mxu0 0
      %873 = vmatpush.bf16.msra.mxu0 %v865
      %874 = vmatpush.bf16.msra.mxu0 %v846
      %875 = vmatmul.bf16.gmra.mxu0 %v850
      %v876 = vpop.f32.mrf.mxu0
      %v877 = vadd.f32 %v838, %v876
      %v878 = vpop.f32.mrf.mxu0
      %v879 = vadd.f32 %v838, %v878
      %880 = vmatmul.bf16.gmra.mxu0 %v852
      %v881 = vpop.f32.mrf.mxu0
      %v882 = vadd.f32 %v838, %v881
      %v883 = vpop.f32.mrf.mxu0
      %v884 = vadd.f32 %v838, %v883
      %885 = vmatmul.bf16.gmra.mxu0 %v854
      %v886 = vpop.f32.mrf.mxu0
      %v887 = vadd.f32 %v838, %v886
      %v888 = vpop.f32.mrf.mxu0
      %v889 = vadd.f32 %v838, %v888
      %890 = vmatmul.bf16.gmra.mxu0 %v856
      %v891 = vpop.f32.mrf.mxu0
      %v892 = vadd.f32 %v838, %v891
      %v893 = vpop.f32.mrf.mxu0
      %v894 = vadd.f32 %v838, %v893
      %895 = vmatmul.bf16.gmra.mxu0 %v858
      %v896 = vpop.f32.mrf.mxu0
      %v897 = vadd.f32 %v838, %v896
      %v898 = vpop.f32.mrf.mxu0
      %v899 = vadd.f32 %v838, %v898
      %900 = vmatmul.bf16.gmra.mxu0 %v860
      %v901 = vpop.f32.mrf.mxu0
      %v902 = vadd.f32 %v838, %v901
      %v903 = vpop.f32.mrf.mxu0
      %v904 = vadd.f32 %v838, %v903
      %905 = vmatmul.bf16.gmra.mxu0 %v862
      %v906 = vpop.f32.mrf.mxu0
      %v907 = vadd.f32 %v838, %v906
      %v908 = vpop.f32.mrf.mxu0
      %909 = vdwg.mxu0
      %vm910 = vcmp.ge.f32.partialorder %v877, 0.0
      %vm911 = vcmp.ge.f32.partialorder %v879, 0.0
      %vm912 = vcmp.ge.f32.partialorder %v882, 0.0
      %vm913 = vcmp.ge.f32.partialorder %v884, 0.0
      %vm914 = vcmp.ge.f32.partialorder %v887, 0.0
      %vm915 = vcmp.ge.f32.partialorder %v889, 0.0
      %vm916 = vcmp.ge.f32.partialorder %v892, 0.0
      %vm917 = vcmp.ge.f32.partialorder %v894, 0.0
      %vm918 = vcmp.ge.f32.partialorder %v897, 0.0
      %vm919 = vcmp.ge.f32.partialorder %v899, 0.0
      %vm920 = vcmp.ge.f32.partialorder %v902, 0.0
      %vm921 = vcmp.ge.f32.partialorder %v904, 0.0
      %vm922 = vcmp.ge.f32.partialorder %v907, 0.0
      %v923 = vmul.f32 %v877, 0.2
      %v924 = vmul.f32 %v879, 0.2
      %v925 = vmul.f32 %v882, 0.2
      %v926 = vmul.f32 %v884, 0.2
      %v927 = vmul.f32 %v887, 0.2
      %v928 = vmul.f32 %v889, 0.2
      %v929 = vmul.f32 %v892, 0.2
      %v930 = vmul.f32 %v894, 0.2
      %v931 = vmul.f32 %v897, 0.2
      %v932 = vmul.f32 %v899, 0.2
      %v933 = vmul.f32 %v902, 0.2
      %v934 = vmul.f32 %v904, 0.2
      %v935 = vmul.f32 %v907, 0.2
      %v936 = vsel %vm910, %v877, %v923
      %v937 = vsel %vm911, %v879, %v924
      %v938 = vsel %vm912, %v882, %v925
      %v939 = vsel %vm913, %v884, %v926
      %v940 = vsel %vm914, %v887, %v927
      %v941 = vsel %vm915, %v889, %v928
      %v942 = vsel %vm916, %v892, %v929
      %v943 = vsel %vm917, %v894, %v930
      %v944 = vsel %vm918, %v897, %v931
      %v945 = vsel %vm919, %v899, %v932
      %v946 = vsel %vm920, %v902, %v933
      %v947 = vsel %vm921, %v904, %v934
      %v948 = vsel %vm922, %v907, %v935
      %v949 = vpack.c.bf16 %v937, %v936
      %v950 = vpack.c.bf16 %v939, %v938
      %v951 = vpack.c.bf16 %v941, %v940
      %v952 = vpack.c.bf16 %v943, %v942
      %v953 = vpack.c.bf16 %v945, %v944
      %v954 = vpack.c.bf16 %v947, %v946
      %v955 = vpack.c.bf16 %v948, %v948
      %v956 = vld [vmem:[%s6] sm:$0xf]
      %v957 = vld [vmem:[%s7] sm:$0x1]
      %v959 = vperm.slane %v957, 0
      %v962 = vsel %vm532, %v949, 0
      %v965 = vsel %vm532, %v950, 0
      %v968 = vsel %vm532, %v951, 0
      %v971 = vsel %vm532, %v952, 0
      %v974 = vsel %vm532, %v953, 0
      %v977 = vsel %vm532, %v954, 0
      %v980 = vsel %vm532, %v955, 0
      %v983 = vsel %vm467, %v956, 0
      %985 = vmatpush.bf16.msra.mxu0 0
      %986 = vmatpush.bf16.msra.mxu0 0
      %987 = vmatpush.bf16.msra.mxu0 0
      %988 = vmatpush.bf16.msra.mxu0 0
      %989 = vmatpush.bf16.msra.mxu0 0
      %990 = vmatpush.bf16.msra.mxu0 0
      %991 = vmatpush.bf16.msra.mxu0 0
      %992 = vmatpush.bf16.msra.mxu0 %v983
      %993 = vmatmul.bf16.gmra.mxu0 %v962
      %v994 = vpop.f32.mrf.mxu0
      %v995 = vadd.f32 %v959, %v994
      %v996 = vpop.f32.mrf.mxu0
      %v997 = vadd.f32 %v959, %v996
      %998 = vmatmul.bf16.gmra.mxu0 %v965
      %v999 = vpop.f32.mrf.mxu0
      %v1000 = vadd.f32 %v959, %v999
      %v1001 = vpop.f32.mrf.mxu0
      %v1002 = vadd.f32 %v959, %v1001
      %1003 = vmatmul.bf16.gmra.mxu0 %v968
      %v1004 = vpop.f32.mrf.mxu0
      %v1005 = vadd.f32 %v959, %v1004
      %v1006 = vpop.f32.mrf.mxu0
      %v1007 = vadd.f32 %v959, %v1006
      %1008 = vmatmul.bf16.gmra.mxu0 %v971
      %v1009 = vpop.f32.mrf.mxu0
      %v1010 = vadd.f32 %v959, %v1009
      %v1011 = vpop.f32.mrf.mxu0
      %v1012 = vadd.f32 %v959, %v1011
      %1013 = vmatmul.bf16.gmra.mxu0 %v974
      %v1014 = vpop.f32.mrf.mxu0
      %v1015 = vadd.f32 %v959, %v1014
      %v1016 = vpop.f32.mrf.mxu0
      %v1017 = vadd.f32 %v959, %v1016
      %1018 = vmatmul.bf16.gmra.mxu0 %v977
      %v1019 = vpop.f32.mrf.mxu0
      %v1020 = vadd.f32 %v959, %v1019
      %v1021 = vpop.f32.mrf.mxu0
      %v1022 = vadd.f32 %v959, %v1021
      %1023 = vmatmul.bf16.gmra.mxu0 %v980
      %v1024 = vpop.f32.mrf.mxu0
      %v1025 = vadd.f32 %v959, %v1024
      %v1026 = vpop.f32.mrf.mxu0
      %1027 = vdwg.mxu0
      %v1028 = vadd.f32 %v567, %v995
      %v1029 = vadd.f32 %v569, %v997
      %v1030 = vadd.f32 %v572, %v1000
      %v1031 = vadd.f32 %v574, %v1002
      %v1032 = vadd.f32 %v577, %v1005
      %v1033 = vadd.f32 %v579, %v1007
      %v1034 = vadd.f32 %v582, %v1010
      %v1035 = vadd.f32 %v584, %v1012
      %v1036 = vadd.f32 %v587, %v1015
      %v1037 = vadd.f32 %v589, %v1017
      %v1038 = vadd.f32 %v592, %v1020
      %v1039 = vadd.f32 %v594, %v1022
      %v1040 = vadd.f32 %v597, %v1025
      %v1041 = vpack.c.bf16 %v1028, %v1028
      %v1042 = vpack.c.bf16 %v1029, %v1029
      %v1043 = vpack.c.bf16 %v1030, %v1030
      %v1044 = vpack.c.bf16 %v1031, %v1031
      %v1045 = vpack.c.bf16 %v1032, %v1032
      %v1046 = vpack.c.bf16 %v1033, %v1033
      %v1047 = vpack.c.bf16 %v1034, %v1034
      %v1048 = vpack.c.bf16 %v1035, %v1035
      %v1049 = vpack.c.bf16 %v1036, %v1036
      %v1050 = vpack.c.bf16 %v1037, %v1037
      %v1051 = vpack.c.bf16 %v1038, %v1038
      %v1052 = vpack.c.bf16 %v1039, %v1039
      %v1053 = vpack.c.bf16 %v1040, %v1040
      %vm1054 = vcmask 60416
      %1055 = vst.msk [vmem:[%s408] sm:$0xf] %vm1054, %v1041
      %1056 = vst.msk [vmem:[%s408 + $0x4] sm:$0xf] %vm1054, %v1042
      %1057 = vst.msk [vmem:[%s408 + $0x8] sm:$0xf] %vm1054, %v1043
      %1058 = vst.msk [vmem:[%s408 + $0xc] sm:$0xf] %vm1054, %v1044
      %1059 = vst.msk [vmem:[%s408 + $0x10] sm:$0xf] %vm1054, %v1045
      %1060 = vst.msk [vmem:[%s408 + $0x14] sm:$0xf] %vm1054, %v1046
      %1061 = vst.msk [vmem:[%s408 + $0x18] sm:$0xf] %vm1054, %v1047
      %1062 = vst.msk [vmem:[%s408 + $0x1c] sm:$0xf] %vm1054, %v1048
      %1063 = vst.msk [vmem:[%s408 + $0x20] sm:$0xf] %vm1054, %v1049
      %1064 = vst.msk [vmem:[%s408 + $0x24] sm:$0xf] %vm1054, %v1050
      %1065 = vst.msk [vmem:[%s408 + $0x28] sm:$0xf] %vm1054, %v1051
      %1066 = vst.msk [vmem:[%s408 + $0x2c] sm:$0xf] %vm1054, %v1052
      %1067 = vst.msk [vmem:[%s408 + $0x30] sm:$0xf] %vm1054, %v1053
      %s1068 = smul.u32 13, %s24
      %p1069 = scmp.lt.s32.totalorder %s23, 1
      %s1070 = scalar_select %p1069, %s23, 1
      %p1071 = scmp.lt.s32.totalorder %s1068, 12
      %s1072 = scalar_select %p1071, %s1068, 12
      %s1073 = smul.addr %s1070, 13
      %s1074 = sadd.s32 %s1072, %s1073
      %s1075 = smul.addr %s1074, 4
      %s1076 = scalar_lea.vmem %s8, %s1075
      // Predicated region
      $region53: #{forward.23} parent=51 // pred_check
        %p1077 = pneg %p237
      $region54: #{forward.23} parent=51 // pred_check_branch
        %1079 = sbr.rel (%p1077) target = $region56
      $region55: #{forward.23} parent=51 // pred_region
        %s1080 = smul.u32 13, %s24
      $region56: #{forward.23} parent=51 // pred_fallthru
        _
    $region52: #{forward.23} parent=5 // pred_fallthru
      _
    %p1081 = scmp.le.s32.totalorder 2, %s14
    // Predicated region
    $region57: #{forward.23} parent=5 // pred_check
      %p1082 = pneg %p1081
    $region58: #{forward.23} parent=5 // pred_check_branch
      %1084 = sbr.rel (%p1082) target = $region60
    $region59: #{forward.23} parent=5 // pred_region
      %s1085 = ssub.s32 %s14, 2
      // Predicated region
      $region61: #{forward.23} parent=59 // pred_check
        %p1086 = pneg %p243
      $region62: #{forward.23} parent=59 // pred_check_branch
        %1088 = sbr.rel (%p1086) target = $region64
      $region63: #{forward.23} parent=59 // pred_region
        %s1089 = smul.u32 13, %s26
        %p1090 = scmp.lt.s32.totalorder %s25, 1
        %s1091 = scalar_select %p1090, %s25, 1
        %p1092 = scmp.lt.s32.totalorder %s1089, 12
        %s1093 = scalar_select %p1092, %s1089, 12
        %s1094 = smul.addr %s1091, 13
        %s1095 = sadd.s32 %s1093, %s1094
        %s1096 = smul.addr %s1095, 4
        %s1097 = scalar_lea.vmem %s8, %s1096
      $region64: #{forward.23} parent=59 // pred_fallthru
        _
    $region60: #{forward.23} parent=5 // pred_fallthru
      _
  $region6: #{forward.23} parent=0 // loop_footer
    %s18 = sadd.s32 1, %s14
  $region7: #{forward.23} parent=0 // loop_footer_branch
    %13 = sbr.rel target = $region3
  $region8: #{forward.23} parent=0 // loop_exit
    _

// kernel: forward.24
$region0: #{forward.24}
  #allocation0 [shape = 'u32[]', space=smem, size = 0x4, offset = 0x4, fixed_abs, tag = 'smem constant byte address 0x4 - core index']
  #allocation1 [shape = 'u32[72,128]{1,0:T(1,128)}', space=vmem, size = 0x9000, scoped, tag = 'internal scratch']
  %s0 = inlined_call_operand.vmem [shape: bf16[2,112,8], index: 0, kind: input, shape index: {}, may-alias: {0,1}]
  %s1 = inlined_call_operand.vmem [shape: bf16[2,112,8], index: 1, kind: input, shape index: {}, may-alias: {0,1}]
  %s2 = inlined_call_operand.vmem [shape: bf16[8,8], index: 2, kind: input, shape index: {}]
  %s3 = inlined_call_operand.vmem [shape: f32[1,8], index: 3, kind: input, shape index: {}]
  %s4 = inlined_call_operand.vmem [shape: bf16[24,8], index: 4, kind: input, shape index: {}]
  %s5 = inlined_call_operand.vmem [shape: f32[1,8], index: 5, kind: input, shape index: {}]
  %s6 = inlined_call_operand.vmem [shape: bf16[8,8], index: 6, kind: input, shape index: {}]
  %s7 = inlined_call_operand.vmem [shape: f32[1,8], index: 7, kind: input, shape index: {}]
  %s8 = inlined_call_operand.vmem [shape: bf16[2,104,8], index: 8, kind: output, shape index: {}]
  %s9 = sld [smem:[#allocation0]]
  $region65: #{forward.24} parent=0
    _
  %s11 = ssub.s32 1, %s9
  %s12 = scalar_select 0, %s11, %s9
  loop: start=0, step=1, limit=4
  $region2: #{forward.24} parent=0 // loop_pre_header
    _
  $region3: #{forward.24} parent=0 // loop_header
    %s14 = sphi 0, %s18
    %p15 = scmp.ge.s32.totalorder %s14, 4
    %s21 = sphi 0, %s33
    %s22 = sphi 0, %s29
    %s23 = sphi 0, %s21
    %s24 = sphi 0, %s22
    %s25 = sphi 0, %s23
    %s26 = sphi 0, %s24
    %s38 = sphi 0, %s40
    %s41 = sphi 0, %s38
    %s42 = sphi 0, %s41
    %s58 = sphi 0, %s42
    %s70 = sphi 0, %s72
    %s73 = sphi 0, %s70
    %s74 = sphi 0, %s73
    %s90 = sphi 0, %s74
    %s94 = sphi 0, %s94
    %s96 = sphi 0, %s94
    %s97 = sphi 0, %s96
    %s111 = sphi 0, %s97
    %s115 = sphi 0, %s115
    %s117 = sphi 0, %s115
    %s118 = sphi 0, %s117
    %s132 = sphi 0, %s118
    %s136 = sphi 0, %s136
    %s138 = sphi 0, %s136
    %s139 = sphi 0, %s138
    %s153 = sphi 0, %s139
    %s157 = sphi 0, %s157
    %s159 = sphi 0, %s157
    %s160 = sphi 0, %s159
    %s174 = sphi 0, %s160
    %s178 = sphi 0, %s178
    %s180 = sphi 0, %s178
    %s181 = sphi 0, %s180
    %s195 = sphi 0, %s181
    %s199 = sphi 0, %s199
    %s201 = sphi 0, %s199
    %s202 = sphi 0, %s201
    %s216 = sphi 0, %s202
    %s224 = sphi 0, %s226
    %s227 = sphi 0, %s224
    %s228 = sphi 0, %s227
    %s244 = sphi 0, %s228
  $region4: #{forward.24} parent=0 // loop_header_branch
    %17 = sbr.rel (%p15) target = $region8
  $region5: #{forward.24} parent=0 // loop_body
    %s19 = ssub.s32 %s14, 1
    %s20 = ssub.s32 %s14, 2
    %s27 = sadd.s32 1, %s22
    %p28 = scmp.ge.s32.totalorder %s27, 1
    %s29 = scalar_select %p28, 0, %s27
    %s30 = sadd.s32 1, %s21
    %s31 = scalar_select %p28, %s30, %s21
    %p32 = scmp.ge.s32.totalorder %s31, 2
    %s33 = scalar_select %p32, 0, %s31
    %s34 = ssub.s32 %s21, %s33
    %s35 = ssub.s32 %s22, %s29
    %s36 = sor.u32 %s34, %s35
    %p37 = scmp.eq.s32.totalorder %s36, 0
    %s39 = sadd.s32 %s38, 1
    %s40 = scalar_select %p37, %s38, %s39
    %p43 = pneg %p37
    %p44 = scmp.eq.s32.totalorder %s14, 1
    %p45 = por %p43, %p44
    %p46 = scmp.ne.s32.totalorder %s38, %s41
    %p47 = scmp.eq.s32.totalorder %s14, 0
    %p48 = por %p46, %p47
    %p49 = scmp.ne.s32.totalorder %s38, %s41
    %p50 = scmp.eq.s32.totalorder %s19, 1
    %p51 = por %p49, %p50
    %p52 = scmp.ne.s32.totalorder %s41, %s42
    %p53 = scmp.eq.s32.totalorder %s19, 0
    %p54 = por %p52, %p53
    %p55 = scmp.ne.s32.totalorder %s41, %s42
    %p56 = scmp.eq.s32.totalorder %s20, 1
    %p57 = por %p55, %p56
    %p59 = scmp.ne.s32.totalorder %s42, %s58
    %p60 = scmp.eq.s32.totalorder %s20, 0
    %p61 = por %p59, %p60
    %s62 = sadd.s32 %s22, 1
    %s63 = smul.u32 %s62, 13
    %s64 = sadd.s32 %s29, 1
    %s65 = smul.u32 %s64, 13
    %s66 = ssub.s32 %s21, %s33
    %s67 = ssub.s32 %s63, %s65
    %s68 = sor.u32 %s66, %s67
    %p69 = scmp.eq.s32.totalorder %s68, 0
    %s71 = sadd.s32 %s70, 1
    %s72 = scalar_select %p69, %s70, %s71
    %p75 = pneg %p69
    %p76 = scmp.eq.s32.totalorder %s14, 1
    %p77 = por %p75, %p76
    %p78 = scmp.ne.s32.totalorder %s70, %s73
    %p79 = scmp.eq.s32.totalorder %s14, 0
    %p80 = por %p78, %p79
    %p81 = scmp.ne.s32.totalorder %s70, %s73
    %p82 = scmp.eq.s32.totalorder %s19, 1
    %p83 = por %p81, %p82
    %p84 = scmp.ne.s32.totalorder %s73, %s74
    %p85 = scmp.eq.s32.totalorder %s19, 0
    %p86 = por %p84, %p85
    %p87 = scmp.ne.s32.totalorder %s73, %s74
    %p88 = scmp.eq.s32.totalorder %s20, 1
    %p89 = por %p87, %p88
    %p91 = scmp.ne.s32.totalorder %s74, %s90
    %p92 = scmp.eq.s32.totalorder %s20, 0
    %p93 = por %p91, %p92
    %s95 = sadd.s32 %s94, 1
    %p98 = scmp.eq.s32.totalorder %s14, 1
    %p99 = scmp.ne.s32.totalorder %s94, %s96
    %p100 = scmp.eq.s32.totalorder %s14, 0
    %p101 = por %p99, %p100
    %p102 = scmp.ne.s32.totalorder %s94, %s96
    %p103 = scmp.eq.s32.totalorder %s19, 1
    %p104 = por %p102, %p103
    %p105 = scmp.ne.s32.totalorder %s96, %s97
    %p106 = scmp.eq.s32.totalorder %s19, 0
    %p107 = por %p105, %p106
    %p108 = scmp.ne.s32.totalorder %s96, %s97
    %p109 = scmp.eq.s32.totalorder %s20, 1
    %p110 = por %p108, %p109
    %p112 = scmp.ne.s32.totalorder %s97, %s111
    %p113 = scmp.eq.s32.totalorder %s20, 0
    %p114 = por %p112, %p113
    %s116 = sadd.s32 %s115, 1
    %p119 = scmp.eq.s32.totalorder %s14, 1
    %p120 = scmp.ne.s32.totalorder %s115, %s117
    %p121 = scmp.eq.s32.totalorder %s14, 0
    %p122 = por %p120, %p121
    %p123 = scmp.ne.s32.totalorder %s115, %s117
    %p124 = scmp.eq.s32.totalorder %s19, 1
    %p125 = por %p123, %p124
    %p126 = scmp.ne.s32.totalorder %s117, %s118
    %p127 = scmp.eq.s32.totalorder %s19, 0
    %p128 = por %p126, %p127
    %p129 = scmp.ne.s32.totalorder %s117, %s118
    %p130 = scmp.eq.s32.totalorder %s20, 1
    %p131 = por %p129, %p130
    %p133 = scmp.ne.s32.totalorder %s118, %s132
    %p134 = scmp.eq.s32.totalorder %s20, 0
    %p135 = por %p133, %p134
    %s137 = sadd.s32 %s136, 1
    %p140 = scmp.eq.s32.totalorder %s14, 1
    %p141 = scmp.ne.s32.totalorder %s136, %s138
    %p142 = scmp.eq.s32.totalorder %s14, 0
    %p143 = por %p141, %p142
    %p144 = scmp.ne.s32.totalorder %s136, %s138
    %p145 = scmp.eq.s32.totalorder %s19, 1
    %p146 = por %p144, %p145
    %p147 = scmp.ne.s32.totalorder %s138, %s139
    %p148 = scmp.eq.s32.totalorder %s19, 0
    %p149 = por %p147, %p148
    %p150 = scmp.ne.s32.totalorder %s138, %s139
    %p151 = scmp.eq.s32.totalorder %s20, 1
    %p152 = por %p150, %p151
    %p154 = scmp.ne.s32.totalorder %s139, %s153
    %p155 = scmp.eq.s32.totalorder %s20, 0
    %p156 = por %p154, %p155
    %s158 = sadd.s32 %s157, 1
    %p161 = scmp.eq.s32.totalorder %s14, 1
    %p162 = scmp.ne.s32.totalorder %s157, %s159
    %p163 = scmp.eq.s32.totalorder %s14, 0
    %p164 = por %p162, %p163
    %p165 = scmp.ne.s32.totalorder %s157, %s159
    %p166 = scmp.eq.s32.totalorder %s19, 1
    %p167 = por %p165, %p166
    %p168 = scmp.ne.s32.totalorder %s159, %s160
    %p169 = scmp.eq.s32.totalorder %s19, 0
    %p170 = por %p168, %p169
    %p171 = scmp.ne.s32.totalorder %s159, %s160
    %p172 = scmp.eq.s32.totalorder %s20, 1
    %p173 = por %p171, %p172
    %p175 = scmp.ne.s32.totalorder %s160, %s174
    %p176 = scmp.eq.s32.totalorder %s20, 0
    %p177 = por %p175, %p176
    %s179 = sadd.s32 %s178, 1
    %p182 = scmp.eq.s32.totalorder %s14, 1
    %p183 = scmp.ne.s32.totalorder %s178, %s180
    %p184 = scmp.eq.s32.totalorder %s14, 0
    %p185 = por %p183, %p184
    %p186 = scmp.ne.s32.totalorder %s178, %s180
    %p187 = scmp.eq.s32.totalorder %s19, 1
    %p188 = por %p186, %p187
    %p189 = scmp.ne.s32.totalorder %s180, %s181
    %p190 = scmp.eq.s32.totalorder %s19, 0
    %p191 = por %p189, %p190
    %p192 = scmp.ne.s32.totalorder %s180, %s181
    %p193 = scmp.eq.s32.totalorder %s20, 1
    %p194 = por %p192, %p193
    %p196 = scmp.ne.s32.totalorder %s181, %s195
    %p197 = scmp.eq.s32.totalorder %s20, 0
    %p198 = por %p196, %p197
    %s200 = sadd.s32 %s199, 1
    %p203 = scmp.eq.s32.totalorder %s14, 1
    %p204 = scmp.ne.s32.totalorder %s199, %s201
    %p205 = scmp.eq.s32.totalorder %s14, 0
    %p206 = por %p204, %p205
    %p207 = scmp.ne.s32.totalorder %s199, %s201
    %p208 = scmp.eq.s32.totalorder %s19, 1
    %p209 = por %p207, %p208
    %p210 = scmp.ne.s32.totalorder %s201, %s202
    %p211 = scmp.eq.s32.totalorder %s19, 0
    %p212 = por %p210, %p211
    %p213 = scmp.ne.s32.totalorder %s201, %s202
    %p214 = scmp.eq.s32.totalorder %s20, 1
    %p215 = por %p213, %p214
    %p217 = scmp.ne.s32.totalorder %s202, %s216
    %p218 = scmp.eq.s32.totalorder %s20, 0
    %p219 = por %p217, %p218
    %s220 = ssub.s32 %s21, %s33
    %s221 = ssub.s32 %s22, %s29
    %s222 = sor.u32 %s220, %s221
    %p223 = scmp.eq.s32.totalorder %s222, 0
    %s225 = sadd.s32 %s224, 1
    %s226 = scalar_select %p223, %s224, %s225
    %p229 = pneg %p223
    %p230 = scmp.eq.s32.totalorder %s14, 1
    %p231 = por %p229, %p230
    %p232 = scmp.ne.s32.totalorder %s224, %s227
    %p233 = scmp.eq.s32.totalorder %s14, 0
    %p234 = por %p232, %p233
    %p235 = scmp.ne.s32.totalorder %s224, %s227
    %p236 = scmp.eq.s32.totalorder %s19, 1
    %p237 = por %p235, %p236
    %p238 = scmp.ne.s32.totalorder %s227, %s228
    %p239 = scmp.eq.s32.totalorder %s19, 0
    %p240 = por %p238, %p239
    %p241 = scmp.ne.s32.totalorder %s227, %s228
    %p242 = scmp.eq.s32.totalorder %s20, 1
    %p243 = por %p241, %p242
    %p245 = scmp.ne.s32.totalorder %s228, %s244
    %p246 = scmp.eq.s32.totalorder %s20, 0
    %p247 = por %p245, %p246
    %p248 = scmp.le.s32.totalorder 1, %s14
    %p249 = scmp.lt.s32.totalorder %s14, 3
    %p250 = pnand %p248, %p249
    %p251 = pneg %p250
    // Predicated region
    $region9: #{forward.24} parent=5 // pred_check
      _
    $region10: #{forward.24} parent=5 // pred_check_branch
      %253 = sbr.rel (%p250) target = $region12
    $region11: #{forward.24} parent=5 // pred_region
      %s254 = ssub.s32 %s14, 1
      // Predicated region
      $region13: #{forward.24} parent=11 // pred_check
        %p255 = pneg %p107
      $region14: #{forward.24} parent=11 // pred_check_branch
        %257 = sbr.rel (%p255) target = $region16
      $region15: #{forward.24} parent=11 // pred_region
        _
      $region16: #{forward.24} parent=11 // pred_fallthru
        _
      // Predicated region
      $region17: #{forward.24} parent=11 // pred_check
        %p258 = pneg %p128
      $region18: #{forward.24} parent=11 // pred_check_branch
        %260 = sbr.rel (%p258) target = $region20
      $region19: #{forward.24} parent=11 // pred_region
        _
      $region20: #{forward.24} parent=11 // pred_fallthru
        _
      // Predicated region
      $region21: #{forward.24} parent=11 // pred_check
        %p261 = pneg %p149
      $region22: #{forward.24} parent=11 // pred_check_branch
        %263 = sbr.rel (%p261) target = $region24
      $region23: #{forward.24} parent=11 // pred_region
        _
      $region24: #{forward.24} parent=11 // pred_fallthru
        _
      // Predicated region
      $region25: #{forward.24} parent=11 // pred_check
        %p264 = pneg %p170
      $region26: #{forward.24} parent=11 // pred_check_branch
        %266 = sbr.rel (%p264) target = $region28
      $region27: #{forward.24} parent=11 // pred_region
        _
      $region28: #{forward.24} parent=11 // pred_fallthru
        _
      // Predicated region
      $region29: #{forward.24} parent=11 // pred_check
        %p267 = pneg %p191
      $region30: #{forward.24} parent=11 // pred_check_branch
        %269 = sbr.rel (%p267) target = $region32
      $region31: #{forward.24} parent=11 // pred_region
        _
      $region32: #{forward.24} parent=11 // pred_fallthru
        _
      // Predicated region
      $region33: #{forward.24} parent=11 // pred_check
        %p270 = pneg %p212
      $region34: #{forward.24} parent=11 // pred_check_branch
        %272 = sbr.rel (%p270) target = $region36
      $region35: #{forward.24} parent=11 // pred_region
        _
      $region36: #{forward.24} parent=11 // pred_fallthru
        _
    $region12: #{forward.24} parent=5 // pred_fallthru
      _
    %p273 = scmp.lt.s32.totalorder %s14, 2
    // Predicated region
    $region37: #{forward.24} parent=5 // pred_check
      %p274 = pneg %p273
    $region38: #{forward.24} parent=5 // pred_check_branch
      %276 = sbr.rel (%p274) target = $region40
    $region39: #{forward.24} parent=5 // pred_region
      // Predicated region
      $region41: #{forward.24} parent=39 // pred_check
        %p277 = pneg %p48
      $region42: #{forward.24} parent=39 // pred_check_branch
        %279 = sbr.rel (%p277) target = $region44
      $region43: #{forward.24} parent=39 // pred_region
        %s280 = smul.u32 13, %s22
        %s281 = ssub.s32 14, %s280
        %p282 = scmp.lt.s32.totalorder %s281, 13
        %s283 = scalar_select %p282, %s281, 13
        %s284 = smul.u32 4, %s283
        %p285 = scmp.lt.s32.totalorder %s21, 1
        %s286 = scalar_select %p285, %s21, 1
        %p287 = scmp.lt.s32.totalorder %s280, 13
        %s288 = scalar_select %p287, %s280, 13
        %s289 = smul.addr %s286, 14
        %s290 = sadd.s32 %s288, %s289
        %s291 = smul.addr %s290, 4
        %s292 = scalar_lea.vmem %s0, %s291
        %s293 = smul.u32 13, %s22
        %s294 = ssub.s32 14, %s293
        %p295 = scmp.lt.s32.totalorder %s294, 13
        %s296 = scalar_select %p295, %s294, 13
        %s297 = smul.u32 4, %s296
      $region44: #{forward.24} parent=39 // pred_fallthru
        _
      // Predicated region
      $region45: #{forward.24} parent=39 // pred_check
        %p298 = pneg %p80
      $region46: #{forward.24} parent=39 // pred_check_branch
        %300 = sbr.rel (%p298) target = $region48
      $region47: #{forward.24} parent=39 // pred_region
        %s301 = sadd.s32 %s22, 1
        %s302 = smul.u32 %s301, 13
        %p303 = scmp.lt.s32.totalorder %s21, 1
        %s304 = scalar_select %p303, %s21, 1
        %p305 = scmp.lt.s32.totalorder %s302, 13
        %s306 = scalar_select %p305, %s302, 13
        %s307 = smul.addr %s304, 14
        %s308 = sadd.s32 %s306, %s307
        %s309 = smul.addr %s308, 4
        %s310 = scalar_lea.vmem %s1, %s309
        %s311 = sadd.s32 %s22, 1
        %s312 = smul.u32 %s311, 13
      $region48: #{forward.24} parent=39 // pred_fallthru
        _
    $region40: #{forward.24} parent=5 // pred_fallthru
      _
    %p313 = scmp.le.s32.totalorder 1, %s14
    %p314 = scmp.lt.s32.totalorder %s14, 3
    %p315 = pnand %p313, %p314
    %p316 = pneg %p315
    // Predicated region
    $region49: #{forward.24} parent=5 // pred_check
      _
    $region50: #{forward.24} parent=5 // pred_check_branch
      %318 = sbr.rel (%p315) target = $region52
    $region51: #{forward.24} parent=5 // pred_region
      %s319 = ssub.s32 %s14, 1
      %s320 = smul.u32 13, %s24
      %s321 = ssub.s32 14, %s320
      %p322 = scmp.lt.s32.totalorder %s321, 13
      %s323 = scalar_select %p322, %s321, 13
      %s324 = smul.u32 4, %s323
      %p325 = scmp.lt.s32.totalorder %s23, 1
      %s326 = scalar_select %p325, %s23, 1
      %p327 = scmp.lt.s32.totalorder %s320, 13
      %s328 = scalar_select %p327, %s320, 13
      %s329 = smul.addr %s326, 14
      %s330 = sadd.s32 %s328, %s329
      %s331 = smul.addr %s330, 4
      %s332 = scalar_lea.vmem %s0, %s331
      %p333 = pneg %p54
      %p334 = pneg %p51
      %s335 = sadd.s32 %s24, 1
      %s336 = smul.u32 %s335, 13
      %p337 = scmp.lt.s32.totalorder %s23, 1
      %s338 = scalar_select %p337, %s23, 1
      %p339 = scmp.lt.s32.totalorder %s336, 13
      %s340 = scalar_select %p339, %s336, 13
      %s341 = smul.addr %s338, 14
      %s342 = sadd.s32 %s340, %s341
      %s343 = smul.addr %s342, 4
      %s344 = scalar_lea.vmem %s1, %s343
      %p345 = pneg %p86
      %p346 = pneg %p83
      %p347 = pneg %p107
      %p348 = pneg %p104
      %p349 = pneg %p128
      %p350 = pneg %p125
      %p351 = pneg %p149
      %p352 = pneg %p146
      %p353 = pneg %p170
      %p354 = pneg %p167
      %p355 = pneg %p191
      %p356 = pneg %p188
      %p357 = pneg %p212
      %p358 = pneg %p209
      %p359 = pneg %p240
      %p360 = pneg %p237
      %s361 = smul.u32 13, %s24
      %p362 = scmp.lt.s32.totalorder %s23, 1
      %s363 = scalar_select %p362, %s23, 1
      %p364 = scmp.lt.s32.totalorder %s361, 12
      %s365 = scalar_select %p364, %s361, 12
      %s366 = smul.addr %s363, 13
      %s367 = sadd.s32 %s365, %s366
      %s368 = smul.addr %s367, 4
      %s369 = scalar_lea.vmem %s8, %s368
      %s370 = smul.u32 13, %s24
      %s371 = ssub.s32 14, %s370
      %p372 = scmp.lt.s32.totalorder %s371, 13
      %s373 = scalar_select %p372, %s371, 13
      %s374 = smul.u32 4, %s373
      %p375 = scmp.lt.s32.totalorder %s23, 1
      %s376 = scalar_select %p375, %s23, 1
      %p377 = scmp.lt.s32.totalorder %s370, 13
      %s378 = scalar_select %p377, %s370, 13
      %s379 = smul.addr %s376, 14
      %s380 = sadd.s32 %s378, %s379
      %s381 = smul.addr %s380, 4
      %s382 = scalar_lea.vmem %s0, %s381
      %s383 = smul.u32 13, %s24
      %s384 = ssub.s32 14, %s383
      %p385 = scmp.lt.s32.totalorder %s384, 13
      %s386 = scalar_select %p385, %s384, 13
      %s387 = smul.u32 4, %s386
      %s388 = sadd.s32 %s24, 1
      %s389 = smul.u32 %s388, 13
      %p390 = scmp.lt.s32.totalorder %s23, 1
      %s391 = scalar_select %p390, %s23, 1
      %p392 = scmp.lt.s32.totalorder %s389, 13
      %s393 = scalar_select %p392, %s389, 13
      %s394 = smul.addr %s391, 14
      %s395 = sadd.s32 %s393, %s394
      %s396 = smul.addr %s395, 4
      %s397 = scalar_lea.vmem %s1, %s396
      %s398 = sadd.s32 %s24, 1
      %s399 = smul.u32 %s398, 13
      %s400 = smul.u32 13, %s24
      %p401 = scmp.lt.s32.totalorder %s23, 1
      %s402 = scalar_select %p401, %s23, 1
      %p403 = scmp.lt.s32.totalorder %s400, 12
      %s404 = scalar_select %p403, %s400, 12
      %s405 = smul.addr %s402, 13
      %s406 = sadd.s32 %s404, %s405
      %s407 = smul.addr %s406, 4
      %s408 = scalar_lea.vmem %s8, %s407
      %s409 = smul.u32 13, %s24
      %v411 = vld [vmem:[%s382] sm:$0xf]
      %v412 = vld [vmem:[%s382 + $0x4] sm:$0xf]
      %v413 = vld [vmem:[%s382 + $0x8] sm:$0xf]
      %v414 = vld [vmem:[%s382 + $0xc] sm:$0xf]
      %v415 = vld [vmem:[%s382 + $0x10] sm:$0xf]
      %v416 = vld [vmem:[%s382 + $0x14] sm:$0xf]
      %v417 = vld [vmem:[%s382 + $0x18] sm:$0xf]
      %v418 = vld [vmem:[%s382 + $0x1c] sm:$0xf]
      %v419 = vld [vmem:[%s382 + $0x20] sm:$0xf]
      %v420 = vld [vmem:[%s382 + $0x24] sm:$0xf]
      %v421 = vld [vmem:[%s382 + $0x28] sm:$0xf]
      %v422 = vld [vmem:[%s382 + $0x2c] sm:$0xf]
      %v423 = vld [vmem:[%s382 + $0x30] sm:$0xf]
      %v424 = vld [vmem:[%s397] sm:$0xf]
      %v438 = vunpack.c.l.b16 %v411
      %v439 = vunpack.c.l.b16 %v412
      %v440 = vunpack.c.l.b16 %v413
      %v441 = vunpack.c.l.b16 %v414
      %v442 = vunpack.c.l.b16 %v415
      %v443 = vunpack.c.l.b16 %v416
      %v444 = vunpack.c.l.b16 %v417
      %v445 = vunpack.c.l.b16 %v418
      %v446 = vunpack.c.l.b16 %v419
      %v447 = vunpack.c.l.b16 %v420
      %v448 = vunpack.c.l.b16 %v421
      %v449 = vunpack.c.l.b16 %v422
      %v450 = vunpack.c.l.b16 %v423
      %v451 = vpack.c.b16 %v439, %v438
      %v452 = vpack.c.b16 %v441, %v440
      %v453 = vpack.c.b16 %v443, %v442
      %v454 = vpack.c.b16 %v445, %v444
      %v455 = vpack.c.b16 %v447, %v446
      %v456 = vpack.c.b16 %v449, %v448
      %v457 = vpack.c.b16 %v450, %v450
      %v465 = vunpack.c.l.b16 %v424
      %v466 = vpack.c.b16 %v465, %v465
      %vm467 = vcmask 1043456
      %v470 = vsel %vm467, %v457, %v466
      %v472 = vld [vmem:[%s2] sm:$0xf]
      %v473 = vld [vmem:[%s3] sm:$0x1]
      %v475 = vperm.slane %v473, 0
      %vm477 = vsmask.f32 6400
      %v479 = vshrl.u32 %v451, 16
      %v481 = vrot.slane %v479, 1
      %v482 = vshll.u32 %v451, 16
      %v484 = vrot.slane %v482, 2
      %v485 = vor.u32 %v481, %v484
      %v487 = vshrl.u32 %v452, 16
      %v489 = vrot.slane %v487, 1
      %v490 = vshll.u32 %v452, 16
      %v492 = vrot.slane %v490, 2
      %v493 = vor.u32 %v489, %v492
      %v494 = vsel %vm477, %v485, %v493
      %v496 = vshrl.u32 %v453, 16
      %v498 = vrot.slane %v496, 1
      %v499 = vshll.u32 %v453, 16
      %v501 = vrot.slane %v499, 2
      %v502 = vor.u32 %v498, %v501
      %v503 = vsel %vm477, %v493, %v502
      %v505 = vshrl.u32 %v454, 16
      %v507 = vrot.slane %v505, 1
      %v508 = vshll.u32 %v454, 16
      %v510 = vrot.slane %v508, 2
      %v511 = vor.u32 %v507, %v510
      %v512 = vsel %vm477, %v502, %v511
      %v514 = vshrl.u32 %v455, 16
      %v516 = vrot.slane %v514, 1
      %v517 = vshll.u32 %v455, 16
      %v519 = vrot.slane %v517, 2
      %v520 = vor.u32 %v516, %v519
      %v521 = vsel %vm477, %v511, %v520
      %v523 = vshrl.u32 %v456, 16
      %v525 = vrot.slane %v523, 1
      %v526 = vshll.u32 %v456, 16
      %v528 = vrot.slane %v526, 2
      %v529 = vor.u32 %v525, %v528
      %v530 = vsel %vm477, %v520, %v529
      %v531 = vshrl.u32 %v470, 16
      %v533 = vrot.slane %v531, 1
      %v534 = vshll.u32 %v470, 16
      %v536 = vrot.slane %v534, 2
      %v537 = vor.u32 %v533, %v536
      %v538 = vsel %vm477, %v529, %v537
      %vm539 = vcmask 64512
      %v541 = vsel %vm539, %v494, 0
      %v544 = vsel %vm539, %v503, 0
      %v547 = vsel %vm539, %v512, 0
      %v550 = vsel %vm539, %v521, 0
      %v553 = vsel %vm539, %v530, 0
      %v556 = vsel %vm539, %v538, 0
      %v559 = vsel %vm539, %v537, 0
      %v562 = vsel %vm467, %v472, 0
      %564 = vmatpush.bf16.msra.mxu0 0
      %565 = vmatpush.bf16.msra.mxu0 0
      %566 = vmatpush.bf16.msra.mxu0 0
      %567 = vmatpush.bf16.msra.mxu0 0
      %568 = vmatpush.bf16.msra.mxu0 0
      %569 = vmatpush.bf16.msra.mxu0 0
      %570 = vmatpush.bf16.msra.mxu0 0
      %571 = vmatpush.bf16.msra.mxu0 %v562
      %572 = vmatmul.bf16.gmra.mxu0 %v541
      %v573 = vpop.f32.mrf.mxu0
      %v574 = vadd.f32 %v475, %v573
      %v575 = vpop.f32.mrf.mxu0
      %v576 = vadd.f32 %v475, %v575
      %577 = vmatmul.bf16.gmra.mxu0 %v544
      %v578 = vpop.f32.mrf.mxu0
      %v579 = vadd.f32 %v475, %v578
      %v580 = vpop.f32.mrf.mxu0
      %v581 = vadd.f32 %v475, %v580
      %582 = vmatmul.bf16.gmra.mxu0 %v547
      %v583 = vpop.f32.mrf.mxu0
      %v584 = vadd.f32 %v475, %v583
      %v585 = vpop.f32.mrf.mxu0
      %v586 = vadd.f32 %v475, %v585
      %587 = vmatmul.bf16.gmra.mxu0 %v550
      %v588 = vpop.f32.mrf.mxu0
      %v589 = vadd.f32 %v475, %v588
      %v590 = vpop.f32.mrf.mxu0
      %v591 = vadd.f32 %v475, %v590
      %592 = vmatmul.bf16.gmra.mxu0 %v553
      %v593 = vpop.f32.mrf.mxu0
      %v594 = vadd.f32 %v475, %v593
      %v595 = vpop.f32.mrf.mxu0
      %v596 = vadd.f32 %v475, %v595
      %597 = vmatmul.bf16.gmra.mxu0 %v556
      %v598 = vpop.f32.mrf.mxu0
      %v599 = vadd.f32 %v475, %v598
      %v600 = vpop.f32.mrf.mxu0
      %v601 = vadd.f32 %v475, %v600
      %602 = vmatmul.bf16.gmra.mxu0 %v559
      %v603 = vpop.f32.mrf.mxu0
      %v604 = vadd.f32 %v475, %v603
      %v605 = vpop.f32.mrf.mxu0
      %606 = vdwg.mxu0
      %v607 = vunpack.c.l.bf16 %v451
      %v608 = vunpack.c.h.bf16 %v451
      %v609 = vunpack.c.l.bf16 %v452
      %v610 = vunpack.c.h.bf16 %v452
      %v611 = vunpack.c.l.bf16 %v453
      %v612 = vunpack.c.h.bf16 %v453
      %v613 = vunpack.c.l.bf16 %v454
      %v614 = vunpack.c.h.bf16 %v454
      %v615 = vunpack.c.l.bf16 %v455
      %v616 = vunpack.c.h.bf16 %v455
      %v617 = vunpack.c.l.bf16 %v456
      %v618 = vunpack.c.h.bf16 %v456
      %v619 = vunpack.c.l.bf16 %v470
      %v620 = vunpack.c.h.bf16 %v470
      %vm621 = vcmp.ge.f32.partialorder %v607, 0.0
      %vm622 = vcmp.ge.f32.partialorder %v608, 0.0
      %vm623 = vcmp.ge.f32.partialorder %v609, 0.0
      %vm624 = vcmp.ge.f32.partialorder %v610, 0.0
      %vm625 = vcmp.ge.f32.partialorder %v611, 0.0
      %vm626 = vcmp.ge.f32.partialorder %v612, 0.0
      %vm627 = vcmp.ge.f32.partialorder %v613, 0.0
      %vm628 = vcmp.ge.f32.partialorder %v614, 0.0
      %vm629 = vcmp.ge.f32.partialorder %v615, 0.0
      %vm630 = vcmp.ge.f32.partialorder %v616, 0.0
      %vm631 = vcmp.ge.f32.partialorder %v617, 0.0
      %vm632 = vcmp.ge.f32.partialorder %v618, 0.0
      %vm633 = vcmp.ge.f32.partialorder %v619, 0.0
      %vm634 = vcmp.ge.f32.partialorder %v620, 0.0
      %v635 = vmul.f32 %v607, 0.2
      %v636 = vmul.f32 %v608, 0.2
      %v637 = vmul.f32 %v609, 0.2
      %v638 = vmul.f32 %v610, 0.2
      %v639 = vmul.f32 %v611, 0.2
      %v640 = vmul.f32 %v612, 0.2
      %v641 = vmul.f32 %v613, 0.2
      %v642 = vmul.f32 %v614, 0.2
      %v643 = vmul.f32 %v615, 0.2
      %v644 = vmul.f32 %v616, 0.2
      %v645 = vmul.f32 %v617, 0.2
      %v646 = vmul.f32 %v618, 0.2
      %v647 = vmul.f32 %v619, 0.2
      %v648 = vmul.f32 %v620, 0.2
      %v649 = vsel %vm621, %v607, %v635
      %v650 = vsel %vm622, %v608, %v636
      %v651 = vsel %vm623, %v609, %v637
      %v652 = vsel %vm624, %v610, %v638
      %v653 = vsel %vm625, %v611, %v639
      %v654 = vsel %vm626, %v612, %v640
      %v655 = vsel %vm627, %v613, %v641
      %v656 = vsel %vm628, %v614, %v642
      %v657 = vsel %vm629, %v615, %v643
      %v658 = vsel %vm630, %v616, %v644
      %v659 = vsel %vm631, %v617, %v645
      %v660 = vsel %vm632, %v618, %v646
      %v661 = vsel %vm633, %v619, %v647
      %v662 = vsel %vm634, %v620, %v648
      %v663 = vpack.c.bf16 %v649, %v649
      %v664 = vpack.c.bf16 %v650, %v650
      %v665 = vpack.c.bf16 %v651, %v651
      %v666 = vpack.c.bf16 %v652, %v652
      %v667 = vpack.c.bf16 %v653, %v653
      %v668 = vpack.c.bf16 %v654, %v654
      %v669 = vpack.c.bf16 %v655, %v655
      %v670 = vpack.c.bf16 %v656, %v656
      %v671 = vpack.c.bf16 %v657, %v657
      %v672 = vpack.c.bf16 %v658, %v658
      %v673 = vpack.c.bf16 %v659, %v659
      %v674 = vpack.c.bf16 %v660, %v660
      %v675 = vpack.c.bf16 %v661, %v661
      %v676 = vpack.c.bf16 %v662, %v662
      %v690 = vunpack.c.l.b16 %v663
      %v691 = vunpack.c.l.b16 %v664
      %v692 = vunpack.c.l.b16 %v665
      %v693 = vunpack.c.l.b16 %v666
      %v694 = vunpack.c.l.b16 %v667
      %v695 = vunpack.c.l.b16 %v668
      %v696 = vunpack.c.l.b16 %v669
      %v697 = vunpack.c.l.b16 %v670
      %v698 = vunpack.c.l.b16 %v671
      %v699 = vunpack.c.l.b16 %v672
      %v700 = vunpack.c.l.b16 %v673
      %v701 = vunpack.c.l.b16 %v674
      %v702 = vunpack.c.l.b16 %v675
      %v703 = vpack.c.b16 %v691, %v690
      %v704 = vpack.c.b16 %v693, %v692
      %v705 = vpack.c.b16 %v695, %v694
      %v706 = vpack.c.b16 %v697, %v696
      %v707 = vpack.c.b16 %v699, %v698
      %v708 = vpack.c.b16 %v701, %v700
      %v709 = vpack.c.b16 %v702, %v702
      %v711 = vunpack.c.l.b16 %v676
      %v712 = vpack.c.b16 %v711, %v702
      %v714 = vshrl.u32 %v703, 16
      %v716 = vrot.slane %v714, 1
      %v717 = vshll.u32 %v703, 16
      %v719 = vrot.slane %v717, 2
      %v720 = vor.u32 %v716, %v719
      %v722 = vshrl.u32 %v704, 16
      %v724 = vrot.slane %v722, 1
      %v725 = vshll.u32 %v704, 16
      %v727 = vrot.slane %v725, 2
      %v728 = vor.u32 %v724, %v727
      %v729 = vsel %vm477, %v720, %v728
      %v731 = vshrl.u32 %v705, 16
      %v733 = vrot.slane %v731, 1
      %v734 = vshll.u32 %v705, 16
      %v736 = vrot.slane %v734, 2
      %v737 = vor.u32 %v733, %v736
      %v738 = vsel %vm477, %v728, %v737
      %v740 = vshrl.u32 %v706, 16
      %v742 = vrot.slane %v740, 1
      %v743 = vshll.u32 %v706, 16
      %v745 = vrot.slane %v743, 2
      %v746 = vor.u32 %v742, %v745
      %v747 = vsel %vm477, %v737, %v746
      %v749 = vshrl.u32 %v707, 16
      %v751 = vrot.slane %v749, 1
      %v752 = vshll.u32 %v707, 16
      %v754 = vrot.slane %v752, 2
      %v755 = vor.u32 %v751, %v754
      %v756 = vsel %vm477, %v746, %v755
      %v758 = vshrl.u32 %v708, 16
      %v760 = vrot.slane %v758, 1
      %v761 = vshll.u32 %v708, 16
      %v763 = vrot.slane %v761, 2
      %v764 = vor.u32 %v760, %v763
      %v765 = vsel %vm477, %v755, %v764
      %v767 = vshrl.u32 %v712, 16
      %v769 = vrot.slane %v767, 1
      %v770 = vshll.u32 %v712, 16
      %v772 = vrot.slane %v770, 2
      %v773 = vor.u32 %v769, %v772
      %v774 = vsel %vm477, %v764, %v773
      %775 = vrot.lane.b32.xlu0 %v729, 8
      %v776 = vpop.permute.xlu0 %775
      %777 = vrot.lane.b32.xlu0 %v738, 8
      %v778 = vpop.permute.xlu0 %777
      %779 = vrot.lane.b32.xlu0 %v747, 8
      %v780 = vpop.permute.xlu0 %779
      %781 = vrot.lane.b32.xlu0 %v756, 8
      %v782 = vpop.permute.xlu0 %781
      %783 = vrot.lane.b32.xlu0 %v765, 8
      %v784 = vpop.permute.xlu0 %783
      %785 = vrot.lane.b32.xlu0 %v774, 8
      %v786 = vpop.permute.xlu0 %785
      %787 = vrot.lane.b32.xlu0 %v773, 8
      %v788 = vpop.permute.xlu0 %787
      %vm789 = vcmask 1044480
      %v790 = vrot.slane %v703, 3
      %v791 = vrot.slane %v704, 3
      %v792 = vsel %vm789, %v790, %v791
      %v793 = vrot.slane %v705, 3
      %v794 = vsel %vm789, %v791, %v793
      %v795 = vrot.slane %v706, 3
      %v796 = vsel %vm789, %v793, %v795
      %v797 = vrot.slane %v707, 3
      %v798 = vsel %vm789, %v795, %v797
      %v799 = vrot.slane %v708, 3
      %v800 = vsel %vm789, %v797, %v799
      %v801 = vrot.slane %v712, 3
      %v802 = vsel %vm789, %v799, %v801
      %803 = vrot.lane.b32.xlu0 %v792, 16
      %v804 = vpop.permute.xlu0 %803
      %805 = vrot.lane.b32.xlu0 %v794, 16
      %v806 = vpop.permute.xlu0 %805
      %807 = vrot.lane.b32.xlu0 %v796, 16
      %v808 = vpop.permute.xlu0 %807
      %809 = vrot.lane.b32.xlu0 %v798, 16
      %v810 = vpop.permute.xlu0 %809
      %811 = vrot.lane.b32.xlu0 %v800, 16
      %v812 = vpop.permute.xlu0 %811
      %813 = vrot.lane.b32.xlu0 %v802, 16
      %v814 = vpop.permute.xlu0 %813
      %815 = vrot.lane.b32.xlu0 %v801, 16
      %v816 = vpop.permute.xlu0 %815
      %v818 = vsel %vm539, %v703, %v776
      %v820 = vsel %vm539, %v704, %v778
      %v822 = vsel %vm539, %v705, %v780
      %v824 = vsel %vm539, %v706, %v782
      %v826 = vsel %vm539, %v707, %v784
      %v828 = vsel %vm539, %v708, %v786
      %v831 = vsel %vm539, %v709, %v788
      %vm832 = vcmask 130048
      %v834 = vsel %vm832, %v818, %v804
      %v836 = vsel %vm832, %v820, %v806
      %v838 = vsel %vm832, %v822, %v808
      %v840 = vsel %vm832, %v824, %v810
      %v842 = vsel %vm832, %v826, %v812
      %v844 = vsel %vm832, %v828, %v814
      %v846 = vsel %vm832, %v831, %v816
      %v847 = vld [vmem:[%s4] sm:$0xf]
      %v848 = vld [vmem:[%s4 + $0x4] sm:$0xf]
      %v849 = vld [vmem:[%s4 + $0x8] sm:$0xf]
      %v850 = vld [vmem:[%s5] sm:$0x1]
      %v852 = vperm.slane %v850, 0
      %v857 = vunpack.c.l.b16 %v847
      %v858 = vunpack.c.l.b16 %v848
      %v859 = vunpack.c.l.b16 %v849
      %v860 = vpack.c.b16 %v858, %v857
      %v861 = vpack.c.b16 %v859, %v859
      %vm863 = vcmask 195584
      %v864 = vsel %vm863, %v834, 0
      %v866 = vsel %vm863, %v836, 0
      %v868 = vsel %vm863, %v838, 0
      %v870 = vsel %vm863, %v840, 0
      %v872 = vsel %vm863, %v842, 0
      %v874 = vsel %vm863, %v844, 0
      %v876 = vsel %vm863, %v846, 0
      %v879 = vsel %vm467, %v861, 0
      %881 = vmatpush.bf16.msra.mxu0 0
      %882 = vmatpush.bf16.msra.mxu0 0
      %883 = vmatpush.bf16.msra.mxu0 0
      %884 = vmatpush.bf16.msra.mxu0 0
      %885 = vmatpush.bf16.msra.mxu0 0
      %886 = vmatpush.bf16.msra.mxu0 0
      %887 = vmatpush.bf16.msra.mxu0 %v879
      %888 = vmatpush.bf16.msra.mxu0 %v860
      %889 = vmatmul.bf16.gmra.mxu0 %v864
      %v890 = vpop.f32.mrf.mxu0
      %v891 = vadd.f32 %v852, %v890
      %v892 = vpop.f32.mrf.mxu0
      %v893 = vadd.f32 %v852, %v892
      %894 = vmatmul.bf16.gmra.mxu0 %v866
      %v895 = vpop.f32.mrf.mxu0
      %v896 = vadd.f32 %v852, %v895
      %v897 = vpop.f32.mrf.mxu0
      %v898 = vadd.f32 %v852, %v897
      %899 = vmatmul.bf16.gmra.mxu0 %v868
      %v900 = vpop.f32.mrf.mxu0
      %v901 = vadd.f32 %v852, %v900
      %v902 = vpop.f32.mrf.mxu0
      %v903 = vadd.f32 %v852, %v902
      %904 = vmatmul.bf16.gmra.mxu0 %v870
      %v905 = vpop.f32.mrf.mxu0
      %v906 = vadd.f32 %v852, %v905
      %v907 = vpop.f32.mrf.mxu0
      %v908 = vadd.f32 %v852, %v907
      %909 = vmatmul.bf16.gmra.mxu0 %v872
      %v910 = vpop.f32.mrf.mxu0
      %v911 = vadd.f32 %v852, %v910
      %v912 = vpop.f32.mrf.mxu0
      %v913 = vadd.f32 %v852, %v912
      %914 = vmatmul.bf16.gmra.mxu0 %v874
      %v915 = vpop.f32.mrf.mxu0
      %v916 = vadd.f32 %v852, %v915
      %v917 = vpop.f32.mrf.mxu0
      %v918 = vadd.f32 %v852, %v917
      %919 = vmatmul.bf16.gmra.mxu0 %v876
      %v920 = vpop.f32.mrf.mxu0
      %v921 = vadd.f32 %v852, %v920
      %v922 = vpop.f32.mrf.mxu0
      %923 = vdwg.mxu0
      %vm924 = vcmp.ge.f32.partialorder %v891, 0.0
      %vm925 = vcmp.ge.f32.partialorder %v893, 0.0
      %vm926 = vcmp.ge.f32.partialorder %v896, 0.0
      %vm927 = vcmp.ge.f32.partialorder %v898, 0.0
      %vm928 = vcmp.ge.f32.partialorder %v901, 0.0
      %vm929 = vcmp.ge.f32.partialorder %v903, 0.0
      %vm930 = vcmp.ge.f32.partialorder %v906, 0.0
      %vm931 = vcmp.ge.f32.partialorder %v908, 0.0
      %vm932 = vcmp.ge.f32.partialorder %v911, 0.0
      %vm933 = vcmp.ge.f32.partialorder %v913, 0.0
      %vm934 = vcmp.ge.f32.partialorder %v916, 0.0
      %vm935 = vcmp.ge.f32.partialorder %v918, 0.0
      %vm936 = vcmp.ge.f32.partialorder %v921, 0.0
      %v937 = vmul.f32 %v891, 0.2
      %v938 = vmul.f32 %v893, 0.2
      %v939 = vmul.f32 %v896, 0.2
      %v940 = vmul.f32 %v898, 0.2
      %v941 = vmul.f32 %v901, 0.2
      %v942 = vmul.f32 %v903, 0.2
      %v943 = vmul.f32 %v906, 0.2
      %v944 = vmul.f32 %v908, 0.2
      %v945 = vmul.f32 %v911, 0.2
      %v946 = vmul.f32 %v913, 0.2
      %v947 = vmul.f32 %v916, 0.2
      %v948 = vmul.f32 %v918, 0.2
      %v949 = vmul.f32 %v921, 0.2
      %v950 = vsel %vm924, %v891, %v937
      %v951 = vsel %vm925, %v893, %v938
      %v952 = vsel %vm926, %v896, %v939
      %v953 = vsel %vm927, %v898, %v940
      %v954 = vsel %vm928, %v901, %v941
      %v955 = vsel %vm929, %v903, %v942
      %v956 = vsel %vm930, %v906, %v943
      %v957 = vsel %vm931, %v908, %v944
      %v958 = vsel %vm932, %v911, %v945
      %v959 = vsel %vm933, %v913, %v946
      %v960 = vsel %vm934, %v916, %v947
      %v961 = vsel %vm935, %v918, %v948
      %v962 = vsel %vm936, %v921, %v949
      %v963 = vpack.c.bf16 %v951, %v950
      %v964 = vpack.c.bf16 %v953, %v952
      %v965 = vpack.c.bf16 %v955, %v954
      %v966 = vpack.c.bf16 %v957, %v956
      %v967 = vpack.c.bf16 %v959, %v958
      %v968 = vpack.c.bf16 %v961, %v960
      %v969 = vpack.c.bf16 %v962, %v962
      %v970 = vld [vmem:[%s6] sm:$0xf]
      %v971 = vld [vmem:[%s7] sm:$0x1]
      %v973 = vperm.slane %v971, 0
      %v976 = vsel %vm539, %v963, 0
      %v979 = vsel %vm539, %v964, 0
      %v982 = vsel %vm539, %v965, 0
      %v985 = vsel %vm539, %v966, 0
      %v988 = vsel %vm539, %v967, 0
      %v991 = vsel %vm539, %v968, 0
      %v994 = vsel %vm539, %v969, 0
      %v997 = vsel %vm467, %v970, 0
      %999 = vmatpush.bf16.msra.mxu0 0
      %1000 = vmatpush.bf16.msra.mxu0 0
      %1001 = vmatpush.bf16.msra.mxu0 0
      %1002 = vmatpush.bf16.msra.mxu0 0
      %1003 = vmatpush.bf16.msra.mxu0 0
      %1004 = vmatpush.bf16.msra.mxu0 0
      %1005 = vmatpush.bf16.msra.mxu0 0
      %1006 = vmatpush.bf16.msra.mxu0 %v997
      %1007 = vmatmul.bf16.gmra.mxu0 %v976
      %v1008 = vpop.f32.mrf.mxu0
      %v1009 = vadd.f32 %v973, %v1008
      %v1010 = vpop.f32.mrf.mxu0
      %v1011 = vadd.f32 %v973, %v1010
      %1012 = vmatmul.bf16.gmra.mxu0 %v979
      %v1013 = vpop.f32.mrf.mxu0
      %v1014 = vadd.f32 %v973, %v1013
      %v1015 = vpop.f32.mrf.mxu0
      %v1016 = vadd.f32 %v973, %v1015
      %1017 = vmatmul.bf16.gmra.mxu0 %v982
      %v1018 = vpop.f32.mrf.mxu0
      %v1019 = vadd.f32 %v973, %v1018
      %v1020 = vpop.f32.mrf.mxu0
      %v1021 = vadd.f32 %v973, %v1020
      %1022 = vmatmul.bf16.gmra.mxu0 %v985
      %v1023 = vpop.f32.mrf.mxu0
      %v1024 = vadd.f32 %v973, %v1023
      %v1025 = vpop.f32.mrf.mxu0
      %v1026 = vadd.f32 %v973, %v1025
      %1027 = vmatmul.bf16.gmra.mxu0 %v988
      %v1028 = vpop.f32.mrf.mxu0
      %v1029 = vadd.f32 %v973, %v1028
      %v1030 = vpop.f32.mrf.mxu0
      %v1031 = vadd.f32 %v973, %v1030
      %1032 = vmatmul.bf16.gmra.mxu0 %v991
      %v1033 = vpop.f32.mrf.mxu0
      %v1034 = vadd.f32 %v973, %v1033
      %v1035 = vpop.f32.mrf.mxu0
      %v1036 = vadd.f32 %v973, %v1035
      %1037 = vmatmul.bf16.gmra.mxu0 %v994
      %v1038 = vpop.f32.mrf.mxu0
      %v1039 = vadd.f32 %v973, %v1038
      %v1040 = vpop.f32.mrf.mxu0
      %1041 = vdwg.mxu0
      %v1042 = vadd.f32 %v574, %v1009
      %v1043 = vadd.f32 %v576, %v1011
      %v1044 = vadd.f32 %v579, %v1014
      %v1045 = vadd.f32 %v581, %v1016
      %v1046 = vadd.f32 %v584, %v1019
      %v1047 = vadd.f32 %v586, %v1021
      %v1048 = vadd.f32 %v589, %v1024
      %v1049 = vadd.f32 %v591, %v1026
      %v1050 = vadd.f32 %v594, %v1029
      %v1051 = vadd.f32 %v596, %v1031
      %v1052 = vadd.f32 %v599, %v1034
      %v1053 = vadd.f32 %v601, %v1036
      %v1054 = vadd.f32 %v604, %v1039
      %v1055 = vpack.c.bf16 %v1042, %v1042
      %v1056 = vpack.c.bf16 %v1043, %v1043
      %v1057 = vpack.c.bf16 %v1044, %v1044
      %v1058 = vpack.c.bf16 %v1045, %v1045
      %v1059 = vpack.c.bf16 %v1046, %v1046
      %v1060 = vpack.c.bf16 %v1047, %v1047
      %v1061 = vpack.c.bf16 %v1048, %v1048
      %v1062 = vpack.c.bf16 %v1049, %v1049
      %v1063 = vpack.c.bf16 %v1050, %v1050
      %v1064 = vpack.c.bf16 %v1051, %v1051
      %v1065 = vpack.c.bf16 %v1052, %v1052
      %v1066 = vpack.c.bf16 %v1053, %v1053
      %v1067 = vpack.c.bf16 %v1054, %v1054
      %vm1068 = vcmask 60416
      %1069 = vst.msk [vmem:[%s408] sm:$0xf] %vm1068, %v1055
      %1070 = vst.msk [vmem:[%s408 + $0x4] sm:$0xf] %vm1068, %v1056
      %1071 = vst.msk [vmem:[%s408 + $0x8] sm:$0xf] %vm1068, %v1057
      %1072 = vst.msk [vmem:[%s408 + $0xc] sm:$0xf] %vm1068, %v1058
      %1073 = vst.msk [vmem:[%s408 + $0x10] sm:$0xf] %vm1068, %v1059
      %1074 = vst.msk [vmem:[%s408 + $0x14] sm:$0xf] %vm1068, %v1060
      %1075 = vst.msk [vmem:[%s408 + $0x18] sm:$0xf] %vm1068, %v1061
      %1076 = vst.msk [vmem:[%s408 + $0x1c] sm:$0xf] %vm1068, %v1062
      %1077 = vst.msk [vmem:[%s408 + $0x20] sm:$0xf] %vm1068, %v1063
      %1078 = vst.msk [vmem:[%s408 + $0x24] sm:$0xf] %vm1068, %v1064
      %1079 = vst.msk [vmem:[%s408 + $0x28] sm:$0xf] %vm1068, %v1065
      %1080 = vst.msk [vmem:[%s408 + $0x2c] sm:$0xf] %vm1068, %v1066
      %1081 = vst.msk [vmem:[%s408 + $0x30] sm:$0xf] %vm1068, %v1067
      %s1082 = smul.u32 13, %s24
      %p1083 = scmp.lt.s32.totalorder %s23, 1
      %s1084 = scalar_select %p1083, %s23, 1
      %p1085 = scmp.lt.s32.totalorder %s1082, 12
      %s1086 = scalar_select %p1085, %s1082, 12
      %s1087 = smul.addr %s1084, 13
      %s1088 = sadd.s32 %s1086, %s1087
      %s1089 = smul.addr %s1088, 4
      %s1090 = scalar_lea.vmem %s8, %s1089
      // Predicated region
      $region53: #{forward.24} parent=51 // pred_check
        %p1091 = pneg %p237
      $region54: #{forward.24} parent=51 // pred_check_branch
        %1093 = sbr.rel (%p1091) target = $region56
      $region55: #{forward.24} parent=51 // pred_region
        %s1094 = smul.u32 13, %s24
      $region56: #{forward.24} parent=51 // pred_fallthru
        _
    $region52: #{forward.24} parent=5 // pred_fallthru
      _
    %p1095 = scmp.le.s32.totalorder 2, %s14
    // Predicated region
    $region57: #{forward.24} parent=5 // pred_check
      %p1096 = pneg %p1095
    $region58: #{forward.24} parent=5 // pred_check_branch
      %1098 = sbr.rel (%p1096) target = $region60
    $region59: #{forward.24} parent=5 // pred_region
      %s1099 = ssub.s32 %s14, 2
      // Predicated region
      $region61: #{forward.24} parent=59 // pred_check
        %p1100 = pneg %p243
      $region62: #{forward.24} parent=59 // pred_check_branch
        %1102 = sbr.rel (%p1100) target = $region64
      $region63: #{forward.24} parent=59 // pred_region
        %s1103 = smul.u32 13, %s26
        %p1104 = scmp.lt.s32.totalorder %s25, 1
        %s1105 = scalar_select %p1104, %s25, 1
        %p1106 = scmp.lt.s32.totalorder %s1103, 12
        %s1107 = scalar_select %p1106, %s1103, 12
        %s1108 = smul.addr %s1105, 13
        %s1109 = sadd.s32 %s1107, %s1108
        %s1110 = smul.addr %s1109, 4
        %s1111 = scalar_lea.vmem %s8, %s1110
      $region64: #{forward.24} parent=59 // pred_fallthru
        _
    $region60: #{forward.24} parent=5 // pred_fallthru
      _
  $region6: #{forward.24} parent=0 // loop_footer
    %s18 = sadd.s32 1, %s14
  $region7: #{forward.24} parent=0 // loop_footer_branch
    %13 = sbr.rel target = $region3
  $region8: #{forward.24} parent=0 // loop_exit
    _

// kernel: forward.25
$region0: #{forward.25}
  #allocation0 [shape = 'u32[]', space=smem, size = 0x4, offset = 0x4, fixed_abs, tag = 'smem constant byte address 0x4 - core index']
  #allocation1 [shape = 'u32[72,128]{1,0:T(1,128)}', space=vmem, size = 0x9000, scoped, tag = 'internal scratch']
  %s0 = inlined_call_operand.vmem [shape: bf16[2,144,8], index: 0, kind: input, shape index: {}, may-alias: {0,1}]
  %s1 = inlined_call_operand.vmem [shape: bf16[2,144,8], index: 1, kind: input, shape index: {}, may-alias: {0,1}]
  %s2 = inlined_call_operand.vmem [shape: bf16[8,8], index: 2, kind: input, shape index: {}]
  %s3 = inlined_call_operand.vmem [shape: f32[1,8], index: 3, kind: input, shape index: {}]
  %s4 = inlined_call_operand.vmem [shape: bf16[24,8], index: 4, kind: input, shape index: {}]
  %s5 = inlined_call_operand.vmem [shape: f32[1,8], index: 5, kind: input, shape index: {}]
  %s6 = inlined_call_operand.vmem [shape: bf16[8,8], index: 6, kind: input, shape index: {}]
  %s7 = inlined_call_operand.vmem [shape: f32[1,8], index: 7, kind: input, shape index: {}]
  %s8 = inlined_call_operand.vmem [shape: bf16[2,120,8], index: 8, kind: output, shape index: {}]
  %s9 = sld [smem:[#allocation0]]
  $region65: #{forward.25} parent=0
    _
  %s11 = ssub.s32 1, %s9
  %s12 = scalar_select 0, %s11, %s9
  loop: start=0, step=1, limit=4
  $region2: #{forward.25} parent=0 // loop_pre_header
    _
  $region3: #{forward.25} parent=0 // loop_header
    %s14 = sphi 0, %s18
    %p15 = scmp.ge.s32.totalorder %s14, 4
    %s21 = sphi 0, %s33
    %s22 = sphi 0, %s29
    %s23 = sphi 0, %s21
    %s24 = sphi 0, %s22
    %s25 = sphi 0, %s23
    %s26 = sphi 0, %s24
    %s38 = sphi 0, %s40
    %s41 = sphi 0, %s38
    %s42 = sphi 0, %s41
    %s58 = sphi 0, %s42
    %s70 = sphi 0, %s72
    %s73 = sphi 0, %s70
    %s74 = sphi 0, %s73
    %s90 = sphi 0, %s74
    %s94 = sphi 0, %s94
    %s96 = sphi 0, %s94
    %s97 = sphi 0, %s96
    %s111 = sphi 0, %s97
    %s115 = sphi 0, %s115
    %s117 = sphi 0, %s115
    %s118 = sphi 0, %s117
    %s132 = sphi 0, %s118
    %s136 = sphi 0, %s136
    %s138 = sphi 0, %s136
    %s139 = sphi 0, %s138
    %s153 = sphi 0, %s139
    %s157 = sphi 0, %s157
    %s159 = sphi 0, %s157
    %s160 = sphi 0, %s159
    %s174 = sphi 0, %s160
    %s178 = sphi 0, %s178
    %s180 = sphi 0, %s178
    %s181 = sphi 0, %s180
    %s195 = sphi 0, %s181
    %s199 = sphi 0, %s199
    %s201 = sphi 0, %s199
    %s202 = sphi 0, %s201
    %s216 = sphi 0, %s202
    %s224 = sphi 0, %s226
    %s227 = sphi 0, %s224
    %s228 = sphi 0, %s227
    %s244 = sphi 0, %s228
  $region4: #{forward.25} parent=0 // loop_header_branch
    %17 = sbr.rel (%p15) target = $region8
  $region5: #{forward.25} parent=0 // loop_body
    %s19 = ssub.s32 %s14, 1
    %s20 = ssub.s32 %s14, 2
    %s27 = sadd.s32 1, %s22
    %p28 = scmp.ge.s32.totalorder %s27, 1
    %s29 = scalar_select %p28, 0, %s27
    %s30 = sadd.s32 1, %s21
    %s31 = scalar_select %p28, %s30, %s21
    %p32 = scmp.ge.s32.totalorder %s31, 2
    %s33 = scalar_select %p32, 0, %s31
    %s34 = ssub.s32 %s21, %s33
    %s35 = ssub.s32 %s22, %s29
    %s36 = sor.u32 %s34, %s35
    %p37 = scmp.eq.s32.totalorder %s36, 0
    %s39 = sadd.s32 %s38, 1
    %s40 = scalar_select %p37, %s38, %s39
    %p43 = pneg %p37
    %p44 = scmp.eq.s32.totalorder %s14, 1
    %p45 = por %p43, %p44
    %p46 = scmp.ne.s32.totalorder %s38, %s41
    %p47 = scmp.eq.s32.totalorder %s14, 0
    %p48 = por %p46, %p47
    %p49 = scmp.ne.s32.totalorder %s38, %s41
    %p50 = scmp.eq.s32.totalorder %s19, 1
    %p51 = por %p49, %p50
    %p52 = scmp.ne.s32.totalorder %s41, %s42
    %p53 = scmp.eq.s32.totalorder %s19, 0
    %p54 = por %p52, %p53
    %p55 = scmp.ne.s32.totalorder %s41, %s42
    %p56 = scmp.eq.s32.totalorder %s20, 1
    %p57 = por %p55, %p56
    %p59 = scmp.ne.s32.totalorder %s42, %s58
    %p60 = scmp.eq.s32.totalorder %s20, 0
    %p61 = por %p59, %p60
    %s62 = sadd.s32 %s22, 1
    %s63 = smul.u32 %s62, 5
    %s64 = sadd.s32 %s29, 1
    %s65 = smul.u32 %s64, 5
    %s66 = ssub.s32 %s21, %s33
    %s67 = ssub.s32 %s63, %s65
    %s68 = sor.u32 %s66, %s67
    %p69 = scmp.eq.s32.totalorder %s68, 0
    %s71 = sadd.s32 %s70, 1
    %s72 = scalar_select %p69, %s70, %s71
    %p75 = pneg %p69
    %p76 = scmp.eq.s32.totalorder %s14, 1
    %p77 = por %p75, %p76
    %p78 = scmp.ne.s32.totalorder %s70, %s73
    %p79 = scmp.eq.s32.totalorder %s14, 0
    %p80 = por %p78, %p79
    %p81 = scmp.ne.s32.totalorder %s70, %s73
    %p82 = scmp.eq.s32.totalorder %s19, 1
    %p83 = por %p81, %p82
    %p84 = scmp.ne.s32.totalorder %s73, %s74
    %p85 = scmp.eq.s32.totalorder %s19, 0
    %p86 = por %p84, %p85
    %p87 = scmp.ne.s32.totalorder %s73, %s74
    %p88 = scmp.eq.s32.totalorder %s20, 1
    %p89 = por %p87, %p88
    %p91 = scmp.ne.s32.totalorder %s74, %s90
    %p92 = scmp.eq.s32.totalorder %s20, 0
    %p93 = por %p91, %p92
    %s95 = sadd.s32 %s94, 1
    %p98 = scmp.eq.s32.totalorder %s14, 1
    %p99 = scmp.ne.s32.totalorder %s94, %s96
    %p100 = scmp.eq.s32.totalorder %s14, 0
    %p101 = por %p99, %p100
    %p102 = scmp.ne.s32.totalorder %s94, %s96
    %p103 = scmp.eq.s32.totalorder %s19, 1
    %p104 = por %p102, %p103
    %p105 = scmp.ne.s32.totalorder %s96, %s97
    %p106 = scmp.eq.s32.totalorder %s19, 0
    %p107 = por %p105, %p106
    %p108 = scmp.ne.s32.totalorder %s96, %s97
    %p109 = scmp.eq.s32.totalorder %s20, 1
    %p110 = por %p108, %p109
    %p112 = scmp.ne.s32.totalorder %s97, %s111
    %p113 = scmp.eq.s32.totalorder %s20, 0
    %p114 = por %p112, %p113
    %s116 = sadd.s32 %s115, 1
    %p119 = scmp.eq.s32.totalorder %s14, 1
    %p120 = scmp.ne.s32.totalorder %s115, %s117
    %p121 = scmp.eq.s32.totalorder %s14, 0
    %p122 = por %p120, %p121
    %p123 = scmp.ne.s32.totalorder %s115, %s117
    %p124 = scmp.eq.s32.totalorder %s19, 1
    %p125 = por %p123, %p124
    %p126 = scmp.ne.s32.totalorder %s117, %s118
    %p127 = scmp.eq.s32.totalorder %s19, 0
    %p128 = por %p126, %p127
    %p129 = scmp.ne.s32.totalorder %s117, %s118
    %p130 = scmp.eq.s32.totalorder %s20, 1
    %p131 = por %p129, %p130
    %p133 = scmp.ne.s32.totalorder %s118, %s132
    %p134 = scmp.eq.s32.totalorder %s20, 0
    %p135 = por %p133, %p134
    %s137 = sadd.s32 %s136, 1
    %p140 = scmp.eq.s32.totalorder %s14, 1
    %p141 = scmp.ne.s32.totalorder %s136, %s138
    %p142 = scmp.eq.s32.totalorder %s14, 0
    %p143 = por %p141, %p142
    %p144 = scmp.ne.s32.totalorder %s136, %s138
    %p145 = scmp.eq.s32.totalorder %s19, 1
    %p146 = por %p144, %p145
    %p147 = scmp.ne.s32.totalorder %s138, %s139
    %p148 = scmp.eq.s32.totalorder %s19, 0
    %p149 = por %p147, %p148
    %p150 = scmp.ne.s32.totalorder %s138, %s139
    %p151 = scmp.eq.s32.totalorder %s20, 1
    %p152 = por %p150, %p151
    %p154 = scmp.ne.s32.totalorder %s139, %s153
    %p155 = scmp.eq.s32.totalorder %s20, 0
    %p156 = por %p154, %p155
    %s158 = sadd.s32 %s157, 1
    %p161 = scmp.eq.s32.totalorder %s14, 1
    %p162 = scmp.ne.s32.totalorder %s157, %s159
    %p163 = scmp.eq.s32.totalorder %s14, 0
    %p164 = por %p162, %p163
    %p165 = scmp.ne.s32.totalorder %s157, %s159
    %p166 = scmp.eq.s32.totalorder %s19, 1
    %p167 = por %p165, %p166
    %p168 = scmp.ne.s32.totalorder %s159, %s160
    %p169 = scmp.eq.s32.totalorder %s19, 0
    %p170 = por %p168, %p169
    %p171 = scmp.ne.s32.totalorder %s159, %s160
    %p172 = scmp.eq.s32.totalorder %s20, 1
    %p173 = por %p171, %p172
    %p175 = scmp.ne.s32.totalorder %s160, %s174
    %p176 = scmp.eq.s32.totalorder %s20, 0
    %p177 = por %p175, %p176
    %s179 = sadd.s32 %s178, 1
    %p182 = scmp.eq.s32.totalorder %s14, 1
    %p183 = scmp.ne.s32.totalorder %s178, %s180
    %p184 = scmp.eq.s32.totalorder %s14, 0
    %p185 = por %p183, %p184
    %p186 = scmp.ne.s32.totalorder %s178, %s180
    %p187 = scmp.eq.s32.totalorder %s19, 1
    %p188 = por %p186, %p187
    %p189 = scmp.ne.s32.totalorder %s180, %s181
    %p190 = scmp.eq.s32.totalorder %s19, 0
    %p191 = por %p189, %p190
    %p192 = scmp.ne.s32.totalorder %s180, %s181
    %p193 = scmp.eq.s32.totalorder %s20, 1
    %p194 = por %p192, %p193
    %p196 = scmp.ne.s32.totalorder %s181, %s195
    %p197 = scmp.eq.s32.totalorder %s20, 0
    %p198 = por %p196, %p197
    %s200 = sadd.s32 %s199, 1
    %p203 = scmp.eq.s32.totalorder %s14, 1
    %p204 = scmp.ne.s32.totalorder %s199, %s201
    %p205 = scmp.eq.s32.totalorder %s14, 0
    %p206 = por %p204, %p205
    %p207 = scmp.ne.s32.totalorder %s199, %s201
    %p208 = scmp.eq.s32.totalorder %s19, 1
    %p209 = por %p207, %p208
    %p210 = scmp.ne.s32.totalorder %s201, %s202
    %p211 = scmp.eq.s32.totalorder %s19, 0
    %p212 = por %p210, %p211
    %p213 = scmp.ne.s32.totalorder %s201, %s202
    %p214 = scmp.eq.s32.totalorder %s20, 1
    %p215 = por %p213, %p214
    %p217 = scmp.ne.s32.totalorder %s202, %s216
    %p218 = scmp.eq.s32.totalorder %s20, 0
    %p219 = por %p217, %p218
    %s220 = ssub.s32 %s21, %s33
    %s221 = ssub.s32 %s22, %s29
    %s222 = sor.u32 %s220, %s221
    %p223 = scmp.eq.s32.totalorder %s222, 0
    %s225 = sadd.s32 %s224, 1
    %s226 = scalar_select %p223, %s224, %s225
    %p229 = pneg %p223
    %p230 = scmp.eq.s32.totalorder %s14, 1
    %p231 = por %p229, %p230
    %p232 = scmp.ne.s32.totalorder %s224, %s227
    %p233 = scmp.eq.s32.totalorder %s14, 0
    %p234 = por %p232, %p233
    %p235 = scmp.ne.s32.totalorder %s224, %s227
    %p236 = scmp.eq.s32.totalorder %s19, 1
    %p237 = por %p235, %p236
    %p238 = scmp.ne.s32.totalorder %s227, %s228
    %p239 = scmp.eq.s32.totalorder %s19, 0
    %p240 = por %p238, %p239
    %p241 = scmp.ne.s32.totalorder %s227, %s228
    %p242 = scmp.eq.s32.totalorder %s20, 1
    %p243 = por %p241, %p242
    %p245 = scmp.ne.s32.totalorder %s228, %s244
    %p246 = scmp.eq.s32.totalorder %s20, 0
    %p247 = por %p245, %p246
    %p248 = scmp.le.s32.totalorder 1, %s14
    %p249 = scmp.lt.s32.totalorder %s14, 3
    %p250 = pnand %p248, %p249
    %p251 = pneg %p250
    // Predicated region
    $region9: #{forward.25} parent=5 // pred_check
      _
    $region10: #{forward.25} parent=5 // pred_check_branch
      %253 = sbr.rel (%p250) target = $region12
    $region11: #{forward.25} parent=5 // pred_region
      %s254 = ssub.s32 %s14, 1
      // Predicated region
      $region13: #{forward.25} parent=11 // pred_check
        %p255 = pneg %p107
      $region14: #{forward.25} parent=11 // pred_check_branch
        %257 = sbr.rel (%p255) target = $region16
      $region15: #{forward.25} parent=11 // pred_region
        _
      $region16: #{forward.25} parent=11 // pred_fallthru
        _
      // Predicated region
      $region17: #{forward.25} parent=11 // pred_check
        %p258 = pneg %p128
      $region18: #{forward.25} parent=11 // pred_check_branch
        %260 = sbr.rel (%p258) target = $region20
      $region19: #{forward.25} parent=11 // pred_region
        _
      $region20: #{forward.25} parent=11 // pred_fallthru
        _
      // Predicated region
      $region21: #{forward.25} parent=11 // pred_check
        %p261 = pneg %p149
      $region22: #{forward.25} parent=11 // pred_check_branch
        %263 = sbr.rel (%p261) target = $region24
      $region23: #{forward.25} parent=11 // pred_region
        _
      $region24: #{forward.25} parent=11 // pred_fallthru
        _
      // Predicated region
      $region25: #{forward.25} parent=11 // pred_check
        %p264 = pneg %p170
      $region26: #{forward.25} parent=11 // pred_check_branch
        %266 = sbr.rel (%p264) target = $region28
      $region27: #{forward.25} parent=11 // pred_region
        _
      $region28: #{forward.25} parent=11 // pred_fallthru
        _
      // Predicated region
      $region29: #{forward.25} parent=11 // pred_check
        %p267 = pneg %p191
      $region30: #{forward.25} parent=11 // pred_check_branch
        %269 = sbr.rel (%p267) target = $region32
      $region31: #{forward.25} parent=11 // pred_region
        _
      $region32: #{forward.25} parent=11 // pred_fallthru
        _
      // Predicated region
      $region33: #{forward.25} parent=11 // pred_check
        %p270 = pneg %p212
      $region34: #{forward.25} parent=11 // pred_check_branch
        %272 = sbr.rel (%p270) target = $region36
      $region35: #{forward.25} parent=11 // pred_region
        _
      $region36: #{forward.25} parent=11 // pred_fallthru
        _
    $region12: #{forward.25} parent=5 // pred_fallthru
      _
    %p273 = scmp.lt.s32.totalorder %s14, 2
    // Predicated region
    $region37: #{forward.25} parent=5 // pred_check
      %p274 = pneg %p273
    $region38: #{forward.25} parent=5 // pred_check_branch
      %276 = sbr.rel (%p274) target = $region40
    $region39: #{forward.25} parent=5 // pred_region
      // Predicated region
      $region41: #{forward.25} parent=39 // pred_check
        %p277 = pneg %p48
      $region42: #{forward.25} parent=39 // pred_check_branch
        %279 = sbr.rel (%p277) target = $region44
      $region43: #{forward.25} parent=39 // pred_region
        %s280 = smul.u32 15, %s22
        %s281 = ssub.s32 18, %s280
        %p282 = scmp.lt.s32.totalorder %s281, 15
        %s283 = scalar_select %p282, %s281, 15
        %s284 = smul.u32 4, %s283
        %p285 = scmp.lt.s32.totalorder %s21, 1
        %s286 = scalar_select %p285, %s21, 1
        %p287 = scmp.lt.s32.totalorder %s280, 17
        %s288 = scalar_select %p287, %s280, 17
        %s289 = smul.addr %s286, 18
        %s290 = sadd.s32 %s288, %s289
        %s291 = smul.addr %s290, 4
        %s292 = scalar_lea.vmem %s0, %s291
        %s293 = smul.u32 15, %s22
        %s294 = ssub.s32 18, %s293
        %p295 = scmp.lt.s32.totalorder %s294, 15
        %s296 = scalar_select %p295, %s294, 15
        %s297 = smul.u32 4, %s296
      $region44: #{forward.25} parent=39 // pred_fallthru
        _
      // Predicated region
      $region45: #{forward.25} parent=39 // pred_check
        %p298 = pneg %p80
      $region46: #{forward.25} parent=39 // pred_check_branch
        %300 = sbr.rel (%p298) target = $region48
      $region47: #{forward.25} parent=39 // pred_region
        %s301 = sadd.s32 %s22, 1
        %s302 = smul.u32 %s301, 5
        %s303 = smul.u32 3, %s302
        %p304 = scmp.lt.s32.totalorder %s21, 1
        %s305 = scalar_select %p304, %s21, 1
        %p306 = scmp.lt.s32.totalorder %s303, 17
        %s307 = scalar_select %p306, %s303, 17
        %s308 = smul.addr %s305, 18
        %s309 = sadd.s32 %s307, %s308
        %s310 = smul.addr %s309, 4
        %s311 = scalar_lea.vmem %s1, %s310
        %s312 = sadd.s32 %s22, 1
        %s313 = smul.u32 %s312, 5
        %s314 = smul.u32 3, %s313
      $region48: #{forward.25} parent=39 // pred_fallthru
        _
    $region40: #{forward.25} parent=5 // pred_fallthru
      _
    %p315 = scmp.le.s32.totalorder 1, %s14
    %p316 = scmp.lt.s32.totalorder %s14, 3
    %p317 = pnand %p315, %p316
    %p318 = pneg %p317
    // Predicated region
    $region49: #{forward.25} parent=5 // pred_check
      _
    $region50: #{forward.25} parent=5 // pred_check_branch
      %320 = sbr.rel (%p317) target = $region52
    $region51: #{forward.25} parent=5 // pred_region
      %s321 = ssub.s32 %s14, 1
      %s322 = smul.u32 15, %s24
      %s323 = ssub.s32 18, %s322
      %p324 = scmp.lt.s32.totalorder %s323, 15
      %s325 = scalar_select %p324, %s323, 15
      %s326 = smul.u32 4, %s325
      %p327 = scmp.lt.s32.totalorder %s23, 1
      %s328 = scalar_select %p327, %s23, 1
      %p329 = scmp.lt.s32.totalorder %s322, 17
      %s330 = scalar_select %p329, %s322, 17
      %s331 = smul.addr %s328, 18
      %s332 = sadd.s32 %s330, %s331
      %s333 = smul.addr %s332, 4
      %s334 = scalar_lea.vmem %s0, %s333
      %p335 = pneg %p54
      %p336 = pneg %p51
      %s337 = sadd.s32 %s24, 1
      %s338 = smul.u32 %s337, 5
      %s339 = smul.u32 3, %s338
      %p340 = scmp.lt.s32.totalorder %s23, 1
      %s341 = scalar_select %p340, %s23, 1
      %p342 = scmp.lt.s32.totalorder %s339, 17
      %s343 = scalar_select %p342, %s339, 17
      %s344 = smul.addr %s341, 18
      %s345 = sadd.s32 %s343, %s344
      %s346 = smul.addr %s345, 4
      %s347 = scalar_lea.vmem %s1, %s346
      %p348 = pneg %p86
      %p349 = pneg %p83
      %p350 = pneg %p107
      %p351 = pneg %p104
      %p352 = pneg %p128
      %p353 = pneg %p125
      %p354 = pneg %p149
      %p355 = pneg %p146
      %p356 = pneg %p170
      %p357 = pneg %p167
      %p358 = pneg %p191
      %p359 = pneg %p188
      %p360 = pneg %p212
      %p361 = pneg %p209
      %p362 = pneg %p240
      %p363 = pneg %p237
      %s364 = smul.u32 15, %s24
      %p365 = scmp.lt.s32.totalorder %s23, 1
      %s366 = scalar_select %p365, %s23, 1
      %p367 = scmp.lt.s32.totalorder %s364, 14
      %s368 = scalar_select %p367, %s364, 14
      %s369 = smul.addr %s366, 15
      %s370 = sadd.s32 %s368, %s369
      %s371 = smul.addr %s370, 4
      %s372 = scalar_lea.vmem %s8, %s371
      %s373 = smul.u32 15, %s24
      %s374 = ssub.s32 18, %s373
      %p375 = scmp.lt.s32.totalorder %s374, 15
      %s376 = scalar_select %p375, %s374, 15
      %s377 = smul.u32 4, %s376
      %p378 = scmp.lt.s32.totalorder %s23, 1
      %s379 = scalar_select %p378, %s23, 1
      %p380 = scmp.lt.s32.totalorder %s373, 17
      %s381 = scalar_select %p380, %s373, 17
      %s382 = smul.addr %s379, 18
      %s383 = sadd.s32 %s381, %s382
      %s384 = smul.addr %s383, 4
      %s385 = scalar_lea.vmem %s0, %s384
      %s386 = smul.u32 15, %s24
      %s387 = ssub.s32 18, %s386
      %p388 = scmp.lt.s32.totalorder %s387, 15
      %s389 = scalar_select %p388, %s387, 15
      %s390 = smul.u32 4, %s389
      %s391 = sadd.s32 %s24, 1
      %s392 = smul.u32 %s391, 5
      %s393 = smul.u32 3, %s392
      %p394 = scmp.lt.s32.totalorder %s23, 1
      %s395 = scalar_select %p394, %s23, 1
      %p396 = scmp.lt.s32.totalorder %s393, 17
      %s397 = scalar_select %p396, %s393, 17
      %s398 = smul.addr %s395, 18
      %s399 = sadd.s32 %s397, %s398
      %s400 = smul.addr %s399, 4
      %s401 = scalar_lea.vmem %s1, %s400
      %s402 = sadd.s32 %s24, 1
      %s403 = smul.u32 %s402, 5
      %s404 = smul.u32 3, %s403
      %s405 = smul.u32 15, %s24
      %p406 = scmp.lt.s32.totalorder %s23, 1
      %s407 = scalar_select %p406, %s23, 1
      %p408 = scmp.lt.s32.totalorder %s405, 14
      %s409 = scalar_select %p408, %s405, 14
      %s410 = smul.addr %s407, 15
      %s411 = sadd.s32 %s409, %s410
      %s412 = smul.addr %s411, 4
      %s413 = scalar_lea.vmem %s8, %s412
      %s414 = smul.u32 15, %s24
      %v416 = vld [vmem:[%s385] sm:$0xf]
      %v417 = vld [vmem:[%s385 + $0x4] sm:$0xf]
      %v418 = vld [vmem:[%s385 + $0x8] sm:$0xf]
      %v419 = vld [vmem:[%s385 + $0xc] sm:$0xf]
      %v420 = vld [vmem:[%s385 + $0x10] sm:$0xf]
      %v421 = vld [vmem:[%s385 + $0x14] sm:$0xf]
      %v422 = vld [vmem:[%s385 + $0x18] sm:$0xf]
      %v423 = vld [vmem:[%s385 + $0x1c] sm:$0xf]
      %v424 = vld [vmem:[%s385 + $0x20] sm:$0xf]
      %v425 = vld [vmem:[%s385 + $0x24] sm:$0xf]
      %v426 = vld [vmem:[%s385 + $0x28] sm:$0xf]
      %v427 = vld [vmem:[%s385 + $0x2c] sm:$0xf]
      %v428 = vld [vmem:[%s385 + $0x30] sm:$0xf]
      %v429 = vld [vmem:[%s385 + $0x34] sm:$0xf]
      %v430 = vld [vmem:[%s385 + $0x38] sm:$0xf]
      %v431 = vld [vmem:[%s401] sm:$0xf]
      %v432 = vld [vmem:[%s401 + $0x4] sm:$0xf]
      %v433 = vld [vmem:[%s401 + $0x8] sm:$0xf]
      %v449 = vunpack.c.l.b16 %v416
      %v450 = vunpack.c.l.b16 %v417
      %v451 = vunpack.c.l.b16 %v418
      %v452 = vunpack.c.l.b16 %v419
      %v453 = vunpack.c.l.b16 %v420
      %v454 = vunpack.c.l.b16 %v421
      %v455 = vunpack.c.l.b16 %v422
      %v456 = vunpack.c.l.b16 %v423
      %v457 = vunpack.c.l.b16 %v424
      %v458 = vunpack.c.l.b16 %v425
      %v459 = vunpack.c.l.b16 %v426
      %v460 = vunpack.c.l.b16 %v427
      %v461 = vunpack.c.l.b16 %v428
      %v462 = vunpack.c.l.b16 %v429
      %v463 = vunpack.c.l.b16 %v430
      %v464 = vpack.c.b16 %v450, %v449
      %v465 = vpack.c.b16 %v452, %v451
      %v466 = vpack.c.b16 %v454, %v453
      %v467 = vpack.c.b16 %v456, %v455
      %v468 = vpack.c.b16 %v458, %v457
      %v469 = vpack.c.b16 %v460, %v459
      %v470 = vpack.c.b16 %v462, %v461
      %v471 = vpack.c.b16 %v463, %v463
      %v482 = vunpack.c.l.b16 %v431
      %v483 = vunpack.c.l.b16 %v432
      %v484 = vunpack.c.l.b16 %v433
      %v485 = vpack.c.b16 %v482, %v482
      %v486 = vpack.c.b16 %v484, %v483
      %vm488 = vcmask 1043456
      %v491 = vsel %vm488, %v471, %v485
      %v493 = vld [vmem:[%s2] sm:$0xf]
      %v494 = vld [vmem:[%s3] sm:$0x1]
      %v496 = vperm.slane %v494, 0
      %vm498 = vsmask.f32 3328
      %v500 = vshrl.u32 %v464, 16
      %v502 = vrot.slane %v500, 4
      %v503 = vshll.u32 %v464, 16
      %v505 = vrot.slane %v503, 5
      %v506 = vor.u32 %v502, %v505
      %v508 = vshrl.u32 %v465, 16
      %v510 = vrot.slane %v508, 4
      %v511 = vshll.u32 %v465, 16
      %v513 = vrot.slane %v511, 5
      %v514 = vor.u32 %v510, %v513
      %v515 = vsel %vm498, %v506, %v514
      %v517 = vshrl.u32 %v466, 16
      %v519 = vrot.slane %v517, 4
      %v520 = vshll.u32 %v466, 16
      %v522 = vrot.slane %v520, 5
      %v523 = vor.u32 %v519, %v522
      %v524 = vsel %vm498, %v514, %v523
      %v526 = vshrl.u32 %v467, 16
      %v528 = vrot.slane %v526, 4
      %v529 = vshll.u32 %v467, 16
      %v531 = vrot.slane %v529, 5
      %v532 = vor.u32 %v528, %v531
      %v533 = vsel %vm498, %v523, %v532
      %v535 = vshrl.u32 %v468, 16
      %v537 = vrot.slane %v535, 4
      %v538 = vshll.u32 %v468, 16
      %v540 = vrot.slane %v538, 5
      %v541 = vor.u32 %v537, %v540
      %v542 = vsel %vm498, %v532, %v541
      %v544 = vshrl.u32 %v469, 16
      %v546 = vrot.slane %v544, 4
      %v547 = vshll.u32 %v469, 16
      %v549 = vrot.slane %v547, 5
      %v550 = vor.u32 %v546, %v549
      %v551 = vsel %vm498, %v541, %v550
      %v553 = vshrl.u32 %v470, 16
      %v555 = vrot.slane %v553, 4
      %v556 = vshll.u32 %v470, 16
      %v558 = vrot.slane %v556, 5
      %v559 = vor.u32 %v555, %v558
      %v560 = vsel %vm498, %v550, %v559
      %v561 = vshrl.u32 %v491, 16
      %v563 = vrot.slane %v561, 4
      %v564 = vshll.u32 %v491, 16
      %v566 = vrot.slane %v564, 5
      %v567 = vor.u32 %v563, %v566
      %v568 = vsel %vm498, %v559, %v567
      %v570 = vshll.u32 %v486, 16
      %v572 = vrot.slane %v570, 5
      %v573 = vsel %vm498, %v567, %v572
      %vm574 = vcmask 64512
      %v576 = vsel %vm574, %v515, 0
      %v579 = vsel %vm574, %v524, 0
      %v582 = vsel %vm574, %v533, 0
      %v585 = vsel %vm574, %v542, 0
      %v588 = vsel %vm574, %v551, 0
      %v591 = vsel %vm574, %v560, 0
      %v594 = vsel %vm574, %v568, 0
      %v597 = vsel %vm574, %v573, 0
      %v600 = vsel %vm488, %v493, 0
      %602 = vmatpush.bf16.msra.mxu0 0
      %603 = vmatpush.bf16.msra.mxu0 0
      %604 = vmatpush.bf16.msra.mxu0 0
      %605 = vmatpush.bf16.msra.mxu0 0
      %606 = vmatpush.bf16.msra.mxu0 0
      %607 = vmatpush.bf16.msra.mxu0 0
      %608 = vmatpush.bf16.msra.mxu0 0
      %609 = vmatpush.bf16.msra.mxu0 %v600
      %610 = vmatmul.bf16.gmra.mxu0 %v576
      %v611 = vpop.f32.mrf.mxu0
      %v612 = vadd.f32 %v496, %v611
      %v613 = vpop.f32.mrf.mxu0
      %v614 = vadd.f32 %v496, %v613
      %615 = vmatmul.bf16.gmra.mxu0 %v579
      %v616 = vpop.f32.mrf.mxu0
      %v617 = vadd.f32 %v496, %v616
      %v618 = vpop.f32.mrf.mxu0
      %v619 = vadd.f32 %v496, %v618
      %620 = vmatmul.bf16.gmra.mxu0 %v582
      %v621 = vpop.f32.mrf.mxu0
      %v622 = vadd.f32 %v496, %v621
      %v623 = vpop.f32.mrf.mxu0
      %v624 = vadd.f32 %v496, %v623
      %625 = vmatmul.bf16.gmra.mxu0 %v585
      %v626 = vpop.f32.mrf.mxu0
      %v627 = vadd.f32 %v496, %v626
      %v628 = vpop.f32.mrf.mxu0
      %v629 = vadd.f32 %v496, %v628
      %630 = vmatmul.bf16.gmra.mxu0 %v588
      %v631 = vpop.f32.mrf.mxu0
      %v632 = vadd.f32 %v496, %v631
      %v633 = vpop.f32.mrf.mxu0
      %v634 = vadd.f32 %v496, %v633
      %635 = vmatmul.bf16.gmra.mxu0 %v591
      %v636 = vpop.f32.mrf.mxu0
      %v637 = vadd.f32 %v496, %v636
      %v638 = vpop.f32.mrf.mxu0
      %v639 = vadd.f32 %v496, %v638
      %640 = vmatmul.bf16.gmra.mxu0 %v594
      %v641 = vpop.f32.mrf.mxu0
      %v642 = vadd.f32 %v496, %v641
      %v643 = vpop.f32.mrf.mxu0
      %v644 = vadd.f32 %v496, %v643
      %645 = vmatmul.bf16.gmra.mxu0 %v597
      %v646 = vpop.f32.mrf.mxu0
      %v647 = vadd.f32 %v496, %v646
      %v648 = vpop.f32.mrf.mxu0
      %649 = vdwg.mxu0
      %v650 = vunpack.c.l.bf16 %v464
      %v651 = vunpack.c.h.bf16 %v464
      %v652 = vunpack.c.l.bf16 %v465
      %v653 = vunpack.c.h.bf16 %v465
      %v654 = vunpack.c.l.bf16 %v466
      %v655 = vunpack.c.h.bf16 %v466
      %v656 = vunpack.c.l.bf16 %v467
      %v657 = vunpack.c.h.bf16 %v467
      %v658 = vunpack.c.l.bf16 %v468
      %v659 = vunpack.c.h.bf16 %v468
      %v660 = vunpack.c.l.bf16 %v469
      %v661 = vunpack.c.h.bf16 %v469
      %v662 = vunpack.c.l.bf16 %v470
      %v663 = vunpack.c.h.bf16 %v470
      %v664 = vunpack.c.l.bf16 %v491
      %v665 = vunpack.c.h.bf16 %v491
      %v666 = vunpack.c.l.bf16 %v486
      %v667 = vunpack.c.h.bf16 %v486
      %vm668 = vcmp.ge.f32.partialorder %v650, 0.0
      %vm669 = vcmp.ge.f32.partialorder %v651, 0.0
      %vm670 = vcmp.ge.f32.partialorder %v652, 0.0
      %vm671 = vcmp.ge.f32.partialorder %v653, 0.0
      %vm672 = vcmp.ge.f32.partialorder %v654, 0.0
      %vm673 = vcmp.ge.f32.partialorder %v655, 0.0
      %vm674 = vcmp.ge.f32.partialorder %v656, 0.0
      %vm675 = vcmp.ge.f32.partialorder %v657, 0.0
      %vm676 = vcmp.ge.f32.partialorder %v658, 0.0
      %vm677 = vcmp.ge.f32.partialorder %v659, 0.0
      %vm678 = vcmp.ge.f32.partialorder %v660, 0.0
      %vm679 = vcmp.ge.f32.partialorder %v661, 0.0
      %vm680 = vcmp.ge.f32.partialorder %v662, 0.0
      %vm681 = vcmp.ge.f32.partialorder %v663, 0.0
      %vm682 = vcmp.ge.f32.partialorder %v664, 0.0
      %vm683 = vcmp.ge.f32.partialorder %v665, 0.0
      %vm684 = vcmp.ge.f32.partialorder %v666, 0.0
      %vm685 = vcmp.ge.f32.partialorder %v667, 0.0
      %v686 = vmul.f32 %v650, 0.2
      %v687 = vmul.f32 %v651, 0.2
      %v688 = vmul.f32 %v652, 0.2
      %v689 = vmul.f32 %v653, 0.2
      %v690 = vmul.f32 %v654, 0.2
      %v691 = vmul.f32 %v655, 0.2
      %v692 = vmul.f32 %v656, 0.2
      %v693 = vmul.f32 %v657, 0.2
      %v694 = vmul.f32 %v658, 0.2
      %v695 = vmul.f32 %v659, 0.2
      %v696 = vmul.f32 %v660, 0.2
      %v697 = vmul.f32 %v661, 0.2
      %v698 = vmul.f32 %v662, 0.2
      %v699 = vmul.f32 %v663, 0.2
      %v700 = vmul.f32 %v664, 0.2
      %v701 = vmul.f32 %v665, 0.2
      %v702 = vmul.f32 %v666, 0.2
      %v703 = vmul.f32 %v667, 0.2
      %v704 = vsel %vm668, %v650, %v686
      %v705 = vsel %vm669, %v651, %v687
      %v706 = vsel %vm670, %v652, %v688
      %v707 = vsel %vm671, %v653, %v689
      %v708 = vsel %vm672, %v654, %v690
      %v709 = vsel %vm673, %v655, %v691
      %v710 = vsel %vm674, %v656, %v692
      %v711 = vsel %vm675, %v657, %v693
      %v712 = vsel %vm676, %v658, %v694
      %v713 = vsel %vm677, %v659, %v695
      %v714 = vsel %vm678, %v660, %v696
      %v715 = vsel %vm679, %v661, %v697
      %v716 = vsel %vm680, %v662, %v698
      %v717 = vsel %vm681, %v663, %v699
      %v718 = vsel %vm682, %v664, %v700
      %v719 = vsel %vm683, %v665, %v701
      %v720 = vsel %vm684, %v666, %v702
      %v721 = vsel %vm685, %v667, %v703
      %v722 = vpack.c.bf16 %v704, %v704
      %v723 = vpack.c.bf16 %v705, %v705
      %v724 = vpack.c.bf16 %v706, %v706
      %v725 = vpack.c.bf16 %v707, %v707
      %v726 = vpack.c.bf16 %v708, %v708
      %v727 = vpack.c.bf16 %v709, %v709
      %v728 = vpack.c.bf16 %v710, %v710
      %v729 = vpack.c.bf16 %v711, %v711
      %v730 = vpack.c.bf16 %v712, %v712
      %v731 = vpack.c.bf16 %v713, %v713
      %v732 = vpack.c.bf16 %v714, %v714
      %v733 = vpack.c.bf16 %v715, %v715
      %v734 = vpack.c.bf16 %v716, %v716
      %v735 = vpack.c.bf16 %v717, %v717
      %v736 = vpack.c.bf16 %v718, %v718
      %v737 = vpack.c.bf16 %v719, %v719
      %v738 = vpack.c.bf16 %v720, %v720
      %v739 = vpack.c.bf16 %v721, %v721
      %v755 = vunpack.c.l.b16 %v722
      %v756 = vunpack.c.l.b16 %v723
      %v757 = vunpack.c.l.b16 %v724
      %v758 = vunpack.c.l.b16 %v725
      %v759 = vunpack.c.l.b16 %v726
      %v760 = vunpack.c.l.b16 %v727
      %v761 = vunpack.c.l.b16 %v728
      %v762 = vunpack.c.l.b16 %v729
      %v763 = vunpack.c.l.b16 %v730
      %v764 = vunpack.c.l.b16 %v731
      %v765 = vunpack.c.l.b16 %v732
      %v766 = vunpack.c.l.b16 %v733
      %v767 = vunpack.c.l.b16 %v734
      %v768 = vunpack.c.l.b16 %v735
      %v769 = vunpack.c.l.b16 %v736
      %v770 = vpack.c.b16 %v756, %v755
      %v771 = vpack.c.b16 %v758, %v757
      %v772 = vpack.c.b16 %v760, %v759
      %v773 = vpack.c.b16 %v762, %v761
      %v774 = vpack.c.b16 %v764, %v763
      %v775 = vpack.c.b16 %v766, %v765
      %v776 = vpack.c.b16 %v768, %v767
      %v777 = vpack.c.b16 %v769, %v769
      %v780 = vunpack.c.l.b16 %v737
      %v781 = vunpack.c.l.b16 %v738
      %v782 = vpack.c.b16 %v757, %v756
      %v783 = vpack.c.b16 %v759, %v758
      %v784 = vpack.c.b16 %v761, %v760
      %v785 = vpack.c.b16 %v763, %v762
      %v786 = vpack.c.b16 %v765, %v764
      %v787 = vpack.c.b16 %v767, %v766
      %v788 = vpack.c.b16 %v769, %v768
      %v789 = vpack.c.b16 %v781, %v780
      %vm790 = vsmask.f32 7424
      %v792 = vshrl.u32 %v782, 16
      %v794 = vshll.u32 %v782, 16
      %v796 = vrot.slane %v794, 1
      %v797 = vor.u32 %v792, %v796
      %v799 = vshll.u32 %v783, 16
      %v801 = vrot.slane %v799, 1
      %v802 = vsel %vm790, %v797, %v801
      %v803 = vshrl.u32 %v783, 16
      %v805 = vor.u32 %v803, %v801
      %v807 = vshll.u32 %v784, 16
      %v809 = vrot.slane %v807, 1
      %v810 = vsel %vm790, %v805, %v809
      %v811 = vshrl.u32 %v784, 16
      %v813 = vor.u32 %v811, %v809
      %v815 = vshll.u32 %v785, 16
      %v817 = vrot.slane %v815, 1
      %v818 = vsel %vm790, %v813, %v817
      %v819 = vshrl.u32 %v785, 16
      %v821 = vor.u32 %v819, %v817
      %v823 = vshll.u32 %v786, 16
      %v825 = vrot.slane %v823, 1
      %v826 = vsel %vm790, %v821, %v825
      %v827 = vshrl.u32 %v786, 16
      %v829 = vor.u32 %v827, %v825
      %v831 = vshll.u32 %v787, 16
      %v833 = vrot.slane %v831, 1
      %v834 = vsel %vm790, %v829, %v833
      %v835 = vshrl.u32 %v787, 16
      %v837 = vor.u32 %v835, %v833
      %v839 = vshll.u32 %v788, 16
      %v841 = vrot.slane %v839, 1
      %v842 = vsel %vm790, %v837, %v841
      %v843 = vshrl.u32 %v788, 16
      %v845 = vor.u32 %v843, %v841
      %v847 = vshll.u32 %v789, 16
      %v849 = vrot.slane %v847, 1
      %v850 = vsel %vm790, %v845, %v849
      %v851 = vshrl.u32 %v789, 16
      %v853 = vor.u32 %v851, %v849
      %854 = vrot.lane.b32.xlu0 %v802, 8
      %v855 = vpop.permute.xlu0 %854
      %856 = vrot.lane.b32.xlu0 %v810, 8
      %v857 = vpop.permute.xlu0 %856
      %858 = vrot.lane.b32.xlu0 %v818, 8
      %v859 = vpop.permute.xlu0 %858
      %860 = vrot.lane.b32.xlu0 %v826, 8
      %v861 = vpop.permute.xlu0 %860
      %862 = vrot.lane.b32.xlu0 %v834, 8
      %v863 = vpop.permute.xlu0 %862
      %864 = vrot.lane.b32.xlu0 %v842, 8
      %v865 = vpop.permute.xlu0 %864
      %866 = vrot.lane.b32.xlu0 %v850, 8
      %v867 = vpop.permute.xlu0 %866
      %868 = vrot.lane.b32.xlu0 %v853, 8
      %v869 = vpop.permute.xlu0 %868
      %v871 = vunpack.c.l.b16 %v739
      %v872 = vpack.c.b16 %v780, %v769
      %v873 = vpack.c.b16 %v871, %v781
      %vm874 = vcmask 1046528
      %v875 = vrot.slane %v771, 1
      %v876 = vrot.slane %v772, 1
      %v877 = vsel %vm874, %v875, %v876
      %v878 = vrot.slane %v773, 1
      %v879 = vsel %vm874, %v876, %v878
      %v880 = vrot.slane %v774, 1
      %v881 = vsel %vm874, %v878, %v880
      %v882 = vrot.slane %v775, 1
      %v883 = vsel %vm874, %v880, %v882
      %v884 = vrot.slane %v776, 1
      %v885 = vsel %vm874, %v882, %v884
      %v886 = vrot.slane %v872, 1
      %v887 = vsel %vm874, %v884, %v886
      %v888 = vrot.slane %v873, 1
      %v889 = vsel %vm874, %v886, %v888
      %890 = vrot.lane.b32.xlu0 %v877, 16
      %v891 = vpop.permute.xlu0 %890
      %892 = vrot.lane.b32.xlu0 %v879, 16
      %v893 = vpop.permute.xlu0 %892
      %894 = vrot.lane.b32.xlu0 %v881, 16
      %v895 = vpop.permute.xlu0 %894
      %896 = vrot.lane.b32.xlu0 %v883, 16
      %v897 = vpop.permute.xlu0 %896
      %898 = vrot.lane.b32.xlu0 %v885, 16
      %v899 = vpop.permute.xlu0 %898
      %900 = vrot.lane.b32.xlu0 %v887, 16
      %v901 = vpop.permute.xlu0 %900
      %902 = vrot.lane.b32.xlu0 %v889, 16
      %v903 = vpop.permute.xlu0 %902
      %904 = vrot.lane.b32.xlu0 %v888, 16
      %v905 = vpop.permute.xlu0 %904
      %v908 = vsel %vm574, %v770, %v855
      %v911 = vsel %vm574, %v771, %v857
      %v914 = vsel %vm574, %v772, %v859
      %v917 = vsel %vm574, %v773, %v861
      %v920 = vsel %vm574, %v774, %v863
      %v923 = vsel %vm574, %v775, %v865
      %v926 = vsel %vm574, %v776, %v867
      %v929 = vsel %vm574, %v777, %v869
      %vm930 = vcmask 130048
      %v932 = vsel %vm930, %v908, %v891
      %v934 = vsel %vm930, %v911, %v893
      %v936 = vsel %vm930, %v914, %v895
      %v938 = vsel %vm930, %v917, %v897
      %v940 = vsel %vm930, %v920, %v899
      %v942 = vsel %vm930, %v923, %v901
      %v944 = vsel %vm930, %v926, %v903
      %v946 = vsel %vm930, %v929, %v905
      %v947 = vld [vmem:[%s4] sm:$0xf]
      %v948 = vld [vmem:[%s4 + $0x4] sm:$0xf]
      %v949 = vld [vmem:[%s4 + $0x8] sm:$0xf]
      %v950 = vld [vmem:[%s5] sm:$0x1]
      %v952 = vperm.slane %v950, 0
      %v957 = vunpack.c.l.b16 %v947
      %v958 = vunpack.c.l.b16 %v948
      %v959 = vunpack.c.l.b16 %v949
      %v960 = vpack.c.b16 %v958, %v957
      %v961 = vpack.c.b16 %v959, %v959
      %vm963 = vcmask 195584
      %v964 = vsel %vm963, %v932, 0
      %v966 = vsel %vm963, %v934, 0
      %v968 = vsel %vm963, %v936, 0
      %v970 = vsel %vm963, %v938, 0
      %v972 = vsel %vm963, %v940, 0
      %v974 = vsel %vm963, %v942, 0
      %v976 = vsel %vm963, %v944, 0
      %v978 = vsel %vm963, %v946, 0
      %v981 = vsel %vm488, %v961, 0
      %983 = vmatpush.bf16.msra.mxu0 0
      %984 = vmatpush.bf16.msra.mxu0 0
      %985 = vmatpush.bf16.msra.mxu0 0
      %986 = vmatpush.bf16.msra.mxu0 0
      %987 = vmatpush.bf16.msra.mxu0 0
      %988 = vmatpush.bf16.msra.mxu0 0
      %989 = vmatpush.bf16.msra.mxu0 %v981
      %990 = vmatpush.bf16.msra.mxu0 %v960
      %991 = vmatmul.bf16.gmra.mxu0 %v964
      %v992 = vpop.f32.mrf.mxu0
      %v993 = vadd.f32 %v952, %v992
      %v994 = vpop.f32.mrf.mxu0
      %v995 = vadd.f32 %v952, %v994
      %996 = vmatmul.bf16.gmra.mxu0 %v966
      %v997 = vpop.f32.mrf.mxu0
      %v998 = vadd.f32 %v952, %v997
      %v999 = vpop.f32.mrf.mxu0
      %v1000 = vadd.f32 %v952, %v999
      %1001 = vmatmul.bf16.gmra.mxu0 %v968
      %v1002 = vpop.f32.mrf.mxu0
      %v1003 = vadd.f32 %v952, %v1002
      %v1004 = vpop.f32.mrf.mxu0
      %v1005 = vadd.f32 %v952, %v1004
      %1006 = vmatmul.bf16.gmra.mxu0 %v970
      %v1007 = vpop.f32.mrf.mxu0
      %v1008 = vadd.f32 %v952, %v1007
      %v1009 = vpop.f32.mrf.mxu0
      %v1010 = vadd.f32 %v952, %v1009
      %1011 = vmatmul.bf16.gmra.mxu0 %v972
      %v1012 = vpop.f32.mrf.mxu0
      %v1013 = vadd.f32 %v952, %v1012
      %v1014 = vpop.f32.mrf.mxu0
      %v1015 = vadd.f32 %v952, %v1014
      %1016 = vmatmul.bf16.gmra.mxu0 %v974
      %v1017 = vpop.f32.mrf.mxu0
      %v1018 = vadd.f32 %v952, %v1017
      %v1019 = vpop.f32.mrf.mxu0
      %v1020 = vadd.f32 %v952, %v1019
      %1021 = vmatmul.bf16.gmra.mxu0 %v976
      %v1022 = vpop.f32.mrf.mxu0
      %v1023 = vadd.f32 %v952, %v1022
      %v1024 = vpop.f32.mrf.mxu0
      %v1025 = vadd.f32 %v952, %v1024
      %1026 = vmatmul.bf16.gmra.mxu0 %v978
      %v1027 = vpop.f32.mrf.mxu0
      %v1028 = vadd.f32 %v952, %v1027
      %v1029 = vpop.f32.mrf.mxu0
      %1030 = vdwg.mxu0
      %vm1031 = vcmp.ge.f32.partialorder %v993, 0.0
      %vm1032 = vcmp.ge.f32.partialorder %v995, 0.0
      %vm1033 = vcmp.ge.f32.partialorder %v998, 0.0
      %vm1034 = vcmp.ge.f32.partialorder %v1000, 0.0
      %vm1035 = vcmp.ge.f32.partialorder %v1003, 0.0
      %vm1036 = vcmp.ge.f32.partialorder %v1005, 0.0
      %vm1037 = vcmp.ge.f32.partialorder %v1008, 0.0
      %vm1038 = vcmp.ge.f32.partialorder %v1010, 0.0
      %vm1039 = vcmp.ge.f32.partialorder %v1013, 0.0
      %vm1040 = vcmp.ge.f32.partialorder %v1015, 0.0
      %vm1041 = vcmp.ge.f32.partialorder %v1018, 0.0
      %vm1042 = vcmp.ge.f32.partialorder %v1020, 0.0
      %vm1043 = vcmp.ge.f32.partialorder %v1023, 0.0
      %vm1044 = vcmp.ge.f32.partialorder %v1025, 0.0
      %vm1045 = vcmp.ge.f32.partialorder %v1028, 0.0
      %v1046 = vmul.f32 %v993, 0.2
      %v1047 = vmul.f32 %v995, 0.2
      %v1048 = vmul.f32 %v998, 0.2
      %v1049 = vmul.f32 %v1000, 0.2
      %v1050 = vmul.f32 %v1003, 0.2
      %v1051 = vmul.f32 %v1005, 0.2
      %v1052 = vmul.f32 %v1008, 0.2
      %v1053 = vmul.f32 %v1010, 0.2
      %v1054 = vmul.f32 %v1013, 0.2
      %v1055 = vmul.f32 %v1015, 0.2
      %v1056 = vmul.f32 %v1018, 0.2
      %v1057 = vmul.f32 %v1020, 0.2
      %v1058 = vmul.f32 %v1023, 0.2
      %v1059 = vmul.f32 %v1025, 0.2
      %v1060 = vmul.f32 %v1028, 0.2
      %v1061 = vsel %vm1031, %v993, %v1046
      %v1062 = vsel %vm1032, %v995, %v1047
      %v1063 = vsel %vm1033, %v998, %v1048
      %v1064 = vsel %vm1034, %v1000, %v1049
      %v1065 = vsel %vm1035, %v1003, %v1050
      %v1066 = vsel %vm1036, %v1005, %v1051
      %v1067 = vsel %vm1037, %v1008, %v1052
      %v1068 = vsel %vm1038, %v1010, %v1053
      %v1069 = vsel %vm1039, %v1013, %v1054
      %v1070 = vsel %vm1040, %v1015, %v1055
      %v1071 = vsel %vm1041, %v1018, %v1056
      %v1072 = vsel %vm1042, %v1020, %v1057
      %v1073 = vsel %vm1043, %v1023, %v1058
      %v1074 = vsel %vm1044, %v1025, %v1059
      %v1075 = vsel %vm1045, %v1028, %v1060
      %v1076 = vpack.c.bf16 %v1062, %v1061
      %v1077 = vpack.c.bf16 %v1064, %v1063
      %v1078 = vpack.c.bf16 %v1066, %v1065
      %v1079 = vpack.c.bf16 %v1068, %v1067
      %v1080 = vpack.c.bf16 %v1070, %v1069
      %v1081 = vpack.c.bf16 %v1072, %v1071
      %v1082 = vpack.c.bf16 %v1074, %v1073
      %v1083 = vpack.c.bf16 %v1075, %v1075
      %v1084 = vld [vmem:[%s6] sm:$0xf]
      %v1085 = vld [vmem:[%s7] sm:$0x1]
      %v1087 = vperm.slane %v1085, 0
      %v1090 = vsel %vm574, %v1076, 0
      %v1093 = vsel %vm574, %v1077, 0
      %v1096 = vsel %vm574, %v1078, 0
      %v1099 = vsel %vm574, %v1079, 0
      %v1102 = vsel %vm574, %v1080, 0
      %v1105 = vsel %vm574, %v1081, 0
      %v1108 = vsel %vm574, %v1082, 0
      %v1111 = vsel %vm574, %v1083, 0
      %v1114 = vsel %vm488, %v1084, 0
      %1116 = vmatpush.bf16.msra.mxu0 0
      %1117 = vmatpush.bf16.msra.mxu0 0
      %1118 = vmatpush.bf16.msra.mxu0 0
      %1119 = vmatpush.bf16.msra.mxu0 0
      %1120 = vmatpush.bf16.msra.mxu0 0
      %1121 = vmatpush.bf16.msra.mxu0 0
      %1122 = vmatpush.bf16.msra.mxu0 0
      %1123 = vmatpush.bf16.msra.mxu0 %v1114
      %1124 = vmatmul.bf16.gmra.mxu0 %v1090
      %v1125 = vpop.f32.mrf.mxu0
      %v1126 = vadd.f32 %v1087, %v1125
      %v1127 = vpop.f32.mrf.mxu0
      %v1128 = vadd.f32 %v1087, %v1127
      %1129 = vmatmul.bf16.gmra.mxu0 %v1093
      %v1130 = vpop.f32.mrf.mxu0
      %v1131 = vadd.f32 %v1087, %v1130
      %v1132 = vpop.f32.mrf.mxu0
      %v1133 = vadd.f32 %v1087, %v1132
      %1134 = vmatmul.bf16.gmra.mxu0 %v1096
      %v1135 = vpop.f32.mrf.mxu0
      %v1136 = vadd.f32 %v1087, %v1135
      %v1137 = vpop.f32.mrf.mxu0
      %v1138 = vadd.f32 %v1087, %v1137
      %1139 = vmatmul.bf16.gmra.mxu0 %v1099
      %v1140 = vpop.f32.mrf.mxu0
      %v1141 = vadd.f32 %v1087, %v1140
      %v1142 = vpop.f32.mrf.mxu0
      %v1143 = vadd.f32 %v1087, %v1142
      %1144 = vmatmul.bf16.gmra.mxu0 %v1102
      %v1145 = vpop.f32.mrf.mxu0
      %v1146 = vadd.f32 %v1087, %v1145
      %v1147 = vpop.f32.mrf.mxu0
      %v1148 = vadd.f32 %v1087, %v1147
      %1149 = vmatmul.bf16.gmra.mxu0 %v1105
      %v1150 = vpop.f32.mrf.mxu0
      %v1151 = vadd.f32 %v1087, %v1150
      %v1152 = vpop.f32.mrf.mxu0
      %v1153 = vadd.f32 %v1087, %v1152
      %1154 = vmatmul.bf16.gmra.mxu0 %v1108
      %v1155 = vpop.f32.mrf.mxu0
      %v1156 = vadd.f32 %v1087, %v1155
      %v1157 = vpop.f32.mrf.mxu0
      %v1158 = vadd.f32 %v1087, %v1157
      %1159 = vmatmul.bf16.gmra.mxu0 %v1111
      %v1160 = vpop.f32.mrf.mxu0
      %v1161 = vadd.f32 %v1087, %v1160
      %v1162 = vpop.f32.mrf.mxu0
      %1163 = vdwg.mxu0
      %v1164 = vadd.f32 %v612, %v1126
      %v1165 = vadd.f32 %v614, %v1128
      %v1166 = vadd.f32 %v617, %v1131
      %v1167 = vadd.f32 %v619, %v1133
      %v1168 = vadd.f32 %v622, %v1136
      %v1169 = vadd.f32 %v624, %v1138
      %v1170 = vadd.f32 %v627, %v1141
      %v1171 = vadd.f32 %v629, %v1143
      %v1172 = vadd.f32 %v632, %v1146
      %v1173 = vadd.f32 %v634, %v1148
      %v1174 = vadd.f32 %v637, %v1151
      %v1175 = vadd.f32 %v639, %v1153
      %v1176 = vadd.f32 %v642, %v1156
      %v1177 = vadd.f32 %v644, %v1158
      %v1178 = vadd.f32 %v647, %v1161
      %v1179 = vpack.c.bf16 %v1164, %v1164
      %v1180 = vpack.c.bf16 %v1165, %v1165
      %v1181 = vpack.c.bf16 %v1166, %v1166
      %v1182 = vpack.c.bf16 %v1167, %v1167
      %v1183 = vpack.c.bf16 %v1168, %v1168
      %v1184 = vpack.c.bf16 %v1169, %v1169
      %v1185 = vpack.c.bf16 %v1170, %v1170
      %v1186 = vpack.c.bf16 %v1171, %v1171
      %v1187 = vpack.c.bf16 %v1172, %v1172
      %v1188 = vpack.c.bf16 %v1173, %v1173
      %v1189 = vpack.c.bf16 %v1174, %v1174
      %v1190 = vpack.c.bf16 %v1175, %v1175
      %v1191 = vpack.c.bf16 %v1176, %v1176
      %v1192 = vpack.c.bf16 %v1177, %v1177
      %v1193 = vpack.c.bf16 %v1178, %v1178
      %vm1194 = vcmask 60416
      %1195 = vst.msk [vmem:[%s413] sm:$0xf] %vm1194, %v1179
      %1196 = vst.msk [vmem:[%s413 + $0x4] sm:$0xf] %vm1194, %v1180
      %1197 = vst.msk [vmem:[%s413 + $0x8] sm:$0xf] %vm1194, %v1181
      %1198 = vst.msk [vmem:[%s413 + $0xc] sm:$0xf] %vm1194, %v1182
      %1199 = vst.msk [vmem:[%s413 + $0x10] sm:$0xf] %vm1194, %v1183
      %1200 = vst.msk [vmem:[%s413 + $0x14] sm:$0xf] %vm1194, %v1184
      %1201 = vst.msk [vmem:[%s413 + $0x18] sm:$0xf] %vm1194, %v1185
      %1202 = vst.msk [vmem:[%s413 + $0x1c] sm:$0xf] %vm1194, %v1186
      %1203 = vst.msk [vmem:[%s413 + $0x20] sm:$0xf] %vm1194, %v1187
      %1204 = vst.msk [vmem:[%s413 + $0x24] sm:$0xf] %vm1194, %v1188
      %1205 = vst.msk [vmem:[%s413 + $0x28] sm:$0xf] %vm1194, %v1189
      %1206 = vst.msk [vmem:[%s413 + $0x2c] sm:$0xf] %vm1194, %v1190
      %1207 = vst.msk [vmem:[%s413 + $0x30] sm:$0xf] %vm1194, %v1191
      %1208 = vst.msk [vmem:[%s413 + $0x34] sm:$0xf] %vm1194, %v1192
      %1209 = vst.msk [vmem:[%s413 + $0x38] sm:$0xf] %vm1194, %v1193
      %s1210 = smul.u32 15, %s24
      %p1211 = scmp.lt.s32.totalorder %s23, 1
      %s1212 = scalar_select %p1211, %s23, 1
      %p1213 = scmp.lt.s32.totalorder %s1210, 14
      %s1214 = scalar_select %p1213, %s1210, 14
      %s1215 = smul.addr %s1212, 15
      %s1216 = sadd.s32 %s1214, %s1215
      %s1217 = smul.addr %s1216, 4
      %s1218 = scalar_lea.vmem %s8, %s1217
      // Predicated region
      $region53: #{forward.25} parent=51 // pred_check
        %p1219 = pneg %p237
      $region54: #{forward.25} parent=51 // pred_check_branch
        %1221 = sbr.rel (%p1219) target = $region56
      $region55: #{forward.25} parent=51 // pred_region
        %s1222 = smul.u32 15, %s24
      $region56: #{forward.25} parent=51 // pred_fallthru
        _
    $region52: #{forward.25} parent=5 // pred_fallthru
      _
    %p1223 = scmp.le.s32.totalorder 2, %s14
    // Predicated region
    $region57: #{forward.25} parent=5 // pred_check
      %p1224 = pneg %p1223
    $region58: #{forward.25} parent=5 // pred_check_branch
      %1226 = sbr.rel (%p1224) target = $region60
    $region59: #{forward.25} parent=5 // pred_region
      %s1227 = ssub.s32 %s14, 2
      // Predicated region
      $region61: #{forward.25} parent=59 // pred_check
        %p1228 = pneg %p243
      $region62: #{forward.25} parent=59 // pred_check_branch
        %1230 = sbr.rel (%p1228) target = $region64
      $region63: #{forward.25} parent=59 // pred_region
        %s1231 = smul.u32 15, %s26
        %p1232 = scmp.lt.s32.totalorder %s25, 1
        %s1233 = scalar_select %p1232, %s25, 1
        %p1234 = scmp.lt.s32.totalorder %s1231, 14
        %s1235 = scalar_select %p1234, %s1231, 14
        %s1236 = smul.addr %s1233, 15
        %s1237 = sadd.s32 %s1235, %s1236
        %s1238 = smul.addr %s1237, 4
        %s1239 = scalar_lea.vmem %s8, %s1238
      $region64: #{forward.25} parent=59 // pred_fallthru
        _
    $region60: #{forward.25} parent=5 // pred_fallthru
      _
  $region6: #{forward.25} parent=0 // loop_footer
    %s18 = sadd.s32 1, %s14
  $region7: #{forward.25} parent=0 // loop_footer_branch
    %13 = sbr.rel target = $region3
  $region8: #{forward.25} parent=0 // loop_exit
    _

// kernel: forward.27
$region0: #{forward.27}
  #allocation0 [shape = 'u32[]', space=smem, size = 0x4, offset = 0x4, fixed_abs, tag = 'smem constant byte address 0x4 - core index']
  #allocation1 [shape = 'u32[72,128]{1,0:T(1,128)}', space=vmem, size = 0x9000, scoped, tag = 'internal scratch']
  %s0 = inlined_call_operand.vmem [shape: bf16[2,64,16], index: 0, kind: input, shape index: {}, may-alias: {0,1}]
  %s1 = inlined_call_operand.vmem [shape: bf16[2,64,16], index: 1, kind: input, shape index: {}, may-alias: {0,1}]
  %s2 = inlined_call_operand.vmem [shape: bf16[16,16], index: 2, kind: input, shape index: {}]
  %s3 = inlined_call_operand.vmem [shape: f32[1,16], index: 3, kind: input, shape index: {}]
  %s4 = inlined_call_operand.vmem [shape: bf16[48,16], index: 4, kind: input, shape index: {}]
  %s5 = inlined_call_operand.vmem [shape: f32[1,16], index: 5, kind: input, shape index: {}]
  %s6 = inlined_call_operand.vmem [shape: bf16[16,16], index: 6, kind: input, shape index: {}]
  %s7 = inlined_call_operand.vmem [shape: f32[1,16], index: 7, kind: input, shape index: {}]
  %s8 = inlined_call_operand.vmem [shape: bf16[2,56,16], index: 8, kind: output, shape index: {}]
  %s9 = sld [smem:[#allocation0]]
  $region65: #{forward.27} parent=0
    _
  %s11 = ssub.s32 1, %s9
  %s12 = scalar_select 0, %s11, %s9
  loop: start=0, step=1, limit=4
  $region2: #{forward.27} parent=0 // loop_pre_header
    _
  $region3: #{forward.27} parent=0 // loop_header
    %s14 = sphi 0, %s18
    %p15 = scmp.ge.s32.totalorder %s14, 4
    %s21 = sphi 0, %s33
    %s22 = sphi 0, %s29
    %s23 = sphi 0, %s21
    %s24 = sphi 0, %s22
    %s25 = sphi 0, %s23
    %s26 = sphi 0, %s24
    %s38 = sphi 0, %s40
    %s41 = sphi 0, %s38
    %s42 = sphi 0, %s41
    %s58 = sphi 0, %s42
    %s70 = sphi 0, %s72
    %s73 = sphi 0, %s70
    %s74 = sphi 0, %s73
    %s90 = sphi 0, %s74
    %s94 = sphi 0, %s94
    %s96 = sphi 0, %s94
    %s97 = sphi 0, %s96
    %s111 = sphi 0, %s97
    %s115 = sphi 0, %s115
    %s117 = sphi 0, %s115
    %s118 = sphi 0, %s117
    %s132 = sphi 0, %s118
    %s136 = sphi 0, %s136
    %s138 = sphi 0, %s136
    %s139 = sphi 0, %s138
    %s153 = sphi 0, %s139
    %s157 = sphi 0, %s157
    %s159 = sphi 0, %s157
    %s160 = sphi 0, %s159
    %s174 = sphi 0, %s160
    %s178 = sphi 0, %s178
    %s180 = sphi 0, %s178
    %s181 = sphi 0, %s180
    %s195 = sphi 0, %s181
    %s199 = sphi 0, %s199
    %s201 = sphi 0, %s199
    %s202 = sphi 0, %s201
    %s216 = sphi 0, %s202
    %s224 = sphi 0, %s226
    %s227 = sphi 0, %s224
    %s228 = sphi 0, %s227
    %s244 = sphi 0, %s228
  $region4: #{forward.27} parent=0 // loop_header_branch
    %17 = sbr.rel (%p15) target = $region8
  $region5: #{forward.27} parent=0 // loop_body
    %s19 = ssub.s32 %s14, 1
    %s20 = ssub.s32 %s14, 2
    %s27 = sadd.s32 1, %s22
    %p28 = scmp.ge.s32.totalorder %s27, 1
    %s29 = scalar_select %p28, 0, %s27
    %s30 = sadd.s32 1, %s21
    %s31 = scalar_select %p28, %s30, %s21
    %p32 = scmp.ge.s32.totalorder %s31, 2
    %s33 = scalar_select %p32, 0, %s31
    %s34 = ssub.s32 %s21, %s33
    %s35 = ssub.s32 %s22, %s29
    %s36 = sor.u32 %s34, %s35
    %p37 = scmp.eq.s32.totalorder %s36, 0
    %s39 = sadd.s32 %s38, 1
    %s40 = scalar_select %p37, %s38, %s39
    %p43 = pneg %p37
    %p44 = scmp.eq.s32.totalorder %s14, 1
    %p45 = por %p43, %p44
    %p46 = scmp.ne.s32.totalorder %s38, %s41
    %p47 = scmp.eq.s32.totalorder %s14, 0
    %p48 = por %p46, %p47
    %p49 = scmp.ne.s32.totalorder %s38, %s41
    %p50 = scmp.eq.s32.totalorder %s19, 1
    %p51 = por %p49, %p50
    %p52 = scmp.ne.s32.totalorder %s41, %s42
    %p53 = scmp.eq.s32.totalorder %s19, 0
    %p54 = por %p52, %p53
    %p55 = scmp.ne.s32.totalorder %s41, %s42
    %p56 = scmp.eq.s32.totalorder %s20, 1
    %p57 = por %p55, %p56
    %p59 = scmp.ne.s32.totalorder %s42, %s58
    %p60 = scmp.eq.s32.totalorder %s20, 0
    %p61 = por %p59, %p60
    %s62 = sadd.s32 %s22, 1
    %s63 = smul.u32 %s62, 7
    %s64 = sadd.s32 %s29, 1
    %s65 = smul.u32 %s64, 7
    %s66 = ssub.s32 %s21, %s33
    %s67 = ssub.s32 %s63, %s65
    %s68 = sor.u32 %s66, %s67
    %p69 = scmp.eq.s32.totalorder %s68, 0
    %s71 = sadd.s32 %s70, 1
    %s72 = scalar_select %p69, %s70, %s71
    %p75 = pneg %p69
    %p76 = scmp.eq.s32.totalorder %s14, 1
    %p77 = por %p75, %p76
    %p78 = scmp.ne.s32.totalorder %s70, %s73
    %p79 = scmp.eq.s32.totalorder %s14, 0
    %p80 = por %p78, %p79
    %p81 = scmp.ne.s32.totalorder %s70, %s73
    %p82 = scmp.eq.s32.totalorder %s19, 1
    %p83 = por %p81, %p82
    %p84 = scmp.ne.s32.totalorder %s73, %s74
    %p85 = scmp.eq.s32.totalorder %s19, 0
    %p86 = por %p84, %p85
    %p87 = scmp.ne.s32.totalorder %s73, %s74
    %p88 = scmp.eq.s32.totalorder %s20, 1
    %p89 = por %p87, %p88
    %p91 = scmp.ne.s32.totalorder %s74, %s90
    %p92 = scmp.eq.s32.totalorder %s20, 0
    %p93 = por %p91, %p92
    %s95 = sadd.s32 %s94, 1
    %p98 = scmp.eq.s32.totalorder %s14, 1
    %p99 = scmp.ne.s32.totalorder %s94, %s96
    %p100 = scmp.eq.s32.totalorder %s14, 0
    %p101 = por %p99, %p100
    %p102 = scmp.ne.s32.totalorder %s94, %s96
    %p103 = scmp.eq.s32.totalorder %s19, 1
    %p104 = por %p102, %p103
    %p105 = scmp.ne.s32.totalorder %s96, %s97
    %p106 = scmp.eq.s32.totalorder %s19, 0
    %p107 = por %p105, %p106
    %p108 = scmp.ne.s32.totalorder %s96, %s97
    %p109 = scmp.eq.s32.totalorder %s20, 1
    %p110 = por %p108, %p109
    %p112 = scmp.ne.s32.totalorder %s97, %s111
    %p113 = scmp.eq.s32.totalorder %s20, 0
    %p114 = por %p112, %p113
    %s116 = sadd.s32 %s115, 1
    %p119 = scmp.eq.s32.totalorder %s14, 1
    %p120 = scmp.ne.s32.totalorder %s115, %s117
    %p121 = scmp.eq.s32.totalorder %s14, 0
    %p122 = por %p120, %p121
    %p123 = scmp.ne.s32.totalorder %s115, %s117
    %p124 = scmp.eq.s32.totalorder %s19, 1
    %p125 = por %p123, %p124
    %p126 = scmp.ne.s32.totalorder %s117, %s118
    %p127 = scmp.eq.s32.totalorder %s19, 0
    %p128 = por %p126, %p127
    %p129 = scmp.ne.s32.totalorder %s117, %s118
    %p130 = scmp.eq.s32.totalorder %s20, 1
    %p131 = por %p129, %p130
    %p133 = scmp.ne.s32.totalorder %s118, %s132
    %p134 = scmp.eq.s32.totalorder %s20, 0
    %p135 = por %p133, %p134
    %s137 = sadd.s32 %s136, 1
    %p140 = scmp.eq.s32.totalorder %s14, 1
    %p141 = scmp.ne.s32.totalorder %s136, %s138
    %p142 = scmp.eq.s32.totalorder %s14, 0
    %p143 = por %p141, %p142
    %p144 = scmp.ne.s32.totalorder %s136, %s138
    %p145 = scmp.eq.s32.totalorder %s19, 1
    %p146 = por %p144, %p145
    %p147 = scmp.ne.s32.totalorder %s138, %s139
    %p148 = scmp.eq.s32.totalorder %s19, 0
    %p149 = por %p147, %p148
    %p150 = scmp.ne.s32.totalorder %s138, %s139
    %p151 = scmp.eq.s32.totalorder %s20, 1
    %p152 = por %p150, %p151
    %p154 = scmp.ne.s32.totalorder %s139, %s153
    %p155 = scmp.eq.s32.totalorder %s20, 0
    %p156 = por %p154, %p155
    %s158 = sadd.s32 %s157, 1
    %p161 = scmp.eq.s32.totalorder %s14, 1
    %p162 = scmp.ne.s32.totalorder %s157, %s159
    %p163 = scmp.eq.s32.totalorder %s14, 0
    %p164 = por %p162, %p163
    %p165 = scmp.ne.s32.totalorder %s157, %s159
    %p166 = scmp.eq.s32.totalorder %s19, 1
    %p167 = por %p165, %p166
    %p168 = scmp.ne.s32.totalorder %s159, %s160
    %p169 = scmp.eq.s32.totalorder %s19, 0
    %p170 = por %p168, %p169
    %p171 = scmp.ne.s32.totalorder %s159, %s160
    %p172 = scmp.eq.s32.totalorder %s20, 1
    %p173 = por %p171, %p172
    %p175 = scmp.ne.s32.totalorder %s160, %s174
    %p176 = scmp.eq.s32.totalorder %s20, 0
    %p177 = por %p175, %p176
    %s179 = sadd.s32 %s178, 1
    %p182 = scmp.eq.s32.totalorder %s14, 1
    %p183 = scmp.ne.s32.totalorder %s178, %s180
    %p184 = scmp.eq.s32.totalorder %s14, 0
    %p185 = por %p183, %p184
    %p186 = scmp.ne.s32.totalorder %s178, %s180
    %p187 = scmp.eq.s32.totalorder %s19, 1
    %p188 = por %p186, %p187
    %p189 = scmp.ne.s32.totalorder %s180, %s181
    %p190 = scmp.eq.s32.totalorder %s19, 0
    %p191 = por %p189, %p190
    %p192 = scmp.ne.s32.totalorder %s180, %s181
    %p193 = scmp.eq.s32.totalorder %s20, 1
    %p194 = por %p192, %p193
    %p196 = scmp.ne.s32.totalorder %s181, %s195
    %p197 = scmp.eq.s32.totalorder %s20, 0
    %p198 = por %p196, %p197
    %s200 = sadd.s32 %s199, 1
    %p203 = scmp.eq.s32.totalorder %s14, 1
    %p204 = scmp.ne.s32.totalorder %s199, %s201
    %p205 = scmp.eq.s32.totalorder %s14, 0
    %p206 = por %p204, %p205
    %p207 = scmp.ne.s32.totalorder %s199, %s201
    %p208 = scmp.eq.s32.totalorder %s19, 1
    %p209 = por %p207, %p208
    %p210 = scmp.ne.s32.totalorder %s201, %s202
    %p211 = scmp.eq.s32.totalorder %s19, 0
    %p212 = por %p210, %p211
    %p213 = scmp.ne.s32.totalorder %s201, %s202
    %p214 = scmp.eq.s32.totalorder %s20, 1
    %p215 = por %p213, %p214
    %p217 = scmp.ne.s32.totalorder %s202, %s216
    %p218 = scmp.eq.s32.totalorder %s20, 0
    %p219 = por %p217, %p218
    %s220 = ssub.s32 %s21, %s33
    %s221 = ssub.s32 %s22, %s29
    %s222 = sor.u32 %s220, %s221
    %p223 = scmp.eq.s32.totalorder %s222, 0
    %s225 = sadd.s32 %s224, 1
    %s226 = scalar_select %p223, %s224, %s225
    %p229 = pneg %p223
    %p230 = scmp.eq.s32.totalorder %s14, 1
    %p231 = por %p229, %p230
    %p232 = scmp.ne.s32.totalorder %s224, %s227
    %p233 = scmp.eq.s32.totalorder %s14, 0
    %p234 = por %p232, %p233
    %p235 = scmp.ne.s32.totalorder %s224, %s227
    %p236 = scmp.eq.s32.totalorder %s19, 1
    %p237 = por %p235, %p236
    %p238 = scmp.ne.s32.totalorder %s227, %s228
    %p239 = scmp.eq.s32.totalorder %s19, 0
    %p240 = por %p238, %p239
    %p241 = scmp.ne.s32.totalorder %s227, %s228
    %p242 = scmp.eq.s32.totalorder %s20, 1
    %p243 = por %p241, %p242
    %p245 = scmp.ne.s32.totalorder %s228, %s244
    %p246 = scmp.eq.s32.totalorder %s20, 0
    %p247 = por %p245, %p246
    %p248 = scmp.le.s32.totalorder 1, %s14
    %p249 = scmp.lt.s32.totalorder %s14, 3
    %p250 = pnand %p248, %p249
    %p251 = pneg %p250
    // Predicated region
    $region9: #{forward.27} parent=5 // pred_check
      _
    $region10: #{forward.27} parent=5 // pred_check_branch
      %253 = sbr.rel (%p250) target = $region12
    $region11: #{forward.27} parent=5 // pred_region
      %s254 = ssub.s32 %s14, 1
      // Predicated region
      $region13: #{forward.27} parent=11 // pred_check
        %p255 = pneg %p107
      $region14: #{forward.27} parent=11 // pred_check_branch
        %257 = sbr.rel (%p255) target = $region16
      $region15: #{forward.27} parent=11 // pred_region
        _
      $region16: #{forward.27} parent=11 // pred_fallthru
        _
      // Predicated region
      $region17: #{forward.27} parent=11 // pred_check
        %p258 = pneg %p128
      $region18: #{forward.27} parent=11 // pred_check_branch
        %260 = sbr.rel (%p258) target = $region20
      $region19: #{forward.27} parent=11 // pred_region
        _
      $region20: #{forward.27} parent=11 // pred_fallthru
        _
      // Predicated region
      $region21: #{forward.27} parent=11 // pred_check
        %p261 = pneg %p149
      $region22: #{forward.27} parent=11 // pred_check_branch
        %263 = sbr.rel (%p261) target = $region24
      $region23: #{forward.27} parent=11 // pred_region
        _
      $region24: #{forward.27} parent=11 // pred_fallthru
        _
      // Predicated region
      $region25: #{forward.27} parent=11 // pred_check
        %p264 = pneg %p170
      $region26: #{forward.27} parent=11 // pred_check_branch
        %266 = sbr.rel (%p264) target = $region28
      $region27: #{forward.27} parent=11 // pred_region
        _
      $region28: #{forward.27} parent=11 // pred_fallthru
        _
      // Predicated region
      $region29: #{forward.27} parent=11 // pred_check
        %p267 = pneg %p191
      $region30: #{forward.27} parent=11 // pred_check_branch
        %269 = sbr.rel (%p267) target = $region32
      $region31: #{forward.27} parent=11 // pred_region
        _
      $region32: #{forward.27} parent=11 // pred_fallthru
        _
      // Predicated region
      $region33: #{forward.27} parent=11 // pred_check
        %p270 = pneg %p212
      $region34: #{forward.27} parent=11 // pred_check_branch
        %272 = sbr.rel (%p270) target = $region36
      $region35: #{forward.27} parent=11 // pred_region
        _
      $region36: #{forward.27} parent=11 // pred_fallthru
        _
    $region12: #{forward.27} parent=5 // pred_fallthru
      _
    %p273 = scmp.lt.s32.totalorder %s14, 2
    // Predicated region
    $region37: #{forward.27} parent=5 // pred_check
      %p274 = pneg %p273
    $region38: #{forward.27} parent=5 // pred_check_branch
      %276 = sbr.rel (%p274) target = $region40
    $region39: #{forward.27} parent=5 // pred_region
      // Predicated region
      $region41: #{forward.27} parent=39 // pred_check
        %p277 = pneg %p48
      $region42: #{forward.27} parent=39 // pred_check_branch
        %279 = sbr.rel (%p277) target = $region44
      $region43: #{forward.27} parent=39 // pred_region
        %s280 = smul.u32 7, %s22
        %s281 = ssub.s32 8, %s280
        %p282 = scmp.lt.s32.totalorder %s281, 7
        %s283 = scalar_select %p282, %s281, 7
        %s284 = smul.u32 4, %s283
        %p285 = scmp.lt.s32.totalorder %s21, 1
        %s286 = scalar_select %p285, %s21, 1
        %p287 = scmp.lt.s32.totalorder %s280, 7
        %s288 = scalar_select %p287, %s280, 7
        %s289 = smul.addr %s286, 8
        %s290 = sadd.s32 %s288, %s289
        %s291 = smul.addr %s290, 4
        %s292 = scalar_lea.vmem %s0, %s291
        %s293 = smul.u32 7, %s22
        %s294 = ssub.s32 8, %s293
        %p295 = scmp.lt.s32.totalorder %s294, 7
        %s296 = scalar_select %p295, %s294, 7
        %s297 = smul.u32 4, %s296
      $region44: #{forward.27} parent=39 // pred_fallthru
        _
      // Predicated region
      $region45: #{forward.27} parent=39 // pred_check
        %p298 = pneg %p80
      $region46: #{forward.27} parent=39 // pred_check_branch
        %300 = sbr.rel (%p298) target = $region48
      $region47: #{forward.27} parent=39 // pred_region
        %s301 = sadd.s32 %s22, 1
        %s302 = smul.u32 %s301, 7
        %p303 = scmp.lt.s32.totalorder %s21, 1
        %s304 = scalar_select %p303, %s21, 1
        %p305 = scmp.lt.s32.totalorder %s302, 7
        %s306 = scalar_select %p305, %s302, 7
        %s307 = smul.addr %s304, 8
        %s308 = sadd.s32 %s306, %s307
        %s309 = smul.addr %s308, 4
        %s310 = scalar_lea.vmem %s1, %s309
        %s311 = sadd.s32 %s22, 1
        %s312 = smul.u32 %s311, 7
      $region48: #{forward.27} parent=39 // pred_fallthru
        _
    $region40: #{forward.27} parent=5 // pred_fallthru
      _
    %p313 = scmp.le.s32.totalorder 1, %s14
    %p314 = scmp.lt.s32.totalorder %s14, 3
    %p315 = pnand %p313, %p314
    %p316 = pneg %p315
    // Predicated region
    $region49: #{forward.27} parent=5 // pred_check
      _
    $region50: #{forward.27} parent=5 // pred_check_branch
      %318 = sbr.rel (%p315) target = $region52
    $region51: #{forward.27} parent=5 // pred_region
      %s319 = ssub.s32 %s14, 1
      %s320 = smul.u32 7, %s24
      %s321 = ssub.s32 8, %s320
      %p322 = scmp.lt.s32.totalorder %s321, 7
      %s323 = scalar_select %p322, %s321, 7
      %s324 = smul.u32 4, %s323
      %p325 = scmp.lt.s32.totalorder %s23, 1
      %s326 = scalar_select %p325, %s23, 1
      %p327 = scmp.lt.s32.totalorder %s320, 7
      %s328 = scalar_select %p327, %s320, 7
      %s329 = smul.addr %s326, 8
      %s330 = sadd.s32 %s328, %s329
      %s331 = smul.addr %s330, 4
      %s332 = scalar_lea.vmem %s0, %s331
      %p333 = pneg %p54
      %p334 = pneg %p51
      %s335 = sadd.s32 %s24, 1
      %s336 = smul.u32 %s335, 7
      %p337 = scmp.lt.s32.totalorder %s23, 1
      %s338 = scalar_select %p337, %s23, 1
      %p339 = scmp.lt.s32.totalorder %s336, 7
      %s340 = scalar_select %p339, %s336, 7
      %s341 = smul.addr %s338, 8
      %s342 = sadd.s32 %s340, %s341
      %s343 = smul.addr %s342, 4
      %s344 = scalar_lea.vmem %s1, %s343
      %p345 = pneg %p86
      %p346 = pneg %p83
      %p347 = pneg %p107
      %p348 = pneg %p104
      %p349 = pneg %p128
      %p350 = pneg %p125
      %p351 = pneg %p149
      %p352 = pneg %p146
      %p353 = pneg %p170
      %p354 = pneg %p167
      %p355 = pneg %p191
      %p356 = pneg %p188
      %p357 = pneg %p212
      %p358 = pneg %p209
      %p359 = pneg %p240
      %p360 = pneg %p237
      %s361 = smul.u32 7, %s24
      %p362 = scmp.lt.s32.totalorder %s23, 1
      %s363 = scalar_select %p362, %s23, 1
      %p364 = scmp.lt.s32.totalorder %s361, 6
      %s365 = scalar_select %p364, %s361, 6
      %s366 = smul.addr %s363, 7
      %s367 = sadd.s32 %s365, %s366
      %s368 = smul.addr %s367, 4
      %s369 = scalar_lea.vmem %s8, %s368
      %s370 = smul.u32 7, %s24
      %s371 = ssub.s32 8, %s370
      %p372 = scmp.lt.s32.totalorder %s371, 7
      %s373 = scalar_select %p372, %s371, 7
      %s374 = smul.u32 4, %s373
      %p375 = scmp.lt.s32.totalorder %s23, 1
      %s376 = scalar_select %p375, %s23, 1
      %p377 = scmp.lt.s32.totalorder %s370, 7
      %s378 = scalar_select %p377, %s370, 7
      %s379 = smul.addr %s376, 8
      %s380 = sadd.s32 %s378, %s379
      %s381 = smul.addr %s380, 4
      %s382 = scalar_lea.vmem %s0, %s381
      %s383 = smul.u32 7, %s24
      %s384 = ssub.s32 8, %s383
      %p385 = scmp.lt.s32.totalorder %s384, 7
      %s386 = scalar_select %p385, %s384, 7
      %s387 = smul.u32 4, %s386
      %s388 = sadd.s32 %s24, 1
      %s389 = smul.u32 %s388, 7
      %p390 = scmp.lt.s32.totalorder %s23, 1
      %s391 = scalar_select %p390, %s23, 1
      %p392 = scmp.lt.s32.totalorder %s389, 7
      %s393 = scalar_select %p392, %s389, 7
      %s394 = smul.addr %s391, 8
      %s395 = sadd.s32 %s393, %s394
      %s396 = smul.addr %s395, 4
      %s397 = scalar_lea.vmem %s1, %s396
      %s398 = sadd.s32 %s24, 1
      %s399 = smul.u32 %s398, 7
      %s400 = smul.u32 7, %s24
      %p401 = scmp.lt.s32.totalorder %s23, 1
      %s402 = scalar_select %p401, %s23, 1
      %p403 = scmp.lt.s32.totalorder %s400, 6
      %s404 = scalar_select %p403, %s400, 6
      %s405 = smul.addr %s402, 7
      %s406 = sadd.s32 %s404, %s405
      %s407 = smul.addr %s406, 4
      %s408 = scalar_lea.vmem %s8, %s407
      %s409 = smul.u32 7, %s24
      %v411 = vld [vmem:[%s382] sm:$0xf]
      %v412 = vld [vmem:[%s382 + $0x4] sm:$0xf]
      %v413 = vld [vmem:[%s382 + $0x8] sm:$0xf]
      %v414 = vld [vmem:[%s382 + $0xc] sm:$0xf]
      %v415 = vld [vmem:[%s382 + $0x10] sm:$0xf]
      %v416 = vld [vmem:[%s382 + $0x14] sm:$0xf]
      %v417 = vld [vmem:[%s382 + $0x18] sm:$0xf]
      %v418 = vld [vmem:[%s397] sm:$0xf]
      %v426 = vunpack.c.l.b16 %v411
      %v427 = vunpack.c.l.b16 %v412
      %v428 = vunpack.c.l.b16 %v413
      %v429 = vunpack.c.l.b16 %v414
      %v430 = vunpack.c.l.b16 %v415
      %v431 = vunpack.c.l.b16 %v416
      %v432 = vunpack.c.l.b16 %v417
      %v433 = vpack.c.b16 %v427, %v426
      %v434 = vpack.c.b16 %v429, %v428
      %v435 = vpack.c.b16 %v431, %v430
      %v436 = vpack.c.b16 %v432, %v432
      %v441 = vunpack.c.l.b16 %v418
      %v442 = vpack.c.b16 %v441, %v441
      %vm443 = vcmask 1043456
      %v446 = vsel %vm443, %v436, %v442
      %v448 = vld [vmem:[%s2] sm:$0xf]
      %v449 = vld [vmem:[%s2 + $0x4] sm:$0xf]
      %v450 = vld [vmem:[%s3] sm:$0x1]
      %v452 = vperm.slane %v450, 0
      %vm454 = vsmask.f32 7424
      %v456 = vshrl.u32 %v433, 16
      %v458 = vshll.u32 %v433, 16
      %v460 = vrot.slane %v458, 1
      %v461 = vor.u32 %v456, %v460
      %v463 = vshll.u32 %v434, 16
      %v465 = vrot.slane %v463, 1
      %v466 = vsel %vm454, %v461, %v465
      %v467 = vshrl.u32 %v434, 16
      %v469 = vor.u32 %v467, %v465
      %v471 = vshll.u32 %v435, 16
      %v473 = vrot.slane %v471, 1
      %v474 = vsel %vm454, %v469, %v473
      %v475 = vshrl.u32 %v435, 16
      %v477 = vor.u32 %v475, %v473
      %v478 = vshll.u32 %v446, 16
      %v480 = vrot.slane %v478, 1
      %v481 = vsel %vm454, %v477, %v480
      %v482 = vshrl.u32 %v446, 16
      %v484 = vor.u32 %v482, %v480
      %v487 = vunpack.c.l.b16 %v448
      %v488 = vunpack.c.l.b16 %v449
      %v489 = vpack.c.b16 %v488, %v487
      %vm491 = vcmask 130048
      %v493 = vsel %vm491, %v466, 0
      %v496 = vsel %vm491, %v474, 0
      %v499 = vsel %vm491, %v481, 0
      %v502 = vsel %vm491, %v484, 0
      %504 = vmatpush.bf16.msra.mxu0 0
      %505 = vmatpush.bf16.msra.mxu0 0
      %506 = vmatpush.bf16.msra.mxu0 0
      %507 = vmatpush.bf16.msra.mxu0 0
      %508 = vmatpush.bf16.msra.mxu0 0
      %509 = vmatpush.bf16.msra.mxu0 0
      %510 = vmatpush.bf16.msra.mxu0 0
      %511 = vmatpush.bf16.msra.mxu0 %v489
      %512 = vmatmul.bf16.gmra.mxu0 %v493
      %v513 = vpop.f32.mrf.mxu0
      %v514 = vadd.f32 %v452, %v513
      %v515 = vpop.f32.mrf.mxu0
      %v516 = vadd.f32 %v452, %v515
      %517 = vmatmul.bf16.gmra.mxu0 %v496
      %v518 = vpop.f32.mrf.mxu0
      %v519 = vadd.f32 %v452, %v518
      %v520 = vpop.f32.mrf.mxu0
      %v521 = vadd.f32 %v452, %v520
      %522 = vmatmul.bf16.gmra.mxu0 %v499
      %v523 = vpop.f32.mrf.mxu0
      %v524 = vadd.f32 %v452, %v523
      %v525 = vpop.f32.mrf.mxu0
      %v526 = vadd.f32 %v452, %v525
      %527 = vmatmul.bf16.gmra.mxu0 %v502
      %v528 = vpop.f32.mrf.mxu0
      %v529 = vadd.f32 %v452, %v528
      %v530 = vpop.f32.mrf.mxu0
      %531 = vdwg.mxu0
      %v532 = vunpack.c.l.bf16 %v433
      %v533 = vunpack.c.h.bf16 %v433
      %v534 = vunpack.c.l.bf16 %v434
      %v535 = vunpack.c.h.bf16 %v434
      %v536 = vunpack.c.l.bf16 %v435
      %v537 = vunpack.c.h.bf16 %v435
      %v538 = vunpack.c.l.bf16 %v446
      %v539 = vunpack.c.h.bf16 %v446
      %vm540 = vcmp.ge.f32.partialorder %v532, 0.0
      %vm541 = vcmp.ge.f32.partialorder %v533, 0.0
      %vm542 = vcmp.ge.f32.partialorder %v534, 0.0
      %vm543 = vcmp.ge.f32.partialorder %v535, 0.0
      %vm544 = vcmp.ge.f32.partialorder %v536, 0.0
      %vm545 = vcmp.ge.f32.partialorder %v537, 0.0
      %vm546 = vcmp.ge.f32.partialorder %v538, 0.0
      %vm547 = vcmp.ge.f32.partialorder %v539, 0.0
      %v548 = vmul.f32 %v532, 0.2
      %v549 = vmul.f32 %v533, 0.2
      %v550 = vmul.f32 %v534, 0.2
      %v551 = vmul.f32 %v535, 0.2
      %v552 = vmul.f32 %v536, 0.2
      %v553 = vmul.f32 %v537, 0.2
      %v554 = vmul.f32 %v538, 0.2
      %v555 = vmul.f32 %v539, 0.2
      %v556 = vsel %vm540, %v532, %v548
      %v557 = vsel %vm541, %v533, %v549
      %v558 = vsel %vm542, %v534, %v550
      %v559 = vsel %vm543, %v535, %v551
      %v560 = vsel %vm544, %v536, %v552
      %v561 = vsel %vm545, %v537, %v553
      %v562 = vsel %vm546, %v538, %v554
      %v563 = vsel %vm547, %v539, %v555
      %v564 = vpack.c.bf16 %v556, %v556
      %v565 = vpack.c.bf16 %v557, %v557
      %v566 = vpack.c.bf16 %v558, %v558
      %v567 = vpack.c.bf16 %v559, %v559
      %v568 = vpack.c.bf16 %v560, %v560
      %v569 = vpack.c.bf16 %v561, %v561
      %v570 = vpack.c.bf16 %v562, %v562
      %v571 = vpack.c.bf16 %v563, %v563
      %v579 = vunpack.c.l.b16 %v564
      %v580 = vunpack.c.l.b16 %v565
      %v581 = vunpack.c.l.b16 %v566
      %v582 = vunpack.c.l.b16 %v567
      %v583 = vunpack.c.l.b16 %v568
      %v584 = vunpack.c.l.b16 %v569
      %v585 = vunpack.c.l.b16 %v570
      %v586 = vpack.c.b16 %v580, %v579
      %v587 = vpack.c.b16 %v582, %v581
      %v588 = vpack.c.b16 %v584, %v583
      %v589 = vpack.c.b16 %v585, %v585
      %v591 = vunpack.c.l.b16 %v571
      %v592 = vpack.c.b16 %v591, %v585
      %v594 = vshrl.u32 %v586, 16
      %v596 = vshll.u32 %v586, 16
      %v598 = vrot.slane %v596, 1
      %v599 = vor.u32 %v594, %v598
      %v601 = vshll.u32 %v587, 16
      %v603 = vrot.slane %v601, 1
      %v604 = vsel %vm454, %v599, %v603
      %v605 = vshrl.u32 %v587, 16
      %v607 = vor.u32 %v605, %v603
      %v609 = vshll.u32 %v588, 16
      %v611 = vrot.slane %v609, 1
      %v612 = vsel %vm454, %v607, %v611
      %v613 = vshrl.u32 %v588, 16
      %v615 = vor.u32 %v613, %v611
      %v617 = vshll.u32 %v592, 16
      %v619 = vrot.slane %v617, 1
      %v620 = vsel %vm454, %v615, %v619
      %v621 = vshrl.u32 %v592, 16
      %v623 = vor.u32 %v621, %v619
      %624 = vrot.lane.b32.xlu0 %v604, 16
      %v625 = vpop.permute.xlu0 %624
      %626 = vrot.lane.b32.xlu0 %v612, 16
      %v627 = vpop.permute.xlu0 %626
      %628 = vrot.lane.b32.xlu0 %v620, 16
      %v629 = vpop.permute.xlu0 %628
      %630 = vrot.lane.b32.xlu0 %v623, 16
      %v631 = vpop.permute.xlu0 %630
      %vm632 = vcmask 1046528
      %v633 = vrot.slane %v586, 1
      %v634 = vrot.slane %v587, 1
      %v635 = vsel %vm632, %v633, %v634
      %v636 = vrot.slane %v588, 1
      %v637 = vsel %vm632, %v634, %v636
      %v638 = vrot.slane %v592, 1
      %v639 = vsel %vm632, %v636, %v638
      %640 = vrot.lane.b32.xlu0 %v635, 32
      %v641 = vpop.permute.xlu0 %640
      %642 = vrot.lane.b32.xlu0 %v637, 32
      %v643 = vpop.permute.xlu0 %642
      %644 = vrot.lane.b32.xlu0 %v639, 32
      %v645 = vpop.permute.xlu0 %644
      %646 = vrot.lane.b32.xlu0 %v638, 32
      %v647 = vpop.permute.xlu0 %646
      %v649 = vsel %vm491, %v586, %v625
      %v651 = vsel %vm491, %v587, %v627
      %v653 = vsel %vm491, %v588, %v629
      %v656 = vsel %vm491, %v589, %v631
      %vm657 = vcmask 261120
      %v659 = vsel %vm657, %v649, %v641
      %v661 = vsel %vm657, %v651, %v643
      %v663 = vsel %vm657, %v653, %v645
      %v665 = vsel %vm657, %v656, %v647
      %v666 = vld [vmem:[%s4] sm:$0xf]
      %v667 = vld [vmem:[%s4 + $0x4] sm:$0xf]
      %v668 = vld [vmem:[%s4 + $0x8] sm:$0xf]
      %v669 = vld [vmem:[%s4 + $0xc] sm:$0xf]
      %v670 = vld [vmem:[%s4 + $0x10] sm:$0xf]
      %v671 = vld [vmem:[%s4 + $0x14] sm:$0xf]
      %v672 = vld [vmem:[%s5] sm:$0x1]
      %v674 = vperm.slane %v672, 0
      %v682 = vunpack.c.l.b16 %v666
      %v683 = vunpack.c.l.b16 %v667
      %v684 = vunpack.c.l.b16 %v668
      %v685 = vunpack.c.l.b16 %v669
      %v686 = vunpack.c.l.b16 %v670
      %v687 = vunpack.c.l.b16 %v671
      %v688 = vpack.c.b16 %v683, %v682
      %v689 = vpack.c.b16 %v685, %v684
      %v690 = vpack.c.b16 %v687, %v686
      %vm694 = vcmask 392192
      %v695 = vsel %vm694, %v659, 0
      %v697 = vsel %vm694, %v661, 0
      %v699 = vsel %vm694, %v663, 0
      %v701 = vsel %vm694, %v665, 0
      %703 = vmatpush.bf16.msra.mxu0 0
      %704 = vmatpush.bf16.msra.mxu0 0
      %705 = vmatpush.bf16.msra.mxu0 0
      %706 = vmatpush.bf16.msra.mxu0 0
      %707 = vmatpush.bf16.msra.mxu0 0
      %708 = vmatpush.bf16.msra.mxu0 %v690
      %709 = vmatpush.bf16.msra.mxu0 %v689
      %710 = vmatpush.bf16.msra.mxu0 %v688
      %711 = vmatmul.bf16.gmra.mxu0 %v695
      %v712 = vpop.f32.mrf.mxu0
      %v713 = vadd.f32 %v674, %v712
      %v714 = vpop.f32.mrf.mxu0
      %v715 = vadd.f32 %v674, %v714
      %716 = vmatmul.bf16.gmra.mxu0 %v697
      %v717 = vpop.f32.mrf.mxu0
      %v718 = vadd.f32 %v674, %v717
      %v719 = vpop.f32.mrf.mxu0
      %v720 = vadd.f32 %v674, %v719
      %721 = vmatmul.bf16.gmra.mxu0 %v699
      %v722 = vpop.f32.mrf.mxu0
      %v723 = vadd.f32 %v674, %v722
      %v724 = vpop.f32.mrf.mxu0
      %v725 = vadd.f32 %v674, %v724
      %726 = vmatmul.bf16.gmra.mxu0 %v701
      %v727 = vpop.f32.mrf.mxu0
      %v728 = vadd.f32 %v674, %v727
      %v729 = vpop.f32.mrf.mxu0
      %730 = vdwg.mxu0
      %vm731 = vcmp.ge.f32.partialorder %v713, 0.0
      %vm732 = vcmp.ge.f32.partialorder %v715, 0.0
      %vm733 = vcmp.ge.f32.partialorder %v718, 0.0
      %vm734 = vcmp.ge.f32.partialorder %v720, 0.0
      %vm735 = vcmp.ge.f32.partialorder %v723, 0.0
      %vm736 = vcmp.ge.f32.partialorder %v725, 0.0
      %vm737 = vcmp.ge.f32.partialorder %v728, 0.0
      %v738 = vmul.f32 %v713, 0.2
      %v739 = vmul.f32 %v715, 0.2
      %v740 = vmul.f32 %v718, 0.2
      %v741 = vmul.f32 %v720, 0.2
      %v742 = vmul.f32 %v723, 0.2
      %v743 = vmul.f32 %v725, 0.2
      %v744 = vmul.f32 %v728, 0.2
      %v745 = vsel %vm731, %v713, %v738
      %v746 = vsel %vm732, %v715, %v739
      %v747 = vsel %vm733, %v718, %v740
      %v748 = vsel %vm734, %v720, %v741
      %v749 = vsel %vm735, %v723, %v742
      %v750 = vsel %vm736, %v725, %v743
      %v751 = vsel %vm737, %v728, %v744
      %v752 = vpack.c.bf16 %v746, %v745
      %v753 = vpack.c.bf16 %v748, %v747
      %v754 = vpack.c.bf16 %v750, %v749
      %v755 = vpack.c.bf16 %v751, %v751
      %v756 = vld [vmem:[%s6] sm:$0xf]
      %v757 = vld [vmem:[%s6 + $0x4] sm:$0xf]
      %v758 = vld [vmem:[%s7] sm:$0x1]
      %v760 = vperm.slane %v758, 0
      %v764 = vunpack.c.l.b16 %v756
      %v765 = vunpack.c.l.b16 %v757
      %v766 = vpack.c.b16 %v765, %v764
      %v769 = vsel %vm491, %v752, 0
      %v772 = vsel %vm491, %v753, 0
      %v775 = vsel %vm491, %v754, 0
      %v778 = vsel %vm491, %v755, 0
      %780 = vmatpush.bf16.msra.mxu0 0
      %781 = vmatpush.bf16.msra.mxu0 0
      %782 = vmatpush.bf16.msra.mxu0 0
      %783 = vmatpush.bf16.msra.mxu0 0
      %784 = vmatpush.bf16.msra.mxu0 0
      %785 = vmatpush.bf16.msra.mxu0 0
      %786 = vmatpush.bf16.msra.mxu0 0
      %787 = vmatpush.bf16.msra.mxu0 %v766
      %788 = vmatmul.bf16.gmra.mxu0 %v769
      %v789 = vpop.f32.mrf.mxu0
      %v790 = vadd.f32 %v760, %v789
      %v791 = vpop.f32.mrf.mxu0
      %v792 = vadd.f32 %v760, %v791
      %793 = vmatmul.bf16.gmra.mxu0 %v772
      %v794 = vpop.f32.mrf.mxu0
      %v795 = vadd.f32 %v760, %v794
      %v796 = vpop.f32.mrf.mxu0
      %v797 = vadd.f32 %v760, %v796
      %798 = vmatmul.bf16.gmra.mxu0 %v775
      %v799 = vpop.f32.mrf.mxu0
      %v800 = vadd.f32 %v760, %v799
      %v801 = vpop.f32.mrf.mxu0
      %v802 = vadd.f32 %v760, %v801
      %803 = vmatmul.bf16.gmra.mxu0 %v778
      %v804 = vpop.f32.mrf.mxu0
      %v805 = vadd.f32 %v760, %v804
      %v806 = vpop.f32.mrf.mxu0
      %807 = vdwg.mxu0
      %v808 = vadd.f32 %v514, %v790
      %v809 = vadd.f32 %v516, %v792
      %v810 = vadd.f32 %v519, %v795
      %v811 = vadd.f32 %v521, %v797
      %v812 = vadd.f32 %v524, %v800
      %v813 = vadd.f32 %v526, %v802
      %v814 = vadd.f32 %v529, %v805
      %v815 = vpack.c.bf16 %v808, %v808
      %v816 = vpack.c.bf16 %v809, %v809
      %v817 = vpack.c.bf16 %v810, %v810
      %v818 = vpack.c.bf16 %v811, %v811
      %v819 = vpack.c.bf16 %v812, %v812
      %v820 = vpack.c.bf16 %v813, %v813
      %v821 = vpack.c.bf16 %v814, %v814
      %vm822 = vcmask 125952
      %823 = vst.msk [vmem:[%s408] sm:$0xf] %vm822, %v815
      %824 = vst.msk [vmem:[%s408 + $0x4] sm:$0xf] %vm822, %v816
      %825 = vst.msk [vmem:[%s408 + $0x8] sm:$0xf] %vm822, %v817
      %826 = vst.msk [vmem:[%s408 + $0xc] sm:$0xf] %vm822, %v818
      %827 = vst.msk [vmem:[%s408 + $0x10] sm:$0xf] %vm822, %v819
      %828 = vst.msk [vmem:[%s408 + $0x14] sm:$0xf] %vm822, %v820
      %829 = vst.msk [vmem:[%s408 + $0x18] sm:$0xf] %vm822, %v821
      %s830 = smul.u32 7, %s24
      %p831 = scmp.lt.s32.totalorder %s23, 1
      %s832 = scalar_select %p831, %s23, 1
      %p833 = scmp.lt.s32.totalorder %s830, 6
      %s834 = scalar_select %p833, %s830, 6
      %s835 = smul.addr %s832, 7
      %s836 = sadd.s32 %s834, %s835
      %s837 = smul.addr %s836, 4
      %s838 = scalar_lea.vmem %s8, %s837
      // Predicated region
      $region53: #{forward.27} parent=51 // pred_check
        %p839 = pneg %p237
      $region54: #{forward.27} parent=51 // pred_check_branch
        %841 = sbr.rel (%p839) target = $region56
      $region55: #{forward.27} parent=51 // pred_region
        %s842 = smul.u32 7, %s24
      $region56: #{forward.27} parent=51 // pred_fallthru
        _
    $region52: #{forward.27} parent=5 // pred_fallthru
      _
    %p843 = scmp.le.s32.totalorder 2, %s14
    // Predicated region
    $region57: #{forward.27} parent=5 // pred_check
      %p844 = pneg %p843
    $region58: #{forward.27} parent=5 // pred_check_branch
      %846 = sbr.rel (%p844) target = $region60
    $region59: #{forward.27} parent=5 // pred_region
      %s847 = ssub.s32 %s14, 2
      // Predicated region
      $region61: #{forward.27} parent=59 // pred_check
        %p848 = pneg %p243
      $region62: #{forward.27} parent=59 // pred_check_branch
        %850 = sbr.rel (%p848) target = $region64
      $region63: #{forward.27} parent=59 // pred_region
        %s851 = smul.u32 7, %s26
        %p852 = scmp.lt.s32.totalorder %s25, 1
        %s853 = scalar_select %p852, %s25, 1
        %p854 = scmp.lt.s32.totalorder %s851, 6
        %s855 = scalar_select %p854, %s851, 6
        %s856 = smul.addr %s853, 7
        %s857 = sadd.s32 %s855, %s856
        %s858 = smul.addr %s857, 4
        %s859 = scalar_lea.vmem %s8, %s858
      $region64: #{forward.27} parent=59 // pred_fallthru
        _
    $region60: #{forward.27} parent=5 // pred_fallthru
      _
  $region6: #{forward.27} parent=0 // loop_footer
    %s18 = sadd.s32 1, %s14
  $region7: #{forward.27} parent=0 // loop_footer_branch
    %13 = sbr.rel target = $region3
  $region8: #{forward.27} parent=0 // loop_exit
    _

// kernel: forward.26
$region0: #{forward.26}
  #allocation0 [shape = 'u32[]', space=smem, size = 0x4, offset = 0x4, fixed_abs, tag = 'smem constant byte address 0x4 - core index']
  #allocation1 [shape = 'u32[72,128]{1,0:T(1,128)}', space=vmem, size = 0x9000, scoped, tag = 'internal scratch']
  %s0 = inlined_call_operand.vmem [shape: bf16[2,64,16], index: 0, kind: input, shape index: {}, may-alias: {0,1}]
  %s1 = inlined_call_operand.vmem [shape: bf16[2,64,16], index: 1, kind: input, shape index: {}, may-alias: {0,1}]
  %s2 = inlined_call_operand.vmem [shape: bf16[32,16], index: 2, kind: input, shape index: {}]
  %s3 = inlined_call_operand.vmem [shape: f32[1,16], index: 3, kind: input, shape index: {}]
  %s4 = inlined_call_operand.vmem [shape: bf16[2,56,16], index: 4, kind: output, shape index: {}]
  %s5 = sld [smem:[#allocation0]]
  $region49: #{forward.26} parent=0
    _
  %s7 = ssub.s32 1, %s5
  %s8 = scalar_select 0, %s7, %s5
  loop: start=0, step=1, limit=4
  $region2: #{forward.26} parent=0 // loop_pre_header
    _
  $region3: #{forward.26} parent=0 // loop_header
    %s10 = sphi 0, %s14
    %p11 = scmp.ge.s32.totalorder %s10, 4
    %s17 = sphi 0, %s29
    %s18 = sphi 0, %s25
    %s19 = sphi 0, %s17
    %s20 = sphi 0, %s18
    %s21 = sphi 0, %s19
    %s22 = sphi 0, %s20
    %s34 = sphi 0, %s36
    %s37 = sphi 0, %s34
    %s38 = sphi 0, %s37
    %s54 = sphi 0, %s38
    %s66 = sphi 0, %s68
    %s69 = sphi 0, %s66
    %s70 = sphi 0, %s69
    %s86 = sphi 0, %s70
    %s90 = sphi 0, %s90
    %s92 = sphi 0, %s90
    %s93 = sphi 0, %s92
    %s107 = sphi 0, %s93
    %s111 = sphi 0, %s111
    %s113 = sphi 0, %s111
    %s114 = sphi 0, %s113
    %s128 = sphi 0, %s114
    %s136 = sphi 0, %s138
    %s139 = sphi 0, %s136
    %s140 = sphi 0, %s139
    %s156 = sphi 0, %s140
  $region4: #{forward.26} parent=0 // loop_header_branch
    %13 = sbr.rel (%p11) target = $region8
  $region5: #{forward.26} parent=0 // loop_body
    %s15 = ssub.s32 %s10, 1
    %s16 = ssub.s32 %s10, 2
    %s23 = sadd.s32 1, %s18
    %p24 = scmp.ge.s32.totalorder %s23, 1
    %s25 = scalar_select %p24, 0, %s23
    %s26 = sadd.s32 1, %s17
    %s27 = scalar_select %p24, %s26, %s17
    %p28 = scmp.ge.s32.totalorder %s27, 2
    %s29 = scalar_select %p28, 0, %s27
    %s30 = ssub.s32 %s17, %s29
    %s31 = ssub.s32 %s18, %s25
    %s32 = sor.u32 %s30, %s31
    %p33 = scmp.eq.s32.totalorder %s32, 0
    %s35 = sadd.s32 %s34, 1
    %s36 = scalar_select %p33, %s34, %s35
    %p39 = pneg %p33
    %p40 = scmp.eq.s32.totalorder %s10, 1
    %p41 = por %p39, %p40
    %p42 = scmp.ne.s32.totalorder %s34, %s37
    %p43 = scmp.eq.s32.totalorder %s10, 0
    %p44 = por %p42, %p43
    %p45 = scmp.ne.s32.totalorder %s34, %s37
    %p46 = scmp.eq.s32.totalorder %s15, 1
    %p47 = por %p45, %p46
    %p48 = scmp.ne.s32.totalorder %s37, %s38
    %p49 = scmp.eq.s32.totalorder %s15, 0
    %p50 = por %p48, %p49
    %p51 = scmp.ne.s32.totalorder %s37, %s38
    %p52 = scmp.eq.s32.totalorder %s16, 1
    %p53 = por %p51, %p52
    %p55 = scmp.ne.s32.totalorder %s38, %s54
    %p56 = scmp.eq.s32.totalorder %s16, 0
    %p57 = por %p55, %p56
    %s58 = sadd.s32 %s18, 1
    %s59 = smul.u32 %s58, 7
    %s60 = sadd.s32 %s25, 1
    %s61 = smul.u32 %s60, 7
    %s62 = ssub.s32 %s17, %s29
    %s63 = ssub.s32 %s59, %s61
    %s64 = sor.u32 %s62, %s63
    %p65 = scmp.eq.s32.totalorder %s64, 0
    %s67 = sadd.s32 %s66, 1
    %s68 = scalar_select %p65, %s66, %s67
    %p71 = pneg %p65
    %p72 = scmp.eq.s32.totalorder %s10, 1
    %p73 = por %p71, %p72
    %p74 = scmp.ne.s32.totalorder %s66, %s69
    %p75 = scmp.eq.s32.totalorder %s10, 0
    %p76 = por %p74, %p75
    %p77 = scmp.ne.s32.totalorder %s66, %s69
    %p78 = scmp.eq.s32.totalorder %s15, 1
    %p79 = por %p77, %p78
    %p80 = scmp.ne.s32.totalorder %s69, %s70
    %p81 = scmp.eq.s32.totalorder %s15, 0
    %p82 = por %p80, %p81
    %p83 = scmp.ne.s32.totalorder %s69, %s70
    %p84 = scmp.eq.s32.totalorder %s16, 1
    %p85 = por %p83, %p84
    %p87 = scmp.ne.s32.totalorder %s70, %s86
    %p88 = scmp.eq.s32.totalorder %s16, 0
    %p89 = por %p87, %p88
    %s91 = sadd.s32 %s90, 1
    %p94 = scmp.eq.s32.totalorder %s10, 1
    %p95 = scmp.ne.s32.totalorder %s90, %s92
    %p96 = scmp.eq.s32.totalorder %s10, 0
    %p97 = por %p95, %p96
    %p98 = scmp.ne.s32.totalorder %s90, %s92
    %p99 = scmp.eq.s32.totalorder %s15, 1
    %p100 = por %p98, %p99
    %p101 = scmp.ne.s32.totalorder %s92, %s93
    %p102 = scmp.eq.s32.totalorder %s15, 0
    %p103 = por %p101, %p102
    %p104 = scmp.ne.s32.totalorder %s92, %s93
    %p105 = scmp.eq.s32.totalorder %s16, 1
    %p106 = por %p104, %p105
    %p108 = scmp.ne.s32.totalorder %s93, %s107
    %p109 = scmp.eq.s32.totalorder %s16, 0
    %p110 = por %p108, %p109
    %s112 = sadd.s32 %s111, 1
    %p115 = scmp.eq.s32.totalorder %s10, 1
    %p116 = scmp.ne.s32.totalorder %s111, %s113
    %p117 = scmp.eq.s32.totalorder %s10, 0
    %p118 = por %p116, %p117
    %p119 = scmp.ne.s32.totalorder %s111, %s113
    %p120 = scmp.eq.s32.totalorder %s15, 1
    %p121 = por %p119, %p120
    %p122 = scmp.ne.s32.totalorder %s113, %s114
    %p123 = scmp.eq.s32.totalorder %s15, 0
    %p124 = por %p122, %p123
    %p125 = scmp.ne.s32.totalorder %s113, %s114
    %p126 = scmp.eq.s32.totalorder %s16, 1
    %p127 = por %p125, %p126
    %p129 = scmp.ne.s32.totalorder %s114, %s128
    %p130 = scmp.eq.s32.totalorder %s16, 0
    %p131 = por %p129, %p130
    %s132 = ssub.s32 %s17, %s29
    %s133 = ssub.s32 %s18, %s25
    %s134 = sor.u32 %s132, %s133
    %p135 = scmp.eq.s32.totalorder %s134, 0
    %s137 = sadd.s32 %s136, 1
    %s138 = scalar_select %p135, %s136, %s137
    %p141 = pneg %p135
    %p142 = scmp.eq.s32.totalorder %s10, 1
    %p143 = por %p141, %p142
    %p144 = scmp.ne.s32.totalorder %s136, %s139
    %p145 = scmp.eq.s32.totalorder %s10, 0
    %p146 = por %p144, %p145
    %p147 = scmp.ne.s32.totalorder %s136, %s139
    %p148 = scmp.eq.s32.totalorder %s15, 1
    %p149 = por %p147, %p148
    %p150 = scmp.ne.s32.totalorder %s139, %s140
    %p151 = scmp.eq.s32.totalorder %s15, 0
    %p152 = por %p150, %p151
    %p153 = scmp.ne.s32.totalorder %s139, %s140
    %p154 = scmp.eq.s32.totalorder %s16, 1
    %p155 = por %p153, %p154
    %p157 = scmp.ne.s32.totalorder %s140, %s156
    %p158 = scmp.eq.s32.totalorder %s16, 0
    %p159 = por %p157, %p158
    %p160 = scmp.le.s32.totalorder 1, %s10
    %p161 = scmp.lt.s32.totalorder %s10, 3
    %p162 = pnand %p160, %p161
    %p163 = pneg %p162
    // Predicated region
    $region9: #{forward.26} parent=5 // pred_check
      _
    $region10: #{forward.26} parent=5 // pred_check_branch
      %165 = sbr.rel (%p162) target = $region12
    $region11: #{forward.26} parent=5 // pred_region
      %s166 = ssub.s32 %s10, 1
      // Predicated region
      $region13: #{forward.26} parent=11 // pred_check
        %p167 = pneg %p103
      $region14: #{forward.26} parent=11 // pred_check_branch
        %169 = sbr.rel (%p167) target = $region16
      $region15: #{forward.26} parent=11 // pred_region
        _
      $region16: #{forward.26} parent=11 // pred_fallthru
        _
      // Predicated region
      $region17: #{forward.26} parent=11 // pred_check
        %p170 = pneg %p124
      $region18: #{forward.26} parent=11 // pred_check_branch
        %172 = sbr.rel (%p170) target = $region20
      $region19: #{forward.26} parent=11 // pred_region
        _
      $region20: #{forward.26} parent=11 // pred_fallthru
        _
    $region12: #{forward.26} parent=5 // pred_fallthru
      _
    %p173 = scmp.lt.s32.totalorder %s10, 2
    // Predicated region
    $region21: #{forward.26} parent=5 // pred_check
      %p174 = pneg %p173
    $region22: #{forward.26} parent=5 // pred_check_branch
      %176 = sbr.rel (%p174) target = $region24
    $region23: #{forward.26} parent=5 // pred_region
      // Predicated region
      $region25: #{forward.26} parent=23 // pred_check
        %p177 = pneg %p44
      $region26: #{forward.26} parent=23 // pred_check_branch
        %179 = sbr.rel (%p177) target = $region28
      $region27: #{forward.26} parent=23 // pred_region
        %s180 = smul.u32 7, %s18
        %s181 = ssub.s32 8, %s180
        %p182 = scmp.lt.s32.totalorder %s181, 7
        %s183 = scalar_select %p182, %s181, 7
        %s184 = smul.u32 4, %s183
        %p185 = scmp.lt.s32.totalorder %s17, 1
        %s186 = scalar_select %p185, %s17, 1
        %p187 = scmp.lt.s32.totalorder %s180, 7
        %s188 = scalar_select %p187, %s180, 7
        %s189 = smul.addr %s186, 8
        %s190 = sadd.s32 %s188, %s189
        %s191 = smul.addr %s190, 4
        %s192 = scalar_lea.vmem %s0, %s191
        %s193 = smul.u32 7, %s18
        %s194 = ssub.s32 8, %s193
        %p195 = scmp.lt.s32.totalorder %s194, 7
        %s196 = scalar_select %p195, %s194, 7
        %s197 = smul.u32 4, %s196
      $region28: #{forward.26} parent=23 // pred_fallthru
        _
      // Predicated region
      $region29: #{forward.26} parent=23 // pred_check
        %p198 = pneg %p76
      $region30: #{forward.26} parent=23 // pred_check_branch
        %200 = sbr.rel (%p198) target = $region32
      $region31: #{forward.26} parent=23 // pred_region
        %s201 = sadd.s32 %s18, 1
        %s202 = smul.u32 %s201, 7
        %p203 = scmp.lt.s32.totalorder %s17, 1
        %s204 = scalar_select %p203, %s17, 1
        %p205 = scmp.lt.s32.totalorder %s202, 7
        %s206 = scalar_select %p205, %s202, 7
        %s207 = smul.addr %s204, 8
        %s208 = sadd.s32 %s206, %s207
        %s209 = smul.addr %s208, 4
        %s210 = scalar_lea.vmem %s1, %s209
        %s211 = sadd.s32 %s18, 1
        %s212 = smul.u32 %s211, 7
      $region32: #{forward.26} parent=23 // pred_fallthru
        _
    $region24: #{forward.26} parent=5 // pred_fallthru
      _
    %p213 = scmp.le.s32.totalorder 1, %s10
    %p214 = scmp.lt.s32.totalorder %s10, 3
    %p215 = pnand %p213, %p214
    %p216 = pneg %p215
    // Predicated region
    $region33: #{forward.26} parent=5 // pred_check
      _
    $region34: #{forward.26} parent=5 // pred_check_branch
      %218 = sbr.rel (%p215) target = $region36
    $region35: #{forward.26} parent=5 // pred_region
      %s219 = ssub.s32 %s10, 1
      %s220 = smul.u32 7, %s20
      %s221 = ssub.s32 8, %s220
      %p222 = scmp.lt.s32.totalorder %s221, 7
      %s223 = scalar_select %p222, %s221, 7
      %s224 = smul.u32 4, %s223
      %p225 = scmp.lt.s32.totalorder %s19, 1
      %s226 = scalar_select %p225, %s19, 1
      %p227 = scmp.lt.s32.totalorder %s220, 7
      %s228 = scalar_select %p227, %s220, 7
      %s229 = smul.addr %s226, 8
      %s230 = sadd.s32 %s228, %s229
      %s231 = smul.addr %s230, 4
      %s232 = scalar_lea.vmem %s0, %s231
      %p233 = pneg %p50
      %p234 = pneg %p47
      %s235 = sadd.s32 %s20, 1
      %s236 = smul.u32 %s235, 7
      %p237 = scmp.lt.s32.totalorder %s19, 1
      %s238 = scalar_select %p237, %s19, 1
      %p239 = scmp.lt.s32.totalorder %s236, 7
      %s240 = scalar_select %p239, %s236, 7
      %s241 = smul.addr %s238, 8
      %s242 = sadd.s32 %s240, %s241
      %s243 = smul.addr %s242, 4
      %s244 = scalar_lea.vmem %s1, %s243
      %p245 = pneg %p82
      %p246 = pneg %p79
      %p247 = pneg %p103
      %p248 = pneg %p100
      %p249 = pneg %p124
      %p250 = pneg %p121
      %p251 = pneg %p152
      %p252 = pneg %p149
      %s253 = smul.u32 7, %s20
      %p254 = scmp.lt.s32.totalorder %s19, 1
      %s255 = scalar_select %p254, %s19, 1
      %p256 = scmp.lt.s32.totalorder %s253, 6
      %s257 = scalar_select %p256, %s253, 6
      %s258 = smul.addr %s255, 7
      %s259 = sadd.s32 %s257, %s258
      %s260 = smul.addr %s259, 4
      %s261 = scalar_lea.vmem %s4, %s260
      %s262 = smul.u32 7, %s20
      %s263 = ssub.s32 8, %s262
      %p264 = scmp.lt.s32.totalorder %s263, 7
      %s265 = scalar_select %p264, %s263, 7
      %s266 = smul.u32 4, %s265
      %p267 = scmp.lt.s32.totalorder %s19, 1
      %s268 = scalar_select %p267, %s19, 1
      %p269 = scmp.lt.s32.totalorder %s262, 7
      %s270 = scalar_select %p269, %s262, 7
      %s271 = smul.addr %s268, 8
      %s272 = sadd.s32 %s270, %s271
      %s273 = smul.addr %s272, 4
      %s274 = scalar_lea.vmem %s0, %s273
      %s275 = smul.u32 7, %s20
      %s276 = ssub.s32 8, %s275
      %p277 = scmp.lt.s32.totalorder %s276, 7
      %s278 = scalar_select %p277, %s276, 7
      %s279 = smul.u32 4, %s278
      %s280 = sadd.s32 %s20, 1
      %s281 = smul.u32 %s280, 7
      %p282 = scmp.lt.s32.totalorder %s19, 1
      %s283 = scalar_select %p282, %s19, 1
      %p284 = scmp.lt.s32.totalorder %s281, 7
      %s285 = scalar_select %p284, %s281, 7
      %s286 = smul.addr %s283, 8
      %s287 = sadd.s32 %s285, %s286
      %s288 = smul.addr %s287, 4
      %s289 = scalar_lea.vmem %s1, %s288
      %s290 = sadd.s32 %s20, 1
      %s291 = smul.u32 %s290, 7
      %s292 = smul.u32 7, %s20
      %p293 = scmp.lt.s32.totalorder %s19, 1
      %s294 = scalar_select %p293, %s19, 1
      %p295 = scmp.lt.s32.totalorder %s292, 6
      %s296 = scalar_select %p295, %s292, 6
      %s297 = smul.addr %s294, 7
      %s298 = sadd.s32 %s296, %s297
      %s299 = smul.addr %s298, 4
      %s300 = scalar_lea.vmem %s4, %s299
      %s301 = smul.u32 7, %s20
      %v303 = vld [vmem:[%s274] sm:$0xf]
      %v304 = vld [vmem:[%s274 + $0x4] sm:$0xf]
      %v305 = vld [vmem:[%s274 + $0x8] sm:$0xf]
      %v306 = vld [vmem:[%s274 + $0xc] sm:$0xf]
      %v307 = vld [vmem:[%s274 + $0x10] sm:$0xf]
      %v308 = vld [vmem:[%s274 + $0x14] sm:$0xf]
      %v309 = vld [vmem:[%s274 + $0x18] sm:$0xf]
      %v310 = vld [vmem:[%s289] sm:$0xf]
      %v318 = vunpack.c.l.b16 %v303
      %v319 = vunpack.c.l.b16 %v304
      %v320 = vunpack.c.l.b16 %v305
      %v321 = vunpack.c.l.b16 %v306
      %v322 = vunpack.c.l.b16 %v307
      %v323 = vunpack.c.l.b16 %v308
      %v324 = vunpack.c.l.b16 %v309
      %v325 = vpack.c.b16 %v319, %v318
      %v326 = vpack.c.b16 %v321, %v320
      %v327 = vpack.c.b16 %v323, %v322
      %v328 = vpack.c.b16 %v324, %v324
      %v333 = vunpack.c.l.b16 %v310
      %v334 = vpack.c.b16 %v333, %v333
      %vm335 = vcmask 1043456
      %v338 = vsel %vm335, %v328, %v334
      %v340 = vunpack.c.l.bf16 %v325
      %v341 = vunpack.c.h.bf16 %v325
      %v342 = vunpack.c.l.bf16 %v326
      %v343 = vunpack.c.h.bf16 %v326
      %v344 = vunpack.c.l.bf16 %v327
      %v345 = vunpack.c.h.bf16 %v327
      %v346 = vunpack.c.l.bf16 %v338
      %v347 = vunpack.c.h.bf16 %v338
      %vm348 = vcmp.ge.f32.partialorder %v340, 0.0
      %vm349 = vcmp.ge.f32.partialorder %v341, 0.0
      %vm350 = vcmp.ge.f32.partialorder %v342, 0.0
      %vm351 = vcmp.ge.f32.partialorder %v343, 0.0
      %vm352 = vcmp.ge.f32.partialorder %v344, 0.0
      %vm353 = vcmp.ge.f32.partialorder %v345, 0.0
      %vm354 = vcmp.ge.f32.partialorder %v346, 0.0
      %vm355 = vcmp.ge.f32.partialorder %v347, 0.0
      %v356 = vmul.f32 %v340, 0.2
      %v357 = vmul.f32 %v341, 0.2
      %v358 = vmul.f32 %v342, 0.2
      %v359 = vmul.f32 %v343, 0.2
      %v360 = vmul.f32 %v344, 0.2
      %v361 = vmul.f32 %v345, 0.2
      %v362 = vmul.f32 %v346, 0.2
      %v363 = vmul.f32 %v347, 0.2
      %v364 = vsel %vm348, %v340, %v356
      %v365 = vsel %vm349, %v341, %v357
      %v366 = vsel %vm350, %v342, %v358
      %v367 = vsel %vm351, %v343, %v359
      %v368 = vsel %vm352, %v344, %v360
      %v369 = vsel %vm353, %v345, %v361
      %v370 = vsel %vm354, %v346, %v362
      %v371 = vsel %vm355, %v347, %v363
      %v372 = vpack.c.bf16 %v364, %v364
      %v373 = vpack.c.bf16 %v365, %v365
      %v374 = vpack.c.bf16 %v366, %v366
      %v375 = vpack.c.bf16 %v367, %v367
      %v376 = vpack.c.bf16 %v368, %v368
      %v377 = vpack.c.bf16 %v369, %v369
      %v378 = vpack.c.bf16 %v370, %v370
      %v379 = vpack.c.bf16 %v371, %v371
      %v387 = vunpack.c.l.b16 %v372
      %v388 = vunpack.c.l.b16 %v373
      %v389 = vunpack.c.l.b16 %v374
      %v390 = vunpack.c.l.b16 %v375
      %v391 = vunpack.c.l.b16 %v376
      %v392 = vunpack.c.l.b16 %v377
      %v393 = vunpack.c.l.b16 %v378
      %v394 = vpack.c.b16 %v388, %v387
      %v395 = vpack.c.b16 %v390, %v389
      %v396 = vpack.c.b16 %v392, %v391
      %v397 = vpack.c.b16 %v393, %v393
      %v399 = vunpack.c.l.b16 %v379
      %v400 = vpack.c.b16 %v399, %v393
      %vm401 = vsmask.f32 7424
      %v403 = vshrl.u32 %v394, 16
      %v405 = vshll.u32 %v394, 16
      %v407 = vrot.slane %v405, 1
      %v408 = vor.u32 %v403, %v407
      %v410 = vshll.u32 %v395, 16
      %v412 = vrot.slane %v410, 1
      %v413 = vsel %vm401, %v408, %v412
      %v414 = vshrl.u32 %v395, 16
      %v416 = vor.u32 %v414, %v412
      %v418 = vshll.u32 %v396, 16
      %v420 = vrot.slane %v418, 1
      %v421 = vsel %vm401, %v416, %v420
      %v422 = vshrl.u32 %v396, 16
      %v424 = vor.u32 %v422, %v420
      %v426 = vshll.u32 %v400, 16
      %v428 = vrot.slane %v426, 1
      %v429 = vsel %vm401, %v424, %v428
      %v430 = vshrl.u32 %v400, 16
      %v432 = vor.u32 %v430, %v428
      %433 = vrot.lane.b32.xlu0 %v413, 16
      %v434 = vpop.permute.xlu0 %433
      %435 = vrot.lane.b32.xlu0 %v421, 16
      %v436 = vpop.permute.xlu0 %435
      %437 = vrot.lane.b32.xlu0 %v429, 16
      %v438 = vpop.permute.xlu0 %437
      %439 = vrot.lane.b32.xlu0 %v432, 16
      %v440 = vpop.permute.xlu0 %439
      %vm441 = vcmask 130048
      %v443 = vsel %vm441, %v394, %v434
      %v445 = vsel %vm441, %v395, %v436
      %v447 = vsel %vm441, %v396, %v438
      %v450 = vsel %vm441, %v397, %v440
      %v451 = vld [vmem:[%s2] sm:$0xf]
      %v452 = vld [vmem:[%s2 + $0x4] sm:$0xf]
      %v453 = vld [vmem:[%s2 + $0x8] sm:$0xf]
      %v454 = vld [vmem:[%s2 + $0xc] sm:$0xf]
      %v455 = vld [vmem:[%s3] sm:$0x1]
      %v457 = vperm.slane %v455, 0
      %v463 = vunpack.c.l.b16 %v451
      %v464 = vunpack.c.l.b16 %v452
      %v465 = vunpack.c.l.b16 %v453
      %v466 = vunpack.c.l.b16 %v454
      %v467 = vpack.c.b16 %v464, %v463
      %v468 = vpack.c.b16 %v466, %v465
      %vm471 = vcmask 261120
      %v472 = vsel %vm471, %v443, 0
      %v474 = vsel %vm471, %v445, 0
      %v476 = vsel %vm471, %v447, 0
      %v478 = vsel %vm471, %v450, 0
      %480 = vmatpush.bf16.msra.mxu0 0
      %481 = vmatpush.bf16.msra.mxu0 0
      %482 = vmatpush.bf16.msra.mxu0 0
      %483 = vmatpush.bf16.msra.mxu0 0
      %484 = vmatpush.bf16.msra.mxu0 0
      %485 = vmatpush.bf16.msra.mxu0 0
      %486 = vmatpush.bf16.msra.mxu0 %v468
      %487 = vmatpush.bf16.msra.mxu0 %v467
      %488 = vmatmul.bf16.gmra.mxu0 %v472
      %v489 = vpop.f32.mrf.mxu0
      %v490 = vadd.f32 %v457, %v489
      %v491 = vpop.f32.mrf.mxu0
      %v492 = vadd.f32 %v457, %v491
      %493 = vmatmul.bf16.gmra.mxu0 %v474
      %v494 = vpop.f32.mrf.mxu0
      %v495 = vadd.f32 %v457, %v494
      %v496 = vpop.f32.mrf.mxu0
      %v497 = vadd.f32 %v457, %v496
      %498 = vmatmul.bf16.gmra.mxu0 %v476
      %v499 = vpop.f32.mrf.mxu0
      %v500 = vadd.f32 %v457, %v499
      %v501 = vpop.f32.mrf.mxu0
      %v502 = vadd.f32 %v457, %v501
      %503 = vmatmul.bf16.gmra.mxu0 %v478
      %v504 = vpop.f32.mrf.mxu0
      %v505 = vadd.f32 %v457, %v504
      %v506 = vpop.f32.mrf.mxu0
      %507 = vdwg.mxu0
      %v508 = vpack.c.bf16 %v490, %v490
      %v509 = vpack.c.bf16 %v492, %v492
      %v510 = vpack.c.bf16 %v495, %v495
      %v511 = vpack.c.bf16 %v497, %v497
      %v512 = vpack.c.bf16 %v500, %v500
      %v513 = vpack.c.bf16 %v502, %v502
      %v514 = vpack.c.bf16 %v505, %v505
      %vm515 = vcmask 125952
      %516 = vst.msk [vmem:[%s300] sm:$0xf] %vm515, %v508
      %517 = vst.msk [vmem:[%s300 + $0x4] sm:$0xf] %vm515, %v509
      %518 = vst.msk [vmem:[%s300 + $0x8] sm:$0xf] %vm515, %v510
      %519 = vst.msk [vmem:[%s300 + $0xc] sm:$0xf] %vm515, %v511
      %520 = vst.msk [vmem:[%s300 + $0x10] sm:$0xf] %vm515, %v512
      %521 = vst.msk [vmem:[%s300 + $0x14] sm:$0xf] %vm515, %v513
      %522 = vst.msk [vmem:[%s300 + $0x18] sm:$0xf] %vm515, %v514
      %s523 = smul.u32 7, %s20
      %p524 = scmp.lt.s32.totalorder %s19, 1
      %s525 = scalar_select %p524, %s19, 1
      %p526 = scmp.lt.s32.totalorder %s523, 6
      %s527 = scalar_select %p526, %s523, 6
      %s528 = smul.addr %s525, 7
      %s529 = sadd.s32 %s527, %s528
      %s530 = smul.addr %s529, 4
      %s531 = scalar_lea.vmem %s4, %s530
      // Predicated region
      $region37: #{forward.26} parent=35 // pred_check
        %p532 = pneg %p149
      $region38: #{forward.26} parent=35 // pred_check_branch
        %534 = sbr.rel (%p532) target = $region40
      $region39: #{forward.26} parent=35 // pred_region
        %s535 = smul.u32 7, %s20
      $region40: #{forward.26} parent=35 // pred_fallthru
        _
    $region36: #{forward.26} parent=5 // pred_fallthru
      _
    %p536 = scmp.le.s32.totalorder 2, %s10
    // Predicated region
    $region41: #{forward.26} parent=5 // pred_check
      %p537 = pneg %p536
    $region42: #{forward.26} parent=5 // pred_check_branch
      %539 = sbr.rel (%p537) target = $region44
    $region43: #{forward.26} parent=5 // pred_region
      %s540 = ssub.s32 %s10, 2
      // Predicated region
      $region45: #{forward.26} parent=43 // pred_check
        %p541 = pneg %p155
      $region46: #{forward.26} parent=43 // pred_check_branch
        %543 = sbr.rel (%p541) target = $region48
      $region47: #{forward.26} parent=43 // pred_region
        %s544 = smul.u32 7, %s22
        %p545 = scmp.lt.s32.totalorder %s21, 1
        %s546 = scalar_select %p545, %s21, 1
        %p547 = scmp.lt.s32.totalorder %s544, 6
        %s548 = scalar_select %p547, %s544, 6
        %s549 = smul.addr %s546, 7
        %s550 = sadd.s32 %s548, %s549
        %s551 = smul.addr %s550, 4
        %s552 = scalar_lea.vmem %s4, %s551
      $region48: #{forward.26} parent=43 // pred_fallthru
        _
    $region44: #{forward.26} parent=5 // pred_fallthru
      _
  $region6: #{forward.26} parent=0 // loop_footer
    %s14 = sadd.s32 1, %s10
  $region7: #{forward.26} parent=0 // loop_footer_branch
    %9 = sbr.rel target = $region3
  $region8: #{forward.26} parent=0 // loop_exit
    _

// kernel: forward.28
$region0: #{forward.28}
  #allocation0 [shape = 'u32[]', space=smem, size = 0x4, offset = 0x4, fixed_abs, tag = 'smem constant byte address 0x4 - core index']
  #allocation1 [shape = 'u32[72,128]{1,0:T(1,128)}', space=vmem, size = 0x9000, scoped, tag = 'internal scratch']
  %s0 = inlined_call_operand.vmem [shape: bf16[2,64,16], index: 0, kind: input, shape index: {}, may-alias: {0,1}]
  %s1 = inlined_call_operand.vmem [shape: bf16[2,64,16], index: 1, kind: input, shape index: {}, may-alias: {0,1}]
  %s2 = inlined_call_operand.vmem [shape: bf16[16,16], index: 2, kind: input, shape index: {}]
  %s3 = inlined_call_operand.vmem [shape: f32[1,16], index: 3, kind: input, shape index: {}]
  %s4 = inlined_call_operand.vmem [shape: bf16[48,16], index: 4, kind: input, shape index: {}]
  %s5 = inlined_call_operand.vmem [shape: f32[1,16], index: 5, kind: input, shape index: {}]
  %s6 = inlined_call_operand.vmem [shape: bf16[16,16], index: 6, kind: input, shape index: {}]
  %s7 = inlined_call_operand.vmem [shape: f32[1,16], index: 7, kind: input, shape index: {}]
  %s8 = inlined_call_operand.vmem [shape: bf16[2,56,16], index: 8, kind: output, shape index: {}]
  %s9 = sld [smem:[#allocation0]]
  $region65: #{forward.28} parent=0
    _
  %s11 = ssub.s32 1, %s9
  %s12 = scalar_select 0, %s11, %s9
  loop: start=0, step=1, limit=4
  $region2: #{forward.28} parent=0 // loop_pre_header
    _
  $region3: #{forward.28} parent=0 // loop_header
    %s14 = sphi 0, %s18
    %p15 = scmp.ge.s32.totalorder %s14, 4
    %s21 = sphi 0, %s33
    %s22 = sphi 0, %s29
    %s23 = sphi 0, %s21
    %s24 = sphi 0, %s22
    %s25 = sphi 0, %s23
    %s26 = sphi 0, %s24
    %s38 = sphi 0, %s40
    %s41 = sphi 0, %s38
    %s42 = sphi 0, %s41
    %s58 = sphi 0, %s42
    %s70 = sphi 0, %s72
    %s73 = sphi 0, %s70
    %s74 = sphi 0, %s73
    %s90 = sphi 0, %s74
    %s94 = sphi 0, %s94
    %s96 = sphi 0, %s94
    %s97 = sphi 0, %s96
    %s111 = sphi 0, %s97
    %s115 = sphi 0, %s115
    %s117 = sphi 0, %s115
    %s118 = sphi 0, %s117
    %s132 = sphi 0, %s118
    %s136 = sphi 0, %s136
    %s138 = sphi 0, %s136
    %s139 = sphi 0, %s138
    %s153 = sphi 0, %s139
    %s157 = sphi 0, %s157
    %s159 = sphi 0, %s157
    %s160 = sphi 0, %s159
    %s174 = sphi 0, %s160
    %s178 = sphi 0, %s178
    %s180 = sphi 0, %s178
    %s181 = sphi 0, %s180
    %s195 = sphi 0, %s181
    %s199 = sphi 0, %s199
    %s201 = sphi 0, %s199
    %s202 = sphi 0, %s201
    %s216 = sphi 0, %s202
    %s224 = sphi 0, %s226
    %s227 = sphi 0, %s224
    %s228 = sphi 0, %s227
    %s244 = sphi 0, %s228
  $region4: #{forward.28} parent=0 // loop_header_branch
    %17 = sbr.rel (%p15) target = $region8
  $region5: #{forward.28} parent=0 // loop_body
    %s19 = ssub.s32 %s14, 1
    %s20 = ssub.s32 %s14, 2
    %s27 = sadd.s32 1, %s22
    %p28 = scmp.ge.s32.totalorder %s27, 1
    %s29 = scalar_select %p28, 0, %s27
    %s30 = sadd.s32 1, %s21
    %s31 = scalar_select %p28, %s30, %s21
    %p32 = scmp.ge.s32.totalorder %s31, 2
    %s33 = scalar_select %p32, 0, %s31
    %s34 = ssub.s32 %s21, %s33
    %s35 = ssub.s32 %s22, %s29
    %s36 = sor.u32 %s34, %s35
    %p37 = scmp.eq.s32.totalorder %s36, 0
    %s39 = sadd.s32 %s38, 1
    %s40 = scalar_select %p37, %s38, %s39
    %p43 = pneg %p37
    %p44 = scmp.eq.s32.totalorder %s14, 1
    %p45 = por %p43, %p44
    %p46 = scmp.ne.s32.totalorder %s38, %s41
    %p47 = scmp.eq.s32.totalorder %s14, 0
    %p48 = por %p46, %p47
    %p49 = scmp.ne.s32.totalorder %s38, %s41
    %p50 = scmp.eq.s32.totalorder %s19, 1
    %p51 = por %p49, %p50
    %p52 = scmp.ne.s32.totalorder %s41, %s42
    %p53 = scmp.eq.s32.totalorder %s19, 0
    %p54 = por %p52, %p53
    %p55 = scmp.ne.s32.totalorder %s41, %s42
    %p56 = scmp.eq.s32.totalorder %s20, 1
    %p57 = por %p55, %p56
    %p59 = scmp.ne.s32.totalorder %s42, %s58
    %p60 = scmp.eq.s32.totalorder %s20, 0
    %p61 = por %p59, %p60
    %s62 = sadd.s32 %s22, 1
    %s63 = smul.u32 %s62, 7
    %s64 = sadd.s32 %s29, 1
    %s65 = smul.u32 %s64, 7
    %s66 = ssub.s32 %s21, %s33
    %s67 = ssub.s32 %s63, %s65
    %s68 = sor.u32 %s66, %s67
    %p69 = scmp.eq.s32.totalorder %s68, 0
    %s71 = sadd.s32 %s70, 1
    %s72 = scalar_select %p69, %s70, %s71
    %p75 = pneg %p69
    %p76 = scmp.eq.s32.totalorder %s14, 1
    %p77 = por %p75, %p76
    %p78 = scmp.ne.s32.totalorder %s70, %s73
    %p79 = scmp.eq.s32.totalorder %s14, 0
    %p80 = por %p78, %p79
    %p81 = scmp.ne.s32.totalorder %s70, %s73
    %p82 = scmp.eq.s32.totalorder %s19, 1
    %p83 = por %p81, %p82
    %p84 = scmp.ne.s32.totalorder %s73, %s74
    %p85 = scmp.eq.s32.totalorder %s19, 0
    %p86 = por %p84, %p85
    %p87 = scmp.ne.s32.totalorder %s73, %s74
    %p88 = scmp.eq.s32.totalorder %s20, 1
    %p89 = por %p87, %p88
    %p91 = scmp.ne.s32.totalorder %s74, %s90
    %p92 = scmp.eq.s32.totalorder %s20, 0
    %p93 = por %p91, %p92
    %s95 = sadd.s32 %s94, 1
    %p98 = scmp.eq.s32.totalorder %s14, 1
    %p99 = scmp.ne.s32.totalorder %s94, %s96
    %p100 = scmp.eq.s32.totalorder %s14, 0
    %p101 = por %p99, %p100
    %p102 = scmp.ne.s32.totalorder %s94, %s96
    %p103 = scmp.eq.s32.totalorder %s19, 1
    %p104 = por %p102, %p103
    %p105 = scmp.ne.s32.totalorder %s96, %s97
    %p106 = scmp.eq.s32.totalorder %s19, 0
    %p107 = por %p105, %p106
    %p108 = scmp.ne.s32.totalorder %s96, %s97
    %p109 = scmp.eq.s32.totalorder %s20, 1
    %p110 = por %p108, %p109
    %p112 = scmp.ne.s32.totalorder %s97, %s111
    %p113 = scmp.eq.s32.totalorder %s20, 0
    %p114 = por %p112, %p113
    %s116 = sadd.s32 %s115, 1
    %p119 = scmp.eq.s32.totalorder %s14, 1
    %p120 = scmp.ne.s32.totalorder %s115, %s117
    %p121 = scmp.eq.s32.totalorder %s14, 0
    %p122 = por %p120, %p121
    %p123 = scmp.ne.s32.totalorder %s115, %s117
    %p124 = scmp.eq.s32.totalorder %s19, 1
    %p125 = por %p123, %p124
    %p126 = scmp.ne.s32.totalorder %s117, %s118
    %p127 = scmp.eq.s32.totalorder %s19, 0
    %p128 = por %p126, %p127
    %p129 = scmp.ne.s32.totalorder %s117, %s118
    %p130 = scmp.eq.s32.totalorder %s20, 1
    %p131 = por %p129, %p130
    %p133 = scmp.ne.s32.totalorder %s118, %s132
    %p134 = scmp.eq.s32.totalorder %s20, 0
    %p135 = por %p133, %p134
    %s137 = sadd.s32 %s136, 1
    %p140 = scmp.eq.s32.totalorder %s14, 1
    %p141 = scmp.ne.s32.totalorder %s136, %s138
    %p142 = scmp.eq.s32.totalorder %s14, 0
    %p143 = por %p141, %p142
    %p144 = scmp.ne.s32.totalorder %s136, %s138
    %p145 = scmp.eq.s32.totalorder %s19, 1
    %p146 = por %p144, %p145
    %p147 = scmp.ne.s32.totalorder %s138, %s139
    %p148 = scmp.eq.s32.totalorder %s19, 0
    %p149 = por %p147, %p148
    %p150 = scmp.ne.s32.totalorder %s138, %s139
    %p151 = scmp.eq.s32.totalorder %s20, 1
    %p152 = por %p150, %p151
    %p154 = scmp.ne.s32.totalorder %s139, %s153
    %p155 = scmp.eq.s32.totalorder %s20, 0
    %p156 = por %p154, %p155
    %s158 = sadd.s32 %s157, 1
    %p161 = scmp.eq.s32.totalorder %s14, 1
    %p162 = scmp.ne.s32.totalorder %s157, %s159
    %p163 = scmp.eq.s32.totalorder %s14, 0
    %p164 = por %p162, %p163
    %p165 = scmp.ne.s32.totalorder %s157, %s159
    %p166 = scmp.eq.s32.totalorder %s19, 1
    %p167 = por %p165, %p166
    %p168 = scmp.ne.s32.totalorder %s159, %s160
    %p169 = scmp.eq.s32.totalorder %s19, 0
    %p170 = por %p168, %p169
    %p171 = scmp.ne.s32.totalorder %s159, %s160
    %p172 = scmp.eq.s32.totalorder %s20, 1
    %p173 = por %p171, %p172
    %p175 = scmp.ne.s32.totalorder %s160, %s174
    %p176 = scmp.eq.s32.totalorder %s20, 0
    %p177 = por %p175, %p176
    %s179 = sadd.s32 %s178, 1
    %p182 = scmp.eq.s32.totalorder %s14, 1
    %p183 = scmp.ne.s32.totalorder %s178, %s180
    %p184 = scmp.eq.s32.totalorder %s14, 0
    %p185 = por %p183, %p184
    %p186 = scmp.ne.s32.totalorder %s178, %s180
    %p187 = scmp.eq.s32.totalorder %s19, 1
    %p188 = por %p186, %p187
    %p189 = scmp.ne.s32.totalorder %s180, %s181
    %p190 = scmp.eq.s32.totalorder %s19, 0
    %p191 = por %p189, %p190
    %p192 = scmp.ne.s32.totalorder %s180, %s181
    %p193 = scmp.eq.s32.totalorder %s20, 1
    %p194 = por %p192, %p193
    %p196 = scmp.ne.s32.totalorder %s181, %s195
    %p197 = scmp.eq.s32.totalorder %s20, 0
    %p198 = por %p196, %p197
    %s200 = sadd.s32 %s199, 1
    %p203 = scmp.eq.s32.totalorder %s14, 1
    %p204 = scmp.ne.s32.totalorder %s199, %s201
    %p205 = scmp.eq.s32.totalorder %s14, 0
    %p206 = por %p204, %p205
    %p207 = scmp.ne.s32.totalorder %s199, %s201
    %p208 = scmp.eq.s32.totalorder %s19, 1
    %p209 = por %p207, %p208
    %p210 = scmp.ne.s32.totalorder %s201, %s202
    %p211 = scmp.eq.s32.totalorder %s19, 0
    %p212 = por %p210, %p211
    %p213 = scmp.ne.s32.totalorder %s201, %s202
    %p214 = scmp.eq.s32.totalorder %s20, 1
    %p215 = por %p213, %p214
    %p217 = scmp.ne.s32.totalorder %s202, %s216
    %p218 = scmp.eq.s32.totalorder %s20, 0
    %p219 = por %p217, %p218
    %s220 = ssub.s32 %s21, %s33
    %s221 = ssub.s32 %s22, %s29
    %s222 = sor.u32 %s220, %s221
    %p223 = scmp.eq.s32.totalorder %s222, 0
    %s225 = sadd.s32 %s224, 1
    %s226 = scalar_select %p223, %s224, %s225
    %p229 = pneg %p223
    %p230 = scmp.eq.s32.totalorder %s14, 1
    %p231 = por %p229, %p230
    %p232 = scmp.ne.s32.totalorder %s224, %s227
    %p233 = scmp.eq.s32.totalorder %s14, 0
    %p234 = por %p232, %p233
    %p235 = scmp.ne.s32.totalorder %s224, %s227
    %p236 = scmp.eq.s32.totalorder %s19, 1
    %p237 = por %p235, %p236
    %p238 = scmp.ne.s32.totalorder %s227, %s228
    %p239 = scmp.eq.s32.totalorder %s19, 0
    %p240 = por %p238, %p239
    %p241 = scmp.ne.s32.totalorder %s227, %s228
    %p242 = scmp.eq.s32.totalorder %s20, 1
    %p243 = por %p241, %p242
    %p245 = scmp.ne.s32.totalorder %s228, %s244
    %p246 = scmp.eq.s32.totalorder %s20, 0
    %p247 = por %p245, %p246
    %p248 = scmp.le.s32.totalorder 1, %s14
    %p249 = scmp.lt.s32.totalorder %s14, 3
    %p250 = pnand %p248, %p249
    %p251 = pneg %p250
    // Predicated region
    $region9: #{forward.28} parent=5 // pred_check
      _
    $region10: #{forward.28} parent=5 // pred_check_branch
      %253 = sbr.rel (%p250) target = $region12
    $region11: #{forward.28} parent=5 // pred_region
      %s254 = ssub.s32 %s14, 1
      // Predicated region
      $region13: #{forward.28} parent=11 // pred_check
        %p255 = pneg %p107
      $region14: #{forward.28} parent=11 // pred_check_branch
        %257 = sbr.rel (%p255) target = $region16
      $region15: #{forward.28} parent=11 // pred_region
        _
      $region16: #{forward.28} parent=11 // pred_fallthru
        _
      // Predicated region
      $region17: #{forward.28} parent=11 // pred_check
        %p258 = pneg %p128
      $region18: #{forward.28} parent=11 // pred_check_branch
        %260 = sbr.rel (%p258) target = $region20
      $region19: #{forward.28} parent=11 // pred_region
        _
      $region20: #{forward.28} parent=11 // pred_fallthru
        _
      // Predicated region
      $region21: #{forward.28} parent=11 // pred_check
        %p261 = pneg %p149
      $region22: #{forward.28} parent=11 // pred_check_branch
        %263 = sbr.rel (%p261) target = $region24
      $region23: #{forward.28} parent=11 // pred_region
        _
      $region24: #{forward.28} parent=11 // pred_fallthru
        _
      // Predicated region
      $region25: #{forward.28} parent=11 // pred_check
        %p264 = pneg %p170
      $region26: #{forward.28} parent=11 // pred_check_branch
        %266 = sbr.rel (%p264) target = $region28
      $region27: #{forward.28} parent=11 // pred_region
        _
      $region28: #{forward.28} parent=11 // pred_fallthru
        _
      // Predicated region
      $region29: #{forward.28} parent=11 // pred_check
        %p267 = pneg %p191
      $region30: #{forward.28} parent=11 // pred_check_branch
        %269 = sbr.rel (%p267) target = $region32
      $region31: #{forward.28} parent=11 // pred_region
        _
      $region32: #{forward.28} parent=11 // pred_fallthru
        _
      // Predicated region
      $region33: #{forward.28} parent=11 // pred_check
        %p270 = pneg %p212
      $region34: #{forward.28} parent=11 // pred_check_branch
        %272 = sbr.rel (%p270) target = $region36
      $region35: #{forward.28} parent=11 // pred_region
        _
      $region36: #{forward.28} parent=11 // pred_fallthru
        _
    $region12: #{forward.28} parent=5 // pred_fallthru
      _
    %p273 = scmp.lt.s32.totalorder %s14, 2
    // Predicated region
    $region37: #{forward.28} parent=5 // pred_check
      %p274 = pneg %p273
    $region38: #{forward.28} parent=5 // pred_check_branch
      %276 = sbr.rel (%p274) target = $region40
    $region39: #{forward.28} parent=5 // pred_region
      // Predicated region
      $region41: #{forward.28} parent=39 // pred_check
        %p277 = pneg %p48
      $region42: #{forward.28} parent=39 // pred_check_branch
        %279 = sbr.rel (%p277) target = $region44
      $region43: #{forward.28} parent=39 // pred_region
        %s280 = smul.u32 7, %s22
        %s281 = ssub.s32 8, %s280
        %p282 = scmp.lt.s32.totalorder %s281, 7
        %s283 = scalar_select %p282, %s281, 7
        %s284 = smul.u32 4, %s283
        %p285 = scmp.lt.s32.totalorder %s21, 1
        %s286 = scalar_select %p285, %s21, 1
        %p287 = scmp.lt.s32.totalorder %s280, 7
        %s288 = scalar_select %p287, %s280, 7
        %s289 = smul.addr %s286, 8
        %s290 = sadd.s32 %s288, %s289
        %s291 = smul.addr %s290, 4
        %s292 = scalar_lea.vmem %s0, %s291
        %s293 = smul.u32 7, %s22
        %s294 = ssub.s32 8, %s293
        %p295 = scmp.lt.s32.totalorder %s294, 7
        %s296 = scalar_select %p295, %s294, 7
        %s297 = smul.u32 4, %s296
      $region44: #{forward.28} parent=39 // pred_fallthru
        _
      // Predicated region
      $region45: #{forward.28} parent=39 // pred_check
        %p298 = pneg %p80
      $region46: #{forward.28} parent=39 // pred_check_branch
        %300 = sbr.rel (%p298) target = $region48
      $region47: #{forward.28} parent=39 // pred_region
        %s301 = sadd.s32 %s22, 1
        %s302 = smul.u32 %s301, 7
        %p303 = scmp.lt.s32.totalorder %s21, 1
        %s304 = scalar_select %p303, %s21, 1
        %p305 = scmp.lt.s32.totalorder %s302, 7
        %s306 = scalar_select %p305, %s302, 7
        %s307 = smul.addr %s304, 8
        %s308 = sadd.s32 %s306, %s307
        %s309 = smul.addr %s308, 4
        %s310 = scalar_lea.vmem %s1, %s309
        %s311 = sadd.s32 %s22, 1
        %s312 = smul.u32 %s311, 7
      $region48: #{forward.28} parent=39 // pred_fallthru
        _
    $region40: #{forward.28} parent=5 // pred_fallthru
      _
    %p313 = scmp.le.s32.totalorder 1, %s14
    %p314 = scmp.lt.s32.totalorder %s14, 3
    %p315 = pnand %p313, %p314
    %p316 = pneg %p315
    // Predicated region
    $region49: #{forward.28} parent=5 // pred_check
      _
    $region50: #{forward.28} parent=5 // pred_check_branch
      %318 = sbr.rel (%p315) target = $region52
    $region51: #{forward.28} parent=5 // pred_region
      %s319 = ssub.s32 %s14, 1
      %s320 = smul.u32 7, %s24
      %s321 = ssub.s32 8, %s320
      %p322 = scmp.lt.s32.totalorder %s321, 7
      %s323 = scalar_select %p322, %s321, 7
      %s324 = smul.u32 4, %s323
      %p325 = scmp.lt.s32.totalorder %s23, 1
      %s326 = scalar_select %p325, %s23, 1
      %p327 = scmp.lt.s32.totalorder %s320, 7
      %s328 = scalar_select %p327, %s320, 7
      %s329 = smul.addr %s326, 8
      %s330 = sadd.s32 %s328, %s329
      %s331 = smul.addr %s330, 4
      %s332 = scalar_lea.vmem %s0, %s331
      %p333 = pneg %p54
      %p334 = pneg %p51
      %s335 = sadd.s32 %s24, 1
      %s336 = smul.u32 %s335, 7
      %p337 = scmp.lt.s32.totalorder %s23, 1
      %s338 = scalar_select %p337, %s23, 1
      %p339 = scmp.lt.s32.totalorder %s336, 7
      %s340 = scalar_select %p339, %s336, 7
      %s341 = smul.addr %s338, 8
      %s342 = sadd.s32 %s340, %s341
      %s343 = smul.addr %s342, 4
      %s344 = scalar_lea.vmem %s1, %s343
      %p345 = pneg %p86
      %p346 = pneg %p83
      %p347 = pneg %p107
      %p348 = pneg %p104
      %p349 = pneg %p128
      %p350 = pneg %p125
      %p351 = pneg %p149
      %p352 = pneg %p146
      %p353 = pneg %p170
      %p354 = pneg %p167
      %p355 = pneg %p191
      %p356 = pneg %p188
      %p357 = pneg %p212
      %p358 = pneg %p209
      %p359 = pneg %p240
      %p360 = pneg %p237
      %s361 = smul.u32 7, %s24
      %p362 = scmp.lt.s32.totalorder %s23, 1
      %s363 = scalar_select %p362, %s23, 1
      %p364 = scmp.lt.s32.totalorder %s361, 6
      %s365 = scalar_select %p364, %s361, 6
      %s366 = smul.addr %s363, 7
      %s367 = sadd.s32 %s365, %s366
      %s368 = smul.addr %s367, 4
      %s369 = scalar_lea.vmem %s8, %s368
      %s370 = smul.u32 7, %s24
      %s371 = ssub.s32 8, %s370
      %p372 = scmp.lt.s32.totalorder %s371, 7
      %s373 = scalar_select %p372, %s371, 7
      %s374 = smul.u32 4, %s373
      %p375 = scmp.lt.s32.totalorder %s23, 1
      %s376 = scalar_select %p375, %s23, 1
      %p377 = scmp.lt.s32.totalorder %s370, 7
      %s378 = scalar_select %p377, %s370, 7
      %s379 = smul.addr %s376, 8
      %s380 = sadd.s32 %s378, %s379
      %s381 = smul.addr %s380, 4
      %s382 = scalar_lea.vmem %s0, %s381
      %s383 = smul.u32 7, %s24
      %s384 = ssub.s32 8, %s383
      %p385 = scmp.lt.s32.totalorder %s384, 7
      %s386 = scalar_select %p385, %s384, 7
      %s387 = smul.u32 4, %s386
      %s388 = sadd.s32 %s24, 1
      %s389 = smul.u32 %s388, 7
      %p390 = scmp.lt.s32.totalorder %s23, 1
      %s391 = scalar_select %p390, %s23, 1
      %p392 = scmp.lt.s32.totalorder %s389, 7
      %s393 = scalar_select %p392, %s389, 7
      %s394 = smul.addr %s391, 8
      %s395 = sadd.s32 %s393, %s394
      %s396 = smul.addr %s395, 4
      %s397 = scalar_lea.vmem %s1, %s396
      %s398 = sadd.s32 %s24, 1
      %s399 = smul.u32 %s398, 7
      %s400 = smul.u32 7, %s24
      %p401 = scmp.lt.s32.totalorder %s23, 1
      %s402 = scalar_select %p401, %s23, 1
      %p403 = scmp.lt.s32.totalorder %s400, 6
      %s404 = scalar_select %p403, %s400, 6
      %s405 = smul.addr %s402, 7
      %s406 = sadd.s32 %s404, %s405
      %s407 = smul.addr %s406, 4
      %s408 = scalar_lea.vmem %s8, %s407
      %s409 = smul.u32 7, %s24
      %v411 = vld [vmem:[%s382] sm:$0xf]
      %v412 = vld [vmem:[%s382 + $0x4] sm:$0xf]
      %v413 = vld [vmem:[%s382 + $0x8] sm:$0xf]
      %v414 = vld [vmem:[%s382 + $0xc] sm:$0xf]
      %v415 = vld [vmem:[%s382 + $0x10] sm:$0xf]
      %v416 = vld [vmem:[%s382 + $0x14] sm:$0xf]
      %v417 = vld [vmem:[%s382 + $0x18] sm:$0xf]
      %v418 = vld [vmem:[%s397] sm:$0xf]
      %v426 = vunpack.c.l.b16 %v411
      %v427 = vunpack.c.l.b16 %v412
      %v428 = vunpack.c.l.b16 %v413
      %v429 = vunpack.c.l.b16 %v414
      %v430 = vunpack.c.l.b16 %v415
      %v431 = vunpack.c.l.b16 %v416
      %v432 = vunpack.c.l.b16 %v417
      %v433 = vpack.c.b16 %v427, %v426
      %v434 = vpack.c.b16 %v429, %v428
      %v435 = vpack.c.b16 %v431, %v430
      %v436 = vpack.c.b16 %v432, %v432
      %v441 = vunpack.c.l.b16 %v418
      %v442 = vpack.c.b16 %v441, %v441
      %vm443 = vcmask 1043456
      %v446 = vsel %vm443, %v436, %v442
      %v448 = vld [vmem:[%s2] sm:$0xf]
      %v449 = vld [vmem:[%s2 + $0x4] sm:$0xf]
      %v450 = vld [vmem:[%s3] sm:$0x1]
      %v452 = vperm.slane %v450, 0
      %vm454 = vsmask.f32 6400
      %v456 = vshrl.u32 %v433, 16
      %v458 = vrot.slane %v456, 1
      %v459 = vshll.u32 %v433, 16
      %v461 = vrot.slane %v459, 2
      %v462 = vor.u32 %v458, %v461
      %v464 = vshrl.u32 %v434, 16
      %v466 = vrot.slane %v464, 1
      %v467 = vshll.u32 %v434, 16
      %v469 = vrot.slane %v467, 2
      %v470 = vor.u32 %v466, %v469
      %v471 = vsel %vm454, %v462, %v470
      %v473 = vshrl.u32 %v435, 16
      %v475 = vrot.slane %v473, 1
      %v476 = vshll.u32 %v435, 16
      %v478 = vrot.slane %v476, 2
      %v479 = vor.u32 %v475, %v478
      %v480 = vsel %vm454, %v470, %v479
      %v481 = vshrl.u32 %v446, 16
      %v483 = vrot.slane %v481, 1
      %v484 = vshll.u32 %v446, 16
      %v486 = vrot.slane %v484, 2
      %v487 = vor.u32 %v483, %v486
      %v488 = vsel %vm454, %v479, %v487
      %v491 = vunpack.c.l.b16 %v448
      %v492 = vunpack.c.l.b16 %v449
      %v493 = vpack.c.b16 %v492, %v491
      %vm495 = vcmask 130048
      %v497 = vsel %vm495, %v471, 0
      %v500 = vsel %vm495, %v480, 0
      %v503 = vsel %vm495, %v488, 0
      %v506 = vsel %vm495, %v487, 0
      %508 = vmatpush.bf16.msra.mxu0 0
      %509 = vmatpush.bf16.msra.mxu0 0
      %510 = vmatpush.bf16.msra.mxu0 0
      %511 = vmatpush.bf16.msra.mxu0 0
      %512 = vmatpush.bf16.msra.mxu0 0
      %513 = vmatpush.bf16.msra.mxu0 0
      %514 = vmatpush.bf16.msra.mxu0 0
      %515 = vmatpush.bf16.msra.mxu0 %v493
      %516 = vmatmul.bf16.gmra.mxu0 %v497
      %v517 = vpop.f32.mrf.mxu0
      %v518 = vadd.f32 %v452, %v517
      %v519 = vpop.f32.mrf.mxu0
      %v520 = vadd.f32 %v452, %v519
      %521 = vmatmul.bf16.gmra.mxu0 %v500
      %v522 = vpop.f32.mrf.mxu0
      %v523 = vadd.f32 %v452, %v522
      %v524 = vpop.f32.mrf.mxu0
      %v525 = vadd.f32 %v452, %v524
      %526 = vmatmul.bf16.gmra.mxu0 %v503
      %v527 = vpop.f32.mrf.mxu0
      %v528 = vadd.f32 %v452, %v527
      %v529 = vpop.f32.mrf.mxu0
      %v530 = vadd.f32 %v452, %v529
      %531 = vmatmul.bf16.gmra.mxu0 %v506
      %v532 = vpop.f32.mrf.mxu0
      %v533 = vadd.f32 %v452, %v532
      %v534 = vpop.f32.mrf.mxu0
      %535 = vdwg.mxu0
      %v536 = vunpack.c.l.bf16 %v433
      %v537 = vunpack.c.h.bf16 %v433
      %v538 = vunpack.c.l.bf16 %v434
      %v539 = vunpack.c.h.bf16 %v434
      %v540 = vunpack.c.l.bf16 %v435
      %v541 = vunpack.c.h.bf16 %v435
      %v542 = vunpack.c.l.bf16 %v446
      %v543 = vunpack.c.h.bf16 %v446
      %vm544 = vcmp.ge.f32.partialorder %v536, 0.0
      %vm545 = vcmp.ge.f32.partialorder %v537, 0.0
      %vm546 = vcmp.ge.f32.partialorder %v538, 0.0
      %vm547 = vcmp.ge.f32.partialorder %v539, 0.0
      %vm548 = vcmp.ge.f32.partialorder %v540, 0.0
      %vm549 = vcmp.ge.f32.partialorder %v541, 0.0
      %vm550 = vcmp.ge.f32.partialorder %v542, 0.0
      %vm551 = vcmp.ge.f32.partialorder %v543, 0.0
      %v552 = vmul.f32 %v536, 0.2
      %v553 = vmul.f32 %v537, 0.2
      %v554 = vmul.f32 %v538, 0.2
      %v555 = vmul.f32 %v539, 0.2
      %v556 = vmul.f32 %v540, 0.2
      %v557 = vmul.f32 %v541, 0.2
      %v558 = vmul.f32 %v542, 0.2
      %v559 = vmul.f32 %v543, 0.2
      %v560 = vsel %vm544, %v536, %v552
      %v561 = vsel %vm545, %v537, %v553
      %v562 = vsel %vm546, %v538, %v554
      %v563 = vsel %vm547, %v539, %v555
      %v564 = vsel %vm548, %v540, %v556
      %v565 = vsel %vm549, %v541, %v557
      %v566 = vsel %vm550, %v542, %v558
      %v567 = vsel %vm551, %v543, %v559
      %v568 = vpack.c.bf16 %v560, %v560
      %v569 = vpack.c.bf16 %v561, %v561
      %v570 = vpack.c.bf16 %v562, %v562
      %v571 = vpack.c.bf16 %v563, %v563
      %v572 = vpack.c.bf16 %v564, %v564
      %v573 = vpack.c.bf16 %v565, %v565
      %v574 = vpack.c.bf16 %v566, %v566
      %v575 = vpack.c.bf16 %v567, %v567
      %v583 = vunpack.c.l.b16 %v568
      %v584 = vunpack.c.l.b16 %v569
      %v585 = vunpack.c.l.b16 %v570
      %v586 = vunpack.c.l.b16 %v571
      %v587 = vunpack.c.l.b16 %v572
      %v588 = vunpack.c.l.b16 %v573
      %v589 = vunpack.c.l.b16 %v574
      %v590 = vpack.c.b16 %v584, %v583
      %v591 = vpack.c.b16 %v586, %v585
      %v592 = vpack.c.b16 %v588, %v587
      %v593 = vpack.c.b16 %v589, %v589
      %v595 = vunpack.c.l.b16 %v575
      %v596 = vpack.c.b16 %v595, %v589
      %v598 = vshrl.u32 %v590, 16
      %v600 = vrot.slane %v598, 1
      %v601 = vshll.u32 %v590, 16
      %v603 = vrot.slane %v601, 2
      %v604 = vor.u32 %v600, %v603
      %v606 = vshrl.u32 %v591, 16
      %v608 = vrot.slane %v606, 1
      %v609 = vshll.u32 %v591, 16
      %v611 = vrot.slane %v609, 2
      %v612 = vor.u32 %v608, %v611
      %v613 = vsel %vm454, %v604, %v612
      %v615 = vshrl.u32 %v592, 16
      %v617 = vrot.slane %v615, 1
      %v618 = vshll.u32 %v592, 16
      %v620 = vrot.slane %v618, 2
      %v621 = vor.u32 %v617, %v620
      %v622 = vsel %vm454, %v612, %v621
      %v624 = vshrl.u32 %v596, 16
      %v626 = vrot.slane %v624, 1
      %v627 = vshll.u32 %v596, 16
      %v629 = vrot.slane %v627, 2
      %v630 = vor.u32 %v626, %v629
      %v631 = vsel %vm454, %v621, %v630
      %632 = vrot.lane.b32.xlu0 %v613, 16
      %v633 = vpop.permute.xlu0 %632
      %634 = vrot.lane.b32.xlu0 %v622, 16
      %v635 = vpop.permute.xlu0 %634
      %636 = vrot.lane.b32.xlu0 %v631, 16
      %v637 = vpop.permute.xlu0 %636
      %638 = vrot.lane.b32.xlu0 %v630, 16
      %v639 = vpop.permute.xlu0 %638
      %vm640 = vcmask 1044480
      %v641 = vrot.slane %v590, 3
      %v642 = vrot.slane %v591, 3
      %v643 = vsel %vm640, %v641, %v642
      %v644 = vrot.slane %v592, 3
      %v645 = vsel %vm640, %v642, %v644
      %v646 = vrot.slane %v596, 3
      %v647 = vsel %vm640, %v644, %v646
      %648 = vrot.lane.b32.xlu0 %v643, 32
      %v649 = vpop.permute.xlu0 %648
      %650 = vrot.lane.b32.xlu0 %v645, 32
      %v651 = vpop.permute.xlu0 %650
      %652 = vrot.lane.b32.xlu0 %v647, 32
      %v653 = vpop.permute.xlu0 %652
      %654 = vrot.lane.b32.xlu0 %v646, 32
      %v655 = vpop.permute.xlu0 %654
      %v657 = vsel %vm495, %v590, %v633
      %v659 = vsel %vm495, %v591, %v635
      %v661 = vsel %vm495, %v592, %v637
      %v664 = vsel %vm495, %v593, %v639
      %vm665 = vcmask 261120
      %v667 = vsel %vm665, %v657, %v649
      %v669 = vsel %vm665, %v659, %v651
      %v671 = vsel %vm665, %v661, %v653
      %v673 = vsel %vm665, %v664, %v655
      %v674 = vld [vmem:[%s4] sm:$0xf]
      %v675 = vld [vmem:[%s4 + $0x4] sm:$0xf]
      %v676 = vld [vmem:[%s4 + $0x8] sm:$0xf]
      %v677 = vld [vmem:[%s4 + $0xc] sm:$0xf]
      %v678 = vld [vmem:[%s4 + $0x10] sm:$0xf]
      %v679 = vld [vmem:[%s4 + $0x14] sm:$0xf]
      %v680 = vld [vmem:[%s5] sm:$0x1]
      %v682 = vperm.slane %v680, 0
      %v690 = vunpack.c.l.b16 %v674
      %v691 = vunpack.c.l.b16 %v675
      %v692 = vunpack.c.l.b16 %v676
      %v693 = vunpack.c.l.b16 %v677
      %v694 = vunpack.c.l.b16 %v678
      %v695 = vunpack.c.l.b16 %v679
      %v696 = vpack.c.b16 %v691, %v690
      %v697 = vpack.c.b16 %v693, %v692
      %v698 = vpack.c.b16 %v695, %v694
      %vm702 = vcmask 392192
      %v703 = vsel %vm702, %v667, 0
      %v705 = vsel %vm702, %v669, 0
      %v707 = vsel %vm702, %v671, 0
      %v709 = vsel %vm702, %v673, 0
      %711 = vmatpush.bf16.msra.mxu0 0
      %712 = vmatpush.bf16.msra.mxu0 0
      %713 = vmatpush.bf16.msra.mxu0 0
      %714 = vmatpush.bf16.msra.mxu0 0
      %715 = vmatpush.bf16.msra.mxu0 0
      %716 = vmatpush.bf16.msra.mxu0 %v698
      %717 = vmatpush.bf16.msra.mxu0 %v697
      %718 = vmatpush.bf16.msra.mxu0 %v696
      %719 = vmatmul.bf16.gmra.mxu0 %v703
      %v720 = vpop.f32.mrf.mxu0
      %v721 = vadd.f32 %v682, %v720
      %v722 = vpop.f32.mrf.mxu0
      %v723 = vadd.f32 %v682, %v722
      %724 = vmatmul.bf16.gmra.mxu0 %v705
      %v725 = vpop.f32.mrf.mxu0
      %v726 = vadd.f32 %v682, %v725
      %v727 = vpop.f32.mrf.mxu0
      %v728 = vadd.f32 %v682, %v727
      %729 = vmatmul.bf16.gmra.mxu0 %v707
      %v730 = vpop.f32.mrf.mxu0
      %v731 = vadd.f32 %v682, %v730
      %v732 = vpop.f32.mrf.mxu0
      %v733 = vadd.f32 %v682, %v732
      %734 = vmatmul.bf16.gmra.mxu0 %v709
      %v735 = vpop.f32.mrf.mxu0
      %v736 = vadd.f32 %v682, %v735
      %v737 = vpop.f32.mrf.mxu0
      %738 = vdwg.mxu0
      %vm739 = vcmp.ge.f32.partialorder %v721, 0.0
      %vm740 = vcmp.ge.f32.partialorder %v723, 0.0
      %vm741 = vcmp.ge.f32.partialorder %v726, 0.0
      %vm742 = vcmp.ge.f32.partialorder %v728, 0.0
      %vm743 = vcmp.ge.f32.partialorder %v731, 0.0
      %vm744 = vcmp.ge.f32.partialorder %v733, 0.0
      %vm745 = vcmp.ge.f32.partialorder %v736, 0.0
      %v746 = vmul.f32 %v721, 0.2
      %v747 = vmul.f32 %v723, 0.2
      %v748 = vmul.f32 %v726, 0.2
      %v749 = vmul.f32 %v728, 0.2
      %v750 = vmul.f32 %v731, 0.2
      %v751 = vmul.f32 %v733, 0.2
      %v752 = vmul.f32 %v736, 0.2
      %v753 = vsel %vm739, %v721, %v746
      %v754 = vsel %vm740, %v723, %v747
      %v755 = vsel %vm741, %v726, %v748
      %v756 = vsel %vm742, %v728, %v749
      %v757 = vsel %vm743, %v731, %v750
      %v758 = vsel %vm744, %v733, %v751
      %v759 = vsel %vm745, %v736, %v752
      %v760 = vpack.c.bf16 %v754, %v753
      %v761 = vpack.c.bf16 %v756, %v755
      %v762 = vpack.c.bf16 %v758, %v757
      %v763 = vpack.c.bf16 %v759, %v759
      %v764 = vld [vmem:[%s6] sm:$0xf]
      %v765 = vld [vmem:[%s6 + $0x4] sm:$0xf]
      %v766 = vld [vmem:[%s7] sm:$0x1]
      %v768 = vperm.slane %v766, 0
      %v772 = vunpack.c.l.b16 %v764
      %v773 = vunpack.c.l.b16 %v765
      %v774 = vpack.c.b16 %v773, %v772
      %v777 = vsel %vm495, %v760, 0
      %v780 = vsel %vm495, %v761, 0
      %v783 = vsel %vm495, %v762, 0
      %v786 = vsel %vm495, %v763, 0
      %788 = vmatpush.bf16.msra.mxu0 0
      %789 = vmatpush.bf16.msra.mxu0 0
      %790 = vmatpush.bf16.msra.mxu0 0
      %791 = vmatpush.bf16.msra.mxu0 0
      %792 = vmatpush.bf16.msra.mxu0 0
      %793 = vmatpush.bf16.msra.mxu0 0
      %794 = vmatpush.bf16.msra.mxu0 0
      %795 = vmatpush.bf16.msra.mxu0 %v774
      %796 = vmatmul.bf16.gmra.mxu0 %v777
      %v797 = vpop.f32.mrf.mxu0
      %v798 = vadd.f32 %v768, %v797
      %v799 = vpop.f32.mrf.mxu0
      %v800 = vadd.f32 %v768, %v799
      %801 = vmatmul.bf16.gmra.mxu0 %v780
      %v802 = vpop.f32.mrf.mxu0
      %v803 = vadd.f32 %v768, %v802
      %v804 = vpop.f32.mrf.mxu0
      %v805 = vadd.f32 %v768, %v804
      %806 = vmatmul.bf16.gmra.mxu0 %v783
      %v807 = vpop.f32.mrf.mxu0
      %v808 = vadd.f32 %v768, %v807
      %v809 = vpop.f32.mrf.mxu0
      %v810 = vadd.f32 %v768, %v809
      %811 = vmatmul.bf16.gmra.mxu0 %v786
      %v812 = vpop.f32.mrf.mxu0
      %v813 = vadd.f32 %v768, %v812
      %v814 = vpop.f32.mrf.mxu0
      %815 = vdwg.mxu0
      %v816 = vadd.f32 %v518, %v798
      %v817 = vadd.f32 %v520, %v800
      %v818 = vadd.f32 %v523, %v803
      %v819 = vadd.f32 %v525, %v805
      %v820 = vadd.f32 %v528, %v808
      %v821 = vadd.f32 %v530, %v810
      %v822 = vadd.f32 %v533, %v813
      %v823 = vpack.c.bf16 %v816, %v816
      %v824 = vpack.c.bf16 %v817, %v817
      %v825 = vpack.c.bf16 %v818, %v818
      %v826 = vpack.c.bf16 %v819, %v819
      %v827 = vpack.c.bf16 %v820, %v820
      %v828 = vpack.c.bf16 %v821, %v821
      %v829 = vpack.c.bf16 %v822, %v822
      %vm830 = vcmask 125952
      %831 = vst.msk [vmem:[%s408] sm:$0xf] %vm830, %v823
      %832 = vst.msk [vmem:[%s408 + $0x4] sm:$0xf] %vm830, %v824
      %833 = vst.msk [vmem:[%s408 + $0x8] sm:$0xf] %vm830, %v825
      %834 = vst.msk [vmem:[%s408 + $0xc] sm:$0xf] %vm830, %v826
      %835 = vst.msk [vmem:[%s408 + $0x10] sm:$0xf] %vm830, %v827
      %836 = vst.msk [vmem:[%s408 + $0x14] sm:$0xf] %vm830, %v828
      %837 = vst.msk [vmem:[%s408 + $0x18] sm:$0xf] %vm830, %v829
      %s838 = smul.u32 7, %s24
      %p839 = scmp.lt.s32.totalorder %s23, 1
      %s840 = scalar_select %p839, %s23, 1
      %p841 = scmp.lt.s32.totalorder %s838, 6
      %s842 = scalar_select %p841, %s838, 6
      %s843 = smul.addr %s840, 7
      %s844 = sadd.s32 %s842, %s843
      %s845 = smul.addr %s844, 4
      %s846 = scalar_lea.vmem %s8, %s845
      // Predicated region
      $region53: #{forward.28} parent=51 // pred_check
        %p847 = pneg %p237
      $region54: #{forward.28} parent=51 // pred_check_branch
        %849 = sbr.rel (%p847) target = $region56
      $region55: #{forward.28} parent=51 // pred_region
        %s850 = smul.u32 7, %s24
      $region56: #{forward.28} parent=51 // pred_fallthru
        _
    $region52: #{forward.28} parent=5 // pred_fallthru
      _
    %p851 = scmp.le.s32.totalorder 2, %s14
    // Predicated region
    $region57: #{forward.28} parent=5 // pred_check
      %p852 = pneg %p851
    $region58: #{forward.28} parent=5 // pred_check_branch
      %854 = sbr.rel (%p852) target = $region60
    $region59: #{forward.28} parent=5 // pred_region
      %s855 = ssub.s32 %s14, 2
      // Predicated region
      $region61: #{forward.28} parent=59 // pred_check
        %p856 = pneg %p243
      $region62: #{forward.28} parent=59 // pred_check_branch
        %858 = sbr.rel (%p856) target = $region64
      $region63: #{forward.28} parent=59 // pred_region
        %s859 = smul.u32 7, %s26
        %p860 = scmp.lt.s32.totalorder %s25, 1
        %s861 = scalar_select %p860, %s25, 1
        %p862 = scmp.lt.s32.totalorder %s859, 6
        %s863 = scalar_select %p862, %s859, 6
        %s864 = smul.addr %s861, 7
        %s865 = sadd.s32 %s863, %s864
        %s866 = smul.addr %s865, 4
        %s867 = scalar_lea.vmem %s8, %s866
      $region64: #{forward.28} parent=59 // pred_fallthru
        _
    $region60: #{forward.28} parent=5 // pred_fallthru
      _
  $region6: #{forward.28} parent=0 // loop_footer
    %s18 = sadd.s32 1, %s14
  $region7: #{forward.28} parent=0 // loop_footer_branch
    %13 = sbr.rel target = $region3
  $region8: #{forward.28} parent=0 // loop_exit
    _

// kernel: forward.30
$region0: #{forward.30}
  #allocation0 [shape = 'u32[]', space=smem, size = 0x4, offset = 0x4, fixed_abs, tag = 'smem constant byte address 0x4 - core index']
  #allocation1 [shape = 'u32[72,128]{1,0:T(1,128)}', space=vmem, size = 0x9000, scoped, tag = 'internal scratch']
  %s0 = inlined_call_operand.vmem [shape: bf16[2,24,64], index: 0, kind: input, shape index: {}, may-alias: {0,1}]
  %s1 = inlined_call_operand.vmem [shape: bf16[2,24,64], index: 1, kind: input, shape index: {}, may-alias: {0,1}]
  %s2 = inlined_call_operand.vmem [shape: bf16[128,32], index: 2, kind: input, shape index: {}]
  %s3 = inlined_call_operand.vmem [shape: f32[1,32], index: 3, kind: input, shape index: {}]
  %s4 = inlined_call_operand.vmem [shape: bf16[2,16,32], index: 4, kind: output, shape index: {}]
  %s5 = sld [smem:[#allocation0]]
  $region49: #{forward.30} parent=0
    _
  %s7 = ssub.s32 1, %s5
  %s8 = scalar_select 0, %s7, %s5
  loop: start=0, step=1, limit=4
  $region2: #{forward.30} parent=0 // loop_pre_header
    _
  $region3: #{forward.30} parent=0 // loop_header
    %s10 = sphi 0, %s14
    %p11 = scmp.ge.s32.totalorder %s10, 4
    %s17 = sphi 0, %s29
    %s18 = sphi 0, %s25
    %s19 = sphi 0, %s17
    %s20 = sphi 0, %s18
    %s21 = sphi 0, %s19
    %s22 = sphi 0, %s20
    %s34 = sphi 0, %s36
    %s37 = sphi 0, %s34
    %s38 = sphi 0, %s37
    %s54 = sphi 0, %s38
    %s66 = sphi 0, %s68
    %s69 = sphi 0, %s66
    %s70 = sphi 0, %s69
    %s86 = sphi 0, %s70
    %s90 = sphi 0, %s90
    %s92 = sphi 0, %s90
    %s93 = sphi 0, %s92
    %s107 = sphi 0, %s93
    %s111 = sphi 0, %s111
    %s113 = sphi 0, %s111
    %s114 = sphi 0, %s113
    %s128 = sphi 0, %s114
    %s136 = sphi 0, %s138
    %s139 = sphi 0, %s136
    %s140 = sphi 0, %s139
    %s156 = sphi 0, %s140
  $region4: #{forward.30} parent=0 // loop_header_branch
    %13 = sbr.rel (%p11) target = $region8
  $region5: #{forward.30} parent=0 // loop_body
    %s15 = ssub.s32 %s10, 1
    %s16 = ssub.s32 %s10, 2
    %s23 = sadd.s32 1, %s18
    %p24 = scmp.ge.s32.totalorder %s23, 1
    %s25 = scalar_select %p24, 0, %s23
    %s26 = sadd.s32 1, %s17
    %s27 = scalar_select %p24, %s26, %s17
    %p28 = scmp.ge.s32.totalorder %s27, 2
    %s29 = scalar_select %p28, 0, %s27
    %s30 = ssub.s32 %s17, %s29
    %s31 = ssub.s32 %s18, %s25
    %s32 = sor.u32 %s30, %s31
    %p33 = scmp.eq.s32.totalorder %s32, 0
    %s35 = sadd.s32 %s34, 1
    %s36 = scalar_select %p33, %s34, %s35
    %p39 = pneg %p33
    %p40 = scmp.eq.s32.totalorder %s10, 1
    %p41 = por %p39, %p40
    %p42 = scmp.ne.s32.totalorder %s34, %s37
    %p43 = scmp.eq.s32.totalorder %s10, 0
    %p44 = por %p42, %p43
    %p45 = scmp.ne.s32.totalorder %s34, %s37
    %p46 = scmp.eq.s32.totalorder %s15, 1
    %p47 = por %p45, %p46
    %p48 = scmp.ne.s32.totalorder %s37, %s38
    %p49 = scmp.eq.s32.totalorder %s15, 0
    %p50 = por %p48, %p49
    %p51 = scmp.ne.s32.totalorder %s37, %s38
    %p52 = scmp.eq.s32.totalorder %s16, 1
    %p53 = por %p51, %p52
    %p55 = scmp.ne.s32.totalorder %s38, %s54
    %p56 = scmp.eq.s32.totalorder %s16, 0
    %p57 = por %p55, %p56
    %s58 = sadd.s32 %s18, 1
    %s59 = smul.u32 %s58, 2
    %s60 = sadd.s32 %s25, 1
    %s61 = smul.u32 %s60, 2
    %s62 = ssub.s32 %s17, %s29
    %s63 = ssub.s32 %s59, %s61
    %s64 = sor.u32 %s62, %s63
    %p65 = scmp.eq.s32.totalorder %s64, 0
    %s67 = sadd.s32 %s66, 1
    %s68 = scalar_select %p65, %s66, %s67
    %p71 = pneg %p65
    %p72 = scmp.eq.s32.totalorder %s10, 1
    %p73 = por %p71, %p72
    %p74 = scmp.ne.s32.totalorder %s66, %s69
    %p75 = scmp.eq.s32.totalorder %s10, 0
    %p76 = por %p74, %p75
    %p77 = scmp.ne.s32.totalorder %s66, %s69
    %p78 = scmp.eq.s32.totalorder %s15, 1
    %p79 = por %p77, %p78
    %p80 = scmp.ne.s32.totalorder %s69, %s70
    %p81 = scmp.eq.s32.totalorder %s15, 0
    %p82 = por %p80, %p81
    %p83 = scmp.ne.s32.totalorder %s69, %s70
    %p84 = scmp.eq.s32.totalorder %s16, 1
    %p85 = por %p83, %p84
    %p87 = scmp.ne.s32.totalorder %s70, %s86
    %p88 = scmp.eq.s32.totalorder %s16, 0
    %p89 = por %p87, %p88
    %s91 = sadd.s32 %s90, 1
    %p94 = scmp.eq.s32.totalorder %s10, 1
    %p95 = scmp.ne.s32.totalorder %s90, %s92
    %p96 = scmp.eq.s32.totalorder %s10, 0
    %p97 = por %p95, %p96
    %p98 = scmp.ne.s32.totalorder %s90, %s92
    %p99 = scmp.eq.s32.totalorder %s15, 1
    %p100 = por %p98, %p99
    %p101 = scmp.ne.s32.totalorder %s92, %s93
    %p102 = scmp.eq.s32.totalorder %s15, 0
    %p103 = por %p101, %p102
    %p104 = scmp.ne.s32.totalorder %s92, %s93
    %p105 = scmp.eq.s32.totalorder %s16, 1
    %p106 = por %p104, %p105
    %p108 = scmp.ne.s32.totalorder %s93, %s107
    %p109 = scmp.eq.s32.totalorder %s16, 0
    %p110 = por %p108, %p109
    %s112 = sadd.s32 %s111, 1
    %p115 = scmp.eq.s32.totalorder %s10, 1
    %p116 = scmp.ne.s32.totalorder %s111, %s113
    %p117 = scmp.eq.s32.totalorder %s10, 0
    %p118 = por %p116, %p117
    %p119 = scmp.ne.s32.totalorder %s111, %s113
    %p120 = scmp.eq.s32.totalorder %s15, 1
    %p121 = por %p119, %p120
    %p122 = scmp.ne.s32.totalorder %s113, %s114
    %p123 = scmp.eq.s32.totalorder %s15, 0
    %p124 = por %p122, %p123
    %p125 = scmp.ne.s32.totalorder %s113, %s114
    %p126 = scmp.eq.s32.totalorder %s16, 1
    %p127 = por %p125, %p126
    %p129 = scmp.ne.s32.totalorder %s114, %s128
    %p130 = scmp.eq.s32.totalorder %s16, 0
    %p131 = por %p129, %p130
    %s132 = ssub.s32 %s17, %s29
    %s133 = ssub.s32 %s18, %s25
    %s134 = sor.u32 %s132, %s133
    %p135 = scmp.eq.s32.totalorder %s134, 0
    %s137 = sadd.s32 %s136, 1
    %s138 = scalar_select %p135, %s136, %s137
    %p141 = pneg %p135
    %p142 = scmp.eq.s32.totalorder %s10, 1
    %p143 = por %p141, %p142
    %p144 = scmp.ne.s32.totalorder %s136, %s139
    %p145 = scmp.eq.s32.totalorder %s10, 0
    %p146 = por %p144, %p145
    %p147 = scmp.ne.s32.totalorder %s136, %s139
    %p148 = scmp.eq.s32.totalorder %s15, 1
    %p149 = por %p147, %p148
    %p150 = scmp.ne.s32.totalorder %s139, %s140
    %p151 = scmp.eq.s32.totalorder %s15, 0
    %p152 = por %p150, %p151
    %p153 = scmp.ne.s32.totalorder %s139, %s140
    %p154 = scmp.eq.s32.totalorder %s16, 1
    %p155 = por %p153, %p154
    %p157 = scmp.ne.s32.totalorder %s140, %s156
    %p158 = scmp.eq.s32.totalorder %s16, 0
    %p159 = por %p157, %p158
    %p160 = scmp.le.s32.totalorder 1, %s10
    %p161 = scmp.lt.s32.totalorder %s10, 3
    %p162 = pnand %p160, %p161
    %p163 = pneg %p162
    // Predicated region
    $region9: #{forward.30} parent=5 // pred_check
      _
    $region10: #{forward.30} parent=5 // pred_check_branch
      %165 = sbr.rel (%p162) target = $region12
    $region11: #{forward.30} parent=5 // pred_region
      %s166 = ssub.s32 %s10, 1
      // Predicated region
      $region13: #{forward.30} parent=11 // pred_check
        %p167 = pneg %p103
      $region14: #{forward.30} parent=11 // pred_check_branch
        %169 = sbr.rel (%p167) target = $region16
      $region15: #{forward.30} parent=11 // pred_region
        _
      $region16: #{forward.30} parent=11 // pred_fallthru
        _
      // Predicated region
      $region17: #{forward.30} parent=11 // pred_check
        %p170 = pneg %p124
      $region18: #{forward.30} parent=11 // pred_check_branch
        %172 = sbr.rel (%p170) target = $region20
      $region19: #{forward.30} parent=11 // pred_region
        _
      $region20: #{forward.30} parent=11 // pred_fallthru
        _
    $region12: #{forward.30} parent=5 // pred_fallthru
      _
    %p173 = scmp.lt.s32.totalorder %s10, 2
    // Predicated region
    $region21: #{forward.30} parent=5 // pred_check
      %p174 = pneg %p173
    $region22: #{forward.30} parent=5 // pred_check_branch
      %176 = sbr.rel (%p174) target = $region24
    $region23: #{forward.30} parent=5 // pred_region
      // Predicated region
      $region25: #{forward.30} parent=23 // pred_check
        %p177 = pneg %p44
      $region26: #{forward.30} parent=23 // pred_check_branch
        %179 = sbr.rel (%p177) target = $region28
      $region27: #{forward.30} parent=23 // pred_region
        %s180 = smul.u32 2, %s18
        %s181 = ssub.s32 3, %s180
        %p182 = scmp.lt.s32.totalorder %s181, 2
        %s183 = scalar_select %p182, %s181, 2
        %s184 = smul.u32 4, %s183
        %p185 = scmp.lt.s32.totalorder %s17, 1
        %s186 = scalar_select %p185, %s17, 1
        %p187 = scmp.lt.s32.totalorder %s180, 2
        %s188 = scalar_select %p187, %s180, 2
        %s189 = smul.addr %s186, 3
        %s190 = sadd.s32 %s188, %s189
        %s191 = smul.addr %s190, 4
        %s192 = scalar_lea.vmem %s0, %s191
        %s193 = smul.u32 2, %s18
        %s194 = ssub.s32 3, %s193
        %p195 = scmp.lt.s32.totalorder %s194, 2
        %s196 = scalar_select %p195, %s194, 2
        %s197 = smul.u32 4, %s196
      $region28: #{forward.30} parent=23 // pred_fallthru
        _
      // Predicated region
      $region29: #{forward.30} parent=23 // pred_check
        %p198 = pneg %p76
      $region30: #{forward.30} parent=23 // pred_check_branch
        %200 = sbr.rel (%p198) target = $region32
      $region31: #{forward.30} parent=23 // pred_region
        %s201 = sadd.s32 %s18, 1
        %s202 = smul.u32 %s201, 2
        %p203 = scmp.lt.s32.totalorder %s17, 1
        %s204 = scalar_select %p203, %s17, 1
        %p205 = scmp.lt.s32.totalorder %s202, 2
        %s206 = scalar_select %p205, %s202, 2
        %s207 = smul.addr %s204, 3
        %s208 = sadd.s32 %s206, %s207
        %s209 = smul.addr %s208, 4
        %s210 = scalar_lea.vmem %s1, %s209
        %s211 = sadd.s32 %s18, 1
        %s212 = smul.u32 %s211, 2
      $region32: #{forward.30} parent=23 // pred_fallthru
        _
    $region24: #{forward.30} parent=5 // pred_fallthru
      _
    %p213 = scmp.le.s32.totalorder 1, %s10
    %p214 = scmp.lt.s32.totalorder %s10, 3
    %p215 = pnand %p213, %p214
    %p216 = pneg %p215
    // Predicated region
    $region33: #{forward.30} parent=5 // pred_check
      _
    $region34: #{forward.30} parent=5 // pred_check_branch
      %218 = sbr.rel (%p215) target = $region36
    $region35: #{forward.30} parent=5 // pred_region
      %s219 = ssub.s32 %s10, 1
      %s220 = smul.u32 2, %s20
      %s221 = ssub.s32 3, %s220
      %p222 = scmp.lt.s32.totalorder %s221, 2
      %s223 = scalar_select %p222, %s221, 2
      %s224 = smul.u32 4, %s223
      %p225 = scmp.lt.s32.totalorder %s19, 1
      %s226 = scalar_select %p225, %s19, 1
      %p227 = scmp.lt.s32.totalorder %s220, 2
      %s228 = scalar_select %p227, %s220, 2
      %s229 = smul.addr %s226, 3
      %s230 = sadd.s32 %s228, %s229
      %s231 = smul.addr %s230, 4
      %s232 = scalar_lea.vmem %s0, %s231
      %p233 = pneg %p50
      %p234 = pneg %p47
      %s235 = sadd.s32 %s20, 1
      %s236 = smul.u32 %s235, 2
      %p237 = scmp.lt.s32.totalorder %s19, 1
      %s238 = scalar_select %p237, %s19, 1
      %p239 = scmp.lt.s32.totalorder %s236, 2
      %s240 = scalar_select %p239, %s236, 2
      %s241 = smul.addr %s238, 3
      %s242 = sadd.s32 %s240, %s241
      %s243 = smul.addr %s242, 4
      %s244 = scalar_lea.vmem %s1, %s243
      %p245 = pneg %p82
      %p246 = pneg %p79
      %p247 = pneg %p103
      %p248 = pneg %p100
      %p249 = pneg %p124
      %p250 = pneg %p121
      %p251 = pneg %p152
      %p252 = pneg %p149
      %s253 = smul.u32 2, %s20
      %p254 = scmp.lt.s32.totalorder %s19, 1
      %s255 = scalar_select %p254, %s19, 1
      %p256 = scmp.lt.s32.totalorder %s253, 1
      %s257 = scalar_select %p256, %s253, 1
      %s258 = smul.addr %s255, 2
      %s259 = sadd.s32 %s257, %s258
      %s260 = smul.addr %s259, 4
      %s261 = scalar_lea.vmem %s4, %s260
      %s262 = smul.u32 2, %s20
      %s263 = ssub.s32 3, %s262
      %p264 = scmp.lt.s32.totalorder %s263, 2
      %s265 = scalar_select %p264, %s263, 2
      %s266 = smul.u32 4, %s265
      %p267 = scmp.lt.s32.totalorder %s19, 1
      %s268 = scalar_select %p267, %s19, 1
      %p269 = scmp.lt.s32.totalorder %s262, 2
      %s270 = scalar_select %p269, %s262, 2
      %s271 = smul.addr %s268, 3
      %s272 = sadd.s32 %s270, %s271
      %s273 = smul.addr %s272, 4
      %s274 = scalar_lea.vmem %s0, %s273
      %s275 = smul.u32 2, %s20
      %s276 = ssub.s32 3, %s275
      %p277 = scmp.lt.s32.totalorder %s276, 2
      %s278 = scalar_select %p277, %s276, 2
      %s279 = smul.u32 4, %s278
      %s280 = sadd.s32 %s20, 1
      %s281 = smul.u32 %s280, 2
      %p282 = scmp.lt.s32.totalorder %s19, 1
      %s283 = scalar_select %p282, %s19, 1
      %p284 = scmp.lt.s32.totalorder %s281, 2
      %s285 = scalar_select %p284, %s281, 2
      %s286 = smul.addr %s283, 3
      %s287 = sadd.s32 %s285, %s286
      %s288 = smul.addr %s287, 4
      %s289 = scalar_lea.vmem %s1, %s288
      %s290 = sadd.s32 %s20, 1
      %s291 = smul.u32 %s290, 2
      %s292 = smul.u32 2, %s20
      %p293 = scmp.lt.s32.totalorder %s19, 1
      %s294 = scalar_select %p293, %s19, 1
      %p295 = scmp.lt.s32.totalorder %s292, 1
      %s296 = scalar_select %p295, %s292, 1
      %s297 = smul.addr %s294, 2
      %s298 = sadd.s32 %s296, %s297
      %s299 = smul.addr %s298, 4
      %s300 = scalar_lea.vmem %s4, %s299
      %s301 = smul.u32 2, %s20
      %v302 = vld [vmem:[%s274] sm:$0xf]
      %v303 = vld [vmem:[%s274 + $0x4] sm:$0xf]
      %v304 = vld [vmem:[%s289] sm:$0xf]
      %v307 = vunpack.c.l.b16 %v302
      %v308 = vunpack.c.l.b16 %v303
      %v309 = vpack.c.b16 %v308, %v307
      %v311 = vunpack.c.l.bf16 %v309
      %v312 = vunpack.c.h.bf16 %v309
      %v313 = vunpack.c.l.bf16 %v304
      %vm314 = vcmp.ge.f32.partialorder %v311, 0.0
      %vm315 = vcmp.ge.f32.partialorder %v312, 0.0
      %vm316 = vcmp.ge.f32.partialorder %v313, 0.0
      %v317 = vmul.f32 %v311, 0.2
      %v318 = vmul.f32 %v312, 0.2
      %v319 = vmul.f32 %v313, 0.2
      %v320 = vsel %vm314, %v311, %v317
      %v321 = vsel %vm315, %v312, %v318
      %v322 = vsel %vm316, %v313, %v319
      %v323 = vpack.c.bf16 %v320, %v320
      %v324 = vpack.c.bf16 %v321, %v321
      %v325 = vpack.c.bf16 %v322, %v322
      %v328 = vunpack.c.l.b16 %v323
      %v329 = vunpack.c.l.b16 %v324
      %v330 = vpack.c.b16 %v329, %v328
      %v332 = vunpack.c.l.b16 %v325
      %v333 = vpack.c.b16 %v332, %v332
      %vm334 = vsmask.f32 7424
      %v336 = vshrl.u32 %v330, 16
      %v338 = vshll.u32 %v330, 16
      %v340 = vrot.slane %v338, 1
      %v341 = vor.u32 %v336, %v340
      %v343 = vshll.u32 %v333, 16
      %v345 = vrot.slane %v343, 1
      %v346 = vsel %vm334, %v341, %v345
      %347 = vrot.lane.b32.xlu0 %v346, 64
      %v348 = vpop.permute.xlu0 %347
      %vm349 = vcmask 523264
      %v351 = vsel %vm349, %v330, %v348
      %v353 = vld [vmem:[%s2] sm:$0xf]
      %v354 = vld [vmem:[%s2 + $0x4] sm:$0xf]
      %v355 = vld [vmem:[%s2 + $0x8] sm:$0xf]
      %v356 = vld [vmem:[%s2 + $0xc] sm:$0xf]
      %v357 = vld [vmem:[%s2 + $0x10] sm:$0xf]
      %v358 = vld [vmem:[%s2 + $0x14] sm:$0xf]
      %v359 = vld [vmem:[%s2 + $0x18] sm:$0xf]
      %v360 = vld [vmem:[%s2 + $0x1c] sm:$0xf]
      %v361 = vld [vmem:[%s2 + $0x20] sm:$0xf]
      %v362 = vld [vmem:[%s2 + $0x24] sm:$0xf]
      %v363 = vld [vmem:[%s2 + $0x28] sm:$0xf]
      %v364 = vld [vmem:[%s2 + $0x2c] sm:$0xf]
      %v365 = vld [vmem:[%s2 + $0x30] sm:$0xf]
      %v366 = vld [vmem:[%s2 + $0x34] sm:$0xf]
      %v367 = vld [vmem:[%s2 + $0x38] sm:$0xf]
      %v368 = vld [vmem:[%s2 + $0x3c] sm:$0xf]
      %v369 = vld [vmem:[%s3] sm:$0x1]
      %v371 = vperm.slane %v369, 0
      %v389 = vunpack.c.l.b16 %v353
      %v390 = vunpack.c.l.b16 %v354
      %v391 = vunpack.c.l.b16 %v355
      %v392 = vunpack.c.l.b16 %v356
      %v393 = vunpack.c.l.b16 %v357
      %v394 = vunpack.c.l.b16 %v358
      %v395 = vunpack.c.l.b16 %v359
      %v396 = vunpack.c.l.b16 %v360
      %v397 = vunpack.c.l.b16 %v361
      %v398 = vunpack.c.l.b16 %v362
      %v399 = vunpack.c.l.b16 %v363
      %v400 = vunpack.c.l.b16 %v364
      %v401 = vunpack.c.l.b16 %v365
      %v402 = vunpack.c.l.b16 %v366
      %v403 = vunpack.c.l.b16 %v367
      %v404 = vunpack.c.l.b16 %v368
      %v405 = vpack.c.b16 %v390, %v389
      %v406 = vpack.c.b16 %v392, %v391
      %v407 = vpack.c.b16 %v394, %v393
      %v408 = vpack.c.b16 %v396, %v395
      %v409 = vpack.c.b16 %v398, %v397
      %v410 = vpack.c.b16 %v400, %v399
      %v411 = vpack.c.b16 %v402, %v401
      %v412 = vpack.c.b16 %v404, %v403
      %421 = vmatpush.bf16.msra.mxu0 %v412
      %422 = vmatpush.bf16.msra.mxu0 %v411
      %423 = vmatpush.bf16.msra.mxu0 %v410
      %424 = vmatpush.bf16.msra.mxu0 %v409
      %425 = vmatpush.bf16.msra.mxu0 %v408
      %426 = vmatpush.bf16.msra.mxu0 %v407
      %427 = vmatpush.bf16.msra.mxu0 %v406
      %428 = vmatpush.bf16.msra.mxu0 %v405
      %429 = vmatmul.bf16.gmra.mxu0 %v351
      %v430 = vpop.f32.mrf.mxu0
      %v431 = vadd.f32 %v371, %v430
      %v432 = vpop.f32.mrf.mxu0
      %v433 = vadd.f32 %v371, %v432
      %434 = vdwg.mxu0
      %v435 = vpack.c.bf16 %v431, %v431
      %v436 = vpack.c.bf16 %v433, %v433
      %vm437 = vcmask 257024
      %438 = vst.msk [vmem:[%s300] sm:$0xf] %vm437, %v435
      %439 = vst.msk [vmem:[%s300 + $0x4] sm:$0xf] %vm437, %v436
      %s440 = smul.u32 2, %s20
      %p441 = scmp.lt.s32.totalorder %s19, 1
      %s442 = scalar_select %p441, %s19, 1
      %p443 = scmp.lt.s32.totalorder %s440, 1
      %s444 = scalar_select %p443, %s440, 1
      %s445 = smul.addr %s442, 2
      %s446 = sadd.s32 %s444, %s445
      %s447 = smul.addr %s446, 4
      %s448 = scalar_lea.vmem %s4, %s447
      // Predicated region
      $region37: #{forward.30} parent=35 // pred_check
        %p449 = pneg %p149
      $region38: #{forward.30} parent=35 // pred_check_branch
        %451 = sbr.rel (%p449) target = $region40
      $region39: #{forward.30} parent=35 // pred_region
        %s452 = smul.u32 2, %s20
      $region40: #{forward.30} parent=35 // pred_fallthru
        _
    $region36: #{forward.30} parent=5 // pred_fallthru
      _
    %p453 = scmp.le.s32.totalorder 2, %s10
    // Predicated region
    $region41: #{forward.30} parent=5 // pred_check
      %p454 = pneg %p453
    $region42: #{forward.30} parent=5 // pred_check_branch
      %456 = sbr.rel (%p454) target = $region44
    $region43: #{forward.30} parent=5 // pred_region
      %s457 = ssub.s32 %s10, 2
      // Predicated region
      $region45: #{forward.30} parent=43 // pred_check
        %p458 = pneg %p155
      $region46: #{forward.30} parent=43 // pred_check_branch
        %460 = sbr.rel (%p458) target = $region48
      $region47: #{forward.30} parent=43 // pred_region
        %s461 = smul.u32 2, %s22
        %p462 = scmp.lt.s32.totalorder %s21, 1
        %s463 = scalar_select %p462, %s21, 1
        %p464 = scmp.lt.s32.totalorder %s461, 1
        %s465 = scalar_select %p464, %s461, 1
        %s466 = smul.addr %s463, 2
        %s467 = sadd.s32 %s465, %s466
        %s468 = smul.addr %s467, 4
        %s469 = scalar_lea.vmem %s4, %s468
      $region48: #{forward.30} parent=43 // pred_fallthru
        _
    $region44: #{forward.30} parent=5 // pred_fallthru
      _
  $region6: #{forward.30} parent=0 // loop_footer
    %s14 = sadd.s32 1, %s10
  $region7: #{forward.30} parent=0 // loop_footer_branch
    %9 = sbr.rel target = $region3
  $region8: #{forward.30} parent=0 // loop_exit
    _

// kernel: forward.29
$region0: #{forward.29}
  #allocation0 [shape = 'u32[]', space=smem, size = 0x4, offset = 0x4, fixed_abs, tag = 'smem constant byte address 0x4 - core index']
  #allocation1 [shape = 'u32[72,128]{1,0:T(1,128)}', space=vmem, size = 0x9000, scoped, tag = 'internal scratch']
  %s0 = inlined_call_operand.vmem [shape: bf16[2,96,16], index: 0, kind: input, shape index: {}, may-alias: {0,1}]
  %s1 = inlined_call_operand.vmem [shape: bf16[2,96,16], index: 1, kind: input, shape index: {}, may-alias: {0,1}]
  %s2 = inlined_call_operand.vmem [shape: bf16[16,16], index: 2, kind: input, shape index: {}]
  %s3 = inlined_call_operand.vmem [shape: f32[1,16], index: 3, kind: input, shape index: {}]
  %s4 = inlined_call_operand.vmem [shape: bf16[48,16], index: 4, kind: input, shape index: {}]
  %s5 = inlined_call_operand.vmem [shape: f32[1,16], index: 5, kind: input, shape index: {}]
  %s6 = inlined_call_operand.vmem [shape: bf16[16,16], index: 6, kind: input, shape index: {}]
  %s7 = inlined_call_operand.vmem [shape: f32[1,16], index: 7, kind: input, shape index: {}]
  %s8 = inlined_call_operand.vmem [shape: bf16[2,72,16], index: 8, kind: output, shape index: {}]
  %s9 = sld [smem:[#allocation0]]
  $region65: #{forward.29} parent=0
    _
  %s11 = ssub.s32 1, %s9
  %s12 = scalar_select 0, %s11, %s9
  loop: start=0, step=1, limit=4
  $region2: #{forward.29} parent=0 // loop_pre_header
    _
  $region3: #{forward.29} parent=0 // loop_header
    %s14 = sphi 0, %s18
    %p15 = scmp.ge.s32.totalorder %s14, 4
    %s21 = sphi 0, %s33
    %s22 = sphi 0, %s29
    %s23 = sphi 0, %s21
    %s24 = sphi 0, %s22
    %s25 = sphi 0, %s23
    %s26 = sphi 0, %s24
    %s38 = sphi 0, %s40
    %s41 = sphi 0, %s38
    %s42 = sphi 0, %s41
    %s58 = sphi 0, %s42
    %s70 = sphi 0, %s72
    %s73 = sphi 0, %s70
    %s74 = sphi 0, %s73
    %s90 = sphi 0, %s74
    %s94 = sphi 0, %s94
    %s96 = sphi 0, %s94
    %s97 = sphi 0, %s96
    %s111 = sphi 0, %s97
    %s115 = sphi 0, %s115
    %s117 = sphi 0, %s115
    %s118 = sphi 0, %s117
    %s132 = sphi 0, %s118
    %s136 = sphi 0, %s136
    %s138 = sphi 0, %s136
    %s139 = sphi 0, %s138
    %s153 = sphi 0, %s139
    %s157 = sphi 0, %s157
    %s159 = sphi 0, %s157
    %s160 = sphi 0, %s159
    %s174 = sphi 0, %s160
    %s178 = sphi 0, %s178
    %s180 = sphi 0, %s178
    %s181 = sphi 0, %s180
    %s195 = sphi 0, %s181
    %s199 = sphi 0, %s199
    %s201 = sphi 0, %s199
    %s202 = sphi 0, %s201
    %s216 = sphi 0, %s202
    %s224 = sphi 0, %s226
    %s227 = sphi 0, %s224
    %s228 = sphi 0, %s227
    %s244 = sphi 0, %s228
  $region4: #{forward.29} parent=0 // loop_header_branch
    %17 = sbr.rel (%p15) target = $region8
  $region5: #{forward.29} parent=0 // loop_body
    %s19 = ssub.s32 %s14, 1
    %s20 = ssub.s32 %s14, 2
    %s27 = sadd.s32 1, %s22
    %p28 = scmp.ge.s32.totalorder %s27, 1
    %s29 = scalar_select %p28, 0, %s27
    %s30 = sadd.s32 1, %s21
    %s31 = scalar_select %p28, %s30, %s21
    %p32 = scmp.ge.s32.totalorder %s31, 2
    %s33 = scalar_select %p32, 0, %s31
    %s34 = ssub.s32 %s21, %s33
    %s35 = ssub.s32 %s22, %s29
    %s36 = sor.u32 %s34, %s35
    %p37 = scmp.eq.s32.totalorder %s36, 0
    %s39 = sadd.s32 %s38, 1
    %s40 = scalar_select %p37, %s38, %s39
    %p43 = pneg %p37
    %p44 = scmp.eq.s32.totalorder %s14, 1
    %p45 = por %p43, %p44
    %p46 = scmp.ne.s32.totalorder %s38, %s41
    %p47 = scmp.eq.s32.totalorder %s14, 0
    %p48 = por %p46, %p47
    %p49 = scmp.ne.s32.totalorder %s38, %s41
    %p50 = scmp.eq.s32.totalorder %s19, 1
    %p51 = por %p49, %p50
    %p52 = scmp.ne.s32.totalorder %s41, %s42
    %p53 = scmp.eq.s32.totalorder %s19, 0
    %p54 = por %p52, %p53
    %p55 = scmp.ne.s32.totalorder %s41, %s42
    %p56 = scmp.eq.s32.totalorder %s20, 1
    %p57 = por %p55, %p56
    %p59 = scmp.ne.s32.totalorder %s42, %s58
    %p60 = scmp.eq.s32.totalorder %s20, 0
    %p61 = por %p59, %p60
    %s62 = sadd.s32 %s22, 1
    %s63 = smul.u32 %s62, 3
    %s64 = sadd.s32 %s29, 1
    %s65 = smul.u32 %s64, 3
    %s66 = ssub.s32 %s21, %s33
    %s67 = ssub.s32 %s63, %s65
    %s68 = sor.u32 %s66, %s67
    %p69 = scmp.eq.s32.totalorder %s68, 0
    %s71 = sadd.s32 %s70, 1
    %s72 = scalar_select %p69, %s70, %s71
    %p75 = pneg %p69
    %p76 = scmp.eq.s32.totalorder %s14, 1
    %p77 = por %p75, %p76
    %p78 = scmp.ne.s32.totalorder %s70, %s73
    %p79 = scmp.eq.s32.totalorder %s14, 0
    %p80 = por %p78, %p79
    %p81 = scmp.ne.s32.totalorder %s70, %s73
    %p82 = scmp.eq.s32.totalorder %s19, 1
    %p83 = por %p81, %p82
    %p84 = scmp.ne.s32.totalorder %s73, %s74
    %p85 = scmp.eq.s32.totalorder %s19, 0
    %p86 = por %p84, %p85
    %p87 = scmp.ne.s32.totalorder %s73, %s74
    %p88 = scmp.eq.s32.totalorder %s20, 1
    %p89 = por %p87, %p88
    %p91 = scmp.ne.s32.totalorder %s74, %s90
    %p92 = scmp.eq.s32.totalorder %s20, 0
    %p93 = por %p91, %p92
    %s95 = sadd.s32 %s94, 1
    %p98 = scmp.eq.s32.totalorder %s14, 1
    %p99 = scmp.ne.s32.totalorder %s94, %s96
    %p100 = scmp.eq.s32.totalorder %s14, 0
    %p101 = por %p99, %p100
    %p102 = scmp.ne.s32.totalorder %s94, %s96
    %p103 = scmp.eq.s32.totalorder %s19, 1
    %p104 = por %p102, %p103
    %p105 = scmp.ne.s32.totalorder %s96, %s97
    %p106 = scmp.eq.s32.totalorder %s19, 0
    %p107 = por %p105, %p106
    %p108 = scmp.ne.s32.totalorder %s96, %s97
    %p109 = scmp.eq.s32.totalorder %s20, 1
    %p110 = por %p108, %p109
    %p112 = scmp.ne.s32.totalorder %s97, %s111
    %p113 = scmp.eq.s32.totalorder %s20, 0
    %p114 = por %p112, %p113
    %s116 = sadd.s32 %s115, 1
    %p119 = scmp.eq.s32.totalorder %s14, 1
    %p120 = scmp.ne.s32.totalorder %s115, %s117
    %p121 = scmp.eq.s32.totalorder %s14, 0
    %p122 = por %p120, %p121
    %p123 = scmp.ne.s32.totalorder %s115, %s117
    %p124 = scmp.eq.s32.totalorder %s19, 1
    %p125 = por %p123, %p124
    %p126 = scmp.ne.s32.totalorder %s117, %s118
    %p127 = scmp.eq.s32.totalorder %s19, 0
    %p128 = por %p126, %p127
    %p129 = scmp.ne.s32.totalorder %s117, %s118
    %p130 = scmp.eq.s32.totalorder %s20, 1
    %p131 = por %p129, %p130
    %p133 = scmp.ne.s32.totalorder %s118, %s132
    %p134 = scmp.eq.s32.totalorder %s20, 0
    %p135 = por %p133, %p134
    %s137 = sadd.s32 %s136, 1
    %p140 = scmp.eq.s32.totalorder %s14, 1
    %p141 = scmp.ne.s32.totalorder %s136, %s138
    %p142 = scmp.eq.s32.totalorder %s14, 0
    %p143 = por %p141, %p142
    %p144 = scmp.ne.s32.totalorder %s136, %s138
    %p145 = scmp.eq.s32.totalorder %s19, 1
    %p146 = por %p144, %p145
    %p147 = scmp.ne.s32.totalorder %s138, %s139
    %p148 = scmp.eq.s32.totalorder %s19, 0
    %p149 = por %p147, %p148
    %p150 = scmp.ne.s32.totalorder %s138, %s139
    %p151 = scmp.eq.s32.totalorder %s20, 1
    %p152 = por %p150, %p151
    %p154 = scmp.ne.s32.totalorder %s139, %s153
    %p155 = scmp.eq.s32.totalorder %s20, 0
    %p156 = por %p154, %p155
    %s158 = sadd.s32 %s157, 1
    %p161 = scmp.eq.s32.totalorder %s14, 1
    %p162 = scmp.ne.s32.totalorder %s157, %s159
    %p163 = scmp.eq.s32.totalorder %s14, 0
    %p164 = por %p162, %p163
    %p165 = scmp.ne.s32.totalorder %s157, %s159
    %p166 = scmp.eq.s32.totalorder %s19, 1
    %p167 = por %p165, %p166
    %p168 = scmp.ne.s32.totalorder %s159, %s160
    %p169 = scmp.eq.s32.totalorder %s19, 0
    %p170 = por %p168, %p169
    %p171 = scmp.ne.s32.totalorder %s159, %s160
    %p172 = scmp.eq.s32.totalorder %s20, 1
    %p173 = por %p171, %p172
    %p175 = scmp.ne.s32.totalorder %s160, %s174
    %p176 = scmp.eq.s32.totalorder %s20, 0
    %p177 = por %p175, %p176
    %s179 = sadd.s32 %s178, 1
    %p182 = scmp.eq.s32.totalorder %s14, 1
    %p183 = scmp.ne.s32.totalorder %s178, %s180
    %p184 = scmp.eq.s32.totalorder %s14, 0
    %p185 = por %p183, %p184
    %p186 = scmp.ne.s32.totalorder %s178, %s180
    %p187 = scmp.eq.s32.totalorder %s19, 1
    %p188 = por %p186, %p187
    %p189 = scmp.ne.s32.totalorder %s180, %s181
    %p190 = scmp.eq.s32.totalorder %s19, 0
    %p191 = por %p189, %p190
    %p192 = scmp.ne.s32.totalorder %s180, %s181
    %p193 = scmp.eq.s32.totalorder %s20, 1
    %p194 = por %p192, %p193
    %p196 = scmp.ne.s32.totalorder %s181, %s195
    %p197 = scmp.eq.s32.totalorder %s20, 0
    %p198 = por %p196, %p197
    %s200 = sadd.s32 %s199, 1
    %p203 = scmp.eq.s32.totalorder %s14, 1
    %p204 = scmp.ne.s32.totalorder %s199, %s201
    %p205 = scmp.eq.s32.totalorder %s14, 0
    %p206 = por %p204, %p205
    %p207 = scmp.ne.s32.totalorder %s199, %s201
    %p208 = scmp.eq.s32.totalorder %s19, 1
    %p209 = por %p207, %p208
    %p210 = scmp.ne.s32.totalorder %s201, %s202
    %p211 = scmp.eq.s32.totalorder %s19, 0
    %p212 = por %p210, %p211
    %p213 = scmp.ne.s32.totalorder %s201, %s202
    %p214 = scmp.eq.s32.totalorder %s20, 1
    %p215 = por %p213, %p214
    %p217 = scmp.ne.s32.totalorder %s202, %s216
    %p218 = scmp.eq.s32.totalorder %s20, 0
    %p219 = por %p217, %p218
    %s220 = ssub.s32 %s21, %s33
    %s221 = ssub.s32 %s22, %s29
    %s222 = sor.u32 %s220, %s221
    %p223 = scmp.eq.s32.totalorder %s222, 0
    %s225 = sadd.s32 %s224, 1
    %s226 = scalar_select %p223, %s224, %s225
    %p229 = pneg %p223
    %p230 = scmp.eq.s32.totalorder %s14, 1
    %p231 = por %p229, %p230
    %p232 = scmp.ne.s32.totalorder %s224, %s227
    %p233 = scmp.eq.s32.totalorder %s14, 0
    %p234 = por %p232, %p233
    %p235 = scmp.ne.s32.totalorder %s224, %s227
    %p236 = scmp.eq.s32.totalorder %s19, 1
    %p237 = por %p235, %p236
    %p238 = scmp.ne.s32.totalorder %s227, %s228
    %p239 = scmp.eq.s32.totalorder %s19, 0
    %p240 = por %p238, %p239
    %p241 = scmp.ne.s32.totalorder %s227, %s228
    %p242 = scmp.eq.s32.totalorder %s20, 1
    %p243 = por %p241, %p242
    %p245 = scmp.ne.s32.totalorder %s228, %s244
    %p246 = scmp.eq.s32.totalorder %s20, 0
    %p247 = por %p245, %p246
    %p248 = scmp.le.s32.totalorder 1, %s14
    %p249 = scmp.lt.s32.totalorder %s14, 3
    %p250 = pnand %p248, %p249
    %p251 = pneg %p250
    // Predicated region
    $region9: #{forward.29} parent=5 // pred_check
      _
    $region10: #{forward.29} parent=5 // pred_check_branch
      %253 = sbr.rel (%p250) target = $region12
    $region11: #{forward.29} parent=5 // pred_region
      %s254 = ssub.s32 %s14, 1
      // Predicated region
      $region13: #{forward.29} parent=11 // pred_check
        %p255 = pneg %p107
      $region14: #{forward.29} parent=11 // pred_check_branch
        %257 = sbr.rel (%p255) target = $region16
      $region15: #{forward.29} parent=11 // pred_region
        _
      $region16: #{forward.29} parent=11 // pred_fallthru
        _
      // Predicated region
      $region17: #{forward.29} parent=11 // pred_check
        %p258 = pneg %p128
      $region18: #{forward.29} parent=11 // pred_check_branch
        %260 = sbr.rel (%p258) target = $region20
      $region19: #{forward.29} parent=11 // pred_region
        _
      $region20: #{forward.29} parent=11 // pred_fallthru
        _
      // Predicated region
      $region21: #{forward.29} parent=11 // pred_check
        %p261 = pneg %p149
      $region22: #{forward.29} parent=11 // pred_check_branch
        %263 = sbr.rel (%p261) target = $region24
      $region23: #{forward.29} parent=11 // pred_region
        _
      $region24: #{forward.29} parent=11 // pred_fallthru
        _
      // Predicated region
      $region25: #{forward.29} parent=11 // pred_check
        %p264 = pneg %p170
      $region26: #{forward.29} parent=11 // pred_check_branch
        %266 = sbr.rel (%p264) target = $region28
      $region27: #{forward.29} parent=11 // pred_region
        _
      $region28: #{forward.29} parent=11 // pred_fallthru
        _
      // Predicated region
      $region29: #{forward.29} parent=11 // pred_check
        %p267 = pneg %p191
      $region30: #{forward.29} parent=11 // pred_check_branch
        %269 = sbr.rel (%p267) target = $region32
      $region31: #{forward.29} parent=11 // pred_region
        _
      $region32: #{forward.29} parent=11 // pred_fallthru
        _
      // Predicated region
      $region33: #{forward.29} parent=11 // pred_check
        %p270 = pneg %p212
      $region34: #{forward.29} parent=11 // pred_check_branch
        %272 = sbr.rel (%p270) target = $region36
      $region35: #{forward.29} parent=11 // pred_region
        _
      $region36: #{forward.29} parent=11 // pred_fallthru
        _
    $region12: #{forward.29} parent=5 // pred_fallthru
      _
    %p273 = scmp.lt.s32.totalorder %s14, 2
    // Predicated region
    $region37: #{forward.29} parent=5 // pred_check
      %p274 = pneg %p273
    $region38: #{forward.29} parent=5 // pred_check_branch
      %276 = sbr.rel (%p274) target = $region40
    $region39: #{forward.29} parent=5 // pred_region
      // Predicated region
      $region41: #{forward.29} parent=39 // pred_check
        %p277 = pneg %p48
      $region42: #{forward.29} parent=39 // pred_check_branch
        %279 = sbr.rel (%p277) target = $region44
      $region43: #{forward.29} parent=39 // pred_region
        %s280 = smul.u32 9, %s22
        %s281 = ssub.s32 12, %s280
        %p282 = scmp.lt.s32.totalorder %s281, 9
        %s283 = scalar_select %p282, %s281, 9
        %s284 = smul.u32 4, %s283
        %p285 = scmp.lt.s32.totalorder %s21, 1
        %s286 = scalar_select %p285, %s21, 1
        %p287 = scmp.lt.s32.totalorder %s280, 11
        %s288 = scalar_select %p287, %s280, 11
        %s289 = smul.addr %s286, 12
        %s290 = sadd.s32 %s288, %s289
        %s291 = smul.addr %s290, 4
        %s292 = scalar_lea.vmem %s0, %s291
        %s293 = smul.u32 9, %s22
        %s294 = ssub.s32 12, %s293
        %p295 = scmp.lt.s32.totalorder %s294, 9
        %s296 = scalar_select %p295, %s294, 9
        %s297 = smul.u32 4, %s296
      $region44: #{forward.29} parent=39 // pred_fallthru
        _
      // Predicated region
      $region45: #{forward.29} parent=39 // pred_check
        %p298 = pneg %p80
      $region46: #{forward.29} parent=39 // pred_check_branch
        %300 = sbr.rel (%p298) target = $region48
      $region47: #{forward.29} parent=39 // pred_region
        %s301 = sadd.s32 %s22, 1
        %s302 = smul.u32 %s301, 3
        %s303 = smul.u32 3, %s302
        %p304 = scmp.lt.s32.totalorder %s21, 1
        %s305 = scalar_select %p304, %s21, 1
        %p306 = scmp.lt.s32.totalorder %s303, 11
        %s307 = scalar_select %p306, %s303, 11
        %s308 = smul.addr %s305, 12
        %s309 = sadd.s32 %s307, %s308
        %s310 = smul.addr %s309, 4
        %s311 = scalar_lea.vmem %s1, %s310
        %s312 = sadd.s32 %s22, 1
        %s313 = smul.u32 %s312, 3
        %s314 = smul.u32 3, %s313
      $region48: #{forward.29} parent=39 // pred_fallthru
        _
    $region40: #{forward.29} parent=5 // pred_fallthru
      _
    %p315 = scmp.le.s32.totalorder 1, %s14
    %p316 = scmp.lt.s32.totalorder %s14, 3
    %p317 = pnand %p315, %p316
    %p318 = pneg %p317
    // Predicated region
    $region49: #{forward.29} parent=5 // pred_check
      _
    $region50: #{forward.29} parent=5 // pred_check_branch
      %320 = sbr.rel (%p317) target = $region52
    $region51: #{forward.29} parent=5 // pred_region
      %s321 = ssub.s32 %s14, 1
      %s322 = smul.u32 9, %s24
      %s323 = ssub.s32 12, %s322
      %p324 = scmp.lt.s32.totalorder %s323, 9
      %s325 = scalar_select %p324, %s323, 9
      %s326 = smul.u32 4, %s325
      %p327 = scmp.lt.s32.totalorder %s23, 1
      %s328 = scalar_select %p327, %s23, 1
      %p329 = scmp.lt.s32.totalorder %s322, 11
      %s330 = scalar_select %p329, %s322, 11
      %s331 = smul.addr %s328, 12
      %s332 = sadd.s32 %s330, %s331
      %s333 = smul.addr %s332, 4
      %s334 = scalar_lea.vmem %s0, %s333
      %p335 = pneg %p54
      %p336 = pneg %p51
      %s337 = sadd.s32 %s24, 1
      %s338 = smul.u32 %s337, 3
      %s339 = smul.u32 3, %s338
      %p340 = scmp.lt.s32.totalorder %s23, 1
      %s341 = scalar_select %p340, %s23, 1
      %p342 = scmp.lt.s32.totalorder %s339, 11
      %s343 = scalar_select %p342, %s339, 11
      %s344 = smul.addr %s341, 12
      %s345 = sadd.s32 %s343, %s344
      %s346 = smul.addr %s345, 4
      %s347 = scalar_lea.vmem %s1, %s346
      %p348 = pneg %p86
      %p349 = pneg %p83
      %p350 = pneg %p107
      %p351 = pneg %p104
      %p352 = pneg %p128
      %p353 = pneg %p125
      %p354 = pneg %p149
      %p355 = pneg %p146
      %p356 = pneg %p170
      %p357 = pneg %p167
      %p358 = pneg %p191
      %p359 = pneg %p188
      %p360 = pneg %p212
      %p361 = pneg %p209
      %p362 = pneg %p240
      %p363 = pneg %p237
      %s364 = smul.u32 9, %s24
      %p365 = scmp.lt.s32.totalorder %s23, 1
      %s366 = scalar_select %p365, %s23, 1
      %p367 = scmp.lt.s32.totalorder %s364, 8
      %s368 = scalar_select %p367, %s364, 8
      %s369 = smul.addr %s366, 9
      %s370 = sadd.s32 %s368, %s369
      %s371 = smul.addr %s370, 4
      %s372 = scalar_lea.vmem %s8, %s371
      %s373 = smul.u32 9, %s24
      %s374 = ssub.s32 12, %s373
      %p375 = scmp.lt.s32.totalorder %s374, 9
      %s376 = scalar_select %p375, %s374, 9
      %s377 = smul.u32 4, %s376
      %p378 = scmp.lt.s32.totalorder %s23, 1
      %s379 = scalar_select %p378, %s23, 1
      %p380 = scmp.lt.s32.totalorder %s373, 11
      %s381 = scalar_select %p380, %s373, 11
      %s382 = smul.addr %s379, 12
      %s383 = sadd.s32 %s381, %s382
      %s384 = smul.addr %s383, 4
      %s385 = scalar_lea.vmem %s0, %s384
      %s386 = smul.u32 9, %s24
      %s387 = ssub.s32 12, %s386
      %p388 = scmp.lt.s32.totalorder %s387, 9
      %s389 = scalar_select %p388, %s387, 9
      %s390 = smul.u32 4, %s389
      %s391 = sadd.s32 %s24, 1
      %s392 = smul.u32 %s391, 3
      %s393 = smul.u32 3, %s392
      %p394 = scmp.lt.s32.totalorder %s23, 1
      %s395 = scalar_select %p394, %s23, 1
      %p396 = scmp.lt.s32.totalorder %s393, 11
      %s397 = scalar_select %p396, %s393, 11
      %s398 = smul.addr %s395, 12
      %s399 = sadd.s32 %s397, %s398
      %s400 = smul.addr %s399, 4
      %s401 = scalar_lea.vmem %s1, %s400
      %s402 = sadd.s32 %s24, 1
      %s403 = smul.u32 %s402, 3
      %s404 = smul.u32 3, %s403
      %s405 = smul.u32 9, %s24
      %p406 = scmp.lt.s32.totalorder %s23, 1
      %s407 = scalar_select %p406, %s23, 1
      %p408 = scmp.lt.s32.totalorder %s405, 8
      %s409 = scalar_select %p408, %s405, 8
      %s410 = smul.addr %s407, 9
      %s411 = sadd.s32 %s409, %s410
      %s412 = smul.addr %s411, 4
      %s413 = scalar_lea.vmem %s8, %s412
      %s414 = smul.u32 9, %s24
      %v416 = vld [vmem:[%s385] sm:$0xf]
      %v417 = vld [vmem:[%s385 + $0x4] sm:$0xf]
      %v418 = vld [vmem:[%s385 + $0x8] sm:$0xf]
      %v419 = vld [vmem:[%s385 + $0xc] sm:$0xf]
      %v420 = vld [vmem:[%s385 + $0x10] sm:$0xf]
      %v421 = vld [vmem:[%s385 + $0x14] sm:$0xf]
      %v422 = vld [vmem:[%s385 + $0x18] sm:$0xf]
      %v423 = vld [vmem:[%s385 + $0x1c] sm:$0xf]
      %v424 = vld [vmem:[%s385 + $0x20] sm:$0xf]
      %v425 = vld [vmem:[%s401] sm:$0xf]
      %v426 = vld [vmem:[%s401 + $0x4] sm:$0xf]
      %v427 = vld [vmem:[%s401 + $0x8] sm:$0xf]
      %v437 = vunpack.c.l.b16 %v416
      %v438 = vunpack.c.l.b16 %v417
      %v439 = vunpack.c.l.b16 %v418
      %v440 = vunpack.c.l.b16 %v419
      %v441 = vunpack.c.l.b16 %v420
      %v442 = vunpack.c.l.b16 %v421
      %v443 = vunpack.c.l.b16 %v422
      %v444 = vunpack.c.l.b16 %v423
      %v445 = vunpack.c.l.b16 %v424
      %v446 = vpack.c.b16 %v438, %v437
      %v447 = vpack.c.b16 %v440, %v439
      %v448 = vpack.c.b16 %v442, %v441
      %v449 = vpack.c.b16 %v444, %v443
      %v450 = vpack.c.b16 %v445, %v445
      %v458 = vunpack.c.l.b16 %v425
      %v459 = vunpack.c.l.b16 %v426
      %v460 = vunpack.c.l.b16 %v427
      %v461 = vpack.c.b16 %v458, %v458
      %v462 = vpack.c.b16 %v460, %v459
      %vm464 = vcmask 1043456
      %v467 = vsel %vm464, %v450, %v461
      %v469 = vld [vmem:[%s2] sm:$0xf]
      %v470 = vld [vmem:[%s2 + $0x4] sm:$0xf]
      %v471 = vld [vmem:[%s3] sm:$0x1]
      %v473 = vperm.slane %v471, 0
      %vm475 = vsmask.f32 3328
      %v477 = vshrl.u32 %v446, 16
      %v479 = vrot.slane %v477, 4
      %v480 = vshll.u32 %v446, 16
      %v482 = vrot.slane %v480, 5
      %v483 = vor.u32 %v479, %v482
      %v485 = vshrl.u32 %v447, 16
      %v487 = vrot.slane %v485, 4
      %v488 = vshll.u32 %v447, 16
      %v490 = vrot.slane %v488, 5
      %v491 = vor.u32 %v487, %v490
      %v492 = vsel %vm475, %v483, %v491
      %v494 = vshrl.u32 %v448, 16
      %v496 = vrot.slane %v494, 4
      %v497 = vshll.u32 %v448, 16
      %v499 = vrot.slane %v497, 5
      %v500 = vor.u32 %v496, %v499
      %v501 = vsel %vm475, %v491, %v500
      %v503 = vshrl.u32 %v449, 16
      %v505 = vrot.slane %v503, 4
      %v506 = vshll.u32 %v449, 16
      %v508 = vrot.slane %v506, 5
      %v509 = vor.u32 %v505, %v508
      %v510 = vsel %vm475, %v500, %v509
      %v511 = vshrl.u32 %v467, 16
      %v513 = vrot.slane %v511, 4
      %v514 = vshll.u32 %v467, 16
      %v516 = vrot.slane %v514, 5
      %v517 = vor.u32 %v513, %v516
      %v518 = vsel %vm475, %v509, %v517
      %v520 = vshll.u32 %v462, 16
      %v522 = vrot.slane %v520, 5
      %v523 = vsel %vm475, %v517, %v522
      %v526 = vunpack.c.l.b16 %v469
      %v527 = vunpack.c.l.b16 %v470
      %v528 = vpack.c.b16 %v527, %v526
      %vm530 = vcmask 130048
      %v532 = vsel %vm530, %v492, 0
      %v535 = vsel %vm530, %v501, 0
      %v538 = vsel %vm530, %v510, 0
      %v541 = vsel %vm530, %v518, 0
      %v544 = vsel %vm530, %v523, 0
      %546 = vmatpush.bf16.msra.mxu0 0
      %547 = vmatpush.bf16.msra.mxu0 0
      %548 = vmatpush.bf16.msra.mxu0 0
      %549 = vmatpush.bf16.msra.mxu0 0
      %550 = vmatpush.bf16.msra.mxu0 0
      %551 = vmatpush.bf16.msra.mxu0 0
      %552 = vmatpush.bf16.msra.mxu0 0
      %553 = vmatpush.bf16.msra.mxu0 %v528
      %554 = vmatmul.bf16.gmra.mxu0 %v532
      %v555 = vpop.f32.mrf.mxu0
      %v556 = vadd.f32 %v473, %v555
      %v557 = vpop.f32.mrf.mxu0
      %v558 = vadd.f32 %v473, %v557
      %559 = vmatmul.bf16.gmra.mxu0 %v535
      %v560 = vpop.f32.mrf.mxu0
      %v561 = vadd.f32 %v473, %v560
      %v562 = vpop.f32.mrf.mxu0
      %v563 = vadd.f32 %v473, %v562
      %564 = vmatmul.bf16.gmra.mxu0 %v538
      %v565 = vpop.f32.mrf.mxu0
      %v566 = vadd.f32 %v473, %v565
      %v567 = vpop.f32.mrf.mxu0
      %v568 = vadd.f32 %v473, %v567
      %569 = vmatmul.bf16.gmra.mxu0 %v541
      %v570 = vpop.f32.mrf.mxu0
      %v571 = vadd.f32 %v473, %v570
      %v572 = vpop.f32.mrf.mxu0
      %v573 = vadd.f32 %v473, %v572
      %574 = vmatmul.bf16.gmra.mxu0 %v544
      %v575 = vpop.f32.mrf.mxu0
      %v576 = vadd.f32 %v473, %v575
      %v577 = vpop.f32.mrf.mxu0
      %578 = vdwg.mxu0
      %v579 = vunpack.c.l.bf16 %v446
      %v580 = vunpack.c.h.bf16 %v446
      %v581 = vunpack.c.l.bf16 %v447
      %v582 = vunpack.c.h.bf16 %v447
      %v583 = vunpack.c.l.bf16 %v448
      %v584 = vunpack.c.h.bf16 %v448
      %v585 = vunpack.c.l.bf16 %v449
      %v586 = vunpack.c.h.bf16 %v449
      %v587 = vunpack.c.l.bf16 %v467
      %v588 = vunpack.c.h.bf16 %v467
      %v589 = vunpack.c.l.bf16 %v462
      %v590 = vunpack.c.h.bf16 %v462
      %vm591 = vcmp.ge.f32.partialorder %v579, 0.0
      %vm592 = vcmp.ge.f32.partialorder %v580, 0.0
      %vm593 = vcmp.ge.f32.partialorder %v581, 0.0
      %vm594 = vcmp.ge.f32.partialorder %v582, 0.0
      %vm595 = vcmp.ge.f32.partialorder %v583, 0.0
      %vm596 = vcmp.ge.f32.partialorder %v584, 0.0
      %vm597 = vcmp.ge.f32.partialorder %v585, 0.0
      %vm598 = vcmp.ge.f32.partialorder %v586, 0.0
      %vm599 = vcmp.ge.f32.partialorder %v587, 0.0
      %vm600 = vcmp.ge.f32.partialorder %v588, 0.0
      %vm601 = vcmp.ge.f32.partialorder %v589, 0.0
      %vm602 = vcmp.ge.f32.partialorder %v590, 0.0
      %v603 = vmul.f32 %v579, 0.2
      %v604 = vmul.f32 %v580, 0.2
      %v605 = vmul.f32 %v581, 0.2
      %v606 = vmul.f32 %v582, 0.2
      %v607 = vmul.f32 %v583, 0.2
      %v608 = vmul.f32 %v584, 0.2
      %v609 = vmul.f32 %v585, 0.2
      %v610 = vmul.f32 %v586, 0.2
      %v611 = vmul.f32 %v587, 0.2
      %v612 = vmul.f32 %v588, 0.2
      %v613 = vmul.f32 %v589, 0.2
      %v614 = vmul.f32 %v590, 0.2
      %v615 = vsel %vm591, %v579, %v603
      %v616 = vsel %vm592, %v580, %v604
      %v617 = vsel %vm593, %v581, %v605
      %v618 = vsel %vm594, %v582, %v606
      %v619 = vsel %vm595, %v583, %v607
      %v620 = vsel %vm596, %v584, %v608
      %v621 = vsel %vm597, %v585, %v609
      %v622 = vsel %vm598, %v586, %v610
      %v623 = vsel %vm599, %v587, %v611
      %v624 = vsel %vm600, %v588, %v612
      %v625 = vsel %vm601, %v589, %v613
      %v626 = vsel %vm602, %v590, %v614
      %v627 = vpack.c.bf16 %v615, %v615
      %v628 = vpack.c.bf16 %v616, %v616
      %v629 = vpack.c.bf16 %v617, %v617
      %v630 = vpack.c.bf16 %v618, %v618
      %v631 = vpack.c.bf16 %v619, %v619
      %v632 = vpack.c.bf16 %v620, %v620
      %v633 = vpack.c.bf16 %v621, %v621
      %v634 = vpack.c.bf16 %v622, %v622
      %v635 = vpack.c.bf16 %v623, %v623
      %v636 = vpack.c.bf16 %v624, %v624
      %v637 = vpack.c.bf16 %v625, %v625
      %v638 = vpack.c.bf16 %v626, %v626
      %v648 = vunpack.c.l.b16 %v627
      %v649 = vunpack.c.l.b16 %v628
      %v650 = vunpack.c.l.b16 %v629
      %v651 = vunpack.c.l.b16 %v630
      %v652 = vunpack.c.l.b16 %v631
      %v653 = vunpack.c.l.b16 %v632
      %v654 = vunpack.c.l.b16 %v633
      %v655 = vunpack.c.l.b16 %v634
      %v656 = vunpack.c.l.b16 %v635
      %v657 = vpack.c.b16 %v649, %v648
      %v658 = vpack.c.b16 %v651, %v650
      %v659 = vpack.c.b16 %v653, %v652
      %v660 = vpack.c.b16 %v655, %v654
      %v661 = vpack.c.b16 %v656, %v656
      %v664 = vunpack.c.l.b16 %v636
      %v665 = vunpack.c.l.b16 %v637
      %v666 = vpack.c.b16 %v650, %v649
      %v667 = vpack.c.b16 %v652, %v651
      %v668 = vpack.c.b16 %v654, %v653
      %v669 = vpack.c.b16 %v656, %v655
      %v670 = vpack.c.b16 %v665, %v664
      %vm671 = vsmask.f32 7424
      %v673 = vshrl.u32 %v666, 16
      %v675 = vshll.u32 %v666, 16
      %v677 = vrot.slane %v675, 1
      %v678 = vor.u32 %v673, %v677
      %v680 = vshll.u32 %v667, 16
      %v682 = vrot.slane %v680, 1
      %v683 = vsel %vm671, %v678, %v682
      %v684 = vshrl.u32 %v667, 16
      %v686 = vor.u32 %v684, %v682
      %v688 = vshll.u32 %v668, 16
      %v690 = vrot.slane %v688, 1
      %v691 = vsel %vm671, %v686, %v690
      %v692 = vshrl.u32 %v668, 16
      %v694 = vor.u32 %v692, %v690
      %v696 = vshll.u32 %v669, 16
      %v698 = vrot.slane %v696, 1
      %v699 = vsel %vm671, %v694, %v698
      %v700 = vshrl.u32 %v669, 16
      %v702 = vor.u32 %v700, %v698
      %v704 = vshll.u32 %v670, 16
      %v706 = vrot.slane %v704, 1
      %v707 = vsel %vm671, %v702, %v706
      %v708 = vshrl.u32 %v670, 16
      %v710 = vor.u32 %v708, %v706
      %711 = vrot.lane.b32.xlu0 %v683, 16
      %v712 = vpop.permute.xlu0 %711
      %713 = vrot.lane.b32.xlu0 %v691, 16
      %v714 = vpop.permute.xlu0 %713
      %715 = vrot.lane.b32.xlu0 %v699, 16
      %v716 = vpop.permute.xlu0 %715
      %717 = vrot.lane.b32.xlu0 %v707, 16
      %v718 = vpop.permute.xlu0 %717
      %719 = vrot.lane.b32.xlu0 %v710, 16
      %v720 = vpop.permute.xlu0 %719
      %v722 = vunpack.c.l.b16 %v638
      %v723 = vpack.c.b16 %v664, %v656
      %v724 = vpack.c.b16 %v722, %v665
      %vm725 = vcmask 1046528
      %v726 = vrot.slane %v658, 1
      %v727 = vrot.slane %v659, 1
      %v728 = vsel %vm725, %v726, %v727
      %v729 = vrot.slane %v660, 1
      %v730 = vsel %vm725, %v727, %v729
      %v731 = vrot.slane %v723, 1
      %v732 = vsel %vm725, %v729, %v731
      %v733 = vrot.slane %v724, 1
      %v734 = vsel %vm725, %v731, %v733
      %735 = vrot.lane.b32.xlu0 %v728, 32
      %v736 = vpop.permute.xlu0 %735
      %737 = vrot.lane.b32.xlu0 %v730, 32
      %v738 = vpop.permute.xlu0 %737
      %739 = vrot.lane.b32.xlu0 %v732, 32
      %v740 = vpop.permute.xlu0 %739
      %741 = vrot.lane.b32.xlu0 %v734, 32
      %v742 = vpop.permute.xlu0 %741
      %743 = vrot.lane.b32.xlu0 %v733, 32
      %v744 = vpop.permute.xlu0 %743
      %v747 = vsel %vm530, %v657, %v712
      %v750 = vsel %vm530, %v658, %v714
      %v753 = vsel %vm530, %v659, %v716
      %v756 = vsel %vm530, %v660, %v718
      %v759 = vsel %vm530, %v661, %v720
      %vm760 = vcmask 261120
      %v762 = vsel %vm760, %v747, %v736
      %v764 = vsel %vm760, %v750, %v738
      %v766 = vsel %vm760, %v753, %v740
      %v768 = vsel %vm760, %v756, %v742
      %v770 = vsel %vm760, %v759, %v744
      %v771 = vld [vmem:[%s4] sm:$0xf]
      %v772 = vld [vmem:[%s4 + $0x4] sm:$0xf]
      %v773 = vld [vmem:[%s4 + $0x8] sm:$0xf]
      %v774 = vld [vmem:[%s4 + $0xc] sm:$0xf]
      %v775 = vld [vmem:[%s4 + $0x10] sm:$0xf]
      %v776 = vld [vmem:[%s4 + $0x14] sm:$0xf]
      %v777 = vld [vmem:[%s5] sm:$0x1]
      %v779 = vperm.slane %v777, 0
      %v787 = vunpack.c.l.b16 %v771
      %v788 = vunpack.c.l.b16 %v772
      %v789 = vunpack.c.l.b16 %v773
      %v790 = vunpack.c.l.b16 %v774
      %v791 = vunpack.c.l.b16 %v775
      %v792 = vunpack.c.l.b16 %v776
      %v793 = vpack.c.b16 %v788, %v787
      %v794 = vpack.c.b16 %v790, %v789
      %v795 = vpack.c.b16 %v792, %v791
      %vm799 = vcmask 392192
      %v800 = vsel %vm799, %v762, 0
      %v802 = vsel %vm799, %v764, 0
      %v804 = vsel %vm799, %v766, 0
      %v806 = vsel %vm799, %v768, 0
      %v808 = vsel %vm799, %v770, 0
      %810 = vmatpush.bf16.msra.mxu0 0
      %811 = vmatpush.bf16.msra.mxu0 0
      %812 = vmatpush.bf16.msra.mxu0 0
      %813 = vmatpush.bf16.msra.mxu0 0
      %814 = vmatpush.bf16.msra.mxu0 0
      %815 = vmatpush.bf16.msra.mxu0 %v795
      %816 = vmatpush.bf16.msra.mxu0 %v794
      %817 = vmatpush.bf16.msra.mxu0 %v793
      %818 = vmatmul.bf16.gmra.mxu0 %v800
      %v819 = vpop.f32.mrf.mxu0
      %v820 = vadd.f32 %v779, %v819
      %v821 = vpop.f32.mrf.mxu0
      %v822 = vadd.f32 %v779, %v821
      %823 = vmatmul.bf16.gmra.mxu0 %v802
      %v824 = vpop.f32.mrf.mxu0
      %v825 = vadd.f32 %v779, %v824
      %v826 = vpop.f32.mrf.mxu0
      %v827 = vadd.f32 %v779, %v826
      %828 = vmatmul.bf16.gmra.mxu0 %v804
      %v829 = vpop.f32.mrf.mxu0
      %v830 = vadd.f32 %v779, %v829
      %v831 = vpop.f32.mrf.mxu0
      %v832 = vadd.f32 %v779, %v831
      %833 = vmatmul.bf16.gmra.mxu0 %v806
      %v834 = vpop.f32.mrf.mxu0
      %v835 = vadd.f32 %v779, %v834
      %v836 = vpop.f32.mrf.mxu0
      %v837 = vadd.f32 %v779, %v836
      %838 = vmatmul.bf16.gmra.mxu0 %v808
      %v839 = vpop.f32.mrf.mxu0
      %v840 = vadd.f32 %v779, %v839
      %v841 = vpop.f32.mrf.mxu0
      %842 = vdwg.mxu0
      %vm843 = vcmp.ge.f32.partialorder %v820, 0.0
      %vm844 = vcmp.ge.f32.partialorder %v822, 0.0
      %vm845 = vcmp.ge.f32.partialorder %v825, 0.0
      %vm846 = vcmp.ge.f32.partialorder %v827, 0.0
      %vm847 = vcmp.ge.f32.partialorder %v830, 0.0
      %vm848 = vcmp.ge.f32.partialorder %v832, 0.0
      %vm849 = vcmp.ge.f32.partialorder %v835, 0.0
      %vm850 = vcmp.ge.f32.partialorder %v837, 0.0
      %vm851 = vcmp.ge.f32.partialorder %v840, 0.0
      %v852 = vmul.f32 %v820, 0.2
      %v853 = vmul.f32 %v822, 0.2
      %v854 = vmul.f32 %v825, 0.2
      %v855 = vmul.f32 %v827, 0.2
      %v856 = vmul.f32 %v830, 0.2
      %v857 = vmul.f32 %v832, 0.2
      %v858 = vmul.f32 %v835, 0.2
      %v859 = vmul.f32 %v837, 0.2
      %v860 = vmul.f32 %v840, 0.2
      %v861 = vsel %vm843, %v820, %v852
      %v862 = vsel %vm844, %v822, %v853
      %v863 = vsel %vm845, %v825, %v854
      %v864 = vsel %vm846, %v827, %v855
      %v865 = vsel %vm847, %v830, %v856
      %v866 = vsel %vm848, %v832, %v857
      %v867 = vsel %vm849, %v835, %v858
      %v868 = vsel %vm850, %v837, %v859
      %v869 = vsel %vm851, %v840, %v860
      %v870 = vpack.c.bf16 %v862, %v861
      %v871 = vpack.c.bf16 %v864, %v863
      %v872 = vpack.c.bf16 %v866, %v865
      %v873 = vpack.c.bf16 %v868, %v867
      %v874 = vpack.c.bf16 %v869, %v869
      %v875 = vld [vmem:[%s6] sm:$0xf]
      %v876 = vld [vmem:[%s6 + $0x4] sm:$0xf]
      %v877 = vld [vmem:[%s7] sm:$0x1]
      %v879 = vperm.slane %v877, 0
      %v883 = vunpack.c.l.b16 %v875
      %v884 = vunpack.c.l.b16 %v876
      %v885 = vpack.c.b16 %v884, %v883
      %v888 = vsel %vm530, %v870, 0
      %v891 = vsel %vm530, %v871, 0
      %v894 = vsel %vm530, %v872, 0
      %v897 = vsel %vm530, %v873, 0
      %v900 = vsel %vm530, %v874, 0
      %902 = vmatpush.bf16.msra.mxu0 0
      %903 = vmatpush.bf16.msra.mxu0 0
      %904 = vmatpush.bf16.msra.mxu0 0
      %905 = vmatpush.bf16.msra.mxu0 0
      %906 = vmatpush.bf16.msra.mxu0 0
      %907 = vmatpush.bf16.msra.mxu0 0
      %908 = vmatpush.bf16.msra.mxu0 0
      %909 = vmatpush.bf16.msra.mxu0 %v885
      %910 = vmatmul.bf16.gmra.mxu0 %v888
      %v911 = vpop.f32.mrf.mxu0
      %v912 = vadd.f32 %v879, %v911
      %v913 = vpop.f32.mrf.mxu0
      %v914 = vadd.f32 %v879, %v913
      %915 = vmatmul.bf16.gmra.mxu0 %v891
      %v916 = vpop.f32.mrf.mxu0
      %v917 = vadd.f32 %v879, %v916
      %v918 = vpop.f32.mrf.mxu0
      %v919 = vadd.f32 %v879, %v918
      %920 = vmatmul.bf16.gmra.mxu0 %v894
      %v921 = vpop.f32.mrf.mxu0
      %v922 = vadd.f32 %v879, %v921
      %v923 = vpop.f32.mrf.mxu0
      %v924 = vadd.f32 %v879, %v923
      %925 = vmatmul.bf16.gmra.mxu0 %v897
      %v926 = vpop.f32.mrf.mxu0
      %v927 = vadd.f32 %v879, %v926
      %v928 = vpop.f32.mrf.mxu0
      %v929 = vadd.f32 %v879, %v928
      %930 = vmatmul.bf16.gmra.mxu0 %v900
      %v931 = vpop.f32.mrf.mxu0
      %v932 = vadd.f32 %v879, %v931
      %v933 = vpop.f32.mrf.mxu0
      %934 = vdwg.mxu0
      %v935 = vadd.f32 %v556, %v912
      %v936 = vadd.f32 %v558, %v914
      %v937 = vadd.f32 %v561, %v917
      %v938 = vadd.f32 %v563, %v919
      %v939 = vadd.f32 %v566, %v922
      %v940 = vadd.f32 %v568, %v924
      %v941 = vadd.f32 %v571, %v927
      %v942 = vadd.f32 %v573, %v929
      %v943 = vadd.f32 %v576, %v932
      %v944 = vpack.c.bf16 %v935, %v935
      %v945 = vpack.c.bf16 %v936, %v936
      %v946 = vpack.c.bf16 %v937, %v937
      %v947 = vpack.c.bf16 %v938, %v938
      %v948 = vpack.c.bf16 %v939, %v939
      %v949 = vpack.c.bf16 %v940, %v940
      %v950 = vpack.c.bf16 %v941, %v941
      %v951 = vpack.c.bf16 %v942, %v942
      %v952 = vpack.c.bf16 %v943, %v943
      %vm953 = vcmask 125952
      %954 = vst.msk [vmem:[%s413] sm:$0xf] %vm953, %v944
      %955 = vst.msk [vmem:[%s413 + $0x4] sm:$0xf] %vm953, %v945
      %956 = vst.msk [vmem:[%s413 + $0x8] sm:$0xf] %vm953, %v946
      %957 = vst.msk [vmem:[%s413 + $0xc] sm:$0xf] %vm953, %v947
      %958 = vst.msk [vmem:[%s413 + $0x10] sm:$0xf] %vm953, %v948
      %959 = vst.msk [vmem:[%s413 + $0x14] sm:$0xf] %vm953, %v949
      %960 = vst.msk [vmem:[%s413 + $0x18] sm:$0xf] %vm953, %v950
      %961 = vst.msk [vmem:[%s413 + $0x1c] sm:$0xf] %vm953, %v951
      %962 = vst.msk [vmem:[%s413 + $0x20] sm:$0xf] %vm953, %v952
      %s963 = smul.u32 9, %s24
      %p964 = scmp.lt.s32.totalorder %s23, 1
      %s965 = scalar_select %p964, %s23, 1
      %p966 = scmp.lt.s32.totalorder %s963, 8
      %s967 = scalar_select %p966, %s963, 8
      %s968 = smul.addr %s965, 9
      %s969 = sadd.s32 %s967, %s968
      %s970 = smul.addr %s969, 4
      %s971 = scalar_lea.vmem %s8, %s970
      // Predicated region
      $region53: #{forward.29} parent=51 // pred_check
        %p972 = pneg %p237
      $region54: #{forward.29} parent=51 // pred_check_branch
        %974 = sbr.rel (%p972) target = $region56
      $region55: #{forward.29} parent=51 // pred_region
        %s975 = smul.u32 9, %s24
      $region56: #{forward.29} parent=51 // pred_fallthru
        _
    $region52: #{forward.29} parent=5 // pred_fallthru
      _
    %p976 = scmp.le.s32.totalorder 2, %s14
    // Predicated region
    $region57: #{forward.29} parent=5 // pred_check
      %p977 = pneg %p976
    $region58: #{forward.29} parent=5 // pred_check_branch
      %979 = sbr.rel (%p977) target = $region60
    $region59: #{forward.29} parent=5 // pred_region
      %s980 = ssub.s32 %s14, 2
      // Predicated region
      $region61: #{forward.29} parent=59 // pred_check
        %p981 = pneg %p243
      $region62: #{forward.29} parent=59 // pred_check_branch
        %983 = sbr.rel (%p981) target = $region64
      $region63: #{forward.29} parent=59 // pred_region
        %s984 = smul.u32 9, %s26
        %p985 = scmp.lt.s32.totalorder %s25, 1
        %s986 = scalar_select %p985, %s25, 1
        %p987 = scmp.lt.s32.totalorder %s984, 8
        %s988 = scalar_select %p987, %s984, 8
        %s989 = smul.addr %s986, 9
        %s990 = sadd.s32 %s988, %s989
        %s991 = smul.addr %s990, 4
        %s992 = scalar_lea.vmem %s8, %s991
      $region64: #{forward.29} parent=59 // pred_fallthru
        _
    $region60: #{forward.29} parent=5 // pred_fallthru
      _
  $region6: #{forward.29} parent=0 // loop_footer
    %s18 = sadd.s32 1, %s14
  $region7: #{forward.29} parent=0 // loop_footer_branch
    %13 = sbr.rel target = $region3
  $region8: #{forward.29} parent=0 // loop_exit
    _

// kernel: forward.31
$region0: #{forward.31}
  #allocation0 [shape = 'u32[]', space=smem, size = 0x4, offset = 0x4, fixed_abs, tag = 'smem constant byte address 0x4 - core index']
  #allocation1 [shape = 'u32[72,128]{1,0:T(1,128)}', space=vmem, size = 0x9000, scoped, tag = 'internal scratch']
  %s0 = inlined_call_operand.vmem [shape: bf16[2,24,32], index: 0, kind: input, shape index: {}, may-alias: {0,1}]
  %s1 = inlined_call_operand.vmem [shape: bf16[2,24,32], index: 1, kind: input, shape index: {}, may-alias: {0,1}]
  %s2 = inlined_call_operand.vmem [shape: bf16[224,32], index: 2, kind: input, shape index: {}]
  %s3 = inlined_call_operand.vmem [shape: f32[1,32], index: 3, kind: input, shape index: {}]
  %s4 = inlined_call_operand.vmem [shape: bf16[2,16,32], index: 4, kind: output, shape index: {}]
  %s5 = sld [smem:[#allocation0]]
  $region49: #{forward.31} parent=0
    _
  %s7 = ssub.s32 1, %s5
  %s8 = scalar_select 0, %s7, %s5
  loop: start=0, step=1, limit=4
  $region2: #{forward.31} parent=0 // loop_pre_header
    _
  $region3: #{forward.31} parent=0 // loop_header
    %s10 = sphi 0, %s14
    %p11 = scmp.ge.s32.totalorder %s10, 4
    %s17 = sphi 0, %s29
    %s18 = sphi 0, %s25
    %s19 = sphi 0, %s17
    %s20 = sphi 0, %s18
    %s21 = sphi 0, %s19
    %s22 = sphi 0, %s20
    %s34 = sphi 0, %s36
    %s37 = sphi 0, %s34
    %s38 = sphi 0, %s37
    %s54 = sphi 0, %s38
    %s66 = sphi 0, %s68
    %s69 = sphi 0, %s66
    %s70 = sphi 0, %s69
    %s86 = sphi 0, %s70
    %s90 = sphi 0, %s90
    %s92 = sphi 0, %s90
    %s93 = sphi 0, %s92
    %s107 = sphi 0, %s93
    %s111 = sphi 0, %s111
    %s113 = sphi 0, %s111
    %s114 = sphi 0, %s113
    %s128 = sphi 0, %s114
    %s136 = sphi 0, %s138
    %s139 = sphi 0, %s136
    %s140 = sphi 0, %s139
    %s156 = sphi 0, %s140
  $region4: #{forward.31} parent=0 // loop_header_branch
    %13 = sbr.rel (%p11) target = $region8
  $region5: #{forward.31} parent=0 // loop_body
    %s15 = ssub.s32 %s10, 1
    %s16 = ssub.s32 %s10, 2
    %s23 = sadd.s32 1, %s18
    %p24 = scmp.ge.s32.totalorder %s23, 1
    %s25 = scalar_select %p24, 0, %s23
    %s26 = sadd.s32 1, %s17
    %s27 = scalar_select %p24, %s26, %s17
    %p28 = scmp.ge.s32.totalorder %s27, 2
    %s29 = scalar_select %p28, 0, %s27
    %s30 = ssub.s32 %s17, %s29
    %s31 = ssub.s32 %s18, %s25
    %s32 = sor.u32 %s30, %s31
    %p33 = scmp.eq.s32.totalorder %s32, 0
    %s35 = sadd.s32 %s34, 1
    %s36 = scalar_select %p33, %s34, %s35
    %p39 = pneg %p33
    %p40 = scmp.eq.s32.totalorder %s10, 1
    %p41 = por %p39, %p40
    %p42 = scmp.ne.s32.totalorder %s34, %s37
    %p43 = scmp.eq.s32.totalorder %s10, 0
    %p44 = por %p42, %p43
    %p45 = scmp.ne.s32.totalorder %s34, %s37
    %p46 = scmp.eq.s32.totalorder %s15, 1
    %p47 = por %p45, %p46
    %p48 = scmp.ne.s32.totalorder %s37, %s38
    %p49 = scmp.eq.s32.totalorder %s15, 0
    %p50 = por %p48, %p49
    %p51 = scmp.ne.s32.totalorder %s37, %s38
    %p52 = scmp.eq.s32.totalorder %s16, 1
    %p53 = por %p51, %p52
    %p55 = scmp.ne.s32.totalorder %s38, %s54
    %p56 = scmp.eq.s32.totalorder %s16, 0
    %p57 = por %p55, %p56
    %s58 = sadd.s32 %s18, 1
    %s59 = smul.u32 %s58, 2
    %s60 = sadd.s32 %s25, 1
    %s61 = smul.u32 %s60, 2
    %s62 = ssub.s32 %s17, %s29
    %s63 = ssub.s32 %s59, %s61
    %s64 = sor.u32 %s62, %s63
    %p65 = scmp.eq.s32.totalorder %s64, 0
    %s67 = sadd.s32 %s66, 1
    %s68 = scalar_select %p65, %s66, %s67
    %p71 = pneg %p65
    %p72 = scmp.eq.s32.totalorder %s10, 1
    %p73 = por %p71, %p72
    %p74 = scmp.ne.s32.totalorder %s66, %s69
    %p75 = scmp.eq.s32.totalorder %s10, 0
    %p76 = por %p74, %p75
    %p77 = scmp.ne.s32.totalorder %s66, %s69
    %p78 = scmp.eq.s32.totalorder %s15, 1
    %p79 = por %p77, %p78
    %p80 = scmp.ne.s32.totalorder %s69, %s70
    %p81 = scmp.eq.s32.totalorder %s15, 0
    %p82 = por %p80, %p81
    %p83 = scmp.ne.s32.totalorder %s69, %s70
    %p84 = scmp.eq.s32.totalorder %s16, 1
    %p85 = por %p83, %p84
    %p87 = scmp.ne.s32.totalorder %s70, %s86
    %p88 = scmp.eq.s32.totalorder %s16, 0
    %p89 = por %p87, %p88
    %s91 = sadd.s32 %s90, 1
    %p94 = scmp.eq.s32.totalorder %s10, 1
    %p95 = scmp.ne.s32.totalorder %s90, %s92
    %p96 = scmp.eq.s32.totalorder %s10, 0
    %p97 = por %p95, %p96
    %p98 = scmp.ne.s32.totalorder %s90, %s92
    %p99 = scmp.eq.s32.totalorder %s15, 1
    %p100 = por %p98, %p99
    %p101 = scmp.ne.s32.totalorder %s92, %s93
    %p102 = scmp.eq.s32.totalorder %s15, 0
    %p103 = por %p101, %p102
    %p104 = scmp.ne.s32.totalorder %s92, %s93
    %p105 = scmp.eq.s32.totalorder %s16, 1
    %p106 = por %p104, %p105
    %p108 = scmp.ne.s32.totalorder %s93, %s107
    %p109 = scmp.eq.s32.totalorder %s16, 0
    %p110 = por %p108, %p109
    %s112 = sadd.s32 %s111, 1
    %p115 = scmp.eq.s32.totalorder %s10, 1
    %p116 = scmp.ne.s32.totalorder %s111, %s113
    %p117 = scmp.eq.s32.totalorder %s10, 0
    %p118 = por %p116, %p117
    %p119 = scmp.ne.s32.totalorder %s111, %s113
    %p120 = scmp.eq.s32.totalorder %s15, 1
    %p121 = por %p119, %p120
    %p122 = scmp.ne.s32.totalorder %s113, %s114
    %p123 = scmp.eq.s32.totalorder %s15, 0
    %p124 = por %p122, %p123
    %p125 = scmp.ne.s32.totalorder %s113, %s114
    %p126 = scmp.eq.s32.totalorder %s16, 1
    %p127 = por %p125, %p126
    %p129 = scmp.ne.s32.totalorder %s114, %s128
    %p130 = scmp.eq.s32.totalorder %s16, 0
    %p131 = por %p129, %p130
    %s132 = ssub.s32 %s17, %s29
    %s133 = ssub.s32 %s18, %s25
    %s134 = sor.u32 %s132, %s133
    %p135 = scmp.eq.s32.totalorder %s134, 0
    %s137 = sadd.s32 %s136, 1
    %s138 = scalar_select %p135, %s136, %s137
    %p141 = pneg %p135
    %p142 = scmp.eq.s32.totalorder %s10, 1
    %p143 = por %p141, %p142
    %p144 = scmp.ne.s32.totalorder %s136, %s139
    %p145 = scmp.eq.s32.totalorder %s10, 0
    %p146 = por %p144, %p145
    %p147 = scmp.ne.s32.totalorder %s136, %s139
    %p148 = scmp.eq.s32.totalorder %s15, 1
    %p149 = por %p147, %p148
    %p150 = scmp.ne.s32.totalorder %s139, %s140
    %p151 = scmp.eq.s32.totalorder %s15, 0
    %p152 = por %p150, %p151
    %p153 = scmp.ne.s32.totalorder %s139, %s140
    %p154 = scmp.eq.s32.totalorder %s16, 1
    %p155 = por %p153, %p154
    %p157 = scmp.ne.s32.totalorder %s140, %s156
    %p158 = scmp.eq.s32.totalorder %s16, 0
    %p159 = por %p157, %p158
    %p160 = scmp.le.s32.totalorder 1, %s10
    %p161 = scmp.lt.s32.totalorder %s10, 3
    %p162 = pnand %p160, %p161
    %p163 = pneg %p162
    // Predicated region
    $region9: #{forward.31} parent=5 // pred_check
      _
    $region10: #{forward.31} parent=5 // pred_check_branch
      %165 = sbr.rel (%p162) target = $region12
    $region11: #{forward.31} parent=5 // pred_region
      %s166 = ssub.s32 %s10, 1
      // Predicated region
      $region13: #{forward.31} parent=11 // pred_check
        %p167 = pneg %p103
      $region14: #{forward.31} parent=11 // pred_check_branch
        %169 = sbr.rel (%p167) target = $region16
      $region15: #{forward.31} parent=11 // pred_region
        _
      $region16: #{forward.31} parent=11 // pred_fallthru
        _
      // Predicated region
      $region17: #{forward.31} parent=11 // pred_check
        %p170 = pneg %p124
      $region18: #{forward.31} parent=11 // pred_check_branch
        %172 = sbr.rel (%p170) target = $region20
      $region19: #{forward.31} parent=11 // pred_region
        _
      $region20: #{forward.31} parent=11 // pred_fallthru
        _
    $region12: #{forward.31} parent=5 // pred_fallthru
      _
    %p173 = scmp.lt.s32.totalorder %s10, 2
    // Predicated region
    $region21: #{forward.31} parent=5 // pred_check
      %p174 = pneg %p173
    $region22: #{forward.31} parent=5 // pred_check_branch
      %176 = sbr.rel (%p174) target = $region24
    $region23: #{forward.31} parent=5 // pred_region
      // Predicated region
      $region25: #{forward.31} parent=23 // pred_check
        %p177 = pneg %p44
      $region26: #{forward.31} parent=23 // pred_check_branch
        %179 = sbr.rel (%p177) target = $region28
      $region27: #{forward.31} parent=23 // pred_region
        %s180 = smul.u32 2, %s18
        %s181 = ssub.s32 3, %s180
        %p182 = scmp.lt.s32.totalorder %s181, 2
        %s183 = scalar_select %p182, %s181, 2
        %s184 = smul.u32 4, %s183
        %p185 = scmp.lt.s32.totalorder %s17, 1
        %s186 = scalar_select %p185, %s17, 1
        %p187 = scmp.lt.s32.totalorder %s180, 2
        %s188 = scalar_select %p187, %s180, 2
        %s189 = smul.addr %s186, 3
        %s190 = sadd.s32 %s188, %s189
        %s191 = smul.addr %s190, 4
        %s192 = scalar_lea.vmem %s0, %s191
        %s193 = smul.u32 2, %s18
        %s194 = ssub.s32 3, %s193
        %p195 = scmp.lt.s32.totalorder %s194, 2
        %s196 = scalar_select %p195, %s194, 2
        %s197 = smul.u32 4, %s196
      $region28: #{forward.31} parent=23 // pred_fallthru
        _
      // Predicated region
      $region29: #{forward.31} parent=23 // pred_check
        %p198 = pneg %p76
      $region30: #{forward.31} parent=23 // pred_check_branch
        %200 = sbr.rel (%p198) target = $region32
      $region31: #{forward.31} parent=23 // pred_region
        %s201 = sadd.s32 %s18, 1
        %s202 = smul.u32 %s201, 2
        %p203 = scmp.lt.s32.totalorder %s17, 1
        %s204 = scalar_select %p203, %s17, 1
        %p205 = scmp.lt.s32.totalorder %s202, 2
        %s206 = scalar_select %p205, %s202, 2
        %s207 = smul.addr %s204, 3
        %s208 = sadd.s32 %s206, %s207
        %s209 = smul.addr %s208, 4
        %s210 = scalar_lea.vmem %s1, %s209
        %s211 = sadd.s32 %s18, 1
        %s212 = smul.u32 %s211, 2
      $region32: #{forward.31} parent=23 // pred_fallthru
        _
    $region24: #{forward.31} parent=5 // pred_fallthru
      _
    %p213 = scmp.le.s32.totalorder 1, %s10
    %p214 = scmp.lt.s32.totalorder %s10, 3
    %p215 = pnand %p213, %p214
    %p216 = pneg %p215
    // Predicated region
    $region33: #{forward.31} parent=5 // pred_check
      _
    $region34: #{forward.31} parent=5 // pred_check_branch
      %218 = sbr.rel (%p215) target = $region36
    $region35: #{forward.31} parent=5 // pred_region
      %s219 = ssub.s32 %s10, 1
      %s220 = smul.u32 2, %s20
      %s221 = ssub.s32 3, %s220
      %p222 = scmp.lt.s32.totalorder %s221, 2
      %s223 = scalar_select %p222, %s221, 2
      %s224 = smul.u32 4, %s223
      %p225 = scmp.lt.s32.totalorder %s19, 1
      %s226 = scalar_select %p225, %s19, 1
      %p227 = scmp.lt.s32.totalorder %s220, 2
      %s228 = scalar_select %p227, %s220, 2
      %s229 = smul.addr %s226, 3
      %s230 = sadd.s32 %s228, %s229
      %s231 = smul.addr %s230, 4
      %s232 = scalar_lea.vmem %s0, %s231
      %p233 = pneg %p50
      %p234 = pneg %p47
      %s235 = sadd.s32 %s20, 1
      %s236 = smul.u32 %s235, 2
      %p237 = scmp.lt.s32.totalorder %s19, 1
      %s238 = scalar_select %p237, %s19, 1
      %p239 = scmp.lt.s32.totalorder %s236, 2
      %s240 = scalar_select %p239, %s236, 2
      %s241 = smul.addr %s238, 3
      %s242 = sadd.s32 %s240, %s241
      %s243 = smul.addr %s242, 4
      %s244 = scalar_lea.vmem %s1, %s243
      %p245 = pneg %p82
      %p246 = pneg %p79
      %p247 = pneg %p103
      %p248 = pneg %p100
      %p249 = pneg %p124
      %p250 = pneg %p121
      %p251 = pneg %p152
      %p252 = pneg %p149
      %s253 = smul.u32 2, %s20
      %p254 = scmp.lt.s32.totalorder %s19, 1
      %s255 = scalar_select %p254, %s19, 1
      %p256 = scmp.lt.s32.totalorder %s253, 1
      %s257 = scalar_select %p256, %s253, 1
      %s258 = smul.addr %s255, 2
      %s259 = sadd.s32 %s257, %s258
      %s260 = smul.addr %s259, 4
      %s261 = scalar_lea.vmem %s4, %s260
      %s262 = smul.u32 2, %s20
      %s263 = ssub.s32 3, %s262
      %p264 = scmp.lt.s32.totalorder %s263, 2
      %s265 = scalar_select %p264, %s263, 2
      %s266 = smul.u32 4, %s265
      %p267 = scmp.lt.s32.totalorder %s19, 1
      %s268 = scalar_select %p267, %s19, 1
      %p269 = scmp.lt.s32.totalorder %s262, 2
      %s270 = scalar_select %p269, %s262, 2
      %s271 = smul.addr %s268, 3
      %s272 = sadd.s32 %s270, %s271
      %s273 = smul.addr %s272, 4
      %s274 = scalar_lea.vmem %s0, %s273
      %s275 = smul.u32 2, %s20
      %s276 = ssub.s32 3, %s275
      %p277 = scmp.lt.s32.totalorder %s276, 2
      %s278 = scalar_select %p277, %s276, 2
      %s279 = smul.u32 4, %s278
      %s280 = sadd.s32 %s20, 1
      %s281 = smul.u32 %s280, 2
      %p282 = scmp.lt.s32.totalorder %s19, 1
      %s283 = scalar_select %p282, %s19, 1
      %p284 = scmp.lt.s32.totalorder %s281, 2
      %s285 = scalar_select %p284, %s281, 2
      %s286 = smul.addr %s283, 3
      %s287 = sadd.s32 %s285, %s286
      %s288 = smul.addr %s287, 4
      %s289 = scalar_lea.vmem %s1, %s288
      %s290 = sadd.s32 %s20, 1
      %s291 = smul.u32 %s290, 2
      %s292 = smul.u32 2, %s20
      %p293 = scmp.lt.s32.totalorder %s19, 1
      %s294 = scalar_select %p293, %s19, 1
      %p295 = scmp.lt.s32.totalorder %s292, 1
      %s296 = scalar_select %p295, %s292, 1
      %s297 = smul.addr %s294, 2
      %s298 = sadd.s32 %s296, %s297
      %s299 = smul.addr %s298, 4
      %s300 = scalar_lea.vmem %s4, %s299
      %s301 = smul.u32 2, %s20
      %v303 = vld [vmem:[%s274] sm:$0xf]
      %v304 = vld [vmem:[%s274 + $0x4] sm:$0xf]
      %v305 = vld [vmem:[%s289] sm:$0xf]
      %v308 = vunpack.c.l.b16 %v303
      %v309 = vunpack.c.l.b16 %v304
      %v310 = vpack.c.b16 %v309, %v308
      %v312 = vunpack.c.l.bf16 %v310
      %v313 = vunpack.c.h.bf16 %v310
      %v314 = vunpack.c.l.bf16 %v305
      %vm315 = vcmp.ge.f32.partialorder %v312, 0.0
      %vm316 = vcmp.ge.f32.partialorder %v313, 0.0
      %vm317 = vcmp.ge.f32.partialorder %v314, 0.0
      %v318 = vmul.f32 %v312, 0.2
      %v319 = vmul.f32 %v313, 0.2
      %v320 = vmul.f32 %v314, 0.2
      %v321 = vsel %vm315, %v312, %v318
      %v322 = vsel %vm316, %v313, %v319
      %v323 = vsel %vm317, %v314, %v320
      %v324 = vpack.c.bf16 %v321, %v321
      %v325 = vpack.c.bf16 %v322, %v322
      %v326 = vpack.c.bf16 %v323, %v323
      %v329 = vunpack.c.l.b16 %v324
      %v330 = vunpack.c.l.b16 %v325
      %v331 = vpack.c.b16 %v330, %v329
      %v333 = vunpack.c.l.b16 %v326
      %v334 = vpack.c.b16 %v333, %v333
      %vm335 = vsmask.f32 7424
      %v337 = vshrl.u32 %v331, 16
      %v339 = vshll.u32 %v331, 16
      %v341 = vrot.slane %v339, 1
      %v342 = vor.u32 %v337, %v341
      %v344 = vshll.u32 %v334, 16
      %v346 = vrot.slane %v344, 1
      %v347 = vsel %vm335, %v342, %v346
      %348 = vrot.lane.b32.xlu0 %v347, 32
      %v349 = vpop.permute.xlu0 %348
      %vm350 = vcmask 1046528
      %v351 = vrot.slane %v331, 1
      %v352 = vrot.slane %v334, 1
      %v353 = vsel %vm350, %v351, %v352
      %354 = vrot.lane.b32.xlu0 %v353, 64
      %v355 = vpop.permute.xlu0 %354
      %vm356 = vsmask.f32 6400
      %v357 = vrot.slane %v337, 1
      %v358 = vrot.slane %v339, 2
      %v359 = vor.u32 %v357, %v358
      %v360 = vshrl.u32 %v334, 16
      %v362 = vrot.slane %v360, 1
      %v363 = vrot.slane %v344, 2
      %v364 = vor.u32 %v362, %v363
      %v365 = vsel %vm356, %v359, %v364
      %366 = vrot.lane.b32.xlu0 %v365, 96
      %v367 = vpop.permute.xlu0 %366
      %vm368 = vcmask 1045504
      %v369 = vrot.slane %v331, 2
      %v370 = vrot.slane %v334, 2
      %v371 = vsel %vm368, %v369, %v370
      %vm372 = vsmask.f32 5376
      %v373 = vrot.slane %v337, 2
      %v374 = vrot.slane %v339, 3
      %v375 = vor.u32 %v373, %v374
      %v376 = vrot.slane %v360, 2
      %v377 = vrot.slane %v344, 3
      %v378 = vor.u32 %v376, %v377
      %v379 = vsel %vm372, %v375, %v378
      %380 = vrot.lane.b32.xlu0 %v379, 32
      %v381 = vpop.permute.xlu0 %380
      %vm382 = vcmask 1044480
      %v383 = vrot.slane %v331, 3
      %v384 = vrot.slane %v334, 3
      %v385 = vsel %vm382, %v383, %v384
      %386 = vrot.lane.b32.xlu0 %v385, 64
      %v387 = vpop.permute.xlu0 %386
      %vm388 = vcmask 261120
      %v390 = vsel %vm388, %v331, %v349
      %vm391 = vcmask 523264
      %v393 = vsel %vm391, %v390, %v355
      %vm394 = vcmask 785408
      %v396 = vsel %vm394, %v393, %v367
      %v400 = vsel %vm388, %v371, %v381
      %v402 = vsel %vm391, %v400, %v387
      %v403 = vld [vmem:[%s2] sm:$0xf]
      %v404 = vld [vmem:[%s2 + $0x4] sm:$0xf]
      %v405 = vld [vmem:[%s2 + $0x8] sm:$0xf]
      %v406 = vld [vmem:[%s2 + $0xc] sm:$0xf]
      %v407 = vld [vmem:[%s2 + $0x10] sm:$0xf]
      %v408 = vld [vmem:[%s2 + $0x14] sm:$0xf]
      %v409 = vld [vmem:[%s2 + $0x18] sm:$0xf]
      %v410 = vld [vmem:[%s2 + $0x1c] sm:$0xf]
      %v411 = vld [vmem:[%s2 + $0x20] sm:$0xf]
      %v412 = vld [vmem:[%s2 + $0x24] sm:$0xf]
      %v413 = vld [vmem:[%s2 + $0x28] sm:$0xf]
      %v414 = vld [vmem:[%s2 + $0x2c] sm:$0xf]
      %v415 = vld [vmem:[%s2 + $0x30] sm:$0xf]
      %v416 = vld [vmem:[%s2 + $0x34] sm:$0xf]
      %v417 = vld [vmem:[%s2 + $0x38] sm:$0xf]
      %v418 = vld [vmem:[%s2 + $0x3c] sm:$0xf]
      %v419 = vld [vmem:[%s2 + $0x40] sm:$0xf]
      %v420 = vld [vmem:[%s2 + $0x44] sm:$0xf]
      %v421 = vld [vmem:[%s2 + $0x48] sm:$0xf]
      %v422 = vld [vmem:[%s2 + $0x4c] sm:$0xf]
      %v423 = vld [vmem:[%s2 + $0x50] sm:$0xf]
      %v424 = vld [vmem:[%s2 + $0x54] sm:$0xf]
      %v425 = vld [vmem:[%s2 + $0x58] sm:$0xf]
      %v426 = vld [vmem:[%s2 + $0x5c] sm:$0xf]
      %v427 = vld [vmem:[%s2 + $0x60] sm:$0xf]
      %v428 = vld [vmem:[%s2 + $0x64] sm:$0xf]
      %v429 = vld [vmem:[%s2 + $0x68] sm:$0xf]
      %v430 = vld [vmem:[%s2 + $0x6c] sm:$0xf]
      %v431 = vld [vmem:[%s3] sm:$0x1]
      %v433 = vperm.slane %v431, 0
      %v463 = vunpack.c.l.b16 %v403
      %v464 = vunpack.c.l.b16 %v404
      %v465 = vunpack.c.l.b16 %v405
      %v466 = vunpack.c.l.b16 %v406
      %v467 = vunpack.c.l.b16 %v407
      %v468 = vunpack.c.l.b16 %v408
      %v469 = vunpack.c.l.b16 %v409
      %v470 = vunpack.c.l.b16 %v410
      %v471 = vunpack.c.l.b16 %v411
      %v472 = vunpack.c.l.b16 %v412
      %v473 = vunpack.c.l.b16 %v413
      %v474 = vunpack.c.l.b16 %v414
      %v475 = vunpack.c.l.b16 %v415
      %v476 = vunpack.c.l.b16 %v416
      %v477 = vunpack.c.l.b16 %v417
      %v478 = vunpack.c.l.b16 %v418
      %v479 = vunpack.c.l.b16 %v419
      %v480 = vunpack.c.l.b16 %v420
      %v481 = vunpack.c.l.b16 %v421
      %v482 = vunpack.c.l.b16 %v422
      %v483 = vunpack.c.l.b16 %v423
      %v484 = vunpack.c.l.b16 %v424
      %v485 = vunpack.c.l.b16 %v425
      %v486 = vunpack.c.l.b16 %v426
      %v487 = vunpack.c.l.b16 %v427
      %v488 = vunpack.c.l.b16 %v428
      %v489 = vunpack.c.l.b16 %v429
      %v490 = vunpack.c.l.b16 %v430
      %v491 = vpack.c.b16 %v464, %v463
      %v492 = vpack.c.b16 %v466, %v465
      %v493 = vpack.c.b16 %v468, %v467
      %v494 = vpack.c.b16 %v470, %v469
      %v495 = vpack.c.b16 %v472, %v471
      %v496 = vpack.c.b16 %v474, %v473
      %v497 = vpack.c.b16 %v476, %v475
      %v498 = vpack.c.b16 %v478, %v477
      %v499 = vpack.c.b16 %v480, %v479
      %v500 = vpack.c.b16 %v482, %v481
      %v501 = vpack.c.b16 %v484, %v483
      %v502 = vpack.c.b16 %v486, %v485
      %v503 = vpack.c.b16 %v488, %v487
      %v504 = vpack.c.b16 %v490, %v489
      %v519 = vsel %vm394, %v402, 0
      %521 = vmatpush.bf16.msra.mxu0 %v498
      %522 = vmatpush.bf16.msra.mxu0 %v497
      %523 = vmatpush.bf16.msra.mxu0 %v496
      %524 = vmatpush.bf16.msra.mxu0 %v495
      %525 = vmatpush.bf16.msra.mxu0 %v494
      %526 = vmatpush.bf16.msra.mxu0 %v493
      %527 = vmatpush.bf16.msra.mxu0 %v492
      %528 = vmatpush.bf16.msra.mxu0 %v491
      %529 = vmatmul.bf16.gmra.mxu0 %v396
      %v530 = vpop.f32.mrf.mxu0
      %v531 = vadd.f32 %v433, %v530
      %v532 = vpop.f32.mrf.mxu0
      %v533 = vadd.f32 %v433, %v532
      %534 = vdwg.mxu0
      %535 = vmatpush.bf16.msra.mxu0 0
      %536 = vmatpush.bf16.msra.mxu0 0
      %537 = vmatpush.bf16.msra.mxu0 %v504
      %538 = vmatpush.bf16.msra.mxu0 %v503
      %539 = vmatpush.bf16.msra.mxu0 %v502
      %540 = vmatpush.bf16.msra.mxu0 %v501
      %541 = vmatpush.bf16.msra.mxu0 %v500
      %542 = vmatpush.bf16.msra.mxu0 %v499
      %543 = vmatmul.bf16.gmra.mxu0 %v519
      %v544 = vpop.f32.mrf.mxu0
      %v545 = vadd.f32 %v531, %v544
      %v546 = vpop.f32.mrf.mxu0
      %v547 = vadd.f32 %v533, %v546
      %548 = vdwg.mxu0
      %v549 = vpack.c.bf16 %v545, %v545
      %v550 = vpack.c.bf16 %v547, %v547
      %vm551 = vcmask 257024
      %552 = vst.msk [vmem:[%s300] sm:$0xf] %vm551, %v549
      %553 = vst.msk [vmem:[%s300 + $0x4] sm:$0xf] %vm551, %v550
      %s554 = smul.u32 2, %s20
      %p555 = scmp.lt.s32.totalorder %s19, 1
      %s556 = scalar_select %p555, %s19, 1
      %p557 = scmp.lt.s32.totalorder %s554, 1
      %s558 = scalar_select %p557, %s554, 1
      %s559 = smul.addr %s556, 2
      %s560 = sadd.s32 %s558, %s559
      %s561 = smul.addr %s560, 4
      %s562 = scalar_lea.vmem %s4, %s561
      // Predicated region
      $region37: #{forward.31} parent=35 // pred_check
        %p563 = pneg %p149
      $region38: #{forward.31} parent=35 // pred_check_branch
        %565 = sbr.rel (%p563) target = $region40
      $region39: #{forward.31} parent=35 // pred_region
        %s566 = smul.u32 2, %s20
      $region40: #{forward.31} parent=35 // pred_fallthru
        _
    $region36: #{forward.31} parent=5 // pred_fallthru
      _
    %p567 = scmp.le.s32.totalorder 2, %s10
    // Predicated region
    $region41: #{forward.31} parent=5 // pred_check
      %p568 = pneg %p567
    $region42: #{forward.31} parent=5 // pred_check_branch
      %570 = sbr.rel (%p568) target = $region44
    $region43: #{forward.31} parent=5 // pred_region
      %s571 = ssub.s32 %s10, 2
      // Predicated region
      $region45: #{forward.31} parent=43 // pred_check
        %p572 = pneg %p155
      $region46: #{forward.31} parent=43 // pred_check_branch
        %574 = sbr.rel (%p572) target = $region48
      $region47: #{forward.31} parent=43 // pred_region
        %s575 = smul.u32 2, %s22
        %p576 = scmp.lt.s32.totalorder %s21, 1
        %s577 = scalar_select %p576, %s21, 1
        %p578 = scmp.lt.s32.totalorder %s575, 1
        %s579 = scalar_select %p578, %s575, 1
        %s580 = smul.addr %s577, 2
        %s581 = sadd.s32 %s579, %s580
        %s582 = smul.addr %s581, 4
        %s583 = scalar_lea.vmem %s4, %s582
      $region48: #{forward.31} parent=43 // pred_fallthru
        _
    $region44: #{forward.31} parent=5 // pred_fallthru
      _
  $region6: #{forward.31} parent=0 // loop_footer
    %s14 = sadd.s32 1, %s10
  $region7: #{forward.31} parent=0 // loop_footer_branch
    %9 = sbr.rel target = $region3
  $region8: #{forward.31} parent=0 // loop_exit
    _

// kernel: forward.33
$region0: #{forward.33}
  #allocation0 [shape = 'u32[]', space=smem, size = 0x4, offset = 0x4, fixed_abs, tag = 'smem constant byte address 0x4 - core index']
  #allocation1 [shape = 'u32[72,128]{1,0:T(1,128)}', space=vmem, size = 0x9000, scoped, tag = 'internal scratch']
  %s0 = inlined_call_operand.vmem [shape: bf16[2,24,32], index: 0, kind: input, shape index: {}, may-alias: {0,1}]
  %s1 = inlined_call_operand.vmem [shape: bf16[2,24,32], index: 1, kind: input, shape index: {}, may-alias: {0,1}]
  %s2 = inlined_call_operand.vmem [shape: bf16[64,64], index: 2, kind: input, shape index: {}]
  %s3 = inlined_call_operand.vmem [shape: f32[1,64], index: 3, kind: input, shape index: {}]
  %s4 = inlined_call_operand.vmem [shape: bf16[2,16,64], index: 4, kind: output, shape index: {}]
  %s5 = sld [smem:[#allocation0]]
  $region49: #{forward.33} parent=0
    _
  %s7 = ssub.s32 1, %s5
  %s8 = scalar_select 0, %s7, %s5
  loop: start=0, step=1, limit=4
  $region2: #{forward.33} parent=0 // loop_pre_header
    _
  $region3: #{forward.33} parent=0 // loop_header
    %s10 = sphi 0, %s14
    %p11 = scmp.ge.s32.totalorder %s10, 4
    %s17 = sphi 0, %s29
    %s18 = sphi 0, %s25
    %s19 = sphi 0, %s17
    %s20 = sphi 0, %s18
    %s21 = sphi 0, %s19
    %s22 = sphi 0, %s20
    %s34 = sphi 0, %s36
    %s37 = sphi 0, %s34
    %s38 = sphi 0, %s37
    %s54 = sphi 0, %s38
    %s66 = sphi 0, %s68
    %s69 = sphi 0, %s66
    %s70 = sphi 0, %s69
    %s86 = sphi 0, %s70
    %s90 = sphi 0, %s90
    %s92 = sphi 0, %s90
    %s93 = sphi 0, %s92
    %s107 = sphi 0, %s93
    %s111 = sphi 0, %s111
    %s113 = sphi 0, %s111
    %s114 = sphi 0, %s113
    %s128 = sphi 0, %s114
    %s136 = sphi 0, %s138
    %s139 = sphi 0, %s136
    %s140 = sphi 0, %s139
    %s156 = sphi 0, %s140
  $region4: #{forward.33} parent=0 // loop_header_branch
    %13 = sbr.rel (%p11) target = $region8
  $region5: #{forward.33} parent=0 // loop_body
    %s15 = ssub.s32 %s10, 1
    %s16 = ssub.s32 %s10, 2
    %s23 = sadd.s32 1, %s18
    %p24 = scmp.ge.s32.totalorder %s23, 1
    %s25 = scalar_select %p24, 0, %s23
    %s26 = sadd.s32 1, %s17
    %s27 = scalar_select %p24, %s26, %s17
    %p28 = scmp.ge.s32.totalorder %s27, 2
    %s29 = scalar_select %p28, 0, %s27
    %s30 = ssub.s32 %s17, %s29
    %s31 = ssub.s32 %s18, %s25
    %s32 = sor.u32 %s30, %s31
    %p33 = scmp.eq.s32.totalorder %s32, 0
    %s35 = sadd.s32 %s34, 1
    %s36 = scalar_select %p33, %s34, %s35
    %p39 = pneg %p33
    %p40 = scmp.eq.s32.totalorder %s10, 1
    %p41 = por %p39, %p40
    %p42 = scmp.ne.s32.totalorder %s34, %s37
    %p43 = scmp.eq.s32.totalorder %s10, 0
    %p44 = por %p42, %p43
    %p45 = scmp.ne.s32.totalorder %s34, %s37
    %p46 = scmp.eq.s32.totalorder %s15, 1
    %p47 = por %p45, %p46
    %p48 = scmp.ne.s32.totalorder %s37, %s38
    %p49 = scmp.eq.s32.totalorder %s15, 0
    %p50 = por %p48, %p49
    %p51 = scmp.ne.s32.totalorder %s37, %s38
    %p52 = scmp.eq.s32.totalorder %s16, 1
    %p53 = por %p51, %p52
    %p55 = scmp.ne.s32.totalorder %s38, %s54
    %p56 = scmp.eq.s32.totalorder %s16, 0
    %p57 = por %p55, %p56
    %s58 = sadd.s32 %s18, 1
    %s59 = smul.u32 %s58, 2
    %s60 = sadd.s32 %s25, 1
    %s61 = smul.u32 %s60, 2
    %s62 = ssub.s32 %s17, %s29
    %s63 = ssub.s32 %s59, %s61
    %s64 = sor.u32 %s62, %s63
    %p65 = scmp.eq.s32.totalorder %s64, 0
    %s67 = sadd.s32 %s66, 1
    %s68 = scalar_select %p65, %s66, %s67
    %p71 = pneg %p65
    %p72 = scmp.eq.s32.totalorder %s10, 1
    %p73 = por %p71, %p72
    %p74 = scmp.ne.s32.totalorder %s66, %s69
    %p75 = scmp.eq.s32.totalorder %s10, 0
    %p76 = por %p74, %p75
    %p77 = scmp.ne.s32.totalorder %s66, %s69
    %p78 = scmp.eq.s32.totalorder %s15, 1
    %p79 = por %p77, %p78
    %p80 = scmp.ne.s32.totalorder %s69, %s70
    %p81 = scmp.eq.s32.totalorder %s15, 0
    %p82 = por %p80, %p81
    %p83 = scmp.ne.s32.totalorder %s69, %s70
    %p84 = scmp.eq.s32.totalorder %s16, 1
    %p85 = por %p83, %p84
    %p87 = scmp.ne.s32.totalorder %s70, %s86
    %p88 = scmp.eq.s32.totalorder %s16, 0
    %p89 = por %p87, %p88
    %s91 = sadd.s32 %s90, 1
    %p94 = scmp.eq.s32.totalorder %s10, 1
    %p95 = scmp.ne.s32.totalorder %s90, %s92
    %p96 = scmp.eq.s32.totalorder %s10, 0
    %p97 = por %p95, %p96
    %p98 = scmp.ne.s32.totalorder %s90, %s92
    %p99 = scmp.eq.s32.totalorder %s15, 1
    %p100 = por %p98, %p99
    %p101 = scmp.ne.s32.totalorder %s92, %s93
    %p102 = scmp.eq.s32.totalorder %s15, 0
    %p103 = por %p101, %p102
    %p104 = scmp.ne.s32.totalorder %s92, %s93
    %p105 = scmp.eq.s32.totalorder %s16, 1
    %p106 = por %p104, %p105
    %p108 = scmp.ne.s32.totalorder %s93, %s107
    %p109 = scmp.eq.s32.totalorder %s16, 0
    %p110 = por %p108, %p109
    %s112 = sadd.s32 %s111, 1
    %p115 = scmp.eq.s32.totalorder %s10, 1
    %p116 = scmp.ne.s32.totalorder %s111, %s113
    %p117 = scmp.eq.s32.totalorder %s10, 0
    %p118 = por %p116, %p117
    %p119 = scmp.ne.s32.totalorder %s111, %s113
    %p120 = scmp.eq.s32.totalorder %s15, 1
    %p121 = por %p119, %p120
    %p122 = scmp.ne.s32.totalorder %s113, %s114
    %p123 = scmp.eq.s32.totalorder %s15, 0
    %p124 = por %p122, %p123
    %p125 = scmp.ne.s32.totalorder %s113, %s114
    %p126 = scmp.eq.s32.totalorder %s16, 1
    %p127 = por %p125, %p126
    %p129 = scmp.ne.s32.totalorder %s114, %s128
    %p130 = scmp.eq.s32.totalorder %s16, 0
    %p131 = por %p129, %p130
    %s132 = ssub.s32 %s17, %s29
    %s133 = ssub.s32 %s18, %s25
    %s134 = sor.u32 %s132, %s133
    %p135 = scmp.eq.s32.totalorder %s134, 0
    %s137 = sadd.s32 %s136, 1
    %s138 = scalar_select %p135, %s136, %s137
    %p141 = pneg %p135
    %p142 = scmp.eq.s32.totalorder %s10, 1
    %p143 = por %p141, %p142
    %p144 = scmp.ne.s32.totalorder %s136, %s139
    %p145 = scmp.eq.s32.totalorder %s10, 0
    %p146 = por %p144, %p145
    %p147 = scmp.ne.s32.totalorder %s136, %s139
    %p148 = scmp.eq.s32.totalorder %s15, 1
    %p149 = por %p147, %p148
    %p150 = scmp.ne.s32.totalorder %s139, %s140
    %p151 = scmp.eq.s32.totalorder %s15, 0
    %p152 = por %p150, %p151
    %p153 = scmp.ne.s32.totalorder %s139, %s140
    %p154 = scmp.eq.s32.totalorder %s16, 1
    %p155 = por %p153, %p154
    %p157 = scmp.ne.s32.totalorder %s140, %s156
    %p158 = scmp.eq.s32.totalorder %s16, 0
    %p159 = por %p157, %p158
    %p160 = scmp.le.s32.totalorder 1, %s10
    %p161 = scmp.lt.s32.totalorder %s10, 3
    %p162 = pnand %p160, %p161
    %p163 = pneg %p162
    // Predicated region
    $region9: #{forward.33} parent=5 // pred_check
      _
    $region10: #{forward.33} parent=5 // pred_check_branch
      %165 = sbr.rel (%p162) target = $region12
    $region11: #{forward.33} parent=5 // pred_region
      %s166 = ssub.s32 %s10, 1
      // Predicated region
      $region13: #{forward.33} parent=11 // pred_check
        %p167 = pneg %p103
      $region14: #{forward.33} parent=11 // pred_check_branch
        %169 = sbr.rel (%p167) target = $region16
      $region15: #{forward.33} parent=11 // pred_region
        _
      $region16: #{forward.33} parent=11 // pred_fallthru
        _
      // Predicated region
      $region17: #{forward.33} parent=11 // pred_check
        %p170 = pneg %p124
      $region18: #{forward.33} parent=11 // pred_check_branch
        %172 = sbr.rel (%p170) target = $region20
      $region19: #{forward.33} parent=11 // pred_region
        _
      $region20: #{forward.33} parent=11 // pred_fallthru
        _
    $region12: #{forward.33} parent=5 // pred_fallthru
      _
    %p173 = scmp.lt.s32.totalorder %s10, 2
    // Predicated region
    $region21: #{forward.33} parent=5 // pred_check
      %p174 = pneg %p173
    $region22: #{forward.33} parent=5 // pred_check_branch
      %176 = sbr.rel (%p174) target = $region24
    $region23: #{forward.33} parent=5 // pred_region
      // Predicated region
      $region25: #{forward.33} parent=23 // pred_check
        %p177 = pneg %p44
      $region26: #{forward.33} parent=23 // pred_check_branch
        %179 = sbr.rel (%p177) target = $region28
      $region27: #{forward.33} parent=23 // pred_region
        %s180 = smul.u32 2, %s18
        %s181 = ssub.s32 3, %s180
        %p182 = scmp.lt.s32.totalorder %s181, 2
        %s183 = scalar_select %p182, %s181, 2
        %s184 = smul.u32 4, %s183
        %p185 = scmp.lt.s32.totalorder %s17, 1
        %s186 = scalar_select %p185, %s17, 1
        %p187 = scmp.lt.s32.totalorder %s180, 2
        %s188 = scalar_select %p187, %s180, 2
        %s189 = smul.addr %s186, 3
        %s190 = sadd.s32 %s188, %s189
        %s191 = smul.addr %s190, 4
        %s192 = scalar_lea.vmem %s0, %s191
        %s193 = smul.u32 2, %s18
        %s194 = ssub.s32 3, %s193
        %p195 = scmp.lt.s32.totalorder %s194, 2
        %s196 = scalar_select %p195, %s194, 2
        %s197 = smul.u32 4, %s196
      $region28: #{forward.33} parent=23 // pred_fallthru
        _
      // Predicated region
      $region29: #{forward.33} parent=23 // pred_check
        %p198 = pneg %p76
      $region30: #{forward.33} parent=23 // pred_check_branch
        %200 = sbr.rel (%p198) target = $region32
      $region31: #{forward.33} parent=23 // pred_region
        %s201 = sadd.s32 %s18, 1
        %s202 = smul.u32 %s201, 2
        %p203 = scmp.lt.s32.totalorder %s17, 1
        %s204 = scalar_select %p203, %s17, 1
        %p205 = scmp.lt.s32.totalorder %s202, 2
        %s206 = scalar_select %p205, %s202, 2
        %s207 = smul.addr %s204, 3
        %s208 = sadd.s32 %s206, %s207
        %s209 = smul.addr %s208, 4
        %s210 = scalar_lea.vmem %s1, %s209
        %s211 = sadd.s32 %s18, 1
        %s212 = smul.u32 %s211, 2
      $region32: #{forward.33} parent=23 // pred_fallthru
        _
    $region24: #{forward.33} parent=5 // pred_fallthru
      _
    %p213 = scmp.le.s32.totalorder 1, %s10
    %p214 = scmp.lt.s32.totalorder %s10, 3
    %p215 = pnand %p213, %p214
    %p216 = pneg %p215
    // Predicated region
    $region33: #{forward.33} parent=5 // pred_check
      _
    $region34: #{forward.33} parent=5 // pred_check_branch
      %218 = sbr.rel (%p215) target = $region36
    $region35: #{forward.33} parent=5 // pred_region
      %s219 = ssub.s32 %s10, 1
      %s220 = smul.u32 2, %s20
      %s221 = ssub.s32 3, %s220
      %p222 = scmp.lt.s32.totalorder %s221, 2
      %s223 = scalar_select %p222, %s221, 2
      %s224 = smul.u32 4, %s223
      %p225 = scmp.lt.s32.totalorder %s19, 1
      %s226 = scalar_select %p225, %s19, 1
      %p227 = scmp.lt.s32.totalorder %s220, 2
      %s228 = scalar_select %p227, %s220, 2
      %s229 = smul.addr %s226, 3
      %s230 = sadd.s32 %s228, %s229
      %s231 = smul.addr %s230, 4
      %s232 = scalar_lea.vmem %s0, %s231
      %p233 = pneg %p50
      %p234 = pneg %p47
      %s235 = sadd.s32 %s20, 1
      %s236 = smul.u32 %s235, 2
      %p237 = scmp.lt.s32.totalorder %s19, 1
      %s238 = scalar_select %p237, %s19, 1
      %p239 = scmp.lt.s32.totalorder %s236, 2
      %s240 = scalar_select %p239, %s236, 2
      %s241 = smul.addr %s238, 3
      %s242 = sadd.s32 %s240, %s241
      %s243 = smul.addr %s242, 4
      %s244 = scalar_lea.vmem %s1, %s243
      %p245 = pneg %p82
      %p246 = pneg %p79
      %p247 = pneg %p103
      %p248 = pneg %p100
      %p249 = pneg %p124
      %p250 = pneg %p121
      %p251 = pneg %p152
      %p252 = pneg %p149
      %s253 = smul.u32 2, %s20
      %p254 = scmp.lt.s32.totalorder %s19, 1
      %s255 = scalar_select %p254, %s19, 1
      %p256 = scmp.lt.s32.totalorder %s253, 1
      %s257 = scalar_select %p256, %s253, 1
      %s258 = smul.addr %s255, 2
      %s259 = sadd.s32 %s257, %s258
      %s260 = smul.addr %s259, 4
      %s261 = scalar_lea.vmem %s4, %s260
      %s262 = smul.u32 2, %s20
      %s263 = ssub.s32 3, %s262
      %p264 = scmp.lt.s32.totalorder %s263, 2
      %s265 = scalar_select %p264, %s263, 2
      %s266 = smul.u32 4, %s265
      %p267 = scmp.lt.s32.totalorder %s19, 1
      %s268 = scalar_select %p267, %s19, 1
      %p269 = scmp.lt.s32.totalorder %s262, 2
      %s270 = scalar_select %p269, %s262, 2
      %s271 = smul.addr %s268, 3
      %s272 = sadd.s32 %s270, %s271
      %s273 = smul.addr %s272, 4
      %s274 = scalar_lea.vmem %s0, %s273
      %s275 = smul.u32 2, %s20
      %s276 = ssub.s32 3, %s275
      %p277 = scmp.lt.s32.totalorder %s276, 2
      %s278 = scalar_select %p277, %s276, 2
      %s279 = smul.u32 4, %s278
      %s280 = sadd.s32 %s20, 1
      %s281 = smul.u32 %s280, 2
      %p282 = scmp.lt.s32.totalorder %s19, 1
      %s283 = scalar_select %p282, %s19, 1
      %p284 = scmp.lt.s32.totalorder %s281, 2
      %s285 = scalar_select %p284, %s281, 2
      %s286 = smul.addr %s283, 3
      %s287 = sadd.s32 %s285, %s286
      %s288 = smul.addr %s287, 4
      %s289 = scalar_lea.vmem %s1, %s288
      %s290 = sadd.s32 %s20, 1
      %s291 = smul.u32 %s290, 2
      %s292 = smul.u32 2, %s20
      %p293 = scmp.lt.s32.totalorder %s19, 1
      %s294 = scalar_select %p293, %s19, 1
      %p295 = scmp.lt.s32.totalorder %s292, 1
      %s296 = scalar_select %p295, %s292, 1
      %s297 = smul.addr %s294, 2
      %s298 = sadd.s32 %s296, %s297
      %s299 = smul.addr %s298, 4
      %s300 = scalar_lea.vmem %s4, %s299
      %s301 = smul.u32 2, %s20
      %v303 = vld [vmem:[%s274] sm:$0xf]
      %v304 = vld [vmem:[%s274 + $0x4] sm:$0xf]
      %v305 = vld [vmem:[%s289] sm:$0xf]
      %v308 = vunpack.c.l.b16 %v303
      %v309 = vunpack.c.l.b16 %v304
      %v310 = vpack.c.b16 %v309, %v308
      %v312 = vunpack.c.l.bf16 %v310
      %v313 = vunpack.c.h.bf16 %v310
      %v314 = vunpack.c.l.bf16 %v305
      %vm315 = vcmp.ge.f32.partialorder %v312, 0.0
      %vm316 = vcmp.ge.f32.partialorder %v313, 0.0
      %vm317 = vcmp.ge.f32.partialorder %v314, 0.0
      %v318 = vmul.f32 %v312, 0.2
      %v319 = vmul.f32 %v313, 0.2
      %v320 = vmul.f32 %v314, 0.2
      %v321 = vsel %vm315, %v312, %v318
      %v322 = vsel %vm316, %v313, %v319
      %v323 = vsel %vm317, %v314, %v320
      %v324 = vpack.c.bf16 %v321, %v321
      %v325 = vpack.c.bf16 %v322, %v322
      %v326 = vpack.c.bf16 %v323, %v323
      %v329 = vunpack.c.l.b16 %v324
      %v330 = vunpack.c.l.b16 %v325
      %v331 = vpack.c.b16 %v330, %v329
      %v333 = vunpack.c.l.b16 %v326
      %v334 = vpack.c.b16 %v333, %v333
      %vm335 = vsmask.f32 7424
      %v337 = vshrl.u32 %v331, 16
      %v339 = vshll.u32 %v331, 16
      %v341 = vrot.slane %v339, 1
      %v342 = vor.u32 %v337, %v341
      %v344 = vshll.u32 %v334, 16
      %v346 = vrot.slane %v344, 1
      %v347 = vsel %vm335, %v342, %v346
      %348 = vrot.lane.b32.xlu0 %v347, 32
      %v349 = vpop.permute.xlu0 %348
      %vm350 = vcmask 261120
      %v352 = vsel %vm350, %v331, %v349
      %v353 = vld [vmem:[%s2] sm:$0xf]
      %v354 = vld [vmem:[%s2 + $0x4] sm:$0xf]
      %v355 = vld [vmem:[%s2 + $0x8] sm:$0xf]
      %v356 = vld [vmem:[%s2 + $0xc] sm:$0xf]
      %v357 = vld [vmem:[%s2 + $0x10] sm:$0xf]
      %v358 = vld [vmem:[%s2 + $0x14] sm:$0xf]
      %v359 = vld [vmem:[%s2 + $0x18] sm:$0xf]
      %v360 = vld [vmem:[%s2 + $0x1c] sm:$0xf]
      %v361 = vld [vmem:[%s3] sm:$0x1]
      %v363 = vperm.slane %v361, 0
      %v373 = vunpack.c.l.b16 %v353
      %v374 = vunpack.c.l.b16 %v354
      %v375 = vunpack.c.l.b16 %v355
      %v376 = vunpack.c.l.b16 %v356
      %v377 = vunpack.c.l.b16 %v357
      %v378 = vunpack.c.l.b16 %v358
      %v379 = vunpack.c.l.b16 %v359
      %v380 = vunpack.c.l.b16 %v360
      %v381 = vpack.c.b16 %v374, %v373
      %v382 = vpack.c.b16 %v376, %v375
      %v383 = vpack.c.b16 %v378, %v377
      %v384 = vpack.c.b16 %v380, %v379
      %vm389 = vcmask 523264
      %v390 = vsel %vm389, %v352, 0
      %392 = vmatpush.bf16.msra.mxu0 0
      %393 = vmatpush.bf16.msra.mxu0 0
      %394 = vmatpush.bf16.msra.mxu0 0
      %395 = vmatpush.bf16.msra.mxu0 0
      %396 = vmatpush.bf16.msra.mxu0 %v384
      %397 = vmatpush.bf16.msra.mxu0 %v383
      %398 = vmatpush.bf16.msra.mxu0 %v382
      %399 = vmatpush.bf16.msra.mxu0 %v381
      %400 = vmatmul.bf16.gmra.mxu0 %v390
      %v401 = vpop.f32.mrf.mxu0
      %v402 = vadd.f32 %v363, %v401
      %v403 = vpop.f32.mrf.mxu0
      %v404 = vadd.f32 %v363, %v403
      %405 = vdwg.mxu0
      %v406 = vpack.c.bf16 %v402, %v402
      %v407 = vpack.c.bf16 %v404, %v404
      %vm408 = vcmask 519168
      %409 = vst.msk [vmem:[%s300] sm:$0xf] %vm408, %v406
      %410 = vst.msk [vmem:[%s300 + $0x4] sm:$0xf] %vm408, %v407
      %s411 = smul.u32 2, %s20
      %p412 = scmp.lt.s32.totalorder %s19, 1
      %s413 = scalar_select %p412, %s19, 1
      %p414 = scmp.lt.s32.totalorder %s411, 1
      %s415 = scalar_select %p414, %s411, 1
      %s416 = smul.addr %s413, 2
      %s417 = sadd.s32 %s415, %s416
      %s418 = smul.addr %s417, 4
      %s419 = scalar_lea.vmem %s4, %s418
      // Predicated region
      $region37: #{forward.33} parent=35 // pred_check
        %p420 = pneg %p149
      $region38: #{forward.33} parent=35 // pred_check_branch
        %422 = sbr.rel (%p420) target = $region40
      $region39: #{forward.33} parent=35 // pred_region
        %s423 = smul.u32 2, %s20
      $region40: #{forward.33} parent=35 // pred_fallthru
        _
    $region36: #{forward.33} parent=5 // pred_fallthru
      _
    %p424 = scmp.le.s32.totalorder 2, %s10
    // Predicated region
    $region41: #{forward.33} parent=5 // pred_check
      %p425 = pneg %p424
    $region42: #{forward.33} parent=5 // pred_check_branch
      %427 = sbr.rel (%p425) target = $region44
    $region43: #{forward.33} parent=5 // pred_region
      %s428 = ssub.s32 %s10, 2
      // Predicated region
      $region45: #{forward.33} parent=43 // pred_check
        %p429 = pneg %p155
      $region46: #{forward.33} parent=43 // pred_check_branch
        %431 = sbr.rel (%p429) target = $region48
      $region47: #{forward.33} parent=43 // pred_region
        %s432 = smul.u32 2, %s22
        %p433 = scmp.lt.s32.totalorder %s21, 1
        %s434 = scalar_select %p433, %s21, 1
        %p435 = scmp.lt.s32.totalorder %s432, 1
        %s436 = scalar_select %p435, %s432, 1
        %s437 = smul.addr %s434, 2
        %s438 = sadd.s32 %s436, %s437
        %s439 = smul.addr %s438, 4
        %s440 = scalar_lea.vmem %s4, %s439
      $region48: #{forward.33} parent=43 // pred_fallthru
        _
    $region44: #{forward.33} parent=5 // pred_fallthru
      _
  $region6: #{forward.33} parent=0 // loop_footer
    %s14 = sadd.s32 1, %s10
  $region7: #{forward.33} parent=0 // loop_footer_branch
    %9 = sbr.rel target = $region3
  $region8: #{forward.33} parent=0 // loop_exit
    _

// kernel: forward.41
$region0: #{forward.41}
  #allocation0 [shape = 'u32[]', space=smem, size = 0x4, offset = 0x4, fixed_abs, tag = 'smem constant byte address 0x4 - core index']
  #allocation1 [shape = 'u32[72,128]{1,0:T(1,128)}', space=vmem, size = 0x9000, scoped, tag = 'internal scratch']
  %s0 = inlined_call_operand.vmem [shape: bf16[2,112,8], index: 0, kind: input, shape index: {}, may-alias: {0,1}]
  %s1 = inlined_call_operand.vmem [shape: bf16[2,112,8], index: 1, kind: input, shape index: {}, may-alias: {0,1}]
  %s2 = inlined_call_operand.vmem [shape: bf16[56,8], index: 2, kind: input, shape index: {}]
  %s3 = inlined_call_operand.vmem [shape: f32[1,8], index: 3, kind: input, shape index: {}]
  %s4 = inlined_call_operand.vmem [shape: bf16[2,104,8], index: 4, kind: output, shape index: {}]
  %s5 = sld [smem:[#allocation0]]
  $region49: #{forward.41} parent=0
    _
  %s7 = ssub.s32 1, %s5
  %s8 = scalar_select 0, %s7, %s5
  loop: start=0, step=1, limit=4
  $region2: #{forward.41} parent=0 // loop_pre_header
    _
  $region3: #{forward.41} parent=0 // loop_header
    %s10 = sphi 0, %s14
    %p11 = scmp.ge.s32.totalorder %s10, 4
    %s17 = sphi 0, %s29
    %s18 = sphi 0, %s25
    %s19 = sphi 0, %s17
    %s20 = sphi 0, %s18
    %s21 = sphi 0, %s19
    %s22 = sphi 0, %s20
    %s34 = sphi 0, %s36
    %s37 = sphi 0, %s34
    %s38 = sphi 0, %s37
    %s54 = sphi 0, %s38
    %s66 = sphi 0, %s68
    %s69 = sphi 0, %s66
    %s70 = sphi 0, %s69
    %s86 = sphi 0, %s70
    %s90 = sphi 0, %s90
    %s92 = sphi 0, %s90
    %s93 = sphi 0, %s92
    %s107 = sphi 0, %s93
    %s111 = sphi 0, %s111
    %s113 = sphi 0, %s111
    %s114 = sphi 0, %s113
    %s128 = sphi 0, %s114
    %s136 = sphi 0, %s138
    %s139 = sphi 0, %s136
    %s140 = sphi 0, %s139
    %s156 = sphi 0, %s140
  $region4: #{forward.41} parent=0 // loop_header_branch
    %13 = sbr.rel (%p11) target = $region8
  $region5: #{forward.41} parent=0 // loop_body
    %s15 = ssub.s32 %s10, 1
    %s16 = ssub.s32 %s10, 2
    %s23 = sadd.s32 1, %s18
    %p24 = scmp.ge.s32.totalorder %s23, 1
    %s25 = scalar_select %p24, 0, %s23
    %s26 = sadd.s32 1, %s17
    %s27 = scalar_select %p24, %s26, %s17
    %p28 = scmp.ge.s32.totalorder %s27, 2
    %s29 = scalar_select %p28, 0, %s27
    %s30 = ssub.s32 %s17, %s29
    %s31 = ssub.s32 %s18, %s25
    %s32 = sor.u32 %s30, %s31
    %p33 = scmp.eq.s32.totalorder %s32, 0
    %s35 = sadd.s32 %s34, 1
    %s36 = scalar_select %p33, %s34, %s35
    %p39 = pneg %p33
    %p40 = scmp.eq.s32.totalorder %s10, 1
    %p41 = por %p39, %p40
    %p42 = scmp.ne.s32.totalorder %s34, %s37
    %p43 = scmp.eq.s32.totalorder %s10, 0
    %p44 = por %p42, %p43
    %p45 = scmp.ne.s32.totalorder %s34, %s37
    %p46 = scmp.eq.s32.totalorder %s15, 1
    %p47 = por %p45, %p46
    %p48 = scmp.ne.s32.totalorder %s37, %s38
    %p49 = scmp.eq.s32.totalorder %s15, 0
    %p50 = por %p48, %p49
    %p51 = scmp.ne.s32.totalorder %s37, %s38
    %p52 = scmp.eq.s32.totalorder %s16, 1
    %p53 = por %p51, %p52
    %p55 = scmp.ne.s32.totalorder %s38, %s54
    %p56 = scmp.eq.s32.totalorder %s16, 0
    %p57 = por %p55, %p56
    %s58 = sadd.s32 %s18, 1
    %s59 = smul.u32 %s58, 13
    %s60 = sadd.s32 %s25, 1
    %s61 = smul.u32 %s60, 13
    %s62 = ssub.s32 %s17, %s29
    %s63 = ssub.s32 %s59, %s61
    %s64 = sor.u32 %s62, %s63
    %p65 = scmp.eq.s32.totalorder %s64, 0
    %s67 = sadd.s32 %s66, 1
    %s68 = scalar_select %p65, %s66, %s67
    %p71 = pneg %p65
    %p72 = scmp.eq.s32.totalorder %s10, 1
    %p73 = por %p71, %p72
    %p74 = scmp.ne.s32.totalorder %s66, %s69
    %p75 = scmp.eq.s32.totalorder %s10, 0
    %p76 = por %p74, %p75
    %p77 = scmp.ne.s32.totalorder %s66, %s69
    %p78 = scmp.eq.s32.totalorder %s15, 1
    %p79 = por %p77, %p78
    %p80 = scmp.ne.s32.totalorder %s69, %s70
    %p81 = scmp.eq.s32.totalorder %s15, 0
    %p82 = por %p80, %p81
    %p83 = scmp.ne.s32.totalorder %s69, %s70
    %p84 = scmp.eq.s32.totalorder %s16, 1
    %p85 = por %p83, %p84
    %p87 = scmp.ne.s32.totalorder %s70, %s86
    %p88 = scmp.eq.s32.totalorder %s16, 0
    %p89 = por %p87, %p88
    %s91 = sadd.s32 %s90, 1
    %p94 = scmp.eq.s32.totalorder %s10, 1
    %p95 = scmp.ne.s32.totalorder %s90, %s92
    %p96 = scmp.eq.s32.totalorder %s10, 0
    %p97 = por %p95, %p96
    %p98 = scmp.ne.s32.totalorder %s90, %s92
    %p99 = scmp.eq.s32.totalorder %s15, 1
    %p100 = por %p98, %p99
    %p101 = scmp.ne.s32.totalorder %s92, %s93
    %p102 = scmp.eq.s32.totalorder %s15, 0
    %p103 = por %p101, %p102
    %p104 = scmp.ne.s32.totalorder %s92, %s93
    %p105 = scmp.eq.s32.totalorder %s16, 1
    %p106 = por %p104, %p105
    %p108 = scmp.ne.s32.totalorder %s93, %s107
    %p109 = scmp.eq.s32.totalorder %s16, 0
    %p110 = por %p108, %p109
    %s112 = sadd.s32 %s111, 1
    %p115 = scmp.eq.s32.totalorder %s10, 1
    %p116 = scmp.ne.s32.totalorder %s111, %s113
    %p117 = scmp.eq.s32.totalorder %s10, 0
    %p118 = por %p116, %p117
    %p119 = scmp.ne.s32.totalorder %s111, %s113
    %p120 = scmp.eq.s32.totalorder %s15, 1
    %p121 = por %p119, %p120
    %p122 = scmp.ne.s32.totalorder %s113, %s114
    %p123 = scmp.eq.s32.totalorder %s15, 0
    %p124 = por %p122, %p123
    %p125 = scmp.ne.s32.totalorder %s113, %s114
    %p126 = scmp.eq.s32.totalorder %s16, 1
    %p127 = por %p125, %p126
    %p129 = scmp.ne.s32.totalorder %s114, %s128
    %p130 = scmp.eq.s32.totalorder %s16, 0
    %p131 = por %p129, %p130
    %s132 = ssub.s32 %s17, %s29
    %s133 = ssub.s32 %s18, %s25
    %s134 = sor.u32 %s132, %s133
    %p135 = scmp.eq.s32.totalorder %s134, 0
    %s137 = sadd.s32 %s136, 1
    %s138 = scalar_select %p135, %s136, %s137
    %p141 = pneg %p135
    %p142 = scmp.eq.s32.totalorder %s10, 1
    %p143 = por %p141, %p142
    %p144 = scmp.ne.s32.totalorder %s136, %s139
    %p145 = scmp.eq.s32.totalorder %s10, 0
    %p146 = por %p144, %p145
    %p147 = scmp.ne.s32.totalorder %s136, %s139
    %p148 = scmp.eq.s32.totalorder %s15, 1
    %p149 = por %p147, %p148
    %p150 = scmp.ne.s32.totalorder %s139, %s140
    %p151 = scmp.eq.s32.totalorder %s15, 0
    %p152 = por %p150, %p151
    %p153 = scmp.ne.s32.totalorder %s139, %s140
    %p154 = scmp.eq.s32.totalorder %s16, 1
    %p155 = por %p153, %p154
    %p157 = scmp.ne.s32.totalorder %s140, %s156
    %p158 = scmp.eq.s32.totalorder %s16, 0
    %p159 = por %p157, %p158
    %p160 = scmp.le.s32.totalorder 1, %s10
    %p161 = scmp.lt.s32.totalorder %s10, 3
    %p162 = pnand %p160, %p161
    %p163 = pneg %p162
    // Predicated region
    $region9: #{forward.41} parent=5 // pred_check
      _
    $region10: #{forward.41} parent=5 // pred_check_branch
      %165 = sbr.rel (%p162) target = $region12
    $region11: #{forward.41} parent=5 // pred_region
      %s166 = ssub.s32 %s10, 1
      // Predicated region
      $region13: #{forward.41} parent=11 // pred_check
        %p167 = pneg %p103
      $region14: #{forward.41} parent=11 // pred_check_branch
        %169 = sbr.rel (%p167) target = $region16
      $region15: #{forward.41} parent=11 // pred_region
        _
      $region16: #{forward.41} parent=11 // pred_fallthru
        _
      // Predicated region
      $region17: #{forward.41} parent=11 // pred_check
        %p170 = pneg %p124
      $region18: #{forward.41} parent=11 // pred_check_branch
        %172 = sbr.rel (%p170) target = $region20
      $region19: #{forward.41} parent=11 // pred_region
        _
      $region20: #{forward.41} parent=11 // pred_fallthru
        _
    $region12: #{forward.41} parent=5 // pred_fallthru
      _
    %p173 = scmp.lt.s32.totalorder %s10, 2
    // Predicated region
    $region21: #{forward.41} parent=5 // pred_check
      %p174 = pneg %p173
    $region22: #{forward.41} parent=5 // pred_check_branch
      %176 = sbr.rel (%p174) target = $region24
    $region23: #{forward.41} parent=5 // pred_region
      // Predicated region
      $region25: #{forward.41} parent=23 // pred_check
        %p177 = pneg %p44
      $region26: #{forward.41} parent=23 // pred_check_branch
        %179 = sbr.rel (%p177) target = $region28
      $region27: #{forward.41} parent=23 // pred_region
        %s180 = smul.u32 13, %s18
        %s181 = ssub.s32 14, %s180
        %p182 = scmp.lt.s32.totalorder %s181, 13
        %s183 = scalar_select %p182, %s181, 13
        %s184 = smul.u32 4, %s183
        %p185 = scmp.lt.s32.totalorder %s17, 1
        %s186 = scalar_select %p185, %s17, 1
        %p187 = scmp.lt.s32.totalorder %s180, 13
        %s188 = scalar_select %p187, %s180, 13
        %s189 = smul.addr %s186, 14
        %s190 = sadd.s32 %s188, %s189
        %s191 = smul.addr %s190, 4
        %s192 = scalar_lea.vmem %s0, %s191
        %s193 = smul.u32 13, %s18
        %s194 = ssub.s32 14, %s193
        %p195 = scmp.lt.s32.totalorder %s194, 13
        %s196 = scalar_select %p195, %s194, 13
        %s197 = smul.u32 4, %s196
      $region28: #{forward.41} parent=23 // pred_fallthru
        _
      // Predicated region
      $region29: #{forward.41} parent=23 // pred_check
        %p198 = pneg %p76
      $region30: #{forward.41} parent=23 // pred_check_branch
        %200 = sbr.rel (%p198) target = $region32
      $region31: #{forward.41} parent=23 // pred_region
        %s201 = sadd.s32 %s18, 1
        %s202 = smul.u32 %s201, 13
        %p203 = scmp.lt.s32.totalorder %s17, 1
        %s204 = scalar_select %p203, %s17, 1
        %p205 = scmp.lt.s32.totalorder %s202, 13
        %s206 = scalar_select %p205, %s202, 13
        %s207 = smul.addr %s204, 14
        %s208 = sadd.s32 %s206, %s207
        %s209 = smul.addr %s208, 4
        %s210 = scalar_lea.vmem %s1, %s209
        %s211 = sadd.s32 %s18, 1
        %s212 = smul.u32 %s211, 13
      $region32: #{forward.41} parent=23 // pred_fallthru
        _
    $region24: #{forward.41} parent=5 // pred_fallthru
      _
    %p213 = scmp.le.s32.totalorder 1, %s10
    %p214 = scmp.lt.s32.totalorder %s10, 3
    %p215 = pnand %p213, %p214
    %p216 = pneg %p215
    // Predicated region
    $region33: #{forward.41} parent=5 // pred_check
      _
    $region34: #{forward.41} parent=5 // pred_check_branch
      %218 = sbr.rel (%p215) target = $region36
    $region35: #{forward.41} parent=5 // pred_region
      %s219 = ssub.s32 %s10, 1
      %s220 = smul.u32 13, %s20
      %s221 = ssub.s32 14, %s220
      %p222 = scmp.lt.s32.totalorder %s221, 13
      %s223 = scalar_select %p222, %s221, 13
      %s224 = smul.u32 4, %s223
      %p225 = scmp.lt.s32.totalorder %s19, 1
      %s226 = scalar_select %p225, %s19, 1
      %p227 = scmp.lt.s32.totalorder %s220, 13
      %s228 = scalar_select %p227, %s220, 13
      %s229 = smul.addr %s226, 14
      %s230 = sadd.s32 %s228, %s229
      %s231 = smul.addr %s230, 4
      %s232 = scalar_lea.vmem %s0, %s231
      %p233 = pneg %p50
      %p234 = pneg %p47
      %s235 = sadd.s32 %s20, 1
      %s236 = smul.u32 %s235, 13
      %p237 = scmp.lt.s32.totalorder %s19, 1
      %s238 = scalar_select %p237, %s19, 1
      %p239 = scmp.lt.s32.totalorder %s236, 13
      %s240 = scalar_select %p239, %s236, 13
      %s241 = smul.addr %s238, 14
      %s242 = sadd.s32 %s240, %s241
      %s243 = smul.addr %s242, 4
      %s244 = scalar_lea.vmem %s1, %s243
      %p245 = pneg %p82
      %p246 = pneg %p79
      %p247 = pneg %p103
      %p248 = pneg %p100
      %p249 = pneg %p124
      %p250 = pneg %p121
      %p251 = pneg %p152
      %p252 = pneg %p149
      %s253 = smul.u32 13, %s20
      %p254 = scmp.lt.s32.totalorder %s19, 1
      %s255 = scalar_select %p254, %s19, 1
      %p256 = scmp.lt.s32.totalorder %s253, 12
      %s257 = scalar_select %p256, %s253, 12
      %s258 = smul.addr %s255, 13
      %s259 = sadd.s32 %s257, %s258
      %s260 = smul.addr %s259, 4
      %s261 = scalar_lea.vmem %s4, %s260
      %s262 = smul.u32 13, %s20
      %s263 = ssub.s32 14, %s262
      %p264 = scmp.lt.s32.totalorder %s263, 13
      %s265 = scalar_select %p264, %s263, 13
      %s266 = smul.u32 4, %s265
      %p267 = scmp.lt.s32.totalorder %s19, 1
      %s268 = scalar_select %p267, %s19, 1
      %p269 = scmp.lt.s32.totalorder %s262, 13
      %s270 = scalar_select %p269, %s262, 13
      %s271 = smul.addr %s268, 14
      %s272 = sadd.s32 %s270, %s271
      %s273 = smul.addr %s272, 4
      %s274 = scalar_lea.vmem %s0, %s273
      %s275 = smul.u32 13, %s20
      %s276 = ssub.s32 14, %s275
      %p277 = scmp.lt.s32.totalorder %s276, 13
      %s278 = scalar_select %p277, %s276, 13
      %s279 = smul.u32 4, %s278
      %s280 = sadd.s32 %s20, 1
      %s281 = smul.u32 %s280, 13
      %p282 = scmp.lt.s32.totalorder %s19, 1
      %s283 = scalar_select %p282, %s19, 1
      %p284 = scmp.lt.s32.totalorder %s281, 13
      %s285 = scalar_select %p284, %s281, 13
      %s286 = smul.addr %s283, 14
      %s287 = sadd.s32 %s285, %s286
      %s288 = smul.addr %s287, 4
      %s289 = scalar_lea.vmem %s1, %s288
      %s290 = sadd.s32 %s20, 1
      %s291 = smul.u32 %s290, 13
      %s292 = smul.u32 13, %s20
      %p293 = scmp.lt.s32.totalorder %s19, 1
      %s294 = scalar_select %p293, %s19, 1
      %p295 = scmp.lt.s32.totalorder %s292, 12
      %s296 = scalar_select %p295, %s292, 12
      %s297 = smul.addr %s294, 13
      %s298 = sadd.s32 %s296, %s297
      %s299 = smul.addr %s298, 4
      %s300 = scalar_lea.vmem %s4, %s299
      %s301 = smul.u32 13, %s20
      %v303 = vld [vmem:[%s274] sm:$0xf]
      %v304 = vld [vmem:[%s274 + $0x4] sm:$0xf]
      %v305 = vld [vmem:[%s274 + $0x8] sm:$0xf]
      %v306 = vld [vmem:[%s274 + $0xc] sm:$0xf]
      %v307 = vld [vmem:[%s274 + $0x10] sm:$0xf]
      %v308 = vld [vmem:[%s274 + $0x14] sm:$0xf]
      %v309 = vld [vmem:[%s274 + $0x18] sm:$0xf]
      %v310 = vld [vmem:[%s274 + $0x1c] sm:$0xf]
      %v311 = vld [vmem:[%s274 + $0x20] sm:$0xf]
      %v312 = vld [vmem:[%s274 + $0x24] sm:$0xf]
      %v313 = vld [vmem:[%s274 + $0x28] sm:$0xf]
      %v314 = vld [vmem:[%s274 + $0x2c] sm:$0xf]
      %v315 = vld [vmem:[%s274 + $0x30] sm:$0xf]
      %v316 = vld [vmem:[%s289] sm:$0xf]
      %v330 = vunpack.c.l.b16 %v303
      %v331 = vunpack.c.l.b16 %v304
      %v332 = vunpack.c.l.b16 %v305
      %v333 = vunpack.c.l.b16 %v306
      %v334 = vunpack.c.l.b16 %v307
      %v335 = vunpack.c.l.b16 %v308
      %v336 = vunpack.c.l.b16 %v309
      %v337 = vunpack.c.l.b16 %v310
      %v338 = vunpack.c.l.b16 %v311
      %v339 = vunpack.c.l.b16 %v312
      %v340 = vunpack.c.l.b16 %v313
      %v341 = vunpack.c.l.b16 %v314
      %v342 = vunpack.c.l.b16 %v315
      %v343 = vpack.c.b16 %v331, %v330
      %v344 = vpack.c.b16 %v333, %v332
      %v345 = vpack.c.b16 %v335, %v334
      %v346 = vpack.c.b16 %v337, %v336
      %v347 = vpack.c.b16 %v339, %v338
      %v348 = vpack.c.b16 %v341, %v340
      %v349 = vpack.c.b16 %v342, %v342
      %v357 = vunpack.c.l.b16 %v316
      %v358 = vpack.c.b16 %v357, %v357
      %vm359 = vcmask 1043456
      %v362 = vsel %vm359, %v349, %v358
      %v364 = vunpack.c.l.bf16 %v343
      %v365 = vunpack.c.h.bf16 %v343
      %v366 = vunpack.c.l.bf16 %v344
      %v367 = vunpack.c.h.bf16 %v344
      %v368 = vunpack.c.l.bf16 %v345
      %v369 = vunpack.c.h.bf16 %v345
      %v370 = vunpack.c.l.bf16 %v346
      %v371 = vunpack.c.h.bf16 %v346
      %v372 = vunpack.c.l.bf16 %v347
      %v373 = vunpack.c.h.bf16 %v347
      %v374 = vunpack.c.l.bf16 %v348
      %v375 = vunpack.c.h.bf16 %v348
      %v376 = vunpack.c.l.bf16 %v362
      %v377 = vunpack.c.h.bf16 %v362
      %vm378 = vcmp.ge.f32.partialorder %v364, 0.0
      %vm379 = vcmp.ge.f32.partialorder %v365, 0.0
      %vm380 = vcmp.ge.f32.partialorder %v366, 0.0
      %vm381 = vcmp.ge.f32.partialorder %v367, 0.0
      %vm382 = vcmp.ge.f32.partialorder %v368, 0.0
      %vm383 = vcmp.ge.f32.partialorder %v369, 0.0
      %vm384 = vcmp.ge.f32.partialorder %v370, 0.0
      %vm385 = vcmp.ge.f32.partialorder %v371, 0.0
      %vm386 = vcmp.ge.f32.partialorder %v372, 0.0
      %vm387 = vcmp.ge.f32.partialorder %v373, 0.0
      %vm388 = vcmp.ge.f32.partialorder %v374, 0.0
      %vm389 = vcmp.ge.f32.partialorder %v375, 0.0
      %vm390 = vcmp.ge.f32.partialorder %v376, 0.0
      %vm391 = vcmp.ge.f32.partialorder %v377, 0.0
      %v392 = vmul.f32 %v364, 0.2
      %v393 = vmul.f32 %v365, 0.2
      %v394 = vmul.f32 %v366, 0.2
      %v395 = vmul.f32 %v367, 0.2
      %v396 = vmul.f32 %v368, 0.2
      %v397 = vmul.f32 %v369, 0.2
      %v398 = vmul.f32 %v370, 0.2
      %v399 = vmul.f32 %v371, 0.2
      %v400 = vmul.f32 %v372, 0.2
      %v401 = vmul.f32 %v373, 0.2
      %v402 = vmul.f32 %v374, 0.2
      %v403 = vmul.f32 %v375, 0.2
      %v404 = vmul.f32 %v376, 0.2
      %v405 = vmul.f32 %v377, 0.2
      %v406 = vsel %vm378, %v364, %v392
      %v407 = vsel %vm379, %v365, %v393
      %v408 = vsel %vm380, %v366, %v394
      %v409 = vsel %vm381, %v367, %v395
      %v410 = vsel %vm382, %v368, %v396
      %v411 = vsel %vm383, %v369, %v397
      %v412 = vsel %vm384, %v370, %v398
      %v413 = vsel %vm385, %v371, %v399
      %v414 = vsel %vm386, %v372, %v400
      %v415 = vsel %vm387, %v373, %v401
      %v416 = vsel %vm388, %v374, %v402
      %v417 = vsel %vm389, %v375, %v403
      %v418 = vsel %vm390, %v376, %v404
      %v419 = vsel %vm391, %v377, %v405
      %v420 = vpack.c.bf16 %v406, %v406
      %v421 = vpack.c.bf16 %v407, %v407
      %v422 = vpack.c.bf16 %v408, %v408
      %v423 = vpack.c.bf16 %v409, %v409
      %v424 = vpack.c.bf16 %v410, %v410
      %v425 = vpack.c.bf16 %v411, %v411
      %v426 = vpack.c.bf16 %v412, %v412
      %v427 = vpack.c.bf16 %v413, %v413
      %v428 = vpack.c.bf16 %v414, %v414
      %v429 = vpack.c.bf16 %v415, %v415
      %v430 = vpack.c.bf16 %v416, %v416
      %v431 = vpack.c.bf16 %v417, %v417
      %v432 = vpack.c.bf16 %v418, %v418
      %v433 = vpack.c.bf16 %v419, %v419
      %v447 = vunpack.c.l.b16 %v420
      %v448 = vunpack.c.l.b16 %v421
      %v449 = vunpack.c.l.b16 %v422
      %v450 = vunpack.c.l.b16 %v423
      %v451 = vunpack.c.l.b16 %v424
      %v452 = vunpack.c.l.b16 %v425
      %v453 = vunpack.c.l.b16 %v426
      %v454 = vunpack.c.l.b16 %v427
      %v455 = vunpack.c.l.b16 %v428
      %v456 = vunpack.c.l.b16 %v429
      %v457 = vunpack.c.l.b16 %v430
      %v458 = vunpack.c.l.b16 %v431
      %v459 = vunpack.c.l.b16 %v432
      %v460 = vpack.c.b16 %v448, %v447
      %v461 = vpack.c.b16 %v450, %v449
      %v462 = vpack.c.b16 %v452, %v451
      %v463 = vpack.c.b16 %v454, %v453
      %v464 = vpack.c.b16 %v456, %v455
      %v465 = vpack.c.b16 %v458, %v457
      %v466 = vpack.c.b16 %v459, %v459
      %v468 = vunpack.c.l.b16 %v433
      %v469 = vpack.c.b16 %v468, %v459
      %vm470 = vsmask.f32 7424
      %v472 = vshrl.u32 %v460, 16
      %v474 = vshll.u32 %v460, 16
      %v476 = vrot.slane %v474, 1
      %v477 = vor.u32 %v472, %v476
      %v479 = vshll.u32 %v461, 16
      %v481 = vrot.slane %v479, 1
      %v482 = vsel %vm470, %v477, %v481
      %v483 = vshrl.u32 %v461, 16
      %v485 = vor.u32 %v483, %v481
      %v487 = vshll.u32 %v462, 16
      %v489 = vrot.slane %v487, 1
      %v490 = vsel %vm470, %v485, %v489
      %v491 = vshrl.u32 %v462, 16
      %v493 = vor.u32 %v491, %v489
      %v495 = vshll.u32 %v463, 16
      %v497 = vrot.slane %v495, 1
      %v498 = vsel %vm470, %v493, %v497
      %v499 = vshrl.u32 %v463, 16
      %v501 = vor.u32 %v499, %v497
      %v503 = vshll.u32 %v464, 16
      %v505 = vrot.slane %v503, 1
      %v506 = vsel %vm470, %v501, %v505
      %v507 = vshrl.u32 %v464, 16
      %v509 = vor.u32 %v507, %v505
      %v511 = vshll.u32 %v465, 16
      %v513 = vrot.slane %v511, 1
      %v514 = vsel %vm470, %v509, %v513
      %v515 = vshrl.u32 %v465, 16
      %v517 = vor.u32 %v515, %v513
      %v519 = vshll.u32 %v469, 16
      %v521 = vrot.slane %v519, 1
      %v522 = vsel %vm470, %v517, %v521
      %v523 = vshrl.u32 %v469, 16
      %v525 = vor.u32 %v523, %v521
      %526 = vrot.lane.b32.xlu0 %v482, 8
      %v527 = vpop.permute.xlu0 %526
      %528 = vrot.lane.b32.xlu0 %v490, 8
      %v529 = vpop.permute.xlu0 %528
      %530 = vrot.lane.b32.xlu0 %v498, 8
      %v531 = vpop.permute.xlu0 %530
      %532 = vrot.lane.b32.xlu0 %v506, 8
      %v533 = vpop.permute.xlu0 %532
      %534 = vrot.lane.b32.xlu0 %v514, 8
      %v535 = vpop.permute.xlu0 %534
      %536 = vrot.lane.b32.xlu0 %v522, 8
      %v537 = vpop.permute.xlu0 %536
      %538 = vrot.lane.b32.xlu0 %v525, 8
      %v539 = vpop.permute.xlu0 %538
      %vm540 = vcmask 1046528
      %v541 = vrot.slane %v460, 1
      %v542 = vrot.slane %v461, 1
      %v543 = vsel %vm540, %v541, %v542
      %v544 = vrot.slane %v462, 1
      %v545 = vsel %vm540, %v542, %v544
      %v546 = vrot.slane %v463, 1
      %v547 = vsel %vm540, %v544, %v546
      %v548 = vrot.slane %v464, 1
      %v549 = vsel %vm540, %v546, %v548
      %v550 = vrot.slane %v465, 1
      %v551 = vsel %vm540, %v548, %v550
      %v552 = vrot.slane %v469, 1
      %v553 = vsel %vm540, %v550, %v552
      %554 = vrot.lane.b32.xlu0 %v543, 16
      %v555 = vpop.permute.xlu0 %554
      %556 = vrot.lane.b32.xlu0 %v545, 16
      %v557 = vpop.permute.xlu0 %556
      %558 = vrot.lane.b32.xlu0 %v547, 16
      %v559 = vpop.permute.xlu0 %558
      %560 = vrot.lane.b32.xlu0 %v549, 16
      %v561 = vpop.permute.xlu0 %560
      %562 = vrot.lane.b32.xlu0 %v551, 16
      %v563 = vpop.permute.xlu0 %562
      %564 = vrot.lane.b32.xlu0 %v553, 16
      %v565 = vpop.permute.xlu0 %564
      %566 = vrot.lane.b32.xlu0 %v552, 16
      %v567 = vpop.permute.xlu0 %566
      %vm568 = vsmask.f32 6400
      %v569 = vrot.slane %v472, 1
      %v570 = vrot.slane %v474, 2
      %v571 = vor.u32 %v569, %v570
      %v572 = vrot.slane %v483, 1
      %v573 = vrot.slane %v479, 2
      %v574 = vor.u32 %v572, %v573
      %v575 = vsel %vm568, %v571, %v574
      %v576 = vrot.slane %v491, 1
      %v577 = vrot.slane %v487, 2
      %v578 = vor.u32 %v576, %v577
      %v579 = vsel %vm568, %v574, %v578
      %v580 = vrot.slane %v499, 1
      %v581 = vrot.slane %v495, 2
      %v582 = vor.u32 %v580, %v581
      %v583 = vsel %vm568, %v578, %v582
      %v584 = vrot.slane %v507, 1
      %v585 = vrot.slane %v503, 2
      %v586 = vor.u32 %v584, %v585
      %v587 = vsel %vm568, %v582, %v586
      %v588 = vrot.slane %v515, 1
      %v589 = vrot.slane %v511, 2
      %v590 = vor.u32 %v588, %v589
      %v591 = vsel %vm568, %v586, %v590
      %v592 = vrot.slane %v523, 1
      %v593 = vrot.slane %v519, 2
      %v594 = vor.u32 %v592, %v593
      %v595 = vsel %vm568, %v590, %v594
      %596 = vrot.lane.b32.xlu0 %v575, 24
      %v597 = vpop.permute.xlu0 %596
      %598 = vrot.lane.b32.xlu0 %v579, 24
      %v599 = vpop.permute.xlu0 %598
      %600 = vrot.lane.b32.xlu0 %v583, 24
      %v601 = vpop.permute.xlu0 %600
      %602 = vrot.lane.b32.xlu0 %v587, 24
      %v603 = vpop.permute.xlu0 %602
      %604 = vrot.lane.b32.xlu0 %v591, 24
      %v605 = vpop.permute.xlu0 %604
      %606 = vrot.lane.b32.xlu0 %v595, 24
      %v607 = vpop.permute.xlu0 %606
      %608 = vrot.lane.b32.xlu0 %v594, 24
      %v609 = vpop.permute.xlu0 %608
      %vm610 = vcmask 1045504
      %v611 = vrot.slane %v460, 2
      %v612 = vrot.slane %v461, 2
      %v613 = vsel %vm610, %v611, %v612
      %v614 = vrot.slane %v462, 2
      %v615 = vsel %vm610, %v612, %v614
      %v616 = vrot.slane %v463, 2
      %v617 = vsel %vm610, %v614, %v616
      %v618 = vrot.slane %v464, 2
      %v619 = vsel %vm610, %v616, %v618
      %v620 = vrot.slane %v465, 2
      %v621 = vsel %vm610, %v618, %v620
      %v622 = vrot.slane %v469, 2
      %v623 = vsel %vm610, %v620, %v622
      %624 = vrot.lane.b32.xlu0 %v613, 32
      %v625 = vpop.permute.xlu0 %624
      %626 = vrot.lane.b32.xlu0 %v615, 32
      %v627 = vpop.permute.xlu0 %626
      %628 = vrot.lane.b32.xlu0 %v617, 32
      %v629 = vpop.permute.xlu0 %628
      %630 = vrot.lane.b32.xlu0 %v619, 32
      %v631 = vpop.permute.xlu0 %630
      %632 = vrot.lane.b32.xlu0 %v621, 32
      %v633 = vpop.permute.xlu0 %632
      %634 = vrot.lane.b32.xlu0 %v623, 32
      %v635 = vpop.permute.xlu0 %634
      %636 = vrot.lane.b32.xlu0 %v622, 32
      %v637 = vpop.permute.xlu0 %636
      %vm638 = vsmask.f32 5376
      %v639 = vrot.slane %v472, 2
      %v640 = vrot.slane %v474, 3
      %v641 = vor.u32 %v639, %v640
      %v642 = vrot.slane %v483, 2
      %v643 = vrot.slane %v479, 3
      %v644 = vor.u32 %v642, %v643
      %v645 = vsel %vm638, %v641, %v644
      %v646 = vrot.slane %v491, 2
      %v647 = vrot.slane %v487, 3
      %v648 = vor.u32 %v646, %v647
      %v649 = vsel %vm638, %v644, %v648
      %v650 = vrot.slane %v499, 2
      %v651 = vrot.slane %v495, 3
      %v652 = vor.u32 %v650, %v651
      %v653 = vsel %vm638, %v648, %v652
      %v654 = vrot.slane %v507, 2
      %v655 = vrot.slane %v503, 3
      %v656 = vor.u32 %v654, %v655
      %v657 = vsel %vm638, %v652, %v656
      %v658 = vrot.slane %v515, 2
      %v659 = vrot.slane %v511, 3
      %v660 = vor.u32 %v658, %v659
      %v661 = vsel %vm638, %v656, %v660
      %v662 = vrot.slane %v523, 2
      %v663 = vrot.slane %v519, 3
      %v664 = vor.u32 %v662, %v663
      %v665 = vsel %vm638, %v660, %v664
      %666 = vrot.lane.b32.xlu0 %v645, 40
      %v667 = vpop.permute.xlu0 %666
      %668 = vrot.lane.b32.xlu0 %v649, 40
      %v669 = vpop.permute.xlu0 %668
      %670 = vrot.lane.b32.xlu0 %v653, 40
      %v671 = vpop.permute.xlu0 %670
      %672 = vrot.lane.b32.xlu0 %v657, 40
      %v673 = vpop.permute.xlu0 %672
      %674 = vrot.lane.b32.xlu0 %v661, 40
      %v675 = vpop.permute.xlu0 %674
      %676 = vrot.lane.b32.xlu0 %v665, 40
      %v677 = vpop.permute.xlu0 %676
      %678 = vrot.lane.b32.xlu0 %v664, 40
      %v679 = vpop.permute.xlu0 %678
      %vm680 = vcmask 1044480
      %v681 = vrot.slane %v460, 3
      %v682 = vrot.slane %v461, 3
      %v683 = vsel %vm680, %v681, %v682
      %v684 = vrot.slane %v462, 3
      %v685 = vsel %vm680, %v682, %v684
      %v686 = vrot.slane %v463, 3
      %v687 = vsel %vm680, %v684, %v686
      %v688 = vrot.slane %v464, 3
      %v689 = vsel %vm680, %v686, %v688
      %v690 = vrot.slane %v465, 3
      %v691 = vsel %vm680, %v688, %v690
      %v692 = vrot.slane %v469, 3
      %v693 = vsel %vm680, %v690, %v692
      %694 = vrot.lane.b32.xlu0 %v683, 48
      %v695 = vpop.permute.xlu0 %694
      %696 = vrot.lane.b32.xlu0 %v685, 48
      %v697 = vpop.permute.xlu0 %696
      %698 = vrot.lane.b32.xlu0 %v687, 48
      %v699 = vpop.permute.xlu0 %698
      %700 = vrot.lane.b32.xlu0 %v689, 48
      %v701 = vpop.permute.xlu0 %700
      %702 = vrot.lane.b32.xlu0 %v691, 48
      %v703 = vpop.permute.xlu0 %702
      %704 = vrot.lane.b32.xlu0 %v693, 48
      %v705 = vpop.permute.xlu0 %704
      %706 = vrot.lane.b32.xlu0 %v692, 48
      %v707 = vpop.permute.xlu0 %706
      %vm708 = vcmask 64512
      %v710 = vsel %vm708, %v460, %v527
      %v712 = vsel %vm708, %v461, %v529
      %v714 = vsel %vm708, %v462, %v531
      %v716 = vsel %vm708, %v463, %v533
      %v718 = vsel %vm708, %v464, %v535
      %v720 = vsel %vm708, %v465, %v537
      %v723 = vsel %vm708, %v466, %v539
      %vm724 = vcmask 130048
      %v726 = vsel %vm724, %v710, %v555
      %v728 = vsel %vm724, %v712, %v557
      %v730 = vsel %vm724, %v714, %v559
      %v732 = vsel %vm724, %v716, %v561
      %v734 = vsel %vm724, %v718, %v563
      %v736 = vsel %vm724, %v720, %v565
      %v738 = vsel %vm724, %v723, %v567
      %vm739 = vcmask 195584
      %v741 = vsel %vm739, %v726, %v597
      %v743 = vsel %vm739, %v728, %v599
      %v745 = vsel %vm739, %v730, %v601
      %v747 = vsel %vm739, %v732, %v603
      %v749 = vsel %vm739, %v734, %v605
      %v751 = vsel %vm739, %v736, %v607
      %v753 = vsel %vm739, %v738, %v609
      %vm754 = vcmask 261120
      %v756 = vsel %vm754, %v741, %v625
      %v758 = vsel %vm754, %v743, %v627
      %v760 = vsel %vm754, %v745, %v629
      %v762 = vsel %vm754, %v747, %v631
      %v764 = vsel %vm754, %v749, %v633
      %v766 = vsel %vm754, %v751, %v635
      %v768 = vsel %vm754, %v753, %v637
      %vm769 = vcmask 326656
      %v771 = vsel %vm769, %v756, %v667
      %v773 = vsel %vm769, %v758, %v669
      %v775 = vsel %vm769, %v760, %v671
      %v777 = vsel %vm769, %v762, %v673
      %v779 = vsel %vm769, %v764, %v675
      %v781 = vsel %vm769, %v766, %v677
      %v783 = vsel %vm769, %v768, %v679
      %vm784 = vcmask 392192
      %v786 = vsel %vm784, %v771, %v695
      %v788 = vsel %vm784, %v773, %v697
      %v790 = vsel %vm784, %v775, %v699
      %v792 = vsel %vm784, %v777, %v701
      %v794 = vsel %vm784, %v779, %v703
      %v796 = vsel %vm784, %v781, %v705
      %v798 = vsel %vm784, %v783, %v707
      %v799 = vld [vmem:[%s2] sm:$0xf]
      %v800 = vld [vmem:[%s2 + $0x4] sm:$0xf]
      %v801 = vld [vmem:[%s2 + $0x8] sm:$0xf]
      %v802 = vld [vmem:[%s2 + $0xc] sm:$0xf]
      %v803 = vld [vmem:[%s2 + $0x10] sm:$0xf]
      %v804 = vld [vmem:[%s2 + $0x14] sm:$0xf]
      %v805 = vld [vmem:[%s2 + $0x18] sm:$0xf]
      %v806 = vld [vmem:[%s3] sm:$0x1]
      %v808 = vperm.slane %v806, 0
      %v817 = vunpack.c.l.b16 %v799
      %v818 = vunpack.c.l.b16 %v800
      %v819 = vunpack.c.l.b16 %v801
      %v820 = vunpack.c.l.b16 %v802
      %v821 = vunpack.c.l.b16 %v803
      %v822 = vunpack.c.l.b16 %v804
      %v823 = vunpack.c.l.b16 %v805
      %v824 = vpack.c.b16 %v818, %v817
      %v825 = vpack.c.b16 %v820, %v819
      %v826 = vpack.c.b16 %v822, %v821
      %v827 = vpack.c.b16 %v823, %v823
      %vm831 = vcmask 457728
      %v832 = vsel %vm831, %v786, 0
      %v834 = vsel %vm831, %v788, 0
      %v836 = vsel %vm831, %v790, 0
      %v838 = vsel %vm831, %v792, 0
      %v840 = vsel %vm831, %v794, 0
      %v842 = vsel %vm831, %v796, 0
      %v844 = vsel %vm831, %v798, 0
      %v847 = vsel %vm359, %v827, 0
      %849 = vmatpush.bf16.msra.mxu0 0
      %850 = vmatpush.bf16.msra.mxu0 0
      %851 = vmatpush.bf16.msra.mxu0 0
      %852 = vmatpush.bf16.msra.mxu0 0
      %853 = vmatpush.bf16.msra.mxu0 %v847
      %854 = vmatpush.bf16.msra.mxu0 %v826
      %855 = vmatpush.bf16.msra.mxu0 %v825
      %856 = vmatpush.bf16.msra.mxu0 %v824
      %857 = vmatmul.bf16.gmra.mxu0 %v832
      %v858 = vpop.f32.mrf.mxu0
      %v859 = vadd.f32 %v808, %v858
      %v860 = vpop.f32.mrf.mxu0
      %v861 = vadd.f32 %v808, %v860
      %862 = vmatmul.bf16.gmra.mxu0 %v834
      %v863 = vpop.f32.mrf.mxu0
      %v864 = vadd.f32 %v808, %v863
      %v865 = vpop.f32.mrf.mxu0
      %v866 = vadd.f32 %v808, %v865
      %867 = vmatmul.bf16.gmra.mxu0 %v836
      %v868 = vpop.f32.mrf.mxu0
      %v869 = vadd.f32 %v808, %v868
      %v870 = vpop.f32.mrf.mxu0
      %v871 = vadd.f32 %v808, %v870
      %872 = vmatmul.bf16.gmra.mxu0 %v838
      %v873 = vpop.f32.mrf.mxu0
      %v874 = vadd.f32 %v808, %v873
      %v875 = vpop.f32.mrf.mxu0
      %v876 = vadd.f32 %v808, %v875
      %877 = vmatmul.bf16.gmra.mxu0 %v840
      %v878 = vpop.f32.mrf.mxu0
      %v879 = vadd.f32 %v808, %v878
      %v880 = vpop.f32.mrf.mxu0
      %v881 = vadd.f32 %v808, %v880
      %882 = vmatmul.bf16.gmra.mxu0 %v842
      %v883 = vpop.f32.mrf.mxu0
      %v884 = vadd.f32 %v808, %v883
      %v885 = vpop.f32.mrf.mxu0
      %v886 = vadd.f32 %v808, %v885
      %887 = vmatmul.bf16.gmra.mxu0 %v844
      %v888 = vpop.f32.mrf.mxu0
      %v889 = vadd.f32 %v808, %v888
      %v890 = vpop.f32.mrf.mxu0
      %891 = vdwg.mxu0
      %v892 = vtanh.pop %v859
      %v893 = vtanh.pop %v861
      %v894 = vtanh.pop %v864
      %v895 = vtanh.pop %v866
      %v896 = vtanh.pop %v869
      %v897 = vtanh.pop %v871
      %v898 = vtanh.pop %v874
      %v899 = vtanh.pop %v876
      %v900 = vtanh.pop %v879
      %v901 = vtanh.pop %v881
      %v902 = vtanh.pop %v884
      %v903 = vtanh.pop %v886
      %v904 = vtanh.pop %v889
      %v905 = vpack.c.bf16 %v892, %v892
      %v906 = vpack.c.bf16 %v893, %v893
      %v907 = vpack.c.bf16 %v894, %v894
      %v908 = vpack.c.bf16 %v895, %v895
      %v909 = vpack.c.bf16 %v896, %v896
      %v910 = vpack.c.bf16 %v897, %v897
      %v911 = vpack.c.bf16 %v898, %v898
      %v912 = vpack.c.bf16 %v899, %v899
      %v913 = vpack.c.bf16 %v900, %v900
      %v914 = vpack.c.bf16 %v901, %v901
      %v915 = vpack.c.bf16 %v902, %v902
      %v916 = vpack.c.bf16 %v903, %v903
      %v917 = vpack.c.bf16 %v904, %v904
      %vm918 = vcmask 60416
      %919 = vst.msk [vmem:[%s300] sm:$0xf] %vm918, %v905
      %920 = vst.msk [vmem:[%s300 + $0x4] sm:$0xf] %vm918, %v906
      %921 = vst.msk [vmem:[%s300 + $0x8] sm:$0xf] %vm918, %v907
      %922 = vst.msk [vmem:[%s300 + $0xc] sm:$0xf] %vm918, %v908
      %923 = vst.msk [vmem:[%s300 + $0x10] sm:$0xf] %vm918, %v909
      %924 = vst.msk [vmem:[%s300 + $0x14] sm:$0xf] %vm918, %v910
      %925 = vst.msk [vmem:[%s300 + $0x18] sm:$0xf] %vm918, %v911
      %926 = vst.msk [vmem:[%s300 + $0x1c] sm:$0xf] %vm918, %v912
      %927 = vst.msk [vmem:[%s300 + $0x20] sm:$0xf] %vm918, %v913
      %928 = vst.msk [vmem:[%s300 + $0x24] sm:$0xf] %vm918, %v914
      %929 = vst.msk [vmem:[%s300 + $0x28] sm:$0xf] %vm918, %v915
      %930 = vst.msk [vmem:[%s300 + $0x2c] sm:$0xf] %vm918, %v916
      %931 = vst.msk [vmem:[%s300 + $0x30] sm:$0xf] %vm918, %v917
      %s932 = smul.u32 13, %s20
      %p933 = scmp.lt.s32.totalorder %s19, 1
      %s934 = scalar_select %p933, %s19, 1
      %p935 = scmp.lt.s32.totalorder %s932, 12
      %s936 = scalar_select %p935, %s932, 12
      %s937 = smul.addr %s934, 13
      %s938 = sadd.s32 %s936, %s937
      %s939 = smul.addr %s938, 4
      %s940 = scalar_lea.vmem %s4, %s939
      // Predicated region
      $region37: #{forward.41} parent=35 // pred_check
        %p941 = pneg %p149
      $region38: #{forward.41} parent=35 // pred_check_branch
        %943 = sbr.rel (%p941) target = $region40
      $region39: #{forward.41} parent=35 // pred_region
        %s944 = smul.u32 13, %s20
      $region40: #{forward.41} parent=35 // pred_fallthru
        _
    $region36: #{forward.41} parent=5 // pred_fallthru
      _
    %p945 = scmp.le.s32.totalorder 2, %s10
    // Predicated region
    $region41: #{forward.41} parent=5 // pred_check
      %p946 = pneg %p945
    $region42: #{forward.41} parent=5 // pred_check_branch
      %948 = sbr.rel (%p946) target = $region44
    $region43: #{forward.41} parent=5 // pred_region
      %s949 = ssub.s32 %s10, 2
      // Predicated region
      $region45: #{forward.41} parent=43 // pred_check
        %p950 = pneg %p155
      $region46: #{forward.41} parent=43 // pred_check_branch
        %952 = sbr.rel (%p950) target = $region48
      $region47: #{forward.41} parent=43 // pred_region
        %s953 = smul.u32 13, %s22
        %p954 = scmp.lt.s32.totalorder %s21, 1
        %s955 = scalar_select %p954, %s21, 1
        %p956 = scmp.lt.s32.totalorder %s953, 12
        %s957 = scalar_select %p956, %s953, 12
        %s958 = smul.addr %s955, 13
        %s959 = sadd.s32 %s957, %s958
        %s960 = smul.addr %s959, 4
        %s961 = scalar_lea.vmem %s4, %s960
      $region48: #{forward.41} parent=43 // pred_fallthru
        _
    $region44: #{forward.41} parent=5 // pred_fallthru
      _
  $region6: #{forward.41} parent=0 // loop_footer
    %s14 = sadd.s32 1, %s10
  $region7: #{forward.41} parent=0 // loop_footer_branch
    %9 = sbr.rel target = $region3
  $region8: #{forward.41} parent=0 // loop_exit
    _

</llo_original>
